<compile_context>
chip_gen: v7x
topology: tpu7x:2x2x1
jax: 0.10.0
libtpu: 0.0.40
codegen_flags: <defaults>
</compile_context>

<pallas_src>
import functools

import jax
import jax.numpy as jnp
from jax import lax
from jax.experimental import pallas as pl
from jax.experimental.pallas import tpu as pltpu

_EPS = 1e-5            # torch.nn.InstanceNorm2d default eps
_LRELU_SLOPE = 0.01    # torch.nn.LeakyReLU default negative_slope
_CBR_KSP = [(7, 1, 3), (4, 2, 1), (4, 2, 1), (4, 2, 1), (4, 2, 1)]  # (kernel, stride, pad)
_LANE = 128
_VMEM_LIMIT = 48 * 1024 * 1024  # explicit scoped-VMEM cap (< v7x's 64 MiB physical)


def _round_up(x, m):
    return (x + m - 1) // m * m


# ----------------------------- Pallas kernels -----------------------------

def _instance_norm(acc):
    """Non-affine InstanceNorm over spatial rows of a resident (M, C) f32 tile.
    Two-pass (subtract-mean-then-square) variance per review."""
    mean = jnp.mean(acc, axis=0, keepdims=True)
    cen = acc - mean
    var = jnp.mean(cen * cen, axis=0, keepdims=True)
    return cen * lax.rsqrt(var + _EPS)


def _conv_in_act_kernel(a_ref, w_ref, o_ref, *, slope):
    """One image: bf16 im2col matmul (f32 acc) -> InstanceNorm -> LeakyReLU/ReLU.
    Conv bias omitted (cancelled exactly by the mean subtraction)."""
    acc = jnp.dot(a_ref[...], w_ref[...], preferred_element_type=jnp.float32)
    y = _instance_norm(acc)
    if slope == 0.0:
        y = jnp.maximum(y, 0.0)
    else:
        y = jnp.where(y >= 0, y, y * slope)
    o_ref[...] = y


def _conv_in_res_kernel(a_ref, w_ref, r_ref, o_ref):
    """One image: bf16 im2col matmul (f32 acc) -> InstanceNorm -> + residual."""
    acc = jnp.dot(a_ref[...], w_ref[...], preferred_element_type=jnp.float32)
    o_ref[...] = _instance_norm(acc) + r_ref[...]


def _conv_in_res_pool_kernel(a_ref, w_ref, r_ref, o_ref):
    """Last encoder layer: conv -> IN -> +residual -> global average pool while
    the (M, 128) tile is resident in VMEM.  Emits only the (1, 128) pooled row,
    so the full spatial tensor never round-trips to HBM."""
    acc = jnp.dot(a_ref[...], w_ref[...], preferred_element_type=jnp.float32)
    y = _instance_norm(acc) + r_ref[...]
    o_ref[...] = jnp.mean(y, axis=0, keepdims=True)


def _mlp_kernel(x_ref, w1_ref, b1_ref, w2_ref, b2_ref, w3_ref, b3_ref, o_ref):
    """Whole batch at once: Linear -> ReLU -> Linear -> ReLU -> Linear (f32)."""
    h = jnp.dot(x_ref[...], w1_ref[...], preferred_element_type=jnp.float32) + b1_ref[...]
    h = jnp.maximum(h, 0.0)
    h = jnp.dot(h, w2_ref[...], preferred_element_type=jnp.float32) + b2_ref[...]
    h = jnp.maximum(h, 0.0)
    o_ref[...] = jnp.dot(h, w3_ref[...], preferred_element_type=jnp.float32) + b3_ref[...]


# ------------------------------ wrappers ----------------------------------

def _im2col(x_nhwc, k, stride, pad):
    """(N,H,W,C) -> (N, OH*OW, C*k*k) patches, feature order (c, kh, kw)."""
    patches = lax.conv_general_dilated_patches(
        x_nhwc, (k, k), (stride, stride), [(pad, pad), (pad, pad)],
        dimension_numbers=("NHWC", "HWIO", "NHWC"),
        precision=lax.Precision.HIGHEST)
    n, oh, ow, kk = patches.shape
    return patches.reshape(n, oh * ow, kk), oh, ow


def fused_conv_in(h, w_p, k, stride, pad, *, slope=0.0, residual=None, pool=False):
    """Fused Conv2d + InstanceNorm2d + activation / residual-add (+ optional
    global-average-pool epilogue).  One pallas_call, one grid step per image."""
    n = h.shape[0]
    kdim, ocp = w_p.shape
    ic = kdim // (k * k)                       # real input channels (static shape math)
    x = h if h.shape[-1] == ic else h[..., :ic]            # drop the 128-lane padding
    a, oh, ow = _im2col(x.astype(jnp.bfloat16), k, stride, pad)  # (N, M, ic*k*k) bf16
    if a.shape[-1] != kdim:                    # weight rows rounded to a multiple of 8
        a = jnp.pad(a, ((0, 0), (0, 0), (0, kdim - a.shape[-1])))
    m = oh * ow

    in_specs = [pl.BlockSpec((None, m, kdim), lambda i: (i, 0, 0)),  # per-image patches
                pl.BlockSpec((kdim, ocp), lambda i: (0, 0))]         # resident weight
    inputs = [a, w_p]
    if residual is None:
        kernel = functools.partial(_conv_in_act_kernel, slope=slope)
    else:
        in_specs.append(pl.BlockSpec((None, m, ocp), lambda i: (i, 0, 0)))
        inputs.append(residual.reshape(n, m, ocp))
        kernel = _conv_in_res_pool_kernel if pool else _conv_in_res_kernel

    out_rows = 1 if pool else m
    out = pl.pallas_call(
        kernel,
        out_shape=jax.ShapeDtypeStruct((n, out_rows, ocp), jnp.float32),
        grid=(n,),
        in_specs=in_specs,
        out_specs=pl.BlockSpec((None, out_rows, ocp), lambda i: (i, 0, 0)),
        compiler_params=pltpu.CompilerParams(
            dimension_semantics=("parallel",),
            vmem_limit_bytes=_VMEM_LIMIT),
    )(*inputs)
    if pool:
        return out.reshape(n, ocp)
    return out.reshape(n, oh, ow, ocp)


def mlp_batch(pooled, mlp_pp):
    """3-layer MLP over the whole (N, 128) batch in one grid-less pallas_call."""
    n = pooled.shape[0]
    (w1, b1), (w2, b2), (w3, b3) = [(p["w"], p["b"]) for p in mlp_pp]
    return pl.pallas_call(
        _mlp_kernel,
        out_shape=jax.ShapeDtypeStruct((n, w3.shape[1]), jnp.float32),
    )(pooled, w1, b1, w2, b2, w3, b3)


# --------------------------- model definition ------------------------------

def init_params(key, base=8):
    """PyTorch-convention raw parameters (Conv2d OIHW, Linear (out, in))."""
    keys = iter(jax.random.split(key, 32))

    def conv_p(ic, oc, k):
        return {"w": 0.05 * jax.random.normal(next(keys), (oc, ic, k, k), jnp.float32),
                "b": 0.05 * jax.random.normal(next(keys), (oc,), jnp.float32)}

    def lin_p(i, o):
        return {"w": 0.05 * jax.random.normal(next(keys), (o, i), jnp.float32),
                "b": 0.05 * jax.random.normal(next(keys), (o,), jnp.float32)}

    return {
        "cbr": [conv_p(3, base, 7), conv_p(base, base * 2, 4),
                conv_p(base * 2, base * 4, 4), conv_p(base * 4, base * 8, 4),
                conv_p(base * 8, base * 8, 4)],
        "res": [{"c1": conv_p(base * 8, base * 8, 3),
                 "c2": conv_p(base * 8, base * 8, 3)} for _ in range(2)],
        "mlp": [lin_p(base * 8, base * 8), lin_p(base * 8, base * 8),
                lin_p(base * 8, base * 16)],
    }


def prepare_params(params):
    """One-time weight preparation (outside the hot path).
    Conv weights -> (K, 128) bf16 matmul slabs with K = real ic*k*k rounded up
    to a sublane multiple of 8; output channels zero-padded to a lane-dense
    128 so every activation store is an unmasked full-lane vst.  Conv biases
    are dropped (a per-channel shift is cancelled exactly by the non-affine
    InstanceNorm).  MLP weights stay f32, padded to width 128; padded channels
    are exactly zero through conv, IN, activations, residual adds and pool, so
    the real channels are unaffected."""
    cbr_raw = params["cbr"]
    cp = _round_up(max(p["w"].shape[0] for p in cbr_raw), _LANE)
    outp = _round_up(params["mlp"][2]["w"].shape[0], _LANE)

    def conv_prep(p):
        oc, ic, kh, kw = p["w"].shape
        k_real = ic * kh * kw
        k_pad = _round_up(k_real, 8)
        w_mat = p["w"].reshape(oc, k_real).T              # rows ordered (ic, kh, kw)
        w_p = jnp.zeros((k_pad, cp), jnp.float32).at[:k_real, :oc].set(w_mat)
        return {"w": w_p.astype(jnp.bfloat16)}

    def lin_prep(p, n_out):
        o, i = p["w"].shape
        w_p = jnp.zeros((cp, n_out), jnp.float32).at[:i, :o].set(p["w"].T)
        b_p = jnp.zeros((1, n_out), jnp.float32).at[0, :o].set(p["b"])
        return {"w": w_p, "b": b_p}

    return {
        "cbr": [conv_prep(p) for p in cbr_raw],
        "res": [{"c1": conv_prep(rp["c1"]), "c2": conv_prep(rp["c2"])}
                for rp in params["res"]],
        "mlp": [lin_prep(params["mlp"][0], cp), lin_prep(params["mlp"][1], cp),
                lin_prep(params["mlp"][2], outp)],
    }


@functools.partial(jax.jit, static_argnames=("out_dim",))
def style_encoder_mlp(x_nchw, pp, *, out_dim):
    # PyTorch NCHW input -> internal NHWC (channels on the lane axis)
    h = jnp.transpose(x_nchw, (0, 2, 3, 1)).astype(jnp.float32)

    # enc: 5x CBR = Conv2d -> InstanceNorm2d -> LeakyReLU(0.01)   (1 kernel each)
    for p, (k, s, pad) in zip(pp["cbr"], _CBR_KSP):
        h = fused_conv_in(h, p["w"], k, s, pad, slope=_LRELU_SLOPE)

    # 2x ResBlock: [conv3x3 -> IN -> ReLU] ; [conv3x3 -> IN -> +x]  (2 kernels each)
    # The last res-block kernel also emits the global average pool.
    n_res = len(pp["res"])
    for idx, rp in enumerate(pp["res"]):
        r = h
        h = fused_conv_in(h, rp["c1"]["w"], 3, 1, 1, slope=0.0)
        h = fused_conv_in(h, rp["c2"]["w"], 3, 1, 1, residual=r,
                          pool=(idx == n_res - 1))

    out = mlp_batch(h, pp["mlp"])             # pooled (N, 128) -> one batched MLP
    return out[:, :out_dim]


# --------------------- pure-JAX references (for checking) -------------------

def _ref_forward(x_nchw, params, conv_dtype=jnp.float32):
    """Faithful PyTorch-semantics forward when conv_dtype=float32; with
    conv_dtype=bfloat16 it matches the kernel's conv-operand quantization
    (bf16 operands, f32 accumulation, f32 everything else)."""
    h = jnp.transpose(x_nchw, (0, 2, 3, 1)).astype(jnp.float32)

    def conv(x, p, s, pad):
        w = jnp.transpose(p["w"], (2, 3, 1, 0)).astype(conv_dtype)
        y = lax.conv_general_dilated(
            x.astype(conv_dtype), w, (s, s), [(pad, pad), (pad, pad)],
            dimension_numbers=("NHWC", "HWIO", "NHWC"),
            precision=lax.Precision.HIGHEST,
            preferred_element_type=jnp.float32)
        return y + p["b"]

    def inorm(x):
        mean = jnp.mean(x, axis=(1, 2), keepdims=True)
        var = jnp.mean(jnp.square(x - mean), axis=(1, 2), keepdims=True)
        return (x - mean) * lax.rsqrt(var + _EPS)

    for p, (k, s, pad) in zip(params["cbr"], _CBR_KSP):
        h = inorm(conv(h, p, s, pad))
        h = jnp.where(h >= 0, h, h * _LRELU_SLOPE)
    for rp in params["res"]:
        r = h
        h = jnp.maximum(inorm(conv(h, rp["c1"], 1, 1)), 0.0)
        h = inorm(conv(h, rp["c2"], 1, 1)) + r
    h = jnp.mean(h, axis=(1, 2))
    for i, lp in enumerate(params["mlp"]):
        h = jnp.dot(h, lp["w"].T, precision=lax.Precision.HIGHEST) + lp["b"]
        if i < 2:
            h = jnp.maximum(h, 0.0)
    return h


if __name__ == "__main__":
    base = 8
    key = jax.random.PRNGKey(0)
    kx, kp, kc = jax.random.split(key, 3)
    x = jax.random.normal(kx, (2, 3, 32, 32), jnp.float32)   # NCHW like PyTorch
    params = init_params(kp, base=base)

    # im2col feature-order unit tests (single- AND multi-channel, per review).
    def _check_order(xin, w_oihw, k, s, pad):
        ref = lax.conv_general_dilated(
            xin, jnp.transpose(w_oihw, (2, 3, 1, 0)), (s, s), [(pad, pad)] * 2,
            dimension_numbers=("NHWC", "HWIO", "NHWC"),
            precision=lax.Precision.HIGHEST)
        a, oh, ow = _im2col(xin, k, s, pad)
        w_mat = w_oihw.reshape(w_oihw.shape[0], -1).T
        got = jnp.einsum("nmk,ko->nmo", a, w_mat,
                         precision=lax.Precision.HIGHEST).reshape(ref.shape)
        err = float(jnp.max(jnp.abs(ref - got)))
        assert err < 1e-4, f"im2col feature-order mismatch: {err}"

    x_nhwc = jnp.transpose(x, (0, 2, 3, 1))
    _check_order(x_nhwc, params["cbr"][0]["w"], 7, 1, 3)                 # ic = 3
    xc = jax.random.normal(kc, (2, 16, 16, base), jnp.float32)
    _check_order(xc, params["cbr"][1]["w"], 4, 2, 1)                     # ic = 8

    pp = prepare_params(params)
    out = style_encoder_mlp(x, pp, out_dim=base * 16)
    out = jax.block_until_ready(out)
    assert out.shape == (2, base * 16), out.shape
    assert bool(jnp.all(jnp.isfinite(out)))

    # Tight check: kernel vs a matched-precision reference (bf16 conv operands,
    # f32 everything else) -> verifies the Pallas implementation itself.
    ref_bf16 = _ref_forward(x, params, conv_dtype=jnp.bfloat16)
    err_impl = float(jnp.max(jnp.abs(out - ref_bf16)))
    assert err_impl < 1e-2, f"mismatch vs matched-precision reference: {err_impl}"

    # Loose check: kernel vs the f32 PyTorch-semantics reference; the gap is
    # the bf16 conv-operand quantization drift.
    ref_f32 = _ref_forward(x, params, conv_dtype=jnp.float32)
    err_sem = float(jnp.max(jnp.abs(out - ref_f32)))
    assert err_sem < 1e-1, f"bf16 drift vs f32 reference too large: {err_sem}"

    print("KERNEL_OK")
</pallas_src>

<mosaic_0001>
module attributes {stable_mosaic.version = 11 : i64} {
  func.func @_conv_in_act_kernel(%arg0: i32, %arg1: memref<1x1024x152xbf16, #tpu.memory_space<vmem>>, %arg2: memref<152x128xbf16, #tpu.memory_space<vmem>>, %arg3: memref<1x1024x128xf32, #tpu.memory_space<vmem>>) attributes {dimension_semantics = [#tpu.dimension_semantics<parallel>], iteration_bounds = array<i64: 2>, scalar_prefetch = 0 : i64, scratch_operands = 0 : i64, tpu.core_type = #tpu.core_type<tc>, window_params = [{transform_indices = @transform_0, window_bounds = array<i64: 1, 1024, 152>}, {pipeline_mode = #tpu.pipeline_mode<synchronous>, transform_indices = @transform_1, window_bounds = array<i64: 152, 128>}, {transform_indices = @transform_2, window_bounds = array<i64: 1, 1024, 128>}]} {
    %c0 = arith.constant 0 : index
    %c0_0 = arith.constant 0 : index
    %c0_1 = arith.constant 0 : index
    %0 = vector.load %arg1[%c0, %c0_0, %c0_1] : memref<1x1024x152xbf16, #tpu.memory_space<vmem>>, vector<1x1024x152xbf16>
    %1 = vector.shape_cast %0 : vector<1x1024x152xbf16> to vector<1024x152xbf16>
    %c0_2 = arith.constant 0 : index
    %c0_3 = arith.constant 0 : index
    %2 = vector.load %arg2[%c0_2, %c0_3] : memref<152x128xbf16, #tpu.memory_space<vmem>>, vector<152x128xbf16>
    %cst = arith.constant dense<0.000000e+00> : vector<1024x128xf32>
    %3 = tpu.matmul %1, %2, %cst {dimension_numbers = #tpu.dot_dimension_numbers<[1], [0], [0], [1], [0, 0, 1, 1], [], []>} : vector<1024x152xbf16>, vector<152x128xbf16>, vector<1024x128xf32> -> vector<1024x128xf32>
    %cst_4 = arith.constant dense<0.000000e+00> : vector<128xf32>
    %4 = vector.multi_reduction <add>, %3, %cst_4 [0] : vector<1024x128xf32> to vector<128xf32>
    %5 = vector.shape_cast %4 : vector<128xf32> to vector<1x128xf32>
    %cst_5 = arith.constant 1.024000e+03 : f32
    %6 = vector.broadcast %cst_5 : f32 to vector<1x128xf32>
    %7 = arith.divf %5, %6 : vector<1x128xf32>
    %8 = vector.broadcast %7 : vector<1x128xf32> to vector<1024x128xf32>
    %9 = arith.subf %3, %8 : vector<1024x128xf32>
    %10 = arith.mulf %9, %9 : vector<1024x128xf32>
    %cst_6 = arith.constant dense<0.000000e+00> : vector<128xf32>
    %11 = vector.multi_reduction <add>, %10, %cst_6 [0] : vector<1024x128xf32> to vector<128xf32>
    %12 = vector.shape_cast %11 : vector<128xf32> to vector<1x128xf32>
    %cst_7 = arith.constant 1.024000e+03 : f32
    %13 = vector.broadcast %cst_7 : f32 to vector<1x128xf32>
    %14 = arith.divf %12, %13 : vector<1x128xf32>
    %cst_8 = arith.constant 9.99999974E-6 : f32
    %15 = vector.broadcast %cst_8 : f32 to vector<1x128xf32>
    %16 = arith.addf %14, %15 : vector<1x128xf32>
    %17 = math.rsqrt %16 : vector<1x128xf32>
    %18 = vector.broadcast %17 : vector<1x128xf32> to vector<1024x128xf32>
    %19 = arith.mulf %9, %18 : vector<1024x128xf32>
    %cst_9 = arith.constant 0.000000e+00 : f32
    %20 = vector.broadcast %cst_9 : f32 to vector<1024x128xf32>
    %21 = arith.cmpf oge, %19, %20 : vector<1024x128xf32>
    %cst_10 = arith.constant 0.00999999977 : f32
    %22 = vector.broadcast %cst_10 : f32 to vector<1024x128xf32>
    %23 = arith.mulf %19, %22 : vector<1024x128xf32>
    %24 = arith.select %21, %19, %23 : vector<1024x128xi1>, vector<1024x128xf32>
    %c0_11 = arith.constant 0 : index
    %c0_12 = arith.constant 0 : index
    %c0_13 = arith.constant 0 : index
    %25 = vector.load %arg3[%c0_11, %c0_12, %c0_13] : memref<1x1024x128xf32, #tpu.memory_space<vmem>>, vector<1x1024x128xf32>
    %26 = vector.shape_cast %25 : vector<1x1024x128xf32> to vector<1024x128xf32>
    %27 = vector.shape_cast %24 : vector<1024x128xf32> to vector<1x1024x128xf32>
    tpu.vector_store %arg3[%c0_11, %c0_12, %c0_13], %27 {strides = array<i32>} : memref<1x1024x128xf32, #tpu.memory_space<vmem>>, vector<1x1024x128xf32>,
    return
  }
  func.func @transform_0(%arg0: i32) -> (i32, i32, i32) {
    %c0_i32 = arith.constant 0 : i32
    %c0_i32_0 = arith.constant 0 : i32
    %c0_i32_1 = arith.constant 0 : i32
    return %arg0, %c0_i32, %c0_i32_0 : i32, i32, i32
  }
  func.func @transform_1(%arg0: i32) -> (i32, i32) {
    %c0_i32 = arith.constant 0 : i32
    %c0_i32_0 = arith.constant 0 : i32
    %c0_i32_1 = arith.constant 0 : i32
    return %c0_i32, %c0_i32_0 : i32, i32
  }
  func.func @transform_2(%arg0: i32) -> (i32, i32, i32) {
    %c0_i32 = arith.constant 0 : i32
    %c0_i32_0 = arith.constant 0 : i32
    %c0_i32_1 = arith.constant 0 : i32
    return %arg0, %c0_i32, %c0_i32_0 : i32, i32, i32
  }
}

module attributes {stable_mosaic.version = 11 : i64} {
  func.func @_conv_in_act_kernel(%arg0: i32, %arg1: memref<1x256x128xbf16, #tpu.memory_space<vmem>>, %arg2: memref<128x128xbf16, #tpu.memory_space<vmem>>, %arg3: memref<1x256x128xf32, #tpu.memory_space<vmem>>) attributes {dimension_semantics = [#tpu.dimension_semantics<parallel>], iteration_bounds = array<i64: 2>, scalar_prefetch = 0 : i64, scratch_operands = 0 : i64, tpu.core_type = #tpu.core_type<tc>, window_params = [{transform_indices = @transform_0, window_bounds = array<i64: 1, 256, 128>}, {pipeline_mode = #tpu.pipeline_mode<synchronous>, transform_indices = @transform_1, window_bounds = array<i64: 128, 128>}, {transform_indices = @transform_2, window_bounds = array<i64: 1, 256, 128>}]} {
    %c0 = arith.constant 0 : index
    %c0_0 = arith.constant 0 : index
    %c0_1 = arith.constant 0 : index
    %0 = vector.load %arg1[%c0, %c0_0, %c0_1] : memref<1x256x128xbf16, #tpu.memory_space<vmem>>, vector<1x256x128xbf16>
    %1 = vector.shape_cast %0 : vector<1x256x128xbf16> to vector<256x128xbf16>
    %c0_2 = arith.constant 0 : index
    %c0_3 = arith.constant 0 : index
    %2 = vector.load %arg2[%c0_2, %c0_3] : memref<128x128xbf16, #tpu.memory_space<vmem>>, vector<128x128xbf16>
    %cst = arith.constant dense<0.000000e+00> : vector<256x128xf32>
    %3 = tpu.matmul %1, %2, %cst {dimension_numbers = #tpu.dot_dimension_numbers<[1], [0], [0], [1], [0, 0, 1, 1], [], []>} : vector<256x128xbf16>, vector<128x128xbf16>, vector<256x128xf32> -> vector<256x128xf32>
    %cst_4 = arith.constant dense<0.000000e+00> : vector<128xf32>
    %4 = vector.multi_reduction <add>, %3, %cst_4 [0] : vector<256x128xf32> to vector<128xf32>
    %5 = vector.shape_cast %4 : vector<128xf32> to vector<1x128xf32>
    %cst_5 = arith.constant 2.560000e+02 : f32
    %6 = vector.broadcast %cst_5 : f32 to vector<1x128xf32>
    %7 = arith.divf %5, %6 : vector<1x128xf32>
    %8 = vector.broadcast %7 : vector<1x128xf32> to vector<256x128xf32>
    %9 = arith.subf %3, %8 : vector<256x128xf32>
    %10 = arith.mulf %9, %9 : vector<256x128xf32>
    %cst_6 = arith.constant dense<0.000000e+00> : vector<128xf32>
    %11 = vector.multi_reduction <add>, %10, %cst_6 [0] : vector<256x128xf32> to vector<128xf32>
    %12 = vector.shape_cast %11 : vector<128xf32> to vector<1x128xf32>
    %cst_7 = arith.constant 2.560000e+02 : f32
    %13 = vector.broadcast %cst_7 : f32 to vector<1x128xf32>
    %14 = arith.divf %12, %13 : vector<1x128xf32>
    %cst_8 = arith.constant 9.99999974E-6 : f32
    %15 = vector.broadcast %cst_8 : f32 to vector<1x128xf32>
    %16 = arith.addf %14, %15 : vector<1x128xf32>
    %17 = math.rsqrt %16 : vector<1x128xf32>
    %18 = vector.broadcast %17 : vector<1x128xf32> to vector<256x128xf32>
    %19 = arith.mulf %9, %18 : vector<256x128xf32>
    %cst_9 = arith.constant 0.000000e+00 : f32
    %20 = vector.broadcast %cst_9 : f32 to vector<256x128xf32>
    %21 = arith.cmpf oge, %19, %20 : vector<256x128xf32>
    %cst_10 = arith.constant 0.00999999977 : f32
    %22 = vector.broadcast %cst_10 : f32 to vector<256x128xf32>
    %23 = arith.mulf %19, %22 : vector<256x128xf32>
    %24 = arith.select %21, %19, %23 : vector<256x128xi1>, vector<256x128xf32>
    %c0_11 = arith.constant 0 : index
    %c0_12 = arith.constant 0 : index
    %c0_13 = arith.constant 0 : index
    %25 = vector.load %arg3[%c0_11, %c0_12, %c0_13] : memref<1x256x128xf32, #tpu.memory_space<vmem>>, vector<1x256x128xf32>
    %26 = vector.shape_cast %25 : vector<1x256x128xf32> to vector<256x128xf32>
    %27 = vector.shape_cast %24 : vector<256x128xf32> to vector<1x256x128xf32>
    tpu.vector_store %arg3[%c0_11, %c0_12, %c0_13], %27 {strides = array<i32>} : memref<1x256x128xf32, #tpu.memory_space<vmem>>, vector<1x256x128xf32>,
    return
  }
  func.func @transform_0(%arg0: i32) -> (i32, i32, i32) {
    %c0_i32 = arith.constant 0 : i32
    %c0_i32_0 = arith.constant 0 : i32
    %c0_i32_1 = arith.constant 0 : i32
    return %arg0, %c0_i32, %c0_i32_0 : i32, i32, i32
  }
  func.func @transform_1(%arg0: i32) -> (i32, i32) {
    %c0_i32 = arith.constant 0 : i32
    %c0_i32_0 = arith.constant 0 : i32
    %c0_i32_1 = arith.constant 0 : i32
    return %c0_i32, %c0_i32_0 : i32, i32
  }
  func.func @transform_2(%arg0: i32) -> (i32, i32, i32) {
    %c0_i32 = arith.constant 0 : i32
    %c0_i32_0 = arith.constant 0 : i32
    %c0_i32_1 = arith.constant 0 : i32
    return %arg0, %c0_i32, %c0_i32_0 : i32, i32, i32
  }
}

module attributes {stable_mosaic.version = 11 : i64} {
  func.func @_conv_in_act_kernel(%arg0: i32, %arg1: memref<1x64x256xbf16, #tpu.memory_space<vmem>>, %arg2: memref<256x128xbf16, #tpu.memory_space<vmem>>, %arg3: memref<1x64x128xf32, #tpu.memory_space<vmem>>) attributes {dimension_semantics = [#tpu.dimension_semantics<parallel>], iteration_bounds = array<i64: 2>, scalar_prefetch = 0 : i64, scratch_operands = 0 : i64, tpu.core_type = #tpu.core_type<tc>, window_params = [{transform_indices = @transform_0, window_bounds = array<i64: 1, 64, 256>}, {pipeline_mode = #tpu.pipeline_mode<synchronous>, transform_indices = @transform_1, window_bounds = array<i64: 256, 128>}, {transform_indices = @transform_2, window_bounds = array<i64: 1, 64, 128>}]} {
    %c0 = arith.constant 0 : index
    %c0_0 = arith.constant 0 : index
    %c0_1 = arith.constant 0 : index
    %0 = vector.load %arg1[%c0, %c0_0, %c0_1] : memref<1x64x256xbf16, #tpu.memory_space<vmem>>, vector<1x64x256xbf16>
    %1 = vector.shape_cast %0 : vector<1x64x256xbf16> to vector<64x256xbf16>
    %c0_2 = arith.constant 0 : index
    %c0_3 = arith.constant 0 : index
    %2 = vector.load %arg2[%c0_2, %c0_3] : memref<256x128xbf16, #tpu.memory_space<vmem>>, vector<256x128xbf16>
    %cst = arith.constant dense<0.000000e+00> : vector<64x128xf32>
    %3 = tpu.matmul %1, %2, %cst {dimension_numbers = #tpu.dot_dimension_numbers<[1], [0], [0], [1], [0, 0, 1, 1], [], []>} : vector<64x256xbf16>, vector<256x128xbf16>, vector<64x128xf32> -> vector<64x128xf32>
    %cst_4 = arith.constant dense<0.000000e+00> : vector<128xf32>
    %4 = vector.multi_reduction <add>, %3, %cst_4 [0] : vector<64x128xf32> to vector<128xf32>
    %5 = vector.shape_cast %4 : vector<128xf32> to vector<1x128xf32>
    %cst_5 = arith.constant 6.400000e+01 : f32
    %6 = vector.broadcast %cst_5 : f32 to vector<1x128xf32>
    %7 = arith.divf %5, %6 : vector<1x128xf32>
    %8 = vector.broadcast %7 : vector<1x128xf32> to vector<64x128xf32>
    %9 = arith.subf %3, %8 : vector<64x128xf32>
    %10 = arith.mulf %9, %9 : vector<64x128xf32>
    %cst_6 = arith.constant dense<0.000000e+00> : vector<128xf32>
    %11 = vector.multi_reduction <add>, %10, %cst_6 [0] : vector<64x128xf32> to vector<128xf32>
    %12 = vector.shape_cast %11 : vector<128xf32> to vector<1x128xf32>
    %cst_7 = arith.constant 6.400000e+01 : f32
    %13 = vector.broadcast %cst_7 : f32 to vector<1x128xf32>
    %14 = arith.divf %12, %13 : vector<1x128xf32>
    %cst_8 = arith.constant 9.99999974E-6 : f32
    %15 = vector.broadcast %cst_8 : f32 to vector<1x128xf32>
    %16 = arith.addf %14, %15 : vector<1x128xf32>
    %17 = math.rsqrt %16 : vector<1x128xf32>
    %18 = vector.broadcast %17 : vector<1x128xf32> to vector<64x128xf32>
    %19 = arith.mulf %9, %18 : vector<64x128xf32>
    %cst_9 = arith.constant 0.000000e+00 : f32
    %20 = vector.broadcast %cst_9 : f32 to vector<64x128xf32>
    %21 = arith.cmpf oge, %19, %20 : vector<64x128xf32>
    %cst_10 = arith.constant 0.00999999977 : f32
    %22 = vector.broadcast %cst_10 : f32 to vector<64x128xf32>
    %23 = arith.mulf %19, %22 : vector<64x128xf32>
    %24 = arith.select %21, %19, %23 : vector<64x128xi1>, vector<64x128xf32>
    %c0_11 = arith.constant 0 : index
    %c0_12 = arith.constant 0 : index
    %c0_13 = arith.constant 0 : index
    %25 = vector.load %arg3[%c0_11, %c0_12, %c0_13] : memref<1x64x128xf32, #tpu.memory_space<vmem>>, vector<1x64x128xf32>
    %26 = vector.shape_cast %25 : vector<1x64x128xf32> to vector<64x128xf32>
    %27 = vector.shape_cast %24 : vector<64x128xf32> to vector<1x64x128xf32>
    tpu.vector_store %arg3[%c0_11, %c0_12, %c0_13], %27 {strides = array<i32>} : memref<1x64x128xf32, #tpu.memory_space<vmem>>, vector<1x64x128xf32>,
    return
  }
  func.func @transform_0(%arg0: i32) -> (i32, i32, i32) {
    %c0_i32 = arith.constant 0 : i32
    %c0_i32_0 = arith.constant 0 : i32
    %c0_i32_1 = arith.constant 0 : i32
    return %arg0, %c0_i32, %c0_i32_0 : i32, i32, i32
  }
  func.func @transform_1(%arg0: i32) -> (i32, i32) {
    %c0_i32 = arith.constant 0 : i32
    %c0_i32_0 = arith.constant 0 : i32
    %c0_i32_1 = arith.constant 0 : i32
    return %c0_i32, %c0_i32_0 : i32, i32
  }
  func.func @transform_2(%arg0: i32) -> (i32, i32, i32) {
    %c0_i32 = arith.constant 0 : i32
    %c0_i32_0 = arith.constant 0 : i32
    %c0_i32_1 = arith.constant 0 : i32
    return %arg0, %c0_i32, %c0_i32_0 : i32, i32, i32
  }
}

module attributes {stable_mosaic.version = 11 : i64} {
  func.func @_conv_in_act_kernel(%arg0: i32, %arg1: memref<1x16x512xbf16, #tpu.memory_space<vmem>>, %arg2: memref<512x128xbf16, #tpu.memory_space<vmem>>, %arg3: memref<1x16x128xf32, #tpu.memory_space<vmem>>) attributes {dimension_semantics = [#tpu.dimension_semantics<parallel>], iteration_bounds = array<i64: 2>, scalar_prefetch = 0 : i64, scratch_operands = 0 : i64, tpu.core_type = #tpu.core_type<tc>, window_params = [{transform_indices = @transform_0, window_bounds = array<i64: 1, 16, 512>}, {pipeline_mode = #tpu.pipeline_mode<synchronous>, transform_indices = @transform_1, window_bounds = array<i64: 512, 128>}, {transform_indices = @transform_2, window_bounds = array<i64: 1, 16, 128>}]} {
    %c0 = arith.constant 0 : index
    %c0_0 = arith.constant 0 : index
    %c0_1 = arith.constant 0 : index
    %0 = vector.load %arg1[%c0, %c0_0, %c0_1] : memref<1x16x512xbf16, #tpu.memory_space<vmem>>, vector<1x16x512xbf16>
    %1 = vector.shape_cast %0 : vector<1x16x512xbf16> to vector<16x512xbf16>
    %c0_2 = arith.constant 0 : index
    %c0_3 = arith.constant 0 : index
    %2 = vector.load %arg2[%c0_2, %c0_3] : memref<512x128xbf16, #tpu.memory_space<vmem>>, vector<512x128xbf16>
    %cst = arith.constant dense<0.000000e+00> : vector<16x128xf32>
    %3 = tpu.matmul %1, %2, %cst {dimension_numbers = #tpu.dot_dimension_numbers<[1], [0], [0], [1], [0, 0, 1, 1], [], []>} : vector<16x512xbf16>, vector<512x128xbf16>, vector<16x128xf32> -> vector<16x128xf32>
    %cst_4 = arith.constant dense<0.000000e+00> : vector<128xf32>
    %4 = vector.multi_reduction <add>, %3, %cst_4 [0] : vector<16x128xf32> to vector<128xf32>
    %5 = vector.shape_cast %4 : vector<128xf32> to vector<1x128xf32>
    %cst_5 = arith.constant 1.600000e+01 : f32
    %6 = vector.broadcast %cst_5 : f32 to vector<1x128xf32>
    %7 = arith.divf %5, %6 : vector<1x128xf32>
    %8 = vector.broadcast %7 : vector<1x128xf32> to vector<16x128xf32>
    %9 = arith.subf %3, %8 : vector<16x128xf32>
    %10 = arith.mulf %9, %9 : vector<16x128xf32>
    %cst_6 = arith.constant dense<0.000000e+00> : vector<128xf32>
    %11 = vector.multi_reduction <add>, %10, %cst_6 [0] : vector<16x128xf32> to vector<128xf32>
    %12 = vector.shape_cast %11 : vector<128xf32> to vector<1x128xf32>
    %cst_7 = arith.constant 1.600000e+01 : f32
    %13 = vector.broadcast %cst_7 : f32 to vector<1x128xf32>
    %14 = arith.divf %12, %13 : vector<1x128xf32>
    %cst_8 = arith.constant 9.99999974E-6 : f32
    %15 = vector.broadcast %cst_8 : f32 to vector<1x128xf32>
    %16 = arith.addf %14, %15 : vector<1x128xf32>
    %17 = math.rsqrt %16 : vector<1x128xf32>
    %18 = vector.broadcast %17 : vector<1x128xf32> to vector<16x128xf32>
    %19 = arith.mulf %9, %18 : vector<16x128xf32>
    %cst_9 = arith.constant 0.000000e+00 : f32
    %20 = vector.broadcast %cst_9 : f32 to vector<16x128xf32>
    %21 = arith.cmpf oge, %19, %20 : vector<16x128xf32>
    %cst_10 = arith.constant 0.00999999977 : f32
    %22 = vector.broadcast %cst_10 : f32 to vector<16x128xf32>
    %23 = arith.mulf %19, %22 : vector<16x128xf32>
    %24 = arith.select %21, %19, %23 : vector<16x128xi1>, vector<16x128xf32>
    %c0_11 = arith.constant 0 : index
    %c0_12 = arith.constant 0 : index
    %c0_13 = arith.constant 0 : index
    %25 = vector.load %arg3[%c0_11, %c0_12, %c0_13] : memref<1x16x128xf32, #tpu.memory_space<vmem>>, vector<1x16x128xf32>
    %26 = vector.shape_cast %25 : vector<1x16x128xf32> to vector<16x128xf32>
    %27 = vector.shape_cast %24 : vector<16x128xf32> to vector<1x16x128xf32>
    tpu.vector_store %arg3[%c0_11, %c0_12, %c0_13], %27 {strides = array<i32>} : memref<1x16x128xf32, #tpu.memory_space<vmem>>, vector<1x16x128xf32>,
    return
  }
  func.func @transform_0(%arg0: i32) -> (i32, i32, i32) {
    %c0_i32 = arith.constant 0 : i32
    %c0_i32_0 = arith.constant 0 : i32
    %c0_i32_1 = arith.constant 0 : i32
    return %arg0, %c0_i32, %c0_i32_0 : i32, i32, i32
  }
  func.func @transform_1(%arg0: i32) -> (i32, i32) {
    %c0_i32 = arith.constant 0 : i32
    %c0_i32_0 = arith.constant 0 : i32
    %c0_i32_1 = arith.constant 0 : i32
    return %c0_i32, %c0_i32_0 : i32, i32
  }
  func.func @transform_2(%arg0: i32) -> (i32, i32, i32) {
    %c0_i32 = arith.constant 0 : i32
    %c0_i32_0 = arith.constant 0 : i32
    %c0_i32_1 = arith.constant 0 : i32
    return %arg0, %c0_i32, %c0_i32_0 : i32, i32, i32
  }
}

module attributes {stable_mosaic.version = 11 : i64} {
  func.func @_conv_in_act_kernel(%arg0: i32, %arg1: memref<1x4x1024xbf16, #tpu.memory_space<vmem>>, %arg2: memref<1024x128xbf16, #tpu.memory_space<vmem>>, %arg3: memref<1x4x128xf32, #tpu.memory_space<vmem>>) attributes {dimension_semantics = [#tpu.dimension_semantics<parallel>], iteration_bounds = array<i64: 2>, scalar_prefetch = 0 : i64, scratch_operands = 0 : i64, tpu.core_type = #tpu.core_type<tc>, window_params = [{transform_indices = @transform_0, window_bounds = array<i64: 1, 4, 1024>}, {pipeline_mode = #tpu.pipeline_mode<synchronous>, transform_indices = @transform_1, window_bounds = array<i64: 1024, 128>}, {transform_indices = @transform_2, window_bounds = array<i64: 1, 4, 128>}]} {
    %c0 = arith.constant 0 : index
    %c0_0 = arith.constant 0 : index
    %c0_1 = arith.constant 0 : index
    %0 = vector.load %arg1[%c0, %c0_0, %c0_1] : memref<1x4x1024xbf16, #tpu.memory_space<vmem>>, vector<1x4x1024xbf16>
    %1 = vector.shape_cast %0 : vector<1x4x1024xbf16> to vector<4x1024xbf16>
    %c0_2 = arith.constant 0 : index
    %c0_3 = arith.constant 0 : index
    %2 = vector.load %arg2[%c0_2, %c0_3] : memref<1024x128xbf16, #tpu.memory_space<vmem>>, vector<1024x128xbf16>
    %cst = arith.constant dense<0.000000e+00> : vector<4x128xf32>
    %3 = tpu.matmul %1, %2, %cst {dimension_numbers = #tpu.dot_dimension_numbers<[1], [0], [0], [1], [0, 0, 1, 1], [], []>} : vector<4x1024xbf16>, vector<1024x128xbf16>, vector<4x128xf32> -> vector<4x128xf32>
    %cst_4 = arith.constant dense<0.000000e+00> : vector<128xf32>
    %4 = vector.multi_reduction <add>, %3, %cst_4 [0] : vector<4x128xf32> to vector<128xf32>
    %5 = vector.shape_cast %4 : vector<128xf32> to vector<1x128xf32>
    %cst_5 = arith.constant 4.000000e+00 : f32
    %6 = vector.broadcast %cst_5 : f32 to vector<1x128xf32>
    %7 = arith.divf %5, %6 : vector<1x128xf32>
    %8 = vector.broadcast %7 : vector<1x128xf32> to vector<4x128xf32>
    %9 = arith.subf %3, %8 : vector<4x128xf32>
    %10 = arith.mulf %9, %9 : vector<4x128xf32>
    %cst_6 = arith.constant dense<0.000000e+00> : vector<128xf32>
    %11 = vector.multi_reduction <add>, %10, %cst_6 [0] : vector<4x128xf32> to vector<128xf32>
    %12 = vector.shape_cast %11 : vector<128xf32> to vector<1x128xf32>
    %cst_7 = arith.constant 4.000000e+00 : f32
    %13 = vector.broadcast %cst_7 : f32 to vector<1x128xf32>
    %14 = arith.divf %12, %13 : vector<1x128xf32>
    %cst_8 = arith.constant 9.99999974E-6 : f32
    %15 = vector.broadcast %cst_8 : f32 to vector<1x128xf32>
    %16 = arith.addf %14, %15 : vector<1x128xf32>
    %17 = math.rsqrt %16 : vector<1x128xf32>
    %18 = vector.broadcast %17 : vector<1x128xf32> to vector<4x128xf32>
    %19 = arith.mulf %9, %18 : vector<4x128xf32>
    %cst_9 = arith.constant 0.000000e+00 : f32
    %20 = vector.broadcast %cst_9 : f32 to vector<4x128xf32>
    %21 = arith.cmpf oge, %19, %20 : vector<4x128xf32>
    %cst_10 = arith.constant 0.00999999977 : f32
    %22 = vector.broadcast %cst_10 : f32 to vector<4x128xf32>
    %23 = arith.mulf %19, %22 : vector<4x128xf32>
    %24 = arith.select %21, %19, %23 : vector<4x128xi1>, vector<4x128xf32>
    %c0_11 = arith.constant 0 : index
    %c0_12 = arith.constant 0 : index
    %c0_13 = arith.constant 0 : index
    %25 = vector.load %arg3[%c0_11, %c0_12, %c0_13] : memref<1x4x128xf32, #tpu.memory_space<vmem>>, vector<1x4x128xf32>
    %26 = vector.shape_cast %25 : vector<1x4x128xf32> to vector<4x128xf32>
    %27 = vector.shape_cast %24 : vector<4x128xf32> to vector<1x4x128xf32>
    tpu.vector_store %arg3[%c0_11, %c0_12, %c0_13], %27 {strides = array<i32>} : memref<1x4x128xf32, #tpu.memory_space<vmem>>, vector<1x4x128xf32>,
    return
  }
  func.func @transform_0(%arg0: i32) -> (i32, i32, i32) {
    %c0_i32 = arith.constant 0 : i32
    %c0_i32_0 = arith.constant 0 : i32
    %c0_i32_1 = arith.constant 0 : i32
    return %arg0, %c0_i32, %c0_i32_0 : i32, i32, i32
  }
  func.func @transform_1(%arg0: i32) -> (i32, i32) {
    %c0_i32 = arith.constant 0 : i32
    %c0_i32_0 = arith.constant 0 : i32
    %c0_i32_1 = arith.constant 0 : i32
    return %c0_i32, %c0_i32_0 : i32, i32
  }
  func.func @transform_2(%arg0: i32) -> (i32, i32, i32) {
    %c0_i32 = arith.constant 0 : i32
    %c0_i32_0 = arith.constant 0 : i32
    %c0_i32_1 = arith.constant 0 : i32
    return %arg0, %c0_i32, %c0_i32_0 : i32, i32, i32
  }
}

module attributes {stable_mosaic.version = 11 : i64} {
  func.func @_conv_in_act_kernel(%arg0: i32, %arg1: memref<1x4x576xbf16, #tpu.memory_space<vmem>>, %arg2: memref<576x128xbf16, #tpu.memory_space<vmem>>, %arg3: memref<1x4x128xf32, #tpu.memory_space<vmem>>) attributes {dimension_semantics = [#tpu.dimension_semantics<parallel>], iteration_bounds = array<i64: 2>, scalar_prefetch = 0 : i64, scratch_operands = 0 : i64, tpu.core_type = #tpu.core_type<tc>, window_params = [{transform_indices = @transform_0, window_bounds = array<i64: 1, 4, 576>}, {pipeline_mode = #tpu.pipeline_mode<synchronous>, transform_indices = @transform_1, window_bounds = array<i64: 576, 128>}, {transform_indices = @transform_2, window_bounds = array<i64: 1, 4, 128>}]} {
    %c0 = arith.constant 0 : index
    %c0_0 = arith.constant 0 : index
    %c0_1 = arith.constant 0 : index
    %0 = vector.load %arg1[%c0, %c0_0, %c0_1] : memref<1x4x576xbf16, #tpu.memory_space<vmem>>, vector<1x4x576xbf16>
    %1 = vector.shape_cast %0 : vector<1x4x576xbf16> to vector<4x576xbf16>
    %c0_2 = arith.constant 0 : index
    %c0_3 = arith.constant 0 : index
    %2 = vector.load %arg2[%c0_2, %c0_3] : memref<576x128xbf16, #tpu.memory_space<vmem>>, vector<576x128xbf16>
    %cst = arith.constant dense<0.000000e+00> : vector<4x128xf32>
    %3 = tpu.matmul %1, %2, %cst {dimension_numbers = #tpu.dot_dimension_numbers<[1], [0], [0], [1], [0, 0, 1, 1], [], []>} : vector<4x576xbf16>, vector<576x128xbf16>, vector<4x128xf32> -> vector<4x128xf32>
    %cst_4 = arith.constant dense<0.000000e+00> : vector<128xf32>
    %4 = vector.multi_reduction <add>, %3, %cst_4 [0] : vector<4x128xf32> to vector<128xf32>
    %5 = vector.shape_cast %4 : vector<128xf32> to vector<1x128xf32>
    %cst_5 = arith.constant 4.000000e+00 : f32
    %6 = vector.broadcast %cst_5 : f32 to vector<1x128xf32>
    %7 = arith.divf %5, %6 : vector<1x128xf32>
    %8 = vector.broadcast %7 : vector<1x128xf32> to vector<4x128xf32>
    %9 = arith.subf %3, %8 : vector<4x128xf32>
    %10 = arith.mulf %9, %9 : vector<4x128xf32>
    %cst_6 = arith.constant dense<0.000000e+00> : vector<128xf32>
    %11 = vector.multi_reduction <add>, %10, %cst_6 [0] : vector<4x128xf32> to vector<128xf32>
    %12 = vector.shape_cast %11 : vector<128xf32> to vector<1x128xf32>
    %cst_7 = arith.constant 4.000000e+00 : f32
    %13 = vector.broadcast %cst_7 : f32 to vector<1x128xf32>
    %14 = arith.divf %12, %13 : vector<1x128xf32>
    %cst_8 = arith.constant 9.99999974E-6 : f32
    %15 = vector.broadcast %cst_8 : f32 to vector<1x128xf32>
    %16 = arith.addf %14, %15 : vector<1x128xf32>
    %17 = math.rsqrt %16 : vector<1x128xf32>
    %18 = vector.broadcast %17 : vector<1x128xf32> to vector<4x128xf32>
    %19 = arith.mulf %9, %18 : vector<4x128xf32>
    %cst_9 = arith.constant 0.000000e+00 : f32
    %20 = vector.broadcast %cst_9 : f32 to vector<4x128xf32>
    %21 = arith.maximumf %19, %20 : vector<4x128xf32>
    %c0_10 = arith.constant 0 : index
    %c0_11 = arith.constant 0 : index
    %c0_12 = arith.constant 0 : index
    %22 = vector.load %arg3[%c0_10, %c0_11, %c0_12] : memref<1x4x128xf32, #tpu.memory_space<vmem>>, vector<1x4x128xf32>
    %23 = vector.shape_cast %22 : vector<1x4x128xf32> to vector<4x128xf32>
    %24 = vector.shape_cast %21 : vector<4x128xf32> to vector<1x4x128xf32>
    tpu.vector_store %arg3[%c0_10, %c0_11, %c0_12], %24 {strides = array<i32>} : memref<1x4x128xf32, #tpu.memory_space<vmem>>, vector<1x4x128xf32>,
    return
  }
  func.func @transform_0(%arg0: i32) -> (i32, i32, i32) {
    %c0_i32 = arith.constant 0 : i32
    %c0_i32_0 = arith.constant 0 : i32
    %c0_i32_1 = arith.constant 0 : i32
    return %arg0, %c0_i32, %c0_i32_0 : i32, i32, i32
  }
  func.func @transform_1(%arg0: i32) -> (i32, i32) {
    %c0_i32 = arith.constant 0 : i32
    %c0_i32_0 = arith.constant 0 : i32
    %c0_i32_1 = arith.constant 0 : i32
    return %c0_i32, %c0_i32_0 : i32, i32
  }
  func.func @transform_2(%arg0: i32) -> (i32, i32, i32) {
    %c0_i32 = arith.constant 0 : i32
    %c0_i32_0 = arith.constant 0 : i32
    %c0_i32_1 = arith.constant 0 : i32
    return %arg0, %c0_i32, %c0_i32_0 : i32, i32, i32
  }
}

module attributes {stable_mosaic.version = 11 : i64} {
  func.func @_conv_in_res_kernel(%arg0: i32, %arg1: memref<1x4x576xbf16, #tpu.memory_space<vmem>>, %arg2: memref<576x128xbf16, #tpu.memory_space<vmem>>, %arg3: memref<1x4x128xf32, #tpu.memory_space<vmem>>, %arg4: memref<1x4x128xf32, #tpu.memory_space<vmem>>) attributes {dimension_semantics = [#tpu.dimension_semantics<parallel>], iteration_bounds = array<i64: 2>, scalar_prefetch = 0 : i64, scratch_operands = 0 : i64, tpu.core_type = #tpu.core_type<tc>, window_params = [{transform_indices = @transform_0, window_bounds = array<i64: 1, 4, 576>}, {pipeline_mode = #tpu.pipeline_mode<synchronous>, transform_indices = @transform_1, window_bounds = array<i64: 576, 128>}, {transform_indices = @transform_2, window_bounds = array<i64: 1, 4, 128>}, {transform_indices = @transform_3, window_bounds = array<i64: 1, 4, 128>}]} {
    %c0 = arith.constant 0 : index
    %c0_0 = arith.constant 0 : index
    %c0_1 = arith.constant 0 : index
    %0 = vector.load %arg1[%c0, %c0_0, %c0_1] : memref<1x4x576xbf16, #tpu.memory_space<vmem>>, vector<1x4x576xbf16>
    %1 = vector.shape_cast %0 : vector<1x4x576xbf16> to vector<4x576xbf16>
    %c0_2 = arith.constant 0 : index
    %c0_3 = arith.constant 0 : index
    %2 = vector.load %arg2[%c0_2, %c0_3] : memref<576x128xbf16, #tpu.memory_space<vmem>>, vector<576x128xbf16>
    %cst = arith.constant dense<0.000000e+00> : vector<4x128xf32>
    %3 = tpu.matmul %1, %2, %cst {dimension_numbers = #tpu.dot_dimension_numbers<[1], [0], [0], [1], [0, 0, 1, 1], [], []>} : vector<4x576xbf16>, vector<576x128xbf16>, vector<4x128xf32> -> vector<4x128xf32>
    %cst_4 = arith.constant dense<0.000000e+00> : vector<128xf32>
    %4 = vector.multi_reduction <add>, %3, %cst_4 [0] : vector<4x128xf32> to vector<128xf32>
    %5 = vector.shape_cast %4 : vector<128xf32> to vector<1x128xf32>
    %cst_5 = arith.constant 4.000000e+00 : f32
    %6 = vector.broadcast %cst_5 : f32 to vector<1x128xf32>
    %7 = arith.divf %5, %6 : vector<1x128xf32>
    %8 = vector.broadcast %7 : vector<1x128xf32> to vector<4x128xf32>
    %9 = arith.subf %3, %8 : vector<4x128xf32>
    %10 = arith.mulf %9, %9 : vector<4x128xf32>
    %cst_6 = arith.constant dense<0.000000e+00> : vector<128xf32>
    %11 = vector.multi_reduction <add>, %10, %cst_6 [0] : vector<4x128xf32> to vector<128xf32>
    %12 = vector.shape_cast %11 : vector<128xf32> to vector<1x128xf32>
    %cst_7 = arith.constant 4.000000e+00 : f32
    %13 = vector.broadcast %cst_7 : f32 to vector<1x128xf32>
    %14 = arith.divf %12, %13 : vector<1x128xf32>
    %cst_8 = arith.constant 9.99999974E-6 : f32
    %15 = vector.broadcast %cst_8 : f32 to vector<1x128xf32>
    %16 = arith.addf %14, %15 : vector<1x128xf32>
    %17 = math.rsqrt %16 : vector<1x128xf32>
    %18 = vector.broadcast %17 : vector<1x128xf32> to vector<4x128xf32>
    %19 = arith.mulf %9, %18 : vector<4x128xf32>
    %c0_9 = arith.constant 0 : index
    %c0_10 = arith.constant 0 : index
    %c0_11 = arith.constant 0 : index
    %20 = vector.load %arg3[%c0_9, %c0_10, %c0_11] : memref<1x4x128xf32, #tpu.memory_space<vmem>>, vector<1x4x128xf32>
    %21 = vector.shape_cast %20 : vector<1x4x128xf32> to vector<4x128xf32>
    %22 = arith.addf %19, %21 : vector<4x128xf32>
    %c0_12 = arith.constant 0 : index
    %c0_13 = arith.constant 0 : index
    %c0_14 = arith.constant 0 : index
    %23 = vector.load %arg4[%c0_12, %c0_13, %c0_14] : memref<1x4x128xf32, #tpu.memory_space<vmem>>, vector<1x4x128xf32>
    %24 = vector.shape_cast %23 : vector<1x4x128xf32> to vector<4x128xf32>
    %25 = vector.shape_cast %22 : vector<4x128xf32> to vector<1x4x128xf32>
    tpu.vector_store %arg4[%c0_12, %c0_13, %c0_14], %25 {strides = array<i32>} : memref<1x4x128xf32, #tpu.memory_space<vmem>>, vector<1x4x128xf32>,
    return
  }
  func.func @transform_0(%arg0: i32) -> (i32, i32, i32) {
    %c0_i32 = arith.constant 0 : i32
    %c0_i32_0 = arith.constant 0 : i32
    %c0_i32_1 = arith.constant 0 : i32
    return %arg0, %c0_i32, %c0_i32_0 : i32, i32, i32
  }
  func.func @transform_1(%arg0: i32) -> (i32, i32) {
    %c0_i32 = arith.constant 0 : i32
    %c0_i32_0 = arith.constant 0 : i32
    %c0_i32_1 = arith.constant 0 : i32
    return %c0_i32, %c0_i32_0 : i32, i32
  }
  func.func @transform_2(%arg0: i32) -> (i32, i32, i32) {
    %c0_i32 = arith.constant 0 : i32
    %c0_i32_0 = arith.constant 0 : i32
    %c0_i32_1 = arith.constant 0 : i32
    return %arg0, %c0_i32, %c0_i32_0 : i32, i32, i32
  }
  func.func @transform_3(%arg0: i32) -> (i32, i32, i32) {
    %c0_i32 = arith.constant 0 : i32
    %c0_i32_0 = arith.constant 0 : i32
    %c0_i32_1 = arith.constant 0 : i32
    return %arg0, %c0_i32, %c0_i32_0 : i32, i32, i32
  }
}

module attributes {stable_mosaic.version = 11 : i64} {
  func.func @_conv_in_res_pool_kernel(%arg0: i32, %arg1: memref<1x4x576xbf16, #tpu.memory_space<vmem>>, %arg2: memref<576x128xbf16, #tpu.memory_space<vmem>>, %arg3: memref<1x4x128xf32, #tpu.memory_space<vmem>>, %arg4: memref<1x1x128xf32, #tpu.memory_space<vmem>>) attributes {dimension_semantics = [#tpu.dimension_semantics<parallel>], iteration_bounds = array<i64: 2>, scalar_prefetch = 0 : i64, scratch_operands = 0 : i64, tpu.core_type = #tpu.core_type<tc>, window_params = [{transform_indices = @transform_0, window_bounds = array<i64: 1, 4, 576>}, {pipeline_mode = #tpu.pipeline_mode<synchronous>, transform_indices = @transform_1, window_bounds = array<i64: 576, 128>}, {transform_indices = @transform_2, window_bounds = array<i64: 1, 4, 128>}, {transform_indices = @transform_3, window_bounds = array<i64: 1, 1, 128>}]} {
    %c0 = arith.constant 0 : index
    %c0_0 = arith.constant 0 : index
    %c0_1 = arith.constant 0 : index
    %0 = vector.load %arg1[%c0, %c0_0, %c0_1] : memref<1x4x576xbf16, #tpu.memory_space<vmem>>, vector<1x4x576xbf16>
    %1 = vector.shape_cast %0 : vector<1x4x576xbf16> to vector<4x576xbf16>
    %c0_2 = arith.constant 0 : index
    %c0_3 = arith.constant 0 : index
    %2 = vector.load %arg2[%c0_2, %c0_3] : memref<576x128xbf16, #tpu.memory_space<vmem>>, vector<576x128xbf16>
    %cst = arith.constant dense<0.000000e+00> : vector<4x128xf32>
    %3 = tpu.matmul %1, %2, %cst {dimension_numbers = #tpu.dot_dimension_numbers<[1], [0], [0], [1], [0, 0, 1, 1], [], []>} : vector<4x576xbf16>, vector<576x128xbf16>, vector<4x128xf32> -> vector<4x128xf32>
    %cst_4 = arith.constant dense<0.000000e+00> : vector<128xf32>
    %4 = vector.multi_reduction <add>, %3, %cst_4 [0] : vector<4x128xf32> to vector<128xf32>
    %5 = vector.shape_cast %4 : vector<128xf32> to vector<1x128xf32>
    %cst_5 = arith.constant 4.000000e+00 : f32
    %6 = vector.broadcast %cst_5 : f32 to vector<1x128xf32>
    %7 = arith.divf %5, %6 : vector<1x128xf32>
    %8 = vector.broadcast %7 : vector<1x128xf32> to vector<4x128xf32>
    %9 = arith.subf %3, %8 : vector<4x128xf32>
    %10 = arith.mulf %9, %9 : vector<4x128xf32>
    %cst_6 = arith.constant dense<0.000000e+00> : vector<128xf32>
    %11 = vector.multi_reduction <add>, %10, %cst_6 [0] : vector<4x128xf32> to vector<128xf32>
    %12 = vector.shape_cast %11 : vector<128xf32> to vector<1x128xf32>
    %cst_7 = arith.constant 4.000000e+00 : f32
    %13 = vector.broadcast %cst_7 : f32 to vector<1x128xf32>
    %14 = arith.divf %12, %13 : vector<1x128xf32>
    %cst_8 = arith.constant 9.99999974E-6 : f32
    %15 = vector.broadcast %cst_8 : f32 to vector<1x128xf32>
    %16 = arith.addf %14, %15 : vector<1x128xf32>
    %17 = math.rsqrt %16 : vector<1x128xf32>
    %18 = vector.broadcast %17 : vector<1x128xf32> to vector<4x128xf32>
    %19 = arith.mulf %9, %18 : vector<4x128xf32>
    %c0_9 = arith.constant 0 : index
    %c0_10 = arith.constant 0 : index
    %c0_11 = arith.constant 0 : index
    %20 = vector.load %arg3[%c0_9, %c0_10, %c0_11] : memref<1x4x128xf32, #tpu.memory_space<vmem>>, vector<1x4x128xf32>
    %21 = vector.shape_cast %20 : vector<1x4x128xf32> to vector<4x128xf32>
    %22 = arith.addf %19, %21 : vector<4x128xf32>
    %cst_12 = arith.constant dense<0.000000e+00> : vector<128xf32>
    %23 = vector.multi_reduction <add>, %22, %cst_12 [0] : vector<4x128xf32> to vector<128xf32>
    %24 = vector.shape_cast %23 : vector<128xf32> to vector<1x128xf32>
    %cst_13 = arith.constant 4.000000e+00 : f32
    %25 = vector.broadcast %cst_13 : f32 to vector<1x128xf32>
    %26 = arith.divf %24, %25 : vector<1x128xf32>
    %c0_14 = arith.constant 0 : index
    %c0_15 = arith.constant 0 : index
    %c0_16 = arith.constant 0 : index
    %27 = vector.load %arg4[%c0_14, %c0_15, %c0_16] : memref<1x1x128xf32, #tpu.memory_space<vmem>>, vector<1x1x128xf32>
    %28 = vector.shape_cast %27 : vector<1x1x128xf32> to vector<1x128xf32>
    %29 = vector.shape_cast %26 : vector<1x128xf32> to vector<1x1x128xf32>
    tpu.vector_store %arg4[%c0_14, %c0_15, %c0_16], %29 {strides = array<i32>} : memref<1x1x128xf32, #tpu.memory_space<vmem>>, vector<1x1x128xf32>,
    return
  }
  func.func @transform_0(%arg0: i32) -> (i32, i32, i32) {
    %c0_i32 = arith.constant 0 : i32
    %c0_i32_0 = arith.constant 0 : i32
    %c0_i32_1 = arith.constant 0 : i32
    return %arg0, %c0_i32, %c0_i32_0 : i32, i32, i32
  }
  func.func @transform_1(%arg0: i32) -> (i32, i32) {
    %c0_i32 = arith.constant 0 : i32
    %c0_i32_0 = arith.constant 0 : i32
    %c0_i32_1 = arith.constant 0 : i32
    return %c0_i32, %c0_i32_0 : i32, i32
  }
  func.func @transform_2(%arg0: i32) -> (i32, i32, i32) {
    %c0_i32 = arith.constant 0 : i32
    %c0_i32_0 = arith.constant 0 : i32
    %c0_i32_1 = arith.constant 0 : i32
    return %arg0, %c0_i32, %c0_i32_0 : i32, i32, i32
  }
  func.func @transform_3(%arg0: i32) -> (i32, i32, i32) {
    %c0_i32 = arith.constant 0 : i32
    %c0_i32_0 = arith.constant 0 : i32
    %c0_i32_1 = arith.constant 0 : i32
    return %arg0, %c0_i32, %c0_i32_0 : i32, i32, i32
  }
}

module attributes {stable_mosaic.version = 11 : i64} {
  func.func @_mlp_kernel(%arg0: memref<2x128xf32, #tpu.memory_space<vmem>>, %arg1: memref<128x128xf32, #tpu.memory_space<vmem>>, %arg2: memref<1x128xf32, #tpu.memory_space<vmem>>, %arg3: memref<128x128xf32, #tpu.memory_space<vmem>>, %arg4: memref<1x128xf32, #tpu.memory_space<vmem>>, %arg5: memref<128x128xf32, #tpu.memory_space<vmem>>, %arg6: memref<1x128xf32, #tpu.memory_space<vmem>>, %arg7: memref<2x128xf32, #tpu.memory_space<vmem>>) attributes {dimension_semantics = [], scalar_prefetch = 0 : i64, scratch_operands = 0 : i64, tpu.core_type = #tpu.core_type<tc>} {
    %c0 = arith.constant 0 : index
    %c0_0 = arith.constant 0 : index
    %0 = vector.load %arg0[%c0, %c0_0] : memref<2x128xf32, #tpu.memory_space<vmem>>, vector<2x128xf32>
    %c0_1 = arith.constant 0 : index
    %c0_2 = arith.constant 0 : index
    %1 = vector.load %arg1[%c0_1, %c0_2] : memref<128x128xf32, #tpu.memory_space<vmem>>, vector<128x128xf32>
    %cst = arith.constant dense<0.000000e+00> : vector<2x128xf32>
    %2 = tpu.matmul %0, %1, %cst {dimension_numbers = #tpu.dot_dimension_numbers<[1], [0], [0], [1], [0, 0, 1, 1], [], []>} : vector<2x128xf32>, vector<128x128xf32>, vector<2x128xf32> -> vector<2x128xf32>
    %c0_3 = arith.constant 0 : index
    %c0_4 = arith.constant 0 : index
    %3 = vector.load %arg2[%c0_3, %c0_4] : memref<1x128xf32, #tpu.memory_space<vmem>>, vector<1x128xf32>
    %4 = vector.broadcast %3 : vector<1x128xf32> to vector<2x128xf32>
    %5 = arith.addf %2, %4 : vector<2x128xf32>
    %cst_5 = arith.constant 0.000000e+00 : f32
    %6 = vector.broadcast %cst_5 : f32 to vector<2x128xf32>
    %7 = arith.maximumf %5, %6 : vector<2x128xf32>
    %c0_6 = arith.constant 0 : index
    %c0_7 = arith.constant 0 : index
    %8 = vector.load %arg3[%c0_6, %c0_7] : memref<128x128xf32, #tpu.memory_space<vmem>>, vector<128x128xf32>
    %cst_8 = arith.constant dense<0.000000e+00> : vector<2x128xf32>
    %9 = tpu.matmul %7, %8, %cst_8 {dimension_numbers = #tpu.dot_dimension_numbers<[1], [0], [0], [1], [0, 0, 1, 1], [], []>} : vector<2x128xf32>, vector<128x128xf32>, vector<2x128xf32> -> vector<2x128xf32>
    %c0_9 = arith.constant 0 : index
    %c0_10 = arith.constant 0 : index
    %10 = vector.load %arg4[%c0_9, %c0_10] : memref<1x128xf32, #tpu.memory_space<vmem>>, vector<1x128xf32>
    %11 = vector.broadcast %10 : vector<1x128xf32> to vector<2x128xf32>
    %12 = arith.addf %9, %11 : vector<2x128xf32>
    %cst_11 = arith.constant 0.000000e+00 : f32
    %13 = vector.broadcast %cst_11 : f32 to vector<2x128xf32>
    %14 = arith.maximumf %12, %13 : vector<2x128xf32>
    %c0_12 = arith.constant 0 : index
    %c0_13 = arith.constant 0 : index
    %15 = vector.load %arg5[%c0_12, %c0_13] : memref<128x128xf32, #tpu.memory_space<vmem>>, vector<128x128xf32>
    %cst_14 = arith.constant dense<0.000000e+00> : vector<2x128xf32>
    %16 = tpu.matmul %14, %15, %cst_14 {dimension_numbers = #tpu.dot_dimension_numbers<[1], [0], [0], [1], [0, 0, 1, 1], [], []>} : vector<2x128xf32>, vector<128x128xf32>, vector<2x128xf32> -> vector<2x128xf32>
    %c0_15 = arith.constant 0 : index
    %c0_16 = arith.constant 0 : index
    %17 = vector.load %arg6[%c0_15, %c0_16] : memref<1x128xf32, #tpu.memory_space<vmem>>, vector<1x128xf32>
    %18 = vector.broadcast %17 : vector<1x128xf32> to vector<2x128xf32>
    %19 = arith.addf %16, %18 : vector<2x128xf32>
    %c0_17 = arith.constant 0 : index
    %c0_18 = arith.constant 0 : index
    %20 = vector.load %arg7[%c0_17, %c0_18] : memref<2x128xf32, #tpu.memory_space<vmem>>, vector<2x128xf32>
    tpu.vector_store %arg7[%c0_17, %c0_18], %19 {strides = array<i32>} : memref<2x128xf32, #tpu.memory_space<vmem>>, vector<2x128xf32>,
    return
  }
}

</mosaic_0001>

<llo_original>
// kernel: style_encoder_mlp.10
$region0: #{style_encoder_mlp.10}
  #allocation0 [shape = 'u32[]', space=smem, size = 0x4, offset = 0x4, fixed_abs, tag = 'smem constant byte address 0x4 - core index']
  #allocation1 [shape = 'u32[144,128]{1,0:T(1,128)}', space=vmem, size = 0x12000, scoped, tag = 'internal scratch']
  %s0 = inlined_call_operand.vmem [shape: bf16[2,1024,152], index: 0, kind: input, shape index: {}]
  %s1 = inlined_call_operand.vmem [shape: bf16[152,128], index: 1, kind: input, shape index: {}]
  %s2 = inlined_call_operand.vmem [shape: f32[2,1024,128], index: 2, kind: output, shape index: {}]
  %s3 = sld [smem:[#allocation0]]
  $region41: #{style_encoder_mlp.10} parent=0
    _
  %s5 = ssub.s32 1, %s3
  %s6 = scalar_select 0, %s5, %s3
  loop: start=0, step=1, limit=4
  $region2: #{style_encoder_mlp.10} parent=0 // loop_pre_header
    _
  $region3: #{style_encoder_mlp.10} parent=0 // loop_header
    %s8 = sphi 0, %s12
    %p9 = scmp.ge.s32.totalorder %s8, 4
    %s18 = sphi 0, %s20
    %s21 = sphi 0, %s18
    %s22 = sphi 0, %s21
    %s38 = sphi 0, %s22
    %s42 = sphi 0, %s42
    %s44 = sphi 0, %s42
    %s45 = sphi 0, %s44
    %s59 = sphi 0, %s45
    %s65 = sphi 0, %s67
    %s68 = sphi 0, %s65
    %s69 = sphi 0, %s68
    %s85 = sphi 0, %s69
  $region4: #{style_encoder_mlp.10} parent=0 // loop_header_branch
    %11 = sbr.rel (%p9) target = $region8
  $region5: #{style_encoder_mlp.10} parent=0 // loop_body
    %s13 = ssub.s32 %s8, 1
    %s14 = ssub.s32 %s8, 2
    %s15 = sadd.s32 %s8, 1
    %s16 = ssub.s32 %s8, %s15
    %p17 = scmp.eq.s32.totalorder %s16, 0
    %s19 = sadd.s32 %s18, 1
    %s20 = scalar_select %p17, %s18, %s19
    %p23 = pneg %p17
    %p24 = scmp.eq.s32.totalorder %s8, 1
    %p25 = por %p23, %p24
    %p26 = scmp.ne.s32.totalorder %s18, %s21
    %p27 = scmp.eq.s32.totalorder %s8, 0
    %p28 = por %p26, %p27
    %p29 = scmp.ne.s32.totalorder %s18, %s21
    %p30 = scmp.eq.s32.totalorder %s13, 1
    %p31 = por %p29, %p30
    %p32 = scmp.ne.s32.totalorder %s21, %s22
    %p33 = scmp.eq.s32.totalorder %s13, 0
    %p34 = por %p32, %p33
    %p35 = scmp.ne.s32.totalorder %s21, %s22
    %p36 = scmp.eq.s32.totalorder %s14, 1
    %p37 = por %p35, %p36
    %p39 = scmp.ne.s32.totalorder %s22, %s38
    %p40 = scmp.eq.s32.totalorder %s14, 0
    %p41 = por %p39, %p40
    %s43 = sadd.s32 %s42, 1
    %p46 = scmp.eq.s32.totalorder %s8, 1
    %p47 = scmp.ne.s32.totalorder %s42, %s44
    %p48 = scmp.eq.s32.totalorder %s8, 0
    %p49 = por %p47, %p48
    %p50 = scmp.ne.s32.totalorder %s42, %s44
    %p51 = scmp.eq.s32.totalorder %s13, 1
    %p52 = por %p50, %p51
    %p53 = scmp.ne.s32.totalorder %s44, %s45
    %p54 = scmp.eq.s32.totalorder %s13, 0
    %p55 = por %p53, %p54
    %p56 = scmp.ne.s32.totalorder %s44, %s45
    %p57 = scmp.eq.s32.totalorder %s14, 1
    %p58 = por %p56, %p57
    %p60 = scmp.ne.s32.totalorder %s45, %s59
    %p61 = scmp.eq.s32.totalorder %s14, 0
    %p62 = por %p60, %p61
    %s63 = ssub.s32 %s8, %s15
    %p64 = scmp.eq.s32.totalorder %s63, 0
    %s66 = sadd.s32 %s65, 1
    %s67 = scalar_select %p64, %s65, %s66
    %p70 = pneg %p64
    %p71 = scmp.eq.s32.totalorder %s8, 1
    %p72 = por %p70, %p71
    %p73 = scmp.ne.s32.totalorder %s65, %s68
    %p74 = scmp.eq.s32.totalorder %s8, 0
    %p75 = por %p73, %p74
    %p76 = scmp.ne.s32.totalorder %s65, %s68
    %p77 = scmp.eq.s32.totalorder %s13, 1
    %p78 = por %p76, %p77
    %p79 = scmp.ne.s32.totalorder %s68, %s69
    %p80 = scmp.eq.s32.totalorder %s13, 0
    %p81 = por %p79, %p80
    %p82 = scmp.ne.s32.totalorder %s68, %s69
    %p83 = scmp.eq.s32.totalorder %s14, 1
    %p84 = por %p82, %p83
    %p86 = scmp.ne.s32.totalorder %s69, %s85
    %p87 = scmp.eq.s32.totalorder %s14, 0
    %p88 = por %p86, %p87
    %p89 = scmp.le.s32.totalorder 1, %s8
    %p90 = scmp.lt.s32.totalorder %s8, 3
    %p91 = pnand %p89, %p90
    %p92 = pneg %p91
    // Predicated region
    $region9: #{style_encoder_mlp.10} parent=5 // pred_check
      _
    $region10: #{style_encoder_mlp.10} parent=5 // pred_check_branch
      %94 = sbr.rel (%p91) target = $region12
    $region11: #{style_encoder_mlp.10} parent=5 // pred_region
      %s95 = ssub.s32 %s8, 1
      // Predicated region
      $region13: #{style_encoder_mlp.10} parent=11 // pred_check
        %p96 = pneg %p55
      $region14: #{style_encoder_mlp.10} parent=11 // pred_check_branch
        %98 = sbr.rel (%p96) target = $region16
      $region15: #{style_encoder_mlp.10} parent=11 // pred_region
        _
      $region16: #{style_encoder_mlp.10} parent=11 // pred_fallthru
        _
    $region12: #{style_encoder_mlp.10} parent=5 // pred_fallthru
      _
    %p99 = scmp.lt.s32.totalorder %s8, 2
    // Predicated region
    $region17: #{style_encoder_mlp.10} parent=5 // pred_check
      %p100 = pneg %p99
    $region18: #{style_encoder_mlp.10} parent=5 // pred_check_branch
      %102 = sbr.rel (%p100) target = $region20
    $region19: #{style_encoder_mlp.10} parent=5 // pred_region
      // Predicated region
      $region21: #{style_encoder_mlp.10} parent=19 // pred_check
        %p103 = pneg %p28
      $region22: #{style_encoder_mlp.10} parent=19 // pred_check_branch
        %105 = sbr.rel (%p103) target = $region24
      $region23: #{style_encoder_mlp.10} parent=19 // pred_region
        %p106 = scmp.lt.s32.totalorder %s8, 1
        %s107 = scalar_select %p106, %s8, 1
        %s108 = smul.addr %s107, 256
        %s109 = smul.addr %s108, 4
        %s110 = scalar_lea.vmem %s0, %s109
      $region24: #{style_encoder_mlp.10} parent=19 // pred_fallthru
        _
    $region20: #{style_encoder_mlp.10} parent=5 // pred_fallthru
      _
    %p111 = scmp.le.s32.totalorder 1, %s8
    %p112 = scmp.lt.s32.totalorder %s8, 3
    %p113 = pnand %p111, %p112
    %p114 = pneg %p113
    // Predicated region
    $region25: #{style_encoder_mlp.10} parent=5 // pred_check
      _
    $region26: #{style_encoder_mlp.10} parent=5 // pred_check_branch
      %116 = sbr.rel (%p113) target = $region28
    $region27: #{style_encoder_mlp.10} parent=5 // pred_region
      %s117 = ssub.s32 %s8, 1
      %p118 = scmp.lt.s32.totalorder %s13, 1
      %s119 = scalar_select %p118, %s13, 1
      %s120 = smul.addr %s119, 256
      %s121 = smul.addr %s120, 4
      %s122 = scalar_lea.vmem %s0, %s121
      %p123 = pneg %p34
      %p124 = pneg %p31
      %p125 = pneg %p55
      %p126 = pneg %p52
      %p127 = pneg %p81
      %p128 = pneg %p78
      %p129 = scmp.lt.s32.totalorder %s13, 1
      %s130 = scalar_select %p129, %s13, 1
      %s131 = smul.addr %s130, 128
      %s132 = smul.addr %s131, 8
      %s133 = scalar_lea.vmem %s2, %s132
      %p134 = scmp.lt.s32.totalorder %s13, 1
      %s135 = scalar_select %p134, %s13, 1
      %s136 = smul.addr %s135, 256
      %s137 = smul.addr %s136, 4
      %s138 = scalar_lea.vmem %s0, %s137
      %p139 = scmp.lt.s32.totalorder %s13, 1
      %s140 = scalar_select %p139, %s13, 1
      %s141 = smul.addr %s140, 128
      %s142 = smul.addr %s141, 8
      %s143 = scalar_lea.vmem %s2, %s142
      %v145 = vld [vmem:[%s138] sm:$0xff]
      %v146 = vld [vmem:[%s138 + $0x8] sm:$0xff]
      %v147 = vld [vmem:[%s138 + $0x10] sm:$0xff]
      %v148 = vld [vmem:[%s138 + $0x18] sm:$0xff]
      %v149 = vld [vmem:[%s138 + $0x20] sm:$0xff]
      %v150 = vld [vmem:[%s138 + $0x28] sm:$0xff]
      %v151 = vld [vmem:[%s138 + $0x30] sm:$0xff]
      %v152 = vld [vmem:[%s138 + $0x38] sm:$0xff]
      %v153 = vld [vmem:[%s138 + $0x40] sm:$0xff]
      %v154 = vld [vmem:[%s138 + $0x48] sm:$0xff]
      %v155 = vld [vmem:[%s138 + $0x50] sm:$0xff]
      %v156 = vld [vmem:[%s138 + $0x58] sm:$0xff]
      %v157 = vld [vmem:[%s138 + $0x60] sm:$0xff]
      %v158 = vld [vmem:[%s138 + $0x68] sm:$0xff]
      %v159 = vld [vmem:[%s138 + $0x70] sm:$0xff]
      %v160 = vld [vmem:[%s138 + $0x78] sm:$0xff]
      %v161 = vld [vmem:[%s138 + $0x80] sm:$0xff]
      %v162 = vld [vmem:[%s138 + $0x88] sm:$0xff]
      %v163 = vld [vmem:[%s138 + $0x90] sm:$0xff]
      %v164 = vld [vmem:[%s138 + $0x98] sm:$0xff]
      %v165 = vld [vmem:[%s138 + $0xa0] sm:$0xff]
      %v166 = vld [vmem:[%s138 + $0xa8] sm:$0xff]
      %v167 = vld [vmem:[%s138 + $0xb0] sm:$0xff]
      %v168 = vld [vmem:[%s138 + $0xb8] sm:$0xff]
      %v169 = vld [vmem:[%s138 + $0xc0] sm:$0xff]
      %v170 = vld [vmem:[%s138 + $0xc8] sm:$0xff]
      %v171 = vld [vmem:[%s138 + $0xd0] sm:$0xff]
      %v172 = vld [vmem:[%s138 + $0xd8] sm:$0xff]
      %v173 = vld [vmem:[%s138 + $0xe0] sm:$0xff]
      %v174 = vld [vmem:[%s138 + $0xe8] sm:$0xff]
      %v175 = vld [vmem:[%s138 + $0xf0] sm:$0xff]
      %v176 = vld [vmem:[%s138 + $0xf8] sm:$0xff]
      %v177 = vld [vmem:[%s138 + $0x100] sm:$0xff]
      %v178 = vld [vmem:[%s138 + $0x108] sm:$0xff]
      %v179 = vld [vmem:[%s138 + $0x110] sm:$0xff]
      %v180 = vld [vmem:[%s138 + $0x118] sm:$0xff]
      %v181 = vld [vmem:[%s138 + $0x120] sm:$0xff]
      %v182 = vld [vmem:[%s138 + $0x128] sm:$0xff]
      %v183 = vld [vmem:[%s138 + $0x130] sm:$0xff]
      %v184 = vld [vmem:[%s138 + $0x138] sm:$0xff]
      %v185 = vld [vmem:[%s138 + $0x140] sm:$0xff]
      %v186 = vld [vmem:[%s138 + $0x148] sm:$0xff]
      %v187 = vld [vmem:[%s138 + $0x150] sm:$0xff]
      %v188 = vld [vmem:[%s138 + $0x158] sm:$0xff]
      %v189 = vld [vmem:[%s138 + $0x160] sm:$0xff]
      %v190 = vld [vmem:[%s138 + $0x168] sm:$0xff]
      %v191 = vld [vmem:[%s138 + $0x170] sm:$0xff]
      %v192 = vld [vmem:[%s138 + $0x178] sm:$0xff]
      %v193 = vld [vmem:[%s138 + $0x180] sm:$0xff]
      %v194 = vld [vmem:[%s138 + $0x188] sm:$0xff]
      %v195 = vld [vmem:[%s138 + $0x190] sm:$0xff]
      %v196 = vld [vmem:[%s138 + $0x198] sm:$0xff]
      %v197 = vld [vmem:[%s138 + $0x1a0] sm:$0xff]
      %v198 = vld [vmem:[%s138 + $0x1a8] sm:$0xff]
      %v199 = vld [vmem:[%s138 + $0x1b0] sm:$0xff]
      %v200 = vld [vmem:[%s138 + $0x1b8] sm:$0xff]
      %v201 = vld [vmem:[%s138 + $0x1c0] sm:$0xff]
      %v202 = vld [vmem:[%s138 + $0x1c8] sm:$0xff]
      %v203 = vld [vmem:[%s138 + $0x1d0] sm:$0xff]
      %v204 = vld [vmem:[%s138 + $0x1d8] sm:$0xff]
      %v205 = vld [vmem:[%s138 + $0x1e0] sm:$0xff]
      %v206 = vld [vmem:[%s138 + $0x1e8] sm:$0xff]
      %v207 = vld [vmem:[%s138 + $0x1f0] sm:$0xff]
      %v208 = vld [vmem:[%s138 + $0x1f8] sm:$0xff]
      %v209 = vld [vmem:[%s138 + $0x200] sm:$0xff]
      %v210 = vld [vmem:[%s138 + $0x208] sm:$0xff]
      %v211 = vld [vmem:[%s138 + $0x210] sm:$0xff]
      %v212 = vld [vmem:[%s138 + $0x218] sm:$0xff]
      %v213 = vld [vmem:[%s138 + $0x220] sm:$0xff]
      %v214 = vld [vmem:[%s138 + $0x228] sm:$0xff]
      %v215 = vld [vmem:[%s138 + $0x230] sm:$0xff]
      %v216 = vld [vmem:[%s138 + $0x238] sm:$0xff]
      %v217 = vld [vmem:[%s138 + $0x240] sm:$0xff]
      %v218 = vld [vmem:[%s138 + $0x248] sm:$0xff]
      %v219 = vld [vmem:[%s138 + $0x250] sm:$0xff]
      %v220 = vld [vmem:[%s138 + $0x258] sm:$0xff]
      %v221 = vld [vmem:[%s138 + $0x260] sm:$0xff]
      %v222 = vld [vmem:[%s138 + $0x268] sm:$0xff]
      %v223 = vld [vmem:[%s138 + $0x270] sm:$0xff]
      %v224 = vld [vmem:[%s138 + $0x278] sm:$0xff]
      %v225 = vld [vmem:[%s138 + $0x280] sm:$0xff]
      %v226 = vld [vmem:[%s138 + $0x288] sm:$0xff]
      %v227 = vld [vmem:[%s138 + $0x290] sm:$0xff]
      %v228 = vld [vmem:[%s138 + $0x298] sm:$0xff]
      %v229 = vld [vmem:[%s138 + $0x2a0] sm:$0xff]
      %v230 = vld [vmem:[%s138 + $0x2a8] sm:$0xff]
      %v231 = vld [vmem:[%s138 + $0x2b0] sm:$0xff]
      %v232 = vld [vmem:[%s138 + $0x2b8] sm:$0xff]
      %v233 = vld [vmem:[%s138 + $0x2c0] sm:$0xff]
      %v234 = vld [vmem:[%s138 + $0x2c8] sm:$0xff]
      %v235 = vld [vmem:[%s138 + $0x2d0] sm:$0xff]
      %v236 = vld [vmem:[%s138 + $0x2d8] sm:$0xff]
      %v237 = vld [vmem:[%s138 + $0x2e0] sm:$0xff]
      %v238 = vld [vmem:[%s138 + $0x2e8] sm:$0xff]
      %v239 = vld [vmem:[%s138 + $0x2f0] sm:$0xff]
      %v240 = vld [vmem:[%s138 + $0x2f8] sm:$0xff]
      %v241 = vld [vmem:[%s138 + $0x300] sm:$0xff]
      %v242 = vld [vmem:[%s138 + $0x308] sm:$0xff]
      %v243 = vld [vmem:[%s138 + $0x310] sm:$0xff]
      %v244 = vld [vmem:[%s138 + $0x318] sm:$0xff]
      %v245 = vld [vmem:[%s138 + $0x320] sm:$0xff]
      %v246 = vld [vmem:[%s138 + $0x328] sm:$0xff]
      %v247 = vld [vmem:[%s138 + $0x330] sm:$0xff]
      %v248 = vld [vmem:[%s138 + $0x338] sm:$0xff]
      %v249 = vld [vmem:[%s138 + $0x340] sm:$0xff]
      %v250 = vld [vmem:[%s138 + $0x348] sm:$0xff]
      %v251 = vld [vmem:[%s138 + $0x350] sm:$0xff]
      %v252 = vld [vmem:[%s138 + $0x358] sm:$0xff]
      %v253 = vld [vmem:[%s138 + $0x360] sm:$0xff]
      %v254 = vld [vmem:[%s138 + $0x368] sm:$0xff]
      %v255 = vld [vmem:[%s138 + $0x370] sm:$0xff]
      %v256 = vld [vmem:[%s138 + $0x378] sm:$0xff]
      %v257 = vld [vmem:[%s138 + $0x380] sm:$0xff]
      %v258 = vld [vmem:[%s138 + $0x388] sm:$0xff]
      %v259 = vld [vmem:[%s138 + $0x390] sm:$0xff]
      %v260 = vld [vmem:[%s138 + $0x398] sm:$0xff]
      %v261 = vld [vmem:[%s138 + $0x3a0] sm:$0xff]
      %v262 = vld [vmem:[%s138 + $0x3a8] sm:$0xff]
      %v263 = vld [vmem:[%s138 + $0x3b0] sm:$0xff]
      %v264 = vld [vmem:[%s138 + $0x3b8] sm:$0xff]
      %v265 = vld [vmem:[%s138 + $0x3c0] sm:$0xff]
      %v266 = vld [vmem:[%s138 + $0x3c8] sm:$0xff]
      %v267 = vld [vmem:[%s138 + $0x3d0] sm:$0xff]
      %v268 = vld [vmem:[%s138 + $0x3d8] sm:$0xff]
      %v269 = vld [vmem:[%s138 + $0x3e0] sm:$0xff]
      %v270 = vld [vmem:[%s138 + $0x3e8] sm:$0xff]
      %v271 = vld [vmem:[%s138 + $0x3f0] sm:$0xff]
      %v272 = vld [vmem:[%s138 + $0x3f8] sm:$0xff]
      %v273 = vld [vmem:[%s1] sm:$0xf]
      %v274 = vld [vmem:[%s1 + $0x4] sm:$0xf]
      %v275 = vld [vmem:[%s1 + $0x8] sm:$0xf]
      %v276 = vld [vmem:[%s1 + $0xc] sm:$0xf]
      %v277 = vld [vmem:[%s1 + $0x10] sm:$0xf]
      %v278 = vld [vmem:[%s1 + $0x14] sm:$0xf]
      %v279 = vld [vmem:[%s1 + $0x18] sm:$0xf]
      %v280 = vld [vmem:[%s1 + $0x1c] sm:$0xf]
      %v281 = vld [vmem:[%s1 + $0x20] sm:$0xf]
      %v282 = vld [vmem:[%s1 + $0x24] sm:$0xf]
      %v283 = vld [vmem:[%s1 + $0x28] sm:$0xf]
      %v284 = vld [vmem:[%s1 + $0x2c] sm:$0xf]
      %v285 = vld [vmem:[%s1 + $0x30] sm:$0xf]
      %v286 = vld [vmem:[%s1 + $0x34] sm:$0xf]
      %v287 = vld [vmem:[%s1 + $0x38] sm:$0xf]
      %v288 = vld [vmem:[%s1 + $0x3c] sm:$0xf]
      %v289 = vld [vmem:[%s1 + $0x40] sm:$0xf]
      %v290 = vld [vmem:[%s1 + $0x44] sm:$0xf]
      %v291 = vld [vmem:[%s1 + $0x48] sm:$0xf]
      %v420 = vunpack.c.l.b16 %v145
      %v421 = vunpack.c.h.b16 %v145
      %v422 = vunpack.c.l.b16 %v146
      %v423 = vunpack.c.h.b16 %v146
      %v424 = vunpack.c.l.b16 %v147
      %v425 = vunpack.c.h.b16 %v147
      %v426 = vunpack.c.l.b16 %v148
      %v427 = vunpack.c.h.b16 %v148
      %v428 = vunpack.c.l.b16 %v149
      %v429 = vunpack.c.h.b16 %v149
      %v430 = vunpack.c.l.b16 %v150
      %v431 = vunpack.c.h.b16 %v150
      %v432 = vunpack.c.l.b16 %v151
      %v433 = vunpack.c.h.b16 %v151
      %v434 = vunpack.c.l.b16 %v152
      %v435 = vunpack.c.h.b16 %v152
      %v436 = vunpack.c.l.b16 %v153
      %v437 = vunpack.c.h.b16 %v153
      %v438 = vunpack.c.l.b16 %v154
      %v439 = vunpack.c.h.b16 %v154
      %v440 = vunpack.c.l.b16 %v155
      %v441 = vunpack.c.h.b16 %v155
      %v442 = vunpack.c.l.b16 %v156
      %v443 = vunpack.c.h.b16 %v156
      %v444 = vunpack.c.l.b16 %v157
      %v445 = vunpack.c.h.b16 %v157
      %v446 = vunpack.c.l.b16 %v158
      %v447 = vunpack.c.h.b16 %v158
      %v448 = vunpack.c.l.b16 %v159
      %v449 = vunpack.c.h.b16 %v159
      %v450 = vunpack.c.l.b16 %v160
      %v451 = vunpack.c.h.b16 %v160
      %v452 = vunpack.c.l.b16 %v161
      %v453 = vunpack.c.h.b16 %v161
      %v454 = vunpack.c.l.b16 %v162
      %v455 = vunpack.c.h.b16 %v162
      %v456 = vunpack.c.l.b16 %v163
      %v457 = vunpack.c.h.b16 %v163
      %v458 = vunpack.c.l.b16 %v164
      %v459 = vunpack.c.h.b16 %v164
      %v460 = vunpack.c.l.b16 %v165
      %v461 = vunpack.c.h.b16 %v165
      %v462 = vunpack.c.l.b16 %v166
      %v463 = vunpack.c.h.b16 %v166
      %v464 = vunpack.c.l.b16 %v167
      %v465 = vunpack.c.h.b16 %v167
      %v466 = vunpack.c.l.b16 %v168
      %v467 = vunpack.c.h.b16 %v168
      %v468 = vunpack.c.l.b16 %v169
      %v469 = vunpack.c.h.b16 %v169
      %v470 = vunpack.c.l.b16 %v170
      %v471 = vunpack.c.h.b16 %v170
      %v472 = vunpack.c.l.b16 %v171
      %v473 = vunpack.c.h.b16 %v171
      %v474 = vunpack.c.l.b16 %v172
      %v475 = vunpack.c.h.b16 %v172
      %v476 = vunpack.c.l.b16 %v173
      %v477 = vunpack.c.h.b16 %v173
      %v478 = vunpack.c.l.b16 %v174
      %v479 = vunpack.c.h.b16 %v174
      %v480 = vunpack.c.l.b16 %v175
      %v481 = vunpack.c.h.b16 %v175
      %v482 = vunpack.c.l.b16 %v176
      %v483 = vunpack.c.h.b16 %v176
      %v484 = vunpack.c.l.b16 %v177
      %v485 = vunpack.c.h.b16 %v177
      %v486 = vunpack.c.l.b16 %v178
      %v487 = vunpack.c.h.b16 %v178
      %v488 = vunpack.c.l.b16 %v179
      %v489 = vunpack.c.h.b16 %v179
      %v490 = vunpack.c.l.b16 %v180
      %v491 = vunpack.c.h.b16 %v180
      %v492 = vunpack.c.l.b16 %v181
      %v493 = vunpack.c.h.b16 %v181
      %v494 = vunpack.c.l.b16 %v182
      %v495 = vunpack.c.h.b16 %v182
      %v496 = vunpack.c.l.b16 %v183
      %v497 = vunpack.c.h.b16 %v183
      %v498 = vunpack.c.l.b16 %v184
      %v499 = vunpack.c.h.b16 %v184
      %v500 = vunpack.c.l.b16 %v185
      %v501 = vunpack.c.h.b16 %v185
      %v502 = vunpack.c.l.b16 %v186
      %v503 = vunpack.c.h.b16 %v186
      %v504 = vunpack.c.l.b16 %v187
      %v505 = vunpack.c.h.b16 %v187
      %v506 = vunpack.c.l.b16 %v188
      %v507 = vunpack.c.h.b16 %v188
      %v508 = vunpack.c.l.b16 %v189
      %v509 = vunpack.c.h.b16 %v189
      %v510 = vunpack.c.l.b16 %v190
      %v511 = vunpack.c.h.b16 %v190
      %v512 = vunpack.c.l.b16 %v191
      %v513 = vunpack.c.h.b16 %v191
      %v514 = vunpack.c.l.b16 %v192
      %v515 = vunpack.c.h.b16 %v192
      %v516 = vunpack.c.l.b16 %v193
      %v517 = vunpack.c.h.b16 %v193
      %v518 = vunpack.c.l.b16 %v194
      %v519 = vunpack.c.h.b16 %v194
      %v520 = vunpack.c.l.b16 %v195
      %v521 = vunpack.c.h.b16 %v195
      %v522 = vunpack.c.l.b16 %v196
      %v523 = vunpack.c.h.b16 %v196
      %v524 = vunpack.c.l.b16 %v197
      %v525 = vunpack.c.h.b16 %v197
      %v526 = vunpack.c.l.b16 %v198
      %v527 = vunpack.c.h.b16 %v198
      %v528 = vunpack.c.l.b16 %v199
      %v529 = vunpack.c.h.b16 %v199
      %v530 = vunpack.c.l.b16 %v200
      %v531 = vunpack.c.h.b16 %v200
      %v532 = vunpack.c.l.b16 %v201
      %v533 = vunpack.c.h.b16 %v201
      %v534 = vunpack.c.l.b16 %v202
      %v535 = vunpack.c.h.b16 %v202
      %v536 = vunpack.c.l.b16 %v203
      %v537 = vunpack.c.h.b16 %v203
      %v538 = vunpack.c.l.b16 %v204
      %v539 = vunpack.c.h.b16 %v204
      %v540 = vunpack.c.l.b16 %v205
      %v541 = vunpack.c.h.b16 %v205
      %v542 = vunpack.c.l.b16 %v206
      %v543 = vunpack.c.h.b16 %v206
      %v544 = vunpack.c.l.b16 %v207
      %v545 = vunpack.c.h.b16 %v207
      %v546 = vunpack.c.l.b16 %v208
      %v547 = vunpack.c.h.b16 %v208
      %v548 = vunpack.c.l.b16 %v209
      %v549 = vunpack.c.h.b16 %v209
      %v550 = vunpack.c.l.b16 %v210
      %v551 = vunpack.c.h.b16 %v210
      %v552 = vunpack.c.l.b16 %v211
      %v553 = vunpack.c.h.b16 %v211
      %v554 = vunpack.c.l.b16 %v212
      %v555 = vunpack.c.h.b16 %v212
      %v556 = vunpack.c.l.b16 %v213
      %v557 = vunpack.c.h.b16 %v213
      %v558 = vunpack.c.l.b16 %v214
      %v559 = vunpack.c.h.b16 %v214
      %v560 = vunpack.c.l.b16 %v215
      %v561 = vunpack.c.h.b16 %v215
      %v562 = vunpack.c.l.b16 %v216
      %v563 = vunpack.c.h.b16 %v216
      %v564 = vunpack.c.l.b16 %v217
      %v565 = vunpack.c.h.b16 %v217
      %v566 = vunpack.c.l.b16 %v218
      %v567 = vunpack.c.h.b16 %v218
      %v568 = vunpack.c.l.b16 %v219
      %v569 = vunpack.c.h.b16 %v219
      %v570 = vunpack.c.l.b16 %v220
      %v571 = vunpack.c.h.b16 %v220
      %v572 = vunpack.c.l.b16 %v221
      %v573 = vunpack.c.h.b16 %v221
      %v574 = vunpack.c.l.b16 %v222
      %v575 = vunpack.c.h.b16 %v222
      %v576 = vunpack.c.l.b16 %v223
      %v577 = vunpack.c.h.b16 %v223
      %v578 = vunpack.c.l.b16 %v224
      %v579 = vunpack.c.h.b16 %v224
      %v580 = vunpack.c.l.b16 %v225
      %v581 = vunpack.c.h.b16 %v225
      %v582 = vunpack.c.l.b16 %v226
      %v583 = vunpack.c.h.b16 %v226
      %v584 = vunpack.c.l.b16 %v227
      %v585 = vunpack.c.h.b16 %v227
      %v586 = vunpack.c.l.b16 %v228
      %v587 = vunpack.c.h.b16 %v228
      %v588 = vunpack.c.l.b16 %v229
      %v589 = vunpack.c.h.b16 %v229
      %v590 = vunpack.c.l.b16 %v230
      %v591 = vunpack.c.h.b16 %v230
      %v592 = vunpack.c.l.b16 %v231
      %v593 = vunpack.c.h.b16 %v231
      %v594 = vunpack.c.l.b16 %v232
      %v595 = vunpack.c.h.b16 %v232
      %v596 = vunpack.c.l.b16 %v233
      %v597 = vunpack.c.h.b16 %v233
      %v598 = vunpack.c.l.b16 %v234
      %v599 = vunpack.c.h.b16 %v234
      %v600 = vunpack.c.l.b16 %v235
      %v601 = vunpack.c.h.b16 %v235
      %v602 = vunpack.c.l.b16 %v236
      %v603 = vunpack.c.h.b16 %v236
      %v604 = vunpack.c.l.b16 %v237
      %v605 = vunpack.c.h.b16 %v237
      %v606 = vunpack.c.l.b16 %v238
      %v607 = vunpack.c.h.b16 %v238
      %v608 = vunpack.c.l.b16 %v239
      %v609 = vunpack.c.h.b16 %v239
      %v610 = vunpack.c.l.b16 %v240
      %v611 = vunpack.c.h.b16 %v240
      %v612 = vunpack.c.l.b16 %v241
      %v613 = vunpack.c.h.b16 %v241
      %v614 = vunpack.c.l.b16 %v242
      %v615 = vunpack.c.h.b16 %v242
      %v616 = vunpack.c.l.b16 %v243
      %v617 = vunpack.c.h.b16 %v243
      %v618 = vunpack.c.l.b16 %v244
      %v619 = vunpack.c.h.b16 %v244
      %v620 = vunpack.c.l.b16 %v245
      %v621 = vunpack.c.h.b16 %v245
      %v622 = vunpack.c.l.b16 %v246
      %v623 = vunpack.c.h.b16 %v246
      %v624 = vunpack.c.l.b16 %v247
      %v625 = vunpack.c.h.b16 %v247
      %v626 = vunpack.c.l.b16 %v248
      %v627 = vunpack.c.h.b16 %v248
      %v628 = vunpack.c.l.b16 %v249
      %v629 = vunpack.c.h.b16 %v249
      %v630 = vunpack.c.l.b16 %v250
      %v631 = vunpack.c.h.b16 %v250
      %v632 = vunpack.c.l.b16 %v251
      %v633 = vunpack.c.h.b16 %v251
      %v634 = vunpack.c.l.b16 %v252
      %v635 = vunpack.c.h.b16 %v252
      %v636 = vunpack.c.l.b16 %v253
      %v637 = vunpack.c.h.b16 %v253
      %v638 = vunpack.c.l.b16 %v254
      %v639 = vunpack.c.h.b16 %v254
      %v640 = vunpack.c.l.b16 %v255
      %v641 = vunpack.c.h.b16 %v255
      %v642 = vunpack.c.l.b16 %v256
      %v643 = vunpack.c.h.b16 %v256
      %v644 = vunpack.c.l.b16 %v257
      %v645 = vunpack.c.h.b16 %v257
      %v646 = vunpack.c.l.b16 %v258
      %v647 = vunpack.c.h.b16 %v258
      %v648 = vunpack.c.l.b16 %v259
      %v649 = vunpack.c.h.b16 %v259
      %v650 = vunpack.c.l.b16 %v260
      %v651 = vunpack.c.h.b16 %v260
      %v652 = vunpack.c.l.b16 %v261
      %v653 = vunpack.c.h.b16 %v261
      %v654 = vunpack.c.l.b16 %v262
      %v655 = vunpack.c.h.b16 %v262
      %v656 = vunpack.c.l.b16 %v263
      %v657 = vunpack.c.h.b16 %v263
      %v658 = vunpack.c.l.b16 %v264
      %v659 = vunpack.c.h.b16 %v264
      %v660 = vunpack.c.l.b16 %v265
      %v661 = vunpack.c.h.b16 %v265
      %v662 = vunpack.c.l.b16 %v266
      %v663 = vunpack.c.h.b16 %v266
      %v664 = vunpack.c.l.b16 %v267
      %v665 = vunpack.c.h.b16 %v267
      %v666 = vunpack.c.l.b16 %v268
      %v667 = vunpack.c.h.b16 %v268
      %v668 = vunpack.c.l.b16 %v269
      %v669 = vunpack.c.h.b16 %v269
      %v670 = vunpack.c.l.b16 %v270
      %v671 = vunpack.c.h.b16 %v270
      %v672 = vunpack.c.l.b16 %v271
      %v673 = vunpack.c.h.b16 %v271
      %v674 = vunpack.c.l.b16 %v272
      %v675 = vunpack.c.h.b16 %v272
      %v676 = vpack.c.b16 %v422, %v420
      %v677 = vpack.c.b16 %v423, %v421
      %v678 = vpack.c.b16 %v426, %v424
      %v679 = vpack.c.b16 %v427, %v425
      %v680 = vpack.c.b16 %v430, %v428
      %v681 = vpack.c.b16 %v431, %v429
      %v682 = vpack.c.b16 %v434, %v432
      %v683 = vpack.c.b16 %v435, %v433
      %v684 = vpack.c.b16 %v438, %v436
      %v685 = vpack.c.b16 %v439, %v437
      %v686 = vpack.c.b16 %v442, %v440
      %v687 = vpack.c.b16 %v443, %v441
      %v688 = vpack.c.b16 %v446, %v444
      %v689 = vpack.c.b16 %v447, %v445
      %v690 = vpack.c.b16 %v450, %v448
      %v691 = vpack.c.b16 %v451, %v449
      %v692 = vpack.c.b16 %v454, %v452
      %v693 = vpack.c.b16 %v455, %v453
      %v694 = vpack.c.b16 %v458, %v456
      %v695 = vpack.c.b16 %v459, %v457
      %v696 = vpack.c.b16 %v462, %v460
      %v697 = vpack.c.b16 %v463, %v461
      %v698 = vpack.c.b16 %v466, %v464
      %v699 = vpack.c.b16 %v467, %v465
      %v700 = vpack.c.b16 %v470, %v468
      %v701 = vpack.c.b16 %v471, %v469
      %v702 = vpack.c.b16 %v474, %v472
      %v703 = vpack.c.b16 %v475, %v473
      %v704 = vpack.c.b16 %v478, %v476
      %v705 = vpack.c.b16 %v479, %v477
      %v706 = vpack.c.b16 %v482, %v480
      %v707 = vpack.c.b16 %v483, %v481
      %v708 = vpack.c.b16 %v486, %v484
      %v709 = vpack.c.b16 %v487, %v485
      %v710 = vpack.c.b16 %v490, %v488
      %v711 = vpack.c.b16 %v491, %v489
      %v712 = vpack.c.b16 %v494, %v492
      %v713 = vpack.c.b16 %v495, %v493
      %v714 = vpack.c.b16 %v498, %v496
      %v715 = vpack.c.b16 %v499, %v497
      %v716 = vpack.c.b16 %v502, %v500
      %v717 = vpack.c.b16 %v503, %v501
      %v718 = vpack.c.b16 %v506, %v504
      %v719 = vpack.c.b16 %v507, %v505
      %v720 = vpack.c.b16 %v510, %v508
      %v721 = vpack.c.b16 %v511, %v509
      %v722 = vpack.c.b16 %v514, %v512
      %v723 = vpack.c.b16 %v515, %v513
      %v724 = vpack.c.b16 %v518, %v516
      %v725 = vpack.c.b16 %v519, %v517
      %v726 = vpack.c.b16 %v522, %v520
      %v727 = vpack.c.b16 %v523, %v521
      %v728 = vpack.c.b16 %v526, %v524
      %v729 = vpack.c.b16 %v527, %v525
      %v730 = vpack.c.b16 %v530, %v528
      %v731 = vpack.c.b16 %v531, %v529
      %v732 = vpack.c.b16 %v534, %v532
      %v733 = vpack.c.b16 %v535, %v533
      %v734 = vpack.c.b16 %v538, %v536
      %v735 = vpack.c.b16 %v539, %v537
      %v736 = vpack.c.b16 %v542, %v540
      %v737 = vpack.c.b16 %v543, %v541
      %v738 = vpack.c.b16 %v546, %v544
      %v739 = vpack.c.b16 %v547, %v545
      %v740 = vpack.c.b16 %v550, %v548
      %v741 = vpack.c.b16 %v551, %v549
      %v742 = vpack.c.b16 %v554, %v552
      %v743 = vpack.c.b16 %v555, %v553
      %v744 = vpack.c.b16 %v558, %v556
      %v745 = vpack.c.b16 %v559, %v557
      %v746 = vpack.c.b16 %v562, %v560
      %v747 = vpack.c.b16 %v563, %v561
      %v748 = vpack.c.b16 %v566, %v564
      %v749 = vpack.c.b16 %v567, %v565
      %v750 = vpack.c.b16 %v570, %v568
      %v751 = vpack.c.b16 %v571, %v569
      %v752 = vpack.c.b16 %v574, %v572
      %v753 = vpack.c.b16 %v575, %v573
      %v754 = vpack.c.b16 %v578, %v576
      %v755 = vpack.c.b16 %v579, %v577
      %v756 = vpack.c.b16 %v582, %v580
      %v757 = vpack.c.b16 %v583, %v581
      %v758 = vpack.c.b16 %v586, %v584
      %v759 = vpack.c.b16 %v587, %v585
      %v760 = vpack.c.b16 %v590, %v588
      %v761 = vpack.c.b16 %v591, %v589
      %v762 = vpack.c.b16 %v594, %v592
      %v763 = vpack.c.b16 %v595, %v593
      %v764 = vpack.c.b16 %v598, %v596
      %v765 = vpack.c.b16 %v599, %v597
      %v766 = vpack.c.b16 %v602, %v600
      %v767 = vpack.c.b16 %v603, %v601
      %v768 = vpack.c.b16 %v606, %v604
      %v769 = vpack.c.b16 %v607, %v605
      %v770 = vpack.c.b16 %v610, %v608
      %v771 = vpack.c.b16 %v611, %v609
      %v772 = vpack.c.b16 %v614, %v612
      %v773 = vpack.c.b16 %v615, %v613
      %v774 = vpack.c.b16 %v618, %v616
      %v775 = vpack.c.b16 %v619, %v617
      %v776 = vpack.c.b16 %v622, %v620
      %v777 = vpack.c.b16 %v623, %v621
      %v778 = vpack.c.b16 %v626, %v624
      %v779 = vpack.c.b16 %v627, %v625
      %v780 = vpack.c.b16 %v630, %v628
      %v781 = vpack.c.b16 %v631, %v629
      %v782 = vpack.c.b16 %v634, %v632
      %v783 = vpack.c.b16 %v635, %v633
      %v784 = vpack.c.b16 %v638, %v636
      %v785 = vpack.c.b16 %v639, %v637
      %v786 = vpack.c.b16 %v642, %v640
      %v787 = vpack.c.b16 %v643, %v641
      %v788 = vpack.c.b16 %v646, %v644
      %v789 = vpack.c.b16 %v647, %v645
      %v790 = vpack.c.b16 %v650, %v648
      %v791 = vpack.c.b16 %v651, %v649
      %v792 = vpack.c.b16 %v654, %v652
      %v793 = vpack.c.b16 %v655, %v653
      %v794 = vpack.c.b16 %v658, %v656
      %v795 = vpack.c.b16 %v659, %v657
      %v796 = vpack.c.b16 %v662, %v660
      %v797 = vpack.c.b16 %v663, %v661
      %v798 = vpack.c.b16 %v666, %v664
      %v799 = vpack.c.b16 %v667, %v665
      %v800 = vpack.c.b16 %v670, %v668
      %v801 = vpack.c.b16 %v671, %v669
      %v802 = vpack.c.b16 %v674, %v672
      %v803 = vpack.c.b16 %v675, %v673
      %v887 = vunpack.c.l.b16 %v273
      %v888 = vunpack.c.l.b16 %v274
      %v889 = vunpack.c.l.b16 %v275
      %v890 = vunpack.c.l.b16 %v276
      %v891 = vunpack.c.l.b16 %v277
      %v892 = vunpack.c.l.b16 %v278
      %v893 = vunpack.c.l.b16 %v279
      %v894 = vunpack.c.l.b16 %v280
      %v895 = vunpack.c.l.b16 %v281
      %v896 = vunpack.c.l.b16 %v282
      %v897 = vunpack.c.l.b16 %v283
      %v898 = vunpack.c.l.b16 %v284
      %v899 = vunpack.c.l.b16 %v285
      %v900 = vunpack.c.l.b16 %v286
      %v901 = vunpack.c.l.b16 %v287
      %v902 = vunpack.c.l.b16 %v288
      %v903 = vunpack.c.l.b16 %v289
      %v904 = vunpack.c.l.b16 %v290
      %v905 = vunpack.c.l.b16 %v291
      %v906 = vpack.c.b16 %v888, %v887
      %v907 = vpack.c.b16 %v890, %v889
      %v908 = vpack.c.b16 %v892, %v891
      %v909 = vpack.c.b16 %v894, %v893
      %v910 = vpack.c.b16 %v896, %v895
      %v911 = vpack.c.b16 %v898, %v897
      %v912 = vpack.c.b16 %v900, %v899
      %v913 = vpack.c.b16 %v902, %v901
      %v914 = vpack.c.b16 %v904, %v903
      %v915 = vpack.c.b16 %v905, %v905
      %vm925 = vcmask 195584
      %v927 = vsel %vm925, %v677, 0
      %v930 = vsel %vm925, %v679, 0
      %v933 = vsel %vm925, %v681, 0
      %v936 = vsel %vm925, %v683, 0
      %v939 = vsel %vm925, %v685, 0
      %v942 = vsel %vm925, %v687, 0
      %v945 = vsel %vm925, %v689, 0
      %v948 = vsel %vm925, %v691, 0
      %v951 = vsel %vm925, %v693, 0
      %v954 = vsel %vm925, %v695, 0
      %v957 = vsel %vm925, %v697, 0
      %v960 = vsel %vm925, %v699, 0
      %v963 = vsel %vm925, %v701, 0
      %v966 = vsel %vm925, %v703, 0
      %v969 = vsel %vm925, %v705, 0
      %v972 = vsel %vm925, %v707, 0
      %v975 = vsel %vm925, %v709, 0
      %v978 = vsel %vm925, %v711, 0
      %v981 = vsel %vm925, %v713, 0
      %v984 = vsel %vm925, %v715, 0
      %v987 = vsel %vm925, %v717, 0
      %v990 = vsel %vm925, %v719, 0
      %v993 = vsel %vm925, %v721, 0
      %v996 = vsel %vm925, %v723, 0
      %v999 = vsel %vm925, %v725, 0
      %v1002 = vsel %vm925, %v727, 0
      %v1005 = vsel %vm925, %v729, 0
      %v1008 = vsel %vm925, %v731, 0
      %v1011 = vsel %vm925, %v733, 0
      %v1014 = vsel %vm925, %v735, 0
      %v1017 = vsel %vm925, %v737, 0
      %v1020 = vsel %vm925, %v739, 0
      %v1023 = vsel %vm925, %v741, 0
      %v1026 = vsel %vm925, %v743, 0
      %v1029 = vsel %vm925, %v745, 0
      %v1032 = vsel %vm925, %v747, 0
      %v1035 = vsel %vm925, %v749, 0
      %v1038 = vsel %vm925, %v751, 0
      %v1041 = vsel %vm925, %v753, 0
      %v1044 = vsel %vm925, %v755, 0
      %v1047 = vsel %vm925, %v757, 0
      %v1050 = vsel %vm925, %v759, 0
      %v1053 = vsel %vm925, %v761, 0
      %v1056 = vsel %vm925, %v763, 0
      %v1059 = vsel %vm925, %v765, 0
      %v1062 = vsel %vm925, %v767, 0
      %v1065 = vsel %vm925, %v769, 0
      %v1068 = vsel %vm925, %v771, 0
      %v1071 = vsel %vm925, %v773, 0
      %v1074 = vsel %vm925, %v775, 0
      %v1077 = vsel %vm925, %v777, 0
      %v1080 = vsel %vm925, %v779, 0
      %v1083 = vsel %vm925, %v781, 0
      %v1086 = vsel %vm925, %v783, 0
      %v1089 = vsel %vm925, %v785, 0
      %v1092 = vsel %vm925, %v787, 0
      %v1095 = vsel %vm925, %v789, 0
      %v1098 = vsel %vm925, %v791, 0
      %v1101 = vsel %vm925, %v793, 0
      %v1104 = vsel %vm925, %v795, 0
      %v1107 = vsel %vm925, %v797, 0
      %v1110 = vsel %vm925, %v799, 0
      %v1113 = vsel %vm925, %v801, 0
      %v1116 = vsel %vm925, %v803, 0
      %vm1118 = vcmask 1043456
      %v1120 = vsel %vm1118, %v915, 0
      %1122 = vmatprep.subr.bf16.mxu0 0
      %1123 = vmatpush1.bf16.msra.mxu0 %v906
      %1124 = vmatprep.subr.bf16.mxu0 0
      %1125 = vmatpush1.bf16.msra.mxu0 %v907
      %1126 = vmatprep.subr.bf16.mxu0 0
      %1127 = vmatpush1.bf16.msra.mxu0 %v908
      %1128 = vmatprep.subr.bf16.mxu0 0
      %1129 = vmatpush1.bf16.msra.mxu0 %v909
      %1130 = vmatprep.subr.bf16.mxu0 0
      %1131 = vmatpush1.bf16.msra.mxu0 %v910
      %1132 = vmatprep.subr.bf16.mxu0 0
      %1133 = vmatpush1.bf16.msra.mxu0 %v911
      %1134 = vmatprep.subr.bf16.mxu0 0
      %1135 = vmatpush1.bf16.msra.mxu0 %v912
      %1136 = vmatprep.subr.bf16.mxu0 0
      %1137 = vmatpush1.bf16.msra.mxu0 %v913
      %1138 = vmatprep.subr.bf16.mxu0 0
      %1139 = vmatpush1.bf16.msra.mxu0 %v914
      %1140 = vmatprep.subr.bf16.mxu0 0
      %1141 = vmatpush1.bf16.msra.mxu0 %v1120
      %1142 = vmatprep.subr.bf16.mxu0 0
      %1143 = vmatpush1.bf16.msra.mxu0 0
      %1144 = vmatprep.subr.bf16.mxu0 0
      %1145 = vmatpush1.bf16.msra.mxu0 0
      %1146 = vmatprep.subr.bf16.mxu0 0
      %1147 = vmatpush1.bf16.msra.mxu0 0
      %1148 = vmatprep.subr.bf16.mxu0 0
      %1149 = vmatpush1.bf16.msra.mxu0 0
      %1150 = vmatprep.subr.bf16.mxu0 0
      %1151 = vmatpush1.bf16.msra.mxu0 0
      %1152 = vmatprep.subr.bf16.mxu0 0
      %1153 = vmatpush1.bf16.msra.mxu0 0
      %1154 = vmatprep.mubr.bf16.mxu0 %v927
      %1155 = vmatmul.mubr.bf16.gmra.mrb[0].mxu0 %v676
      %v1156 = vpop.f32.mrb[0].mxu0
      %v1157 = vadd.f32 0.0, %v1156
      %v1158 = vpop.f32.mrb[0].mxu0
      %v1159 = vpop.f32.mrb[0].mxu0
      %v1160 = vadd.f32 0.0, %v1159
      %v1161 = vpop.f32.mrb[0].mxu0
      %1162 = vmatprep.mubr.bf16.mxu0 %v930
      %1163 = vmatmul.mubr.bf16.gmra.mrb[0].mxu0 %v678
      %v1164 = vpop.f32.mrb[0].mxu0
      %v1165 = vadd.f32 0.0, %v1164
      %v1166 = vpop.f32.mrb[0].mxu0
      %v1167 = vpop.f32.mrb[0].mxu0
      %v1168 = vadd.f32 0.0, %v1167
      %v1169 = vpop.f32.mrb[0].mxu0
      %1170 = vmatprep.mubr.bf16.mxu0 %v933
      %1171 = vmatmul.mubr.bf16.gmra.mrb[0].mxu0 %v680
      %v1172 = vpop.f32.mrb[0].mxu0
      %v1173 = vadd.f32 0.0, %v1172
      %v1174 = vpop.f32.mrb[0].mxu0
      %v1175 = vpop.f32.mrb[0].mxu0
      %v1176 = vadd.f32 0.0, %v1175
      %v1177 = vpop.f32.mrb[0].mxu0
      %1178 = vmatprep.mubr.bf16.mxu0 %v936
      %1179 = vmatmul.mubr.bf16.gmra.mrb[0].mxu0 %v682
      %v1180 = vpop.f32.mrb[0].mxu0
      %v1181 = vadd.f32 0.0, %v1180
      %v1182 = vpop.f32.mrb[0].mxu0
      %v1183 = vpop.f32.mrb[0].mxu0
      %v1184 = vadd.f32 0.0, %v1183
      %v1185 = vpop.f32.mrb[0].mxu0
      %1186 = vmatprep.mubr.bf16.mxu0 %v939
      %1187 = vmatmul.mubr.bf16.gmra.mrb[0].mxu0 %v684
      %v1188 = vpop.f32.mrb[0].mxu0
      %v1189 = vadd.f32 0.0, %v1188
      %v1190 = vpop.f32.mrb[0].mxu0
      %v1191 = vpop.f32.mrb[0].mxu0
      %v1192 = vadd.f32 0.0, %v1191
      %v1193 = vpop.f32.mrb[0].mxu0
      %1194 = vmatprep.mubr.bf16.mxu0 %v942
      %1195 = vmatmul.mubr.bf16.gmra.mrb[0].mxu0 %v686
      %v1196 = vpop.f32.mrb[0].mxu0
      %v1197 = vadd.f32 0.0, %v1196
      %v1198 = vpop.f32.mrb[0].mxu0
      %v1199 = vpop.f32.mrb[0].mxu0
      %v1200 = vadd.f32 0.0, %v1199
      %v1201 = vpop.f32.mrb[0].mxu0
      %1202 = vmatprep.mubr.bf16.mxu0 %v945
      %1203 = vmatmul.mubr.bf16.gmra.mrb[0].mxu0 %v688
      %v1204 = vpop.f32.mrb[0].mxu0
      %v1205 = vadd.f32 0.0, %v1204
      %v1206 = vpop.f32.mrb[0].mxu0
      %v1207 = vpop.f32.mrb[0].mxu0
      %v1208 = vadd.f32 0.0, %v1207
      %v1209 = vpop.f32.mrb[0].mxu0
      %1210 = vmatprep.mubr.bf16.mxu0 %v948
      %1211 = vmatmul.mubr.bf16.gmra.mrb[0].mxu0 %v690
      %v1212 = vpop.f32.mrb[0].mxu0
      %v1213 = vadd.f32 0.0, %v1212
      %v1214 = vpop.f32.mrb[0].mxu0
      %v1215 = vpop.f32.mrb[0].mxu0
      %v1216 = vadd.f32 0.0, %v1215
      %v1217 = vpop.f32.mrb[0].mxu0
      %1218 = vmatprep.mubr.bf16.mxu0 %v951
      %1219 = vmatmul.mubr.bf16.gmra.mrb[0].mxu0 %v692
      %v1220 = vpop.f32.mrb[0].mxu0
      %v1221 = vadd.f32 0.0, %v1220
      %v1222 = vpop.f32.mrb[0].mxu0
      %v1223 = vpop.f32.mrb[0].mxu0
      %v1224 = vadd.f32 0.0, %v1223
      %v1225 = vpop.f32.mrb[0].mxu0
      %1226 = vmatprep.mubr.bf16.mxu0 %v954
      %1227 = vmatmul.mubr.bf16.gmra.mrb[0].mxu0 %v694
      %v1228 = vpop.f32.mrb[0].mxu0
      %v1229 = vadd.f32 0.0, %v1228
      %v1230 = vpop.f32.mrb[0].mxu0
      %v1231 = vpop.f32.mrb[0].mxu0
      %v1232 = vadd.f32 0.0, %v1231
      %v1233 = vpop.f32.mrb[0].mxu0
      %1234 = vmatprep.mubr.bf16.mxu0 %v957
      %1235 = vmatmul.mubr.bf16.gmra.mrb[0].mxu0 %v696
      %v1236 = vpop.f32.mrb[0].mxu0
      %v1237 = vadd.f32 0.0, %v1236
      %v1238 = vpop.f32.mrb[0].mxu0
      %v1239 = vpop.f32.mrb[0].mxu0
      %v1240 = vadd.f32 0.0, %v1239
      %v1241 = vpop.f32.mrb[0].mxu0
      %1242 = vmatprep.mubr.bf16.mxu0 %v960
      %1243 = vmatmul.mubr.bf16.gmra.mrb[0].mxu0 %v698
      %v1244 = vpop.f32.mrb[0].mxu0
      %v1245 = vadd.f32 0.0, %v1244
      %v1246 = vpop.f32.mrb[0].mxu0
      %v1247 = vpop.f32.mrb[0].mxu0
      %v1248 = vadd.f32 0.0, %v1247
      %v1249 = vpop.f32.mrb[0].mxu0
      %1250 = vmatprep.mubr.bf16.mxu0 %v963
      %1251 = vmatmul.mubr.bf16.gmra.mrb[0].mxu0 %v700
      %v1252 = vpop.f32.mrb[0].mxu0
      %v1253 = vadd.f32 0.0, %v1252
      %v1254 = vpop.f32.mrb[0].mxu0
      %v1255 = vpop.f32.mrb[0].mxu0
      %v1256 = vadd.f32 0.0, %v1255
      %v1257 = vpop.f32.mrb[0].mxu0
      %1258 = vmatprep.mubr.bf16.mxu0 %v966
      %1259 = vmatmul.mubr.bf16.gmra.mrb[0].mxu0 %v702
      %v1260 = vpop.f32.mrb[0].mxu0
      %v1261 = vadd.f32 0.0, %v1260
      %v1262 = vpop.f32.mrb[0].mxu0
      %v1263 = vpop.f32.mrb[0].mxu0
      %v1264 = vadd.f32 0.0, %v1263
      %v1265 = vpop.f32.mrb[0].mxu0
      %1266 = vmatprep.mubr.bf16.mxu0 %v969
      %1267 = vmatmul.mubr.bf16.gmra.mrb[0].mxu0 %v704
      %v1268 = vpop.f32.mrb[0].mxu0
      %v1269 = vadd.f32 0.0, %v1268
      %v1270 = vpop.f32.mrb[0].mxu0
      %v1271 = vpop.f32.mrb[0].mxu0
      %v1272 = vadd.f32 0.0, %v1271
      %v1273 = vpop.f32.mrb[0].mxu0
      %1274 = vmatprep.mubr.bf16.mxu0 %v972
      %1275 = vmatmul.mubr.bf16.gmra.mrb[0].mxu0 %v706
      %v1276 = vpop.f32.mrb[0].mxu0
      %v1277 = vadd.f32 0.0, %v1276
      %v1278 = vpop.f32.mrb[0].mxu0
      %v1279 = vpop.f32.mrb[0].mxu0
      %v1280 = vadd.f32 0.0, %v1279
      %v1281 = vpop.f32.mrb[0].mxu0
      %1282 = vmatprep.mubr.bf16.mxu0 %v975
      %1283 = vmatmul.mubr.bf16.gmra.mrb[0].mxu0 %v708
      %v1284 = vpop.f32.mrb[0].mxu0
      %v1285 = vadd.f32 0.0, %v1284
      %v1286 = vpop.f32.mrb[0].mxu0
      %v1287 = vpop.f32.mrb[0].mxu0
      %v1288 = vadd.f32 0.0, %v1287
      %v1289 = vpop.f32.mrb[0].mxu0
      %1290 = vmatprep.mubr.bf16.mxu0 %v978
      %1291 = vmatmul.mubr.bf16.gmra.mrb[0].mxu0 %v710
      %v1292 = vpop.f32.mrb[0].mxu0
      %v1293 = vadd.f32 0.0, %v1292
      %v1294 = vpop.f32.mrb[0].mxu0
      %v1295 = vpop.f32.mrb[0].mxu0
      %v1296 = vadd.f32 0.0, %v1295
      %v1297 = vpop.f32.mrb[0].mxu0
      %1298 = vmatprep.mubr.bf16.mxu0 %v981
      %1299 = vmatmul.mubr.bf16.gmra.mrb[0].mxu0 %v712
      %v1300 = vpop.f32.mrb[0].mxu0
      %v1301 = vadd.f32 0.0, %v1300
      %v1302 = vpop.f32.mrb[0].mxu0
      %v1303 = vpop.f32.mrb[0].mxu0
      %v1304 = vadd.f32 0.0, %v1303
      %v1305 = vpop.f32.mrb[0].mxu0
      %1306 = vmatprep.mubr.bf16.mxu0 %v984
      %1307 = vmatmul.mubr.bf16.gmra.mrb[0].mxu0 %v714
      %v1308 = vpop.f32.mrb[0].mxu0
      %v1309 = vadd.f32 0.0, %v1308
      %v1310 = vpop.f32.mrb[0].mxu0
      %v1311 = vpop.f32.mrb[0].mxu0
      %v1312 = vadd.f32 0.0, %v1311
      %v1313 = vpop.f32.mrb[0].mxu0
      %1314 = vmatprep.mubr.bf16.mxu0 %v987
      %1315 = vmatmul.mubr.bf16.gmra.mrb[0].mxu0 %v716
      %v1316 = vpop.f32.mrb[0].mxu0
      %v1317 = vadd.f32 0.0, %v1316
      %v1318 = vpop.f32.mrb[0].mxu0
      %v1319 = vpop.f32.mrb[0].mxu0
      %v1320 = vadd.f32 0.0, %v1319
      %v1321 = vpop.f32.mrb[0].mxu0
      %1322 = vmatprep.mubr.bf16.mxu0 %v990
      %1323 = vmatmul.mubr.bf16.gmra.mrb[0].mxu0 %v718
      %v1324 = vpop.f32.mrb[0].mxu0
      %v1325 = vadd.f32 0.0, %v1324
      %v1326 = vpop.f32.mrb[0].mxu0
      %v1327 = vpop.f32.mrb[0].mxu0
      %v1328 = vadd.f32 0.0, %v1327
      %v1329 = vpop.f32.mrb[0].mxu0
      %1330 = vmatprep.mubr.bf16.mxu0 %v993
      %1331 = vmatmul.mubr.bf16.gmra.mrb[0].mxu0 %v720
      %v1332 = vpop.f32.mrb[0].mxu0
      %v1333 = vadd.f32 0.0, %v1332
      %v1334 = vpop.f32.mrb[0].mxu0
      %v1335 = vpop.f32.mrb[0].mxu0
      %v1336 = vadd.f32 0.0, %v1335
      %v1337 = vpop.f32.mrb[0].mxu0
      %1338 = vmatprep.mubr.bf16.mxu0 %v996
      %1339 = vmatmul.mubr.bf16.gmra.mrb[0].mxu0 %v722
      %v1340 = vpop.f32.mrb[0].mxu0
      %v1341 = vadd.f32 0.0, %v1340
      %v1342 = vpop.f32.mrb[0].mxu0
      %v1343 = vpop.f32.mrb[0].mxu0
      %v1344 = vadd.f32 0.0, %v1343
      %v1345 = vpop.f32.mrb[0].mxu0
      %1346 = vmatprep.mubr.bf16.mxu0 %v999
      %1347 = vmatmul.mubr.bf16.gmra.mrb[0].mxu0 %v724
      %v1348 = vpop.f32.mrb[0].mxu0
      %v1349 = vadd.f32 0.0, %v1348
      %v1350 = vpop.f32.mrb[0].mxu0
      %v1351 = vpop.f32.mrb[0].mxu0
      %v1352 = vadd.f32 0.0, %v1351
      %v1353 = vpop.f32.mrb[0].mxu0
      %1354 = vmatprep.mubr.bf16.mxu0 %v1002
      %1355 = vmatmul.mubr.bf16.gmra.mrb[0].mxu0 %v726
      %v1356 = vpop.f32.mrb[0].mxu0
      %v1357 = vadd.f32 0.0, %v1356
      %v1358 = vpop.f32.mrb[0].mxu0
      %v1359 = vpop.f32.mrb[0].mxu0
      %v1360 = vadd.f32 0.0, %v1359
      %v1361 = vpop.f32.mrb[0].mxu0
      %1362 = vmatprep.mubr.bf16.mxu0 %v1005
      %1363 = vmatmul.mubr.bf16.gmra.mrb[0].mxu0 %v728
      %v1364 = vpop.f32.mrb[0].mxu0
      %v1365 = vadd.f32 0.0, %v1364
      %v1366 = vpop.f32.mrb[0].mxu0
      %v1367 = vpop.f32.mrb[0].mxu0
      %v1368 = vadd.f32 0.0, %v1367
      %v1369 = vpop.f32.mrb[0].mxu0
      %1370 = vmatprep.mubr.bf16.mxu0 %v1008
      %1371 = vmatmul.mubr.bf16.gmra.mrb[0].mxu0 %v730
      %v1372 = vpop.f32.mrb[0].mxu0
      %v1373 = vadd.f32 0.0, %v1372
      %v1374 = vpop.f32.mrb[0].mxu0
      %v1375 = vpop.f32.mrb[0].mxu0
      %v1376 = vadd.f32 0.0, %v1375
      %v1377 = vpop.f32.mrb[0].mxu0
      %1378 = vmatprep.mubr.bf16.mxu0 %v1011
      %1379 = vmatmul.mubr.bf16.gmra.mrb[0].mxu0 %v732
      %v1380 = vpop.f32.mrb[0].mxu0
      %v1381 = vadd.f32 0.0, %v1380
      %v1382 = vpop.f32.mrb[0].mxu0
      %v1383 = vpop.f32.mrb[0].mxu0
      %v1384 = vadd.f32 0.0, %v1383
      %v1385 = vpop.f32.mrb[0].mxu0
      %1386 = vmatprep.mubr.bf16.mxu0 %v1014
      %1387 = vmatmul.mubr.bf16.gmra.mrb[0].mxu0 %v734
      %v1388 = vpop.f32.mrb[0].mxu0
      %v1389 = vadd.f32 0.0, %v1388
      %v1390 = vpop.f32.mrb[0].mxu0
      %v1391 = vpop.f32.mrb[0].mxu0
      %v1392 = vadd.f32 0.0, %v1391
      %v1393 = vpop.f32.mrb[0].mxu0
      %1394 = vmatprep.mubr.bf16.mxu0 %v1017
      %1395 = vmatmul.mubr.bf16.gmra.mrb[0].mxu0 %v736
      %v1396 = vpop.f32.mrb[0].mxu0
      %v1397 = vadd.f32 0.0, %v1396
      %v1398 = vpop.f32.mrb[0].mxu0
      %v1399 = vpop.f32.mrb[0].mxu0
      %v1400 = vadd.f32 0.0, %v1399
      %v1401 = vpop.f32.mrb[0].mxu0
      %1402 = vmatprep.mubr.bf16.mxu0 %v1020
      %1403 = vmatmul.mubr.bf16.gmra.mrb[0].mxu0 %v738
      %v1404 = vpop.f32.mrb[0].mxu0
      %v1405 = vadd.f32 0.0, %v1404
      %v1406 = vpop.f32.mrb[0].mxu0
      %v1407 = vpop.f32.mrb[0].mxu0
      %v1408 = vadd.f32 0.0, %v1407
      %v1409 = vpop.f32.mrb[0].mxu0
      %1410 = vmatprep.mubr.bf16.mxu0 %v1023
      %1411 = vmatmul.mubr.bf16.gmra.mrb[0].mxu0 %v740
      %v1412 = vpop.f32.mrb[0].mxu0
      %v1413 = vadd.f32 0.0, %v1412
      %v1414 = vpop.f32.mrb[0].mxu0
      %v1415 = vpop.f32.mrb[0].mxu0
      %v1416 = vadd.f32 0.0, %v1415
      %v1417 = vpop.f32.mrb[0].mxu0
      %1418 = vmatprep.mubr.bf16.mxu0 %v1026
      %1419 = vmatmul.mubr.bf16.gmra.mrb[0].mxu0 %v742
      %v1420 = vpop.f32.mrb[0].mxu0
      %v1421 = vadd.f32 0.0, %v1420
      %v1422 = vpop.f32.mrb[0].mxu0
      %v1423 = vpop.f32.mrb[0].mxu0
      %v1424 = vadd.f32 0.0, %v1423
      %v1425 = vpop.f32.mrb[0].mxu0
      %1426 = vmatprep.mubr.bf16.mxu0 %v1029
      %1427 = vmatmul.mubr.bf16.gmra.mrb[0].mxu0 %v744
      %v1428 = vpop.f32.mrb[0].mxu0
      %v1429 = vadd.f32 0.0, %v1428
      %v1430 = vpop.f32.mrb[0].mxu0
      %v1431 = vpop.f32.mrb[0].mxu0
      %v1432 = vadd.f32 0.0, %v1431
      %v1433 = vpop.f32.mrb[0].mxu0
      %1434 = vmatprep.mubr.bf16.mxu0 %v1032
      %1435 = vmatmul.mubr.bf16.gmra.mrb[0].mxu0 %v746
      %v1436 = vpop.f32.mrb[0].mxu0
      %v1437 = vadd.f32 0.0, %v1436
      %v1438 = vpop.f32.mrb[0].mxu0
      %v1439 = vpop.f32.mrb[0].mxu0
      %v1440 = vadd.f32 0.0, %v1439
      %v1441 = vpop.f32.mrb[0].mxu0
      %1442 = vmatprep.mubr.bf16.mxu0 %v1035
      %1443 = vmatmul.mubr.bf16.gmra.mrb[0].mxu0 %v748
      %v1444 = vpop.f32.mrb[0].mxu0
      %v1445 = vadd.f32 0.0, %v1444
      %v1446 = vpop.f32.mrb[0].mxu0
      %v1447 = vpop.f32.mrb[0].mxu0
      %v1448 = vadd.f32 0.0, %v1447
      %v1449 = vpop.f32.mrb[0].mxu0
      %1450 = vmatprep.mubr.bf16.mxu0 %v1038
      %1451 = vmatmul.mubr.bf16.gmra.mrb[0].mxu0 %v750
      %v1452 = vpop.f32.mrb[0].mxu0
      %v1453 = vadd.f32 0.0, %v1452
      %v1454 = vpop.f32.mrb[0].mxu0
      %v1455 = vpop.f32.mrb[0].mxu0
      %v1456 = vadd.f32 0.0, %v1455
      %v1457 = vpop.f32.mrb[0].mxu0
      %1458 = vmatprep.mubr.bf16.mxu0 %v1041
      %1459 = vmatmul.mubr.bf16.gmra.mrb[0].mxu0 %v752
      %v1460 = vpop.f32.mrb[0].mxu0
      %v1461 = vadd.f32 0.0, %v1460
      %v1462 = vpop.f32.mrb[0].mxu0
      %v1463 = vpop.f32.mrb[0].mxu0
      %v1464 = vadd.f32 0.0, %v1463
      %v1465 = vpop.f32.mrb[0].mxu0
      %1466 = vmatprep.mubr.bf16.mxu0 %v1044
      %1467 = vmatmul.mubr.bf16.gmra.mrb[0].mxu0 %v754
      %v1468 = vpop.f32.mrb[0].mxu0
      %v1469 = vadd.f32 0.0, %v1468
      %v1470 = vpop.f32.mrb[0].mxu0
      %v1471 = vpop.f32.mrb[0].mxu0
      %v1472 = vadd.f32 0.0, %v1471
      %v1473 = vpop.f32.mrb[0].mxu0
      %1474 = vmatprep.mubr.bf16.mxu0 %v1047
      %1475 = vmatmul.mubr.bf16.gmra.mrb[0].mxu0 %v756
      %v1476 = vpop.f32.mrb[0].mxu0
      %v1477 = vadd.f32 0.0, %v1476
      %v1478 = vpop.f32.mrb[0].mxu0
      %v1479 = vpop.f32.mrb[0].mxu0
      %v1480 = vadd.f32 0.0, %v1479
      %v1481 = vpop.f32.mrb[0].mxu0
      %1482 = vmatprep.mubr.bf16.mxu0 %v1050
      %1483 = vmatmul.mubr.bf16.gmra.mrb[0].mxu0 %v758
      %v1484 = vpop.f32.mrb[0].mxu0
      %v1485 = vadd.f32 0.0, %v1484
      %v1486 = vpop.f32.mrb[0].mxu0
      %v1487 = vpop.f32.mrb[0].mxu0
      %v1488 = vadd.f32 0.0, %v1487
      %v1489 = vpop.f32.mrb[0].mxu0
      %1490 = vmatprep.mubr.bf16.mxu0 %v1053
      %1491 = vmatmul.mubr.bf16.gmra.mrb[0].mxu0 %v760
      %v1492 = vpop.f32.mrb[0].mxu0
      %v1493 = vadd.f32 0.0, %v1492
      %v1494 = vpop.f32.mrb[0].mxu0
      %v1495 = vpop.f32.mrb[0].mxu0
      %v1496 = vadd.f32 0.0, %v1495
      %v1497 = vpop.f32.mrb[0].mxu0
      %1498 = vmatprep.mubr.bf16.mxu0 %v1056
      %1499 = vmatmul.mubr.bf16.gmra.mrb[0].mxu0 %v762
      %v1500 = vpop.f32.mrb[0].mxu0
      %v1501 = vadd.f32 0.0, %v1500
      %v1502 = vpop.f32.mrb[0].mxu0
      %v1503 = vpop.f32.mrb[0].mxu0
      %v1504 = vadd.f32 0.0, %v1503
      %v1505 = vpop.f32.mrb[0].mxu0
      %1506 = vmatprep.mubr.bf16.mxu0 %v1059
      %1507 = vmatmul.mubr.bf16.gmra.mrb[0].mxu0 %v764
      %v1508 = vpop.f32.mrb[0].mxu0
      %v1509 = vadd.f32 0.0, %v1508
      %v1510 = vpop.f32.mrb[0].mxu0
      %v1511 = vpop.f32.mrb[0].mxu0
      %v1512 = vadd.f32 0.0, %v1511
      %v1513 = vpop.f32.mrb[0].mxu0
      %1514 = vmatprep.mubr.bf16.mxu0 %v1062
      %1515 = vmatmul.mubr.bf16.gmra.mrb[0].mxu0 %v766
      %v1516 = vpop.f32.mrb[0].mxu0
      %v1517 = vadd.f32 0.0, %v1516
      %v1518 = vpop.f32.mrb[0].mxu0
      %v1519 = vpop.f32.mrb[0].mxu0
      %v1520 = vadd.f32 0.0, %v1519
      %v1521 = vpop.f32.mrb[0].mxu0
      %1522 = vmatprep.mubr.bf16.mxu0 %v1065
      %1523 = vmatmul.mubr.bf16.gmra.mrb[0].mxu0 %v768
      %v1524 = vpop.f32.mrb[0].mxu0
      %v1525 = vadd.f32 0.0, %v1524
      %v1526 = vpop.f32.mrb[0].mxu0
      %v1527 = vpop.f32.mrb[0].mxu0
      %v1528 = vadd.f32 0.0, %v1527
      %v1529 = vpop.f32.mrb[0].mxu0
      %1530 = vmatprep.mubr.bf16.mxu0 %v1068
      %1531 = vmatmul.mubr.bf16.gmra.mrb[0].mxu0 %v770
      %v1532 = vpop.f32.mrb[0].mxu0
      %v1533 = vadd.f32 0.0, %v1532
      %v1534 = vpop.f32.mrb[0].mxu0
      %v1535 = vpop.f32.mrb[0].mxu0
      %v1536 = vadd.f32 0.0, %v1535
      %v1537 = vpop.f32.mrb[0].mxu0
      %1538 = vmatprep.mubr.bf16.mxu0 %v1071
      %1539 = vmatmul.mubr.bf16.gmra.mrb[0].mxu0 %v772
      %v1540 = vpop.f32.mrb[0].mxu0
      %v1541 = vadd.f32 0.0, %v1540
      %v1542 = vpop.f32.mrb[0].mxu0
      %v1543 = vpop.f32.mrb[0].mxu0
      %v1544 = vadd.f32 0.0, %v1543
      %v1545 = vpop.f32.mrb[0].mxu0
      %1546 = vmatprep.mubr.bf16.mxu0 %v1074
      %1547 = vmatmul.mubr.bf16.gmra.mrb[0].mxu0 %v774
      %v1548 = vpop.f32.mrb[0].mxu0
      %v1549 = vadd.f32 0.0, %v1548
      %v1550 = vpop.f32.mrb[0].mxu0
      %v1551 = vpop.f32.mrb[0].mxu0
      %v1552 = vadd.f32 0.0, %v1551
      %v1553 = vpop.f32.mrb[0].mxu0
      %1554 = vmatprep.mubr.bf16.mxu0 %v1077
      %1555 = vmatmul.mubr.bf16.gmra.mrb[0].mxu0 %v776
      %v1556 = vpop.f32.mrb[0].mxu0
      %v1557 = vadd.f32 0.0, %v1556
      %v1558 = vpop.f32.mrb[0].mxu0
      %v1559 = vpop.f32.mrb[0].mxu0
      %v1560 = vadd.f32 0.0, %v1559
      %v1561 = vpop.f32.mrb[0].mxu0
      %1562 = vmatprep.mubr.bf16.mxu0 %v1080
      %1563 = vmatmul.mubr.bf16.gmra.mrb[0].mxu0 %v778
      %v1564 = vpop.f32.mrb[0].mxu0
      %v1565 = vadd.f32 0.0, %v1564
      %v1566 = vpop.f32.mrb[0].mxu0
      %v1567 = vpop.f32.mrb[0].mxu0
      %v1568 = vadd.f32 0.0, %v1567
      %v1569 = vpop.f32.mrb[0].mxu0
      %1570 = vmatprep.mubr.bf16.mxu0 %v1083
      %1571 = vmatmul.mubr.bf16.gmra.mrb[0].mxu0 %v780
      %v1572 = vpop.f32.mrb[0].mxu0
      %v1573 = vadd.f32 0.0, %v1572
      %v1574 = vpop.f32.mrb[0].mxu0
      %v1575 = vpop.f32.mrb[0].mxu0
      %v1576 = vadd.f32 0.0, %v1575
      %v1577 = vpop.f32.mrb[0].mxu0
      %1578 = vmatprep.mubr.bf16.mxu0 %v1086
      %1579 = vmatmul.mubr.bf16.gmra.mrb[0].mxu0 %v782
      %v1580 = vpop.f32.mrb[0].mxu0
      %v1581 = vadd.f32 0.0, %v1580
      %v1582 = vpop.f32.mrb[0].mxu0
      %v1583 = vpop.f32.mrb[0].mxu0
      %v1584 = vadd.f32 0.0, %v1583
      %v1585 = vpop.f32.mrb[0].mxu0
      %1586 = vmatprep.mubr.bf16.mxu0 %v1089
      %1587 = vmatmul.mubr.bf16.gmra.mrb[0].mxu0 %v784
      %v1588 = vpop.f32.mrb[0].mxu0
      %v1589 = vadd.f32 0.0, %v1588
      %v1590 = vpop.f32.mrb[0].mxu0
      %v1591 = vpop.f32.mrb[0].mxu0
      %v1592 = vadd.f32 0.0, %v1591
      %v1593 = vpop.f32.mrb[0].mxu0
      %1594 = vmatprep.mubr.bf16.mxu0 %v1092
      %1595 = vmatmul.mubr.bf16.gmra.mrb[0].mxu0 %v786
      %v1596 = vpop.f32.mrb[0].mxu0
      %v1597 = vadd.f32 0.0, %v1596
      %v1598 = vpop.f32.mrb[0].mxu0
      %v1599 = vpop.f32.mrb[0].mxu0
      %v1600 = vadd.f32 0.0, %v1599
      %v1601 = vpop.f32.mrb[0].mxu0
      %1602 = vmatprep.mubr.bf16.mxu0 %v1095
      %1603 = vmatmul.mubr.bf16.gmra.mrb[0].mxu0 %v788
      %v1604 = vpop.f32.mrb[0].mxu0
      %v1605 = vadd.f32 0.0, %v1604
      %v1606 = vpop.f32.mrb[0].mxu0
      %v1607 = vpop.f32.mrb[0].mxu0
      %v1608 = vadd.f32 0.0, %v1607
      %v1609 = vpop.f32.mrb[0].mxu0
      %1610 = vmatprep.mubr.bf16.mxu0 %v1098
      %1611 = vmatmul.mubr.bf16.gmra.mrb[0].mxu0 %v790
      %v1612 = vpop.f32.mrb[0].mxu0
      %v1613 = vadd.f32 0.0, %v1612
      %v1614 = vpop.f32.mrb[0].mxu0
      %v1615 = vpop.f32.mrb[0].mxu0
      %v1616 = vadd.f32 0.0, %v1615
      %v1617 = vpop.f32.mrb[0].mxu0
      %1618 = vmatprep.mubr.bf16.mxu0 %v1101
      %1619 = vmatmul.mubr.bf16.gmra.mrb[0].mxu0 %v792
      %v1620 = vpop.f32.mrb[0].mxu0
      %v1621 = vadd.f32 0.0, %v1620
      %v1622 = vpop.f32.mrb[0].mxu0
      %v1623 = vpop.f32.mrb[0].mxu0
      %v1624 = vadd.f32 0.0, %v1623
      %v1625 = vpop.f32.mrb[0].mxu0
      %1626 = vmatprep.mubr.bf16.mxu0 %v1104
      %1627 = vmatmul.mubr.bf16.gmra.mrb[0].mxu0 %v794
      %v1628 = vpop.f32.mrb[0].mxu0
      %v1629 = vadd.f32 0.0, %v1628
      %v1630 = vpop.f32.mrb[0].mxu0
      %v1631 = vpop.f32.mrb[0].mxu0
      %v1632 = vadd.f32 0.0, %v1631
      %v1633 = vpop.f32.mrb[0].mxu0
      %1634 = vmatprep.mubr.bf16.mxu0 %v1107
      %1635 = vmatmul.mubr.bf16.gmra.mrb[0].mxu0 %v796
      %v1636 = vpop.f32.mrb[0].mxu0
      %v1637 = vadd.f32 0.0, %v1636
      %v1638 = vpop.f32.mrb[0].mxu0
      %v1639 = vpop.f32.mrb[0].mxu0
      %v1640 = vadd.f32 0.0, %v1639
      %v1641 = vpop.f32.mrb[0].mxu0
      %1642 = vmatprep.mubr.bf16.mxu0 %v1110
      %1643 = vmatmul.mubr.bf16.gmra.mrb[0].mxu0 %v798
      %v1644 = vpop.f32.mrb[0].mxu0
      %v1645 = vadd.f32 0.0, %v1644
      %v1646 = vpop.f32.mrb[0].mxu0
      %v1647 = vpop.f32.mrb[0].mxu0
      %v1648 = vadd.f32 0.0, %v1647
      %v1649 = vpop.f32.mrb[0].mxu0
      %1650 = vmatprep.mubr.bf16.mxu0 %v1113
      %1651 = vmatmul.mubr.bf16.gmra.mrb[0].mxu0 %v800
      %v1652 = vpop.f32.mrb[0].mxu0
      %v1653 = vadd.f32 0.0, %v1652
      %v1654 = vpop.f32.mrb[0].mxu0
      %v1655 = vpop.f32.mrb[0].mxu0
      %v1656 = vadd.f32 0.0, %v1655
      %v1657 = vpop.f32.mrb[0].mxu0
      %1658 = vmatprep.mubr.bf16.mxu0 %v1116
      %1659 = vmatmul.mubr.bf16.gmra.mrb[0].mxu0 %v802
      %v1660 = vpop.f32.mrb[0].mxu0
      %v1661 = vadd.f32 0.0, %v1660
      %v1662 = vpop.f32.mrb[0].mxu0
      %v1663 = vpop.f32.mrb[0].mxu0
      %v1664 = vadd.f32 0.0, %v1663
      %v1665 = vpop.f32.mrb[0].mxu0
      %1666 = vdwg.mxu0
      %v1667 = vadd.f32 %v1157, %v1160
      %v1668 = vadd.f32 %v1667, %v1165
      %v1669 = vadd.f32 %v1668, %v1168
      %v1670 = vadd.f32 %v1669, %v1173
      %v1671 = vadd.f32 %v1670, %v1176
      %v1672 = vadd.f32 %v1671, %v1181
      %v1673 = vadd.f32 %v1672, %v1184
      %v1674 = vadd.f32 %v1673, %v1189
      %v1675 = vadd.f32 %v1674, %v1192
      %v1676 = vadd.f32 %v1675, %v1197
      %v1677 = vadd.f32 %v1676, %v1200
      %v1678 = vadd.f32 %v1677, %v1205
      %v1679 = vadd.f32 %v1678, %v1208
      %v1680 = vadd.f32 %v1679, %v1213
      %v1681 = vadd.f32 %v1680, %v1216
      %v1682 = vadd.f32 %v1681, %v1221
      %v1683 = vadd.f32 %v1682, %v1224
      %v1684 = vadd.f32 %v1683, %v1229
      %v1685 = vadd.f32 %v1684, %v1232
      %v1686 = vadd.f32 %v1685, %v1237
      %v1687 = vadd.f32 %v1686, %v1240
      %v1688 = vadd.f32 %v1687, %v1245
      %v1689 = vadd.f32 %v1688, %v1248
      %v1690 = vadd.f32 %v1689, %v1253
      %v1691 = vadd.f32 %v1690, %v1256
      %v1692 = vadd.f32 %v1691, %v1261
      %v1693 = vadd.f32 %v1692, %v1264
      %v1694 = vadd.f32 %v1693, %v1269
      %v1695 = vadd.f32 %v1694, %v1272
      %v1696 = vadd.f32 %v1695, %v1277
      %v1697 = vadd.f32 %v1696, %v1280
      %v1698 = vadd.f32 %v1697, %v1285
      %v1699 = vadd.f32 %v1698, %v1288
      %v1700 = vadd.f32 %v1699, %v1293
      %v1701 = vadd.f32 %v1700, %v1296
      %v1702 = vadd.f32 %v1701, %v1301
      %v1703 = vadd.f32 %v1702, %v1304
      %v1704 = vadd.f32 %v1703, %v1309
      %v1705 = vadd.f32 %v1704, %v1312
      %v1706 = vadd.f32 %v1705, %v1317
      %v1707 = vadd.f32 %v1706, %v1320
      %v1708 = vadd.f32 %v1707, %v1325
      %v1709 = vadd.f32 %v1708, %v1328
      %v1710 = vadd.f32 %v1709, %v1333
      %v1711 = vadd.f32 %v1710, %v1336
      %v1712 = vadd.f32 %v1711, %v1341
      %v1713 = vadd.f32 %v1712, %v1344
      %v1714 = vadd.f32 %v1713, %v1349
      %v1715 = vadd.f32 %v1714, %v1352
      %v1716 = vadd.f32 %v1715, %v1357
      %v1717 = vadd.f32 %v1716, %v1360
      %v1718 = vadd.f32 %v1717, %v1365
      %v1719 = vadd.f32 %v1718, %v1368
      %v1720 = vadd.f32 %v1719, %v1373
      %v1721 = vadd.f32 %v1720, %v1376
      %v1722 = vadd.f32 %v1721, %v1381
      %v1723 = vadd.f32 %v1722, %v1384
      %v1724 = vadd.f32 %v1723, %v1389
      %v1725 = vadd.f32 %v1724, %v1392
      %v1726 = vadd.f32 %v1725, %v1397
      %v1727 = vadd.f32 %v1726, %v1400
      %v1728 = vadd.f32 %v1727, %v1405
      %v1729 = vadd.f32 %v1728, %v1408
      %v1730 = vadd.f32 %v1729, %v1413
      %v1731 = vadd.f32 %v1730, %v1416
      %v1732 = vadd.f32 %v1731, %v1421
      %v1733 = vadd.f32 %v1732, %v1424
      %v1734 = vadd.f32 %v1733, %v1429
      %v1735 = vadd.f32 %v1734, %v1432
      %v1736 = vadd.f32 %v1735, %v1437
      %v1737 = vadd.f32 %v1736, %v1440
      %v1738 = vadd.f32 %v1737, %v1445
      %v1739 = vadd.f32 %v1738, %v1448
      %v1740 = vadd.f32 %v1739, %v1453
      %v1741 = vadd.f32 %v1740, %v1456
      %v1742 = vadd.f32 %v1741, %v1461
      %v1743 = vadd.f32 %v1742, %v1464
      %v1744 = vadd.f32 %v1743, %v1469
      %v1745 = vadd.f32 %v1744, %v1472
      %v1746 = vadd.f32 %v1745, %v1477
      %v1747 = vadd.f32 %v1746, %v1480
      %v1748 = vadd.f32 %v1747, %v1485
      %v1749 = vadd.f32 %v1748, %v1488
      %v1750 = vadd.f32 %v1749, %v1493
      %v1751 = vadd.f32 %v1750, %v1496
      %v1752 = vadd.f32 %v1751, %v1501
      %v1753 = vadd.f32 %v1752, %v1504
      %v1754 = vadd.f32 %v1753, %v1509
      %v1755 = vadd.f32 %v1754, %v1512
      %v1756 = vadd.f32 %v1755, %v1517
      %v1757 = vadd.f32 %v1756, %v1520
      %v1758 = vadd.f32 %v1757, %v1525
      %v1759 = vadd.f32 %v1758, %v1528
      %v1760 = vadd.f32 %v1759, %v1533
      %v1761 = vadd.f32 %v1760, %v1536
      %v1762 = vadd.f32 %v1761, %v1541
      %v1763 = vadd.f32 %v1762, %v1544
      %v1764 = vadd.f32 %v1763, %v1549
      %v1765 = vadd.f32 %v1764, %v1552
      %v1766 = vadd.f32 %v1765, %v1557
      %v1767 = vadd.f32 %v1766, %v1560
      %v1768 = vadd.f32 %v1767, %v1565
      %v1769 = vadd.f32 %v1768, %v1568
      %v1770 = vadd.f32 %v1769, %v1573
      %v1771 = vadd.f32 %v1770, %v1576
      %v1772 = vadd.f32 %v1771, %v1581
      %v1773 = vadd.f32 %v1772, %v1584
      %v1774 = vadd.f32 %v1773, %v1589
      %v1775 = vadd.f32 %v1774, %v1592
      %v1776 = vadd.f32 %v1775, %v1597
      %v1777 = vadd.f32 %v1776, %v1600
      %v1778 = vadd.f32 %v1777, %v1605
      %v1779 = vadd.f32 %v1778, %v1608
      %v1780 = vadd.f32 %v1779, %v1613
      %v1781 = vadd.f32 %v1780, %v1616
      %v1782 = vadd.f32 %v1781, %v1621
      %v1783 = vadd.f32 %v1782, %v1624
      %v1784 = vadd.f32 %v1783, %v1629
      %v1785 = vadd.f32 %v1784, %v1632
      %v1786 = vadd.f32 %v1785, %v1637
      %v1787 = vadd.f32 %v1786, %v1640
      %v1788 = vadd.f32 %v1787, %v1645
      %v1789 = vadd.f32 %v1788, %v1648
      %v1790 = vadd.f32 %v1789, %v1653
      %v1791 = vadd.f32 %v1790, %v1656
      %v1792 = vadd.f32 %v1791, %v1661
      %v1793 = vadd.f32 %v1792, %v1664
      %v1794 = vrot.slane %v1793, 4
      %v1795 = vadd.f32 %v1793, %v1794
      %v1796 = vrot.slane %v1795, 2
      %v1797 = vadd.f32 %v1795, %v1796
      %v1798 = vrot.slane %v1797, 1
      %v1799 = vadd.f32 %v1797, %v1798
      %v1800 = vrcp.pop 1024.0
      %v1801 = vmul.f32 %v1799, %v1800
      %v1802 = vsub.f32 %v1157, %v1801
      %v1803 = vsub.f32 %v1160, %v1801
      %v1804 = vsub.f32 %v1165, %v1801
      %v1805 = vsub.f32 %v1168, %v1801
      %v1806 = vsub.f32 %v1173, %v1801
      %v1807 = vsub.f32 %v1176, %v1801
      %v1808 = vsub.f32 %v1181, %v1801
      %v1809 = vsub.f32 %v1184, %v1801
      %v1810 = vsub.f32 %v1189, %v1801
      %v1811 = vsub.f32 %v1192, %v1801
      %v1812 = vsub.f32 %v1197, %v1801
      %v1813 = vsub.f32 %v1200, %v1801
      %v1814 = vsub.f32 %v1205, %v1801
      %v1815 = vsub.f32 %v1208, %v1801
      %v1816 = vsub.f32 %v1213, %v1801
      %v1817 = vsub.f32 %v1216, %v1801
      %v1818 = vsub.f32 %v1221, %v1801
      %v1819 = vsub.f32 %v1224, %v1801
      %v1820 = vsub.f32 %v1229, %v1801
      %v1821 = vsub.f32 %v1232, %v1801
      %v1822 = vsub.f32 %v1237, %v1801
      %v1823 = vsub.f32 %v1240, %v1801
      %v1824 = vsub.f32 %v1245, %v1801
      %v1825 = vsub.f32 %v1248, %v1801
      %v1826 = vsub.f32 %v1253, %v1801
      %v1827 = vsub.f32 %v1256, %v1801
      %v1828 = vsub.f32 %v1261, %v1801
      %v1829 = vsub.f32 %v1264, %v1801
      %v1830 = vsub.f32 %v1269, %v1801
      %v1831 = vsub.f32 %v1272, %v1801
      %v1832 = vsub.f32 %v1277, %v1801
      %v1833 = vsub.f32 %v1280, %v1801
      %v1834 = vsub.f32 %v1285, %v1801
      %v1835 = vsub.f32 %v1288, %v1801
      %v1836 = vsub.f32 %v1293, %v1801
      %v1837 = vsub.f32 %v1296, %v1801
      %v1838 = vsub.f32 %v1301, %v1801
      %v1839 = vsub.f32 %v1304, %v1801
      %v1840 = vsub.f32 %v1309, %v1801
      %v1841 = vsub.f32 %v1312, %v1801
      %v1842 = vsub.f32 %v1317, %v1801
      %v1843 = vsub.f32 %v1320, %v1801
      %v1844 = vsub.f32 %v1325, %v1801
      %v1845 = vsub.f32 %v1328, %v1801
      %v1846 = vsub.f32 %v1333, %v1801
      %v1847 = vsub.f32 %v1336, %v1801
      %v1848 = vsub.f32 %v1341, %v1801
      %v1849 = vsub.f32 %v1344, %v1801
      %v1850 = vsub.f32 %v1349, %v1801
      %v1851 = vsub.f32 %v1352, %v1801
      %v1852 = vsub.f32 %v1357, %v1801
      %v1853 = vsub.f32 %v1360, %v1801
      %v1854 = vsub.f32 %v1365, %v1801
      %v1855 = vsub.f32 %v1368, %v1801
      %v1856 = vsub.f32 %v1373, %v1801
      %v1857 = vsub.f32 %v1376, %v1801
      %v1858 = vsub.f32 %v1381, %v1801
      %v1859 = vsub.f32 %v1384, %v1801
      %v1860 = vsub.f32 %v1389, %v1801
      %v1861 = vsub.f32 %v1392, %v1801
      %v1862 = vsub.f32 %v1397, %v1801
      %v1863 = vsub.f32 %v1400, %v1801
      %v1864 = vsub.f32 %v1405, %v1801
      %v1865 = vsub.f32 %v1408, %v1801
      %v1866 = vsub.f32 %v1413, %v1801
      %v1867 = vsub.f32 %v1416, %v1801
      %v1868 = vsub.f32 %v1421, %v1801
      %v1869 = vsub.f32 %v1424, %v1801
      %v1870 = vsub.f32 %v1429, %v1801
      %v1871 = vsub.f32 %v1432, %v1801
      %v1872 = vsub.f32 %v1437, %v1801
      %v1873 = vsub.f32 %v1440, %v1801
      %v1874 = vsub.f32 %v1445, %v1801
      %v1875 = vsub.f32 %v1448, %v1801
      %v1876 = vsub.f32 %v1453, %v1801
      %v1877 = vsub.f32 %v1456, %v1801
      %v1878 = vsub.f32 %v1461, %v1801
      %v1879 = vsub.f32 %v1464, %v1801
      %v1880 = vsub.f32 %v1469, %v1801
      %v1881 = vsub.f32 %v1472, %v1801
      %v1882 = vsub.f32 %v1477, %v1801
      %v1883 = vsub.f32 %v1480, %v1801
      %v1884 = vsub.f32 %v1485, %v1801
      %v1885 = vsub.f32 %v1488, %v1801
      %v1886 = vsub.f32 %v1493, %v1801
      %v1887 = vsub.f32 %v1496, %v1801
      %v1888 = vsub.f32 %v1501, %v1801
      %v1889 = vsub.f32 %v1504, %v1801
      %v1890 = vsub.f32 %v1509, %v1801
      %v1891 = vsub.f32 %v1512, %v1801
      %v1892 = vsub.f32 %v1517, %v1801
      %v1893 = vsub.f32 %v1520, %v1801
      %v1894 = vsub.f32 %v1525, %v1801
      %v1895 = vsub.f32 %v1528, %v1801
      %v1896 = vsub.f32 %v1533, %v1801
      %v1897 = vsub.f32 %v1536, %v1801
      %v1898 = vsub.f32 %v1541, %v1801
      %v1899 = vsub.f32 %v1544, %v1801
      %v1900 = vsub.f32 %v1549, %v1801
      %v1901 = vsub.f32 %v1552, %v1801
      %v1902 = vsub.f32 %v1557, %v1801
      %v1903 = vsub.f32 %v1560, %v1801
      %v1904 = vsub.f32 %v1565, %v1801
      %v1905 = vsub.f32 %v1568, %v1801
      %v1906 = vsub.f32 %v1573, %v1801
      %v1907 = vsub.f32 %v1576, %v1801
      %v1908 = vsub.f32 %v1581, %v1801
      %v1909 = vsub.f32 %v1584, %v1801
      %v1910 = vsub.f32 %v1589, %v1801
      %v1911 = vsub.f32 %v1592, %v1801
      %v1912 = vsub.f32 %v1597, %v1801
      %v1913 = vsub.f32 %v1600, %v1801
      %v1914 = vsub.f32 %v1605, %v1801
      %v1915 = vsub.f32 %v1608, %v1801
      %v1916 = vsub.f32 %v1613, %v1801
      %v1917 = vsub.f32 %v1616, %v1801
      %v1918 = vsub.f32 %v1621, %v1801
      %v1919 = vsub.f32 %v1624, %v1801
      %v1920 = vsub.f32 %v1629, %v1801
      %v1921 = vsub.f32 %v1632, %v1801
      %v1922 = vsub.f32 %v1637, %v1801
      %v1923 = vsub.f32 %v1640, %v1801
      %v1924 = vsub.f32 %v1645, %v1801
      %v1925 = vsub.f32 %v1648, %v1801
      %v1926 = vsub.f32 %v1653, %v1801
      %v1927 = vsub.f32 %v1656, %v1801
      %v1928 = vsub.f32 %v1661, %v1801
      %v1929 = vsub.f32 %v1664, %v1801
      %v1930 = vmul.f32 %v1802, %v1802
      %v1931 = vmul.f32 %v1803, %v1803
      %v1932 = vmul.f32 %v1804, %v1804
      %v1933 = vmul.f32 %v1805, %v1805
      %v1934 = vmul.f32 %v1806, %v1806
      %v1935 = vmul.f32 %v1807, %v1807
      %v1936 = vmul.f32 %v1808, %v1808
      %v1937 = vmul.f32 %v1809, %v1809
      %v1938 = vmul.f32 %v1810, %v1810
      %v1939 = vmul.f32 %v1811, %v1811
      %v1940 = vmul.f32 %v1812, %v1812
      %v1941 = vmul.f32 %v1813, %v1813
      %v1942 = vmul.f32 %v1814, %v1814
      %v1943 = vmul.f32 %v1815, %v1815
      %v1944 = vmul.f32 %v1816, %v1816
      %v1945 = vmul.f32 %v1817, %v1817
      %v1946 = vmul.f32 %v1818, %v1818
      %v1947 = vmul.f32 %v1819, %v1819
      %v1948 = vmul.f32 %v1820, %v1820
      %v1949 = vmul.f32 %v1821, %v1821
      %v1950 = vmul.f32 %v1822, %v1822
      %v1951 = vmul.f32 %v1823, %v1823
      %v1952 = vmul.f32 %v1824, %v1824
      %v1953 = vmul.f32 %v1825, %v1825
      %v1954 = vmul.f32 %v1826, %v1826
      %v1955 = vmul.f32 %v1827, %v1827
      %v1956 = vmul.f32 %v1828, %v1828
      %v1957 = vmul.f32 %v1829, %v1829
      %v1958 = vmul.f32 %v1830, %v1830
      %v1959 = vmul.f32 %v1831, %v1831
      %v1960 = vmul.f32 %v1832, %v1832
      %v1961 = vmul.f32 %v1833, %v1833
      %v1962 = vmul.f32 %v1834, %v1834
      %v1963 = vmul.f32 %v1835, %v1835
      %v1964 = vmul.f32 %v1836, %v1836
      %v1965 = vmul.f32 %v1837, %v1837
      %v1966 = vmul.f32 %v1838, %v1838
      %v1967 = vmul.f32 %v1839, %v1839
      %v1968 = vmul.f32 %v1840, %v1840
      %v1969 = vmul.f32 %v1841, %v1841
      %v1970 = vmul.f32 %v1842, %v1842
      %v1971 = vmul.f32 %v1843, %v1843
      %v1972 = vmul.f32 %v1844, %v1844
      %v1973 = vmul.f32 %v1845, %v1845
      %v1974 = vmul.f32 %v1846, %v1846
      %v1975 = vmul.f32 %v1847, %v1847
      %v1976 = vmul.f32 %v1848, %v1848
      %v1977 = vmul.f32 %v1849, %v1849
      %v1978 = vmul.f32 %v1850, %v1850
      %v1979 = vmul.f32 %v1851, %v1851
      %v1980 = vmul.f32 %v1852, %v1852
      %v1981 = vmul.f32 %v1853, %v1853
      %v1982 = vmul.f32 %v1854, %v1854
      %v1983 = vmul.f32 %v1855, %v1855
      %v1984 = vmul.f32 %v1856, %v1856
      %v1985 = vmul.f32 %v1857, %v1857
      %v1986 = vmul.f32 %v1858, %v1858
      %v1987 = vmul.f32 %v1859, %v1859
      %v1988 = vmul.f32 %v1860, %v1860
      %v1989 = vmul.f32 %v1861, %v1861
      %v1990 = vmul.f32 %v1862, %v1862
      %v1991 = vmul.f32 %v1863, %v1863
      %v1992 = vmul.f32 %v1864, %v1864
      %v1993 = vmul.f32 %v1865, %v1865
      %v1994 = vmul.f32 %v1866, %v1866
      %v1995 = vmul.f32 %v1867, %v1867
      %v1996 = vmul.f32 %v1868, %v1868
      %v1997 = vmul.f32 %v1869, %v1869
      %v1998 = vmul.f32 %v1870, %v1870
      %v1999 = vmul.f32 %v1871, %v1871
      %v2000 = vmul.f32 %v1872, %v1872
      %v2001 = vmul.f32 %v1873, %v1873
      %v2002 = vmul.f32 %v1874, %v1874
      %v2003 = vmul.f32 %v1875, %v1875
      %v2004 = vmul.f32 %v1876, %v1876
      %v2005 = vmul.f32 %v1877, %v1877
      %v2006 = vmul.f32 %v1878, %v1878
      %v2007 = vmul.f32 %v1879, %v1879
      %v2008 = vmul.f32 %v1880, %v1880
      %v2009 = vmul.f32 %v1881, %v1881
      %v2010 = vmul.f32 %v1882, %v1882
      %v2011 = vmul.f32 %v1883, %v1883
      %v2012 = vmul.f32 %v1884, %v1884
      %v2013 = vmul.f32 %v1885, %v1885
      %v2014 = vmul.f32 %v1886, %v1886
      %v2015 = vmul.f32 %v1887, %v1887
      %v2016 = vmul.f32 %v1888, %v1888
      %v2017 = vmul.f32 %v1889, %v1889
      %v2018 = vmul.f32 %v1890, %v1890
      %v2019 = vmul.f32 %v1891, %v1891
      %v2020 = vmul.f32 %v1892, %v1892
      %v2021 = vmul.f32 %v1893, %v1893
      %v2022 = vmul.f32 %v1894, %v1894
      %v2023 = vmul.f32 %v1895, %v1895
      %v2024 = vmul.f32 %v1896, %v1896
      %v2025 = vmul.f32 %v1897, %v1897
      %v2026 = vmul.f32 %v1898, %v1898
      %v2027 = vmul.f32 %v1899, %v1899
      %v2028 = vmul.f32 %v1900, %v1900
      %v2029 = vmul.f32 %v1901, %v1901
      %v2030 = vmul.f32 %v1902, %v1902
      %v2031 = vmul.f32 %v1903, %v1903
      %v2032 = vmul.f32 %v1904, %v1904
      %v2033 = vmul.f32 %v1905, %v1905
      %v2034 = vmul.f32 %v1906, %v1906
      %v2035 = vmul.f32 %v1907, %v1907
      %v2036 = vmul.f32 %v1908, %v1908
      %v2037 = vmul.f32 %v1909, %v1909
      %v2038 = vmul.f32 %v1910, %v1910
      %v2039 = vmul.f32 %v1911, %v1911
      %v2040 = vmul.f32 %v1912, %v1912
      %v2041 = vmul.f32 %v1913, %v1913
      %v2042 = vmul.f32 %v1914, %v1914
      %v2043 = vmul.f32 %v1915, %v1915
      %v2044 = vmul.f32 %v1916, %v1916
      %v2045 = vmul.f32 %v1917, %v1917
      %v2046 = vmul.f32 %v1918, %v1918
      %v2047 = vmul.f32 %v1919, %v1919
      %v2048 = vmul.f32 %v1920, %v1920
      %v2049 = vmul.f32 %v1921, %v1921
      %v2050 = vmul.f32 %v1922, %v1922
      %v2051 = vmul.f32 %v1923, %v1923
      %v2052 = vmul.f32 %v1924, %v1924
      %v2053 = vmul.f32 %v1925, %v1925
      %v2054 = vmul.f32 %v1926, %v1926
      %v2055 = vmul.f32 %v1927, %v1927
      %v2056 = vmul.f32 %v1928, %v1928
      %v2057 = vmul.f32 %v1929, %v1929
      %v2058 = vadd.f32 %v1930, %v1931
      %v2059 = vadd.f32 %v2058, %v1932
      %v2060 = vadd.f32 %v2059, %v1933
      %v2061 = vadd.f32 %v2060, %v1934
      %v2062 = vadd.f32 %v2061, %v1935
      %v2063 = vadd.f32 %v2062, %v1936
      %v2064 = vadd.f32 %v2063, %v1937
      %v2065 = vadd.f32 %v2064, %v1938
      %v2066 = vadd.f32 %v2065, %v1939
      %v2067 = vadd.f32 %v2066, %v1940
      %v2068 = vadd.f32 %v2067, %v1941
      %v2069 = vadd.f32 %v2068, %v1942
      %v2070 = vadd.f32 %v2069, %v1943
      %v2071 = vadd.f32 %v2070, %v1944
      %v2072 = vadd.f32 %v2071, %v1945
      %v2073 = vadd.f32 %v2072, %v1946
      %v2074 = vadd.f32 %v2073, %v1947
      %v2075 = vadd.f32 %v2074, %v1948
      %v2076 = vadd.f32 %v2075, %v1949
      %v2077 = vadd.f32 %v2076, %v1950
      %v2078 = vadd.f32 %v2077, %v1951
      %v2079 = vadd.f32 %v2078, %v1952
      %v2080 = vadd.f32 %v2079, %v1953
      %v2081 = vadd.f32 %v2080, %v1954
      %v2082 = vadd.f32 %v2081, %v1955
      %v2083 = vadd.f32 %v2082, %v1956
      %v2084 = vadd.f32 %v2083, %v1957
      %v2085 = vadd.f32 %v2084, %v1958
      %v2086 = vadd.f32 %v2085, %v1959
      %v2087 = vadd.f32 %v2086, %v1960
      %v2088 = vadd.f32 %v2087, %v1961
      %v2089 = vadd.f32 %v2088, %v1962
      %v2090 = vadd.f32 %v2089, %v1963
      %v2091 = vadd.f32 %v2090, %v1964
      %v2092 = vadd.f32 %v2091, %v1965
      %v2093 = vadd.f32 %v2092, %v1966
      %v2094 = vadd.f32 %v2093, %v1967
      %v2095 = vadd.f32 %v2094, %v1968
      %v2096 = vadd.f32 %v2095, %v1969
      %v2097 = vadd.f32 %v2096, %v1970
      %v2098 = vadd.f32 %v2097, %v1971
      %v2099 = vadd.f32 %v2098, %v1972
      %v2100 = vadd.f32 %v2099, %v1973
      %v2101 = vadd.f32 %v2100, %v1974
      %v2102 = vadd.f32 %v2101, %v1975
      %v2103 = vadd.f32 %v2102, %v1976
      %v2104 = vadd.f32 %v2103, %v1977
      %v2105 = vadd.f32 %v2104, %v1978
      %v2106 = vadd.f32 %v2105, %v1979
      %v2107 = vadd.f32 %v2106, %v1980
      %v2108 = vadd.f32 %v2107, %v1981
      %v2109 = vadd.f32 %v2108, %v1982
      %v2110 = vadd.f32 %v2109, %v1983
      %v2111 = vadd.f32 %v2110, %v1984
      %v2112 = vadd.f32 %v2111, %v1985
      %v2113 = vadd.f32 %v2112, %v1986
      %v2114 = vadd.f32 %v2113, %v1987
      %v2115 = vadd.f32 %v2114, %v1988
      %v2116 = vadd.f32 %v2115, %v1989
      %v2117 = vadd.f32 %v2116, %v1990
      %v2118 = vadd.f32 %v2117, %v1991
      %v2119 = vadd.f32 %v2118, %v1992
      %v2120 = vadd.f32 %v2119, %v1993
      %v2121 = vadd.f32 %v2120, %v1994
      %v2122 = vadd.f32 %v2121, %v1995
      %v2123 = vadd.f32 %v2122, %v1996
      %v2124 = vadd.f32 %v2123, %v1997
      %v2125 = vadd.f32 %v2124, %v1998
      %v2126 = vadd.f32 %v2125, %v1999
      %v2127 = vadd.f32 %v2126, %v2000
      %v2128 = vadd.f32 %v2127, %v2001
      %v2129 = vadd.f32 %v2128, %v2002
      %v2130 = vadd.f32 %v2129, %v2003
      %v2131 = vadd.f32 %v2130, %v2004
      %v2132 = vadd.f32 %v2131, %v2005
      %v2133 = vadd.f32 %v2132, %v2006
      %v2134 = vadd.f32 %v2133, %v2007
      %v2135 = vadd.f32 %v2134, %v2008
      %v2136 = vadd.f32 %v2135, %v2009
      %v2137 = vadd.f32 %v2136, %v2010
      %v2138 = vadd.f32 %v2137, %v2011
      %v2139 = vadd.f32 %v2138, %v2012
      %v2140 = vadd.f32 %v2139, %v2013
      %v2141 = vadd.f32 %v2140, %v2014
      %v2142 = vadd.f32 %v2141, %v2015
      %v2143 = vadd.f32 %v2142, %v2016
      %v2144 = vadd.f32 %v2143, %v2017
      %v2145 = vadd.f32 %v2144, %v2018
      %v2146 = vadd.f32 %v2145, %v2019
      %v2147 = vadd.f32 %v2146, %v2020
      %v2148 = vadd.f32 %v2147, %v2021
      %v2149 = vadd.f32 %v2148, %v2022
      %v2150 = vadd.f32 %v2149, %v2023
      %v2151 = vadd.f32 %v2150, %v2024
      %v2152 = vadd.f32 %v2151, %v2025
      %v2153 = vadd.f32 %v2152, %v2026
      %v2154 = vadd.f32 %v2153, %v2027
      %v2155 = vadd.f32 %v2154, %v2028
      %v2156 = vadd.f32 %v2155, %v2029
      %v2157 = vadd.f32 %v2156, %v2030
      %v2158 = vadd.f32 %v2157, %v2031
      %v2159 = vadd.f32 %v2158, %v2032
      %v2160 = vadd.f32 %v2159, %v2033
      %v2161 = vadd.f32 %v2160, %v2034
      %v2162 = vadd.f32 %v2161, %v2035
      %v2163 = vadd.f32 %v2162, %v2036
      %v2164 = vadd.f32 %v2163, %v2037
      %v2165 = vadd.f32 %v2164, %v2038
      %v2166 = vadd.f32 %v2165, %v2039
      %v2167 = vadd.f32 %v2166, %v2040
      %v2168 = vadd.f32 %v2167, %v2041
      %v2169 = vadd.f32 %v2168, %v2042
      %v2170 = vadd.f32 %v2169, %v2043
      %v2171 = vadd.f32 %v2170, %v2044
      %v2172 = vadd.f32 %v2171, %v2045
      %v2173 = vadd.f32 %v2172, %v2046
      %v2174 = vadd.f32 %v2173, %v2047
      %v2175 = vadd.f32 %v2174, %v2048
      %v2176 = vadd.f32 %v2175, %v2049
      %v2177 = vadd.f32 %v2176, %v2050
      %v2178 = vadd.f32 %v2177, %v2051
      %v2179 = vadd.f32 %v2178, %v2052
      %v2180 = vadd.f32 %v2179, %v2053
      %v2181 = vadd.f32 %v2180, %v2054
      %v2182 = vadd.f32 %v2181, %v2055
      %v2183 = vadd.f32 %v2182, %v2056
      %v2184 = vadd.f32 %v2183, %v2057
      %v2185 = vrot.slane %v2184, 4
      %v2186 = vadd.f32 %v2184, %v2185
      %v2187 = vrot.slane %v2186, 2
      %v2188 = vadd.f32 %v2186, %v2187
      %v2189 = vrot.slane %v2188, 1
      %v2190 = vadd.f32 %v2188, %v2189
      %v2191 = vmul.f32 %v2190, %v1800
      %v2192 = vadd.f32 %v2191, 1e-05
      %v2193 = vrsqrt.pop %v2192
      %v2194 = vmul.f32 %v1802, %v2193
      %v2195 = vmul.f32 %v1803, %v2193
      %v2196 = vmul.f32 %v1804, %v2193
      %v2197 = vmul.f32 %v1805, %v2193
      %v2198 = vmul.f32 %v1806, %v2193
      %v2199 = vmul.f32 %v1807, %v2193
      %v2200 = vmul.f32 %v1808, %v2193
      %v2201 = vmul.f32 %v1809, %v2193
      %v2202 = vmul.f32 %v1810, %v2193
      %v2203 = vmul.f32 %v1811, %v2193
      %v2204 = vmul.f32 %v1812, %v2193
      %v2205 = vmul.f32 %v1813, %v2193
      %v2206 = vmul.f32 %v1814, %v2193
      %v2207 = vmul.f32 %v1815, %v2193
      %v2208 = vmul.f32 %v1816, %v2193
      %v2209 = vmul.f32 %v1817, %v2193
      %v2210 = vmul.f32 %v1818, %v2193
      %v2211 = vmul.f32 %v1819, %v2193
      %v2212 = vmul.f32 %v1820, %v2193
      %v2213 = vmul.f32 %v1821, %v2193
      %v2214 = vmul.f32 %v1822, %v2193
      %v2215 = vmul.f32 %v1823, %v2193
      %v2216 = vmul.f32 %v1824, %v2193
      %v2217 = vmul.f32 %v1825, %v2193
      %v2218 = vmul.f32 %v1826, %v2193
      %v2219 = vmul.f32 %v1827, %v2193
      %v2220 = vmul.f32 %v1828, %v2193
      %v2221 = vmul.f32 %v1829, %v2193
      %v2222 = vmul.f32 %v1830, %v2193
      %v2223 = vmul.f32 %v1831, %v2193
      %v2224 = vmul.f32 %v1832, %v2193
      %v2225 = vmul.f32 %v1833, %v2193
      %v2226 = vmul.f32 %v1834, %v2193
      %v2227 = vmul.f32 %v1835, %v2193
      %v2228 = vmul.f32 %v1836, %v2193
      %v2229 = vmul.f32 %v1837, %v2193
      %v2230 = vmul.f32 %v1838, %v2193
      %v2231 = vmul.f32 %v1839, %v2193
      %v2232 = vmul.f32 %v1840, %v2193
      %v2233 = vmul.f32 %v1841, %v2193
      %v2234 = vmul.f32 %v1842, %v2193
      %v2235 = vmul.f32 %v1843, %v2193
      %v2236 = vmul.f32 %v1844, %v2193
      %v2237 = vmul.f32 %v1845, %v2193
      %v2238 = vmul.f32 %v1846, %v2193
      %v2239 = vmul.f32 %v1847, %v2193
      %v2240 = vmul.f32 %v1848, %v2193
      %v2241 = vmul.f32 %v1849, %v2193
      %v2242 = vmul.f32 %v1850, %v2193
      %v2243 = vmul.f32 %v1851, %v2193
      %v2244 = vmul.f32 %v1852, %v2193
      %v2245 = vmul.f32 %v1853, %v2193
      %v2246 = vmul.f32 %v1854, %v2193
      %v2247 = vmul.f32 %v1855, %v2193
      %v2248 = vmul.f32 %v1856, %v2193
      %v2249 = vmul.f32 %v1857, %v2193
      %v2250 = vmul.f32 %v1858, %v2193
      %v2251 = vmul.f32 %v1859, %v2193
      %v2252 = vmul.f32 %v1860, %v2193
      %v2253 = vmul.f32 %v1861, %v2193
      %v2254 = vmul.f32 %v1862, %v2193
      %v2255 = vmul.f32 %v1863, %v2193
      %v2256 = vmul.f32 %v1864, %v2193
      %v2257 = vmul.f32 %v1865, %v2193
      %v2258 = vmul.f32 %v1866, %v2193
      %v2259 = vmul.f32 %v1867, %v2193
      %v2260 = vmul.f32 %v1868, %v2193
      %v2261 = vmul.f32 %v1869, %v2193
      %v2262 = vmul.f32 %v1870, %v2193
      %v2263 = vmul.f32 %v1871, %v2193
      %v2264 = vmul.f32 %v1872, %v2193
      %v2265 = vmul.f32 %v1873, %v2193
      %v2266 = vmul.f32 %v1874, %v2193
      %v2267 = vmul.f32 %v1875, %v2193
      %v2268 = vmul.f32 %v1876, %v2193
      %v2269 = vmul.f32 %v1877, %v2193
      %v2270 = vmul.f32 %v1878, %v2193
      %v2271 = vmul.f32 %v1879, %v2193
      %v2272 = vmul.f32 %v1880, %v2193
      %v2273 = vmul.f32 %v1881, %v2193
      %v2274 = vmul.f32 %v1882, %v2193
      %v2275 = vmul.f32 %v1883, %v2193
      %v2276 = vmul.f32 %v1884, %v2193
      %v2277 = vmul.f32 %v1885, %v2193
      %v2278 = vmul.f32 %v1886, %v2193
      %v2279 = vmul.f32 %v1887, %v2193
      %v2280 = vmul.f32 %v1888, %v2193
      %v2281 = vmul.f32 %v1889, %v2193
      %v2282 = vmul.f32 %v1890, %v2193
      %v2283 = vmul.f32 %v1891, %v2193
      %v2284 = vmul.f32 %v1892, %v2193
      %v2285 = vmul.f32 %v1893, %v2193
      %v2286 = vmul.f32 %v1894, %v2193
      %v2287 = vmul.f32 %v1895, %v2193
      %v2288 = vmul.f32 %v1896, %v2193
      %v2289 = vmul.f32 %v1897, %v2193
      %v2290 = vmul.f32 %v1898, %v2193
      %v2291 = vmul.f32 %v1899, %v2193
      %v2292 = vmul.f32 %v1900, %v2193
      %v2293 = vmul.f32 %v1901, %v2193
      %v2294 = vmul.f32 %v1902, %v2193
      %v2295 = vmul.f32 %v1903, %v2193
      %v2296 = vmul.f32 %v1904, %v2193
      %v2297 = vmul.f32 %v1905, %v2193
      %v2298 = vmul.f32 %v1906, %v2193
      %v2299 = vmul.f32 %v1907, %v2193
      %v2300 = vmul.f32 %v1908, %v2193
      %v2301 = vmul.f32 %v1909, %v2193
      %v2302 = vmul.f32 %v1910, %v2193
      %v2303 = vmul.f32 %v1911, %v2193
      %v2304 = vmul.f32 %v1912, %v2193
      %v2305 = vmul.f32 %v1913, %v2193
      %v2306 = vmul.f32 %v1914, %v2193
      %v2307 = vmul.f32 %v1915, %v2193
      %v2308 = vmul.f32 %v1916, %v2193
      %v2309 = vmul.f32 %v1917, %v2193
      %v2310 = vmul.f32 %v1918, %v2193
      %v2311 = vmul.f32 %v1919, %v2193
      %v2312 = vmul.f32 %v1920, %v2193
      %v2313 = vmul.f32 %v1921, %v2193
      %v2314 = vmul.f32 %v1922, %v2193
      %v2315 = vmul.f32 %v1923, %v2193
      %v2316 = vmul.f32 %v1924, %v2193
      %v2317 = vmul.f32 %v1925, %v2193
      %v2318 = vmul.f32 %v1926, %v2193
      %v2319 = vmul.f32 %v1927, %v2193
      %v2320 = vmul.f32 %v1928, %v2193
      %v2321 = vmul.f32 %v1929, %v2193
      %vm2322 = vcmp.ge.f32.partialorder %v2194, 0.0
      %vm2323 = vcmp.ge.f32.partialorder %v2195, 0.0
      %vm2324 = vcmp.ge.f32.partialorder %v2196, 0.0
      %vm2325 = vcmp.ge.f32.partialorder %v2197, 0.0
      %vm2326 = vcmp.ge.f32.partialorder %v2198, 0.0
      %vm2327 = vcmp.ge.f32.partialorder %v2199, 0.0
      %vm2328 = vcmp.ge.f32.partialorder %v2200, 0.0
      %vm2329 = vcmp.ge.f32.partialorder %v2201, 0.0
      %vm2330 = vcmp.ge.f32.partialorder %v2202, 0.0
      %vm2331 = vcmp.ge.f32.partialorder %v2203, 0.0
      %vm2332 = vcmp.ge.f32.partialorder %v2204, 0.0
      %vm2333 = vcmp.ge.f32.partialorder %v2205, 0.0
      %vm2334 = vcmp.ge.f32.partialorder %v2206, 0.0
      %vm2335 = vcmp.ge.f32.partialorder %v2207, 0.0
      %vm2336 = vcmp.ge.f32.partialorder %v2208, 0.0
      %vm2337 = vcmp.ge.f32.partialorder %v2209, 0.0
      %vm2338 = vcmp.ge.f32.partialorder %v2210, 0.0
      %vm2339 = vcmp.ge.f32.partialorder %v2211, 0.0
      %vm2340 = vcmp.ge.f32.partialorder %v2212, 0.0
      %vm2341 = vcmp.ge.f32.partialorder %v2213, 0.0
      %vm2342 = vcmp.ge.f32.partialorder %v2214, 0.0
      %vm2343 = vcmp.ge.f32.partialorder %v2215, 0.0
      %vm2344 = vcmp.ge.f32.partialorder %v2216, 0.0
      %vm2345 = vcmp.ge.f32.partialorder %v2217, 0.0
      %vm2346 = vcmp.ge.f32.partialorder %v2218, 0.0
      %vm2347 = vcmp.ge.f32.partialorder %v2219, 0.0
      %vm2348 = vcmp.ge.f32.partialorder %v2220, 0.0
      %vm2349 = vcmp.ge.f32.partialorder %v2221, 0.0
      %vm2350 = vcmp.ge.f32.partialorder %v2222, 0.0
      %vm2351 = vcmp.ge.f32.partialorder %v2223, 0.0
      %vm2352 = vcmp.ge.f32.partialorder %v2224, 0.0
      %vm2353 = vcmp.ge.f32.partialorder %v2225, 0.0
      %vm2354 = vcmp.ge.f32.partialorder %v2226, 0.0
      %vm2355 = vcmp.ge.f32.partialorder %v2227, 0.0
      %vm2356 = vcmp.ge.f32.partialorder %v2228, 0.0
      %vm2357 = vcmp.ge.f32.partialorder %v2229, 0.0
      %vm2358 = vcmp.ge.f32.partialorder %v2230, 0.0
      %vm2359 = vcmp.ge.f32.partialorder %v2231, 0.0
      %vm2360 = vcmp.ge.f32.partialorder %v2232, 0.0
      %vm2361 = vcmp.ge.f32.partialorder %v2233, 0.0
      %vm2362 = vcmp.ge.f32.partialorder %v2234, 0.0
      %vm2363 = vcmp.ge.f32.partialorder %v2235, 0.0
      %vm2364 = vcmp.ge.f32.partialorder %v2236, 0.0
      %vm2365 = vcmp.ge.f32.partialorder %v2237, 0.0
      %vm2366 = vcmp.ge.f32.partialorder %v2238, 0.0
      %vm2367 = vcmp.ge.f32.partialorder %v2239, 0.0
      %vm2368 = vcmp.ge.f32.partialorder %v2240, 0.0
      %vm2369 = vcmp.ge.f32.partialorder %v2241, 0.0
      %vm2370 = vcmp.ge.f32.partialorder %v2242, 0.0
      %vm2371 = vcmp.ge.f32.partialorder %v2243, 0.0
      %vm2372 = vcmp.ge.f32.partialorder %v2244, 0.0
      %vm2373 = vcmp.ge.f32.partialorder %v2245, 0.0
      %vm2374 = vcmp.ge.f32.partialorder %v2246, 0.0
      %vm2375 = vcmp.ge.f32.partialorder %v2247, 0.0
      %vm2376 = vcmp.ge.f32.partialorder %v2248, 0.0
      %vm2377 = vcmp.ge.f32.partialorder %v2249, 0.0
      %vm2378 = vcmp.ge.f32.partialorder %v2250, 0.0
      %vm2379 = vcmp.ge.f32.partialorder %v2251, 0.0
      %vm2380 = vcmp.ge.f32.partialorder %v2252, 0.0
      %vm2381 = vcmp.ge.f32.partialorder %v2253, 0.0
      %vm2382 = vcmp.ge.f32.partialorder %v2254, 0.0
      %vm2383 = vcmp.ge.f32.partialorder %v2255, 0.0
      %vm2384 = vcmp.ge.f32.partialorder %v2256, 0.0
      %vm2385 = vcmp.ge.f32.partialorder %v2257, 0.0
      %vm2386 = vcmp.ge.f32.partialorder %v2258, 0.0
      %vm2387 = vcmp.ge.f32.partialorder %v2259, 0.0
      %vm2388 = vcmp.ge.f32.partialorder %v2260, 0.0
      %vm2389 = vcmp.ge.f32.partialorder %v2261, 0.0
      %vm2390 = vcmp.ge.f32.partialorder %v2262, 0.0
      %vm2391 = vcmp.ge.f32.partialorder %v2263, 0.0
      %vm2392 = vcmp.ge.f32.partialorder %v2264, 0.0
      %vm2393 = vcmp.ge.f32.partialorder %v2265, 0.0
      %vm2394 = vcmp.ge.f32.partialorder %v2266, 0.0
      %vm2395 = vcmp.ge.f32.partialorder %v2267, 0.0
      %vm2396 = vcmp.ge.f32.partialorder %v2268, 0.0
      %vm2397 = vcmp.ge.f32.partialorder %v2269, 0.0
      %vm2398 = vcmp.ge.f32.partialorder %v2270, 0.0
      %vm2399 = vcmp.ge.f32.partialorder %v2271, 0.0
      %vm2400 = vcmp.ge.f32.partialorder %v2272, 0.0
      %vm2401 = vcmp.ge.f32.partialorder %v2273, 0.0
      %vm2402 = vcmp.ge.f32.partialorder %v2274, 0.0
      %vm2403 = vcmp.ge.f32.partialorder %v2275, 0.0
      %vm2404 = vcmp.ge.f32.partialorder %v2276, 0.0
      %vm2405 = vcmp.ge.f32.partialorder %v2277, 0.0
      %vm2406 = vcmp.ge.f32.partialorder %v2278, 0.0
      %vm2407 = vcmp.ge.f32.partialorder %v2279, 0.0
      %vm2408 = vcmp.ge.f32.partialorder %v2280, 0.0
      %vm2409 = vcmp.ge.f32.partialorder %v2281, 0.0
      %vm2410 = vcmp.ge.f32.partialorder %v2282, 0.0
      %vm2411 = vcmp.ge.f32.partialorder %v2283, 0.0
      %vm2412 = vcmp.ge.f32.partialorder %v2284, 0.0
      %vm2413 = vcmp.ge.f32.partialorder %v2285, 0.0
      %vm2414 = vcmp.ge.f32.partialorder %v2286, 0.0
      %vm2415 = vcmp.ge.f32.partialorder %v2287, 0.0
      %vm2416 = vcmp.ge.f32.partialorder %v2288, 0.0
      %vm2417 = vcmp.ge.f32.partialorder %v2289, 0.0
      %vm2418 = vcmp.ge.f32.partialorder %v2290, 0.0
      %vm2419 = vcmp.ge.f32.partialorder %v2291, 0.0
      %vm2420 = vcmp.ge.f32.partialorder %v2292, 0.0
      %vm2421 = vcmp.ge.f32.partialorder %v2293, 0.0
      %vm2422 = vcmp.ge.f32.partialorder %v2294, 0.0
      %vm2423 = vcmp.ge.f32.partialorder %v2295, 0.0
      %vm2424 = vcmp.ge.f32.partialorder %v2296, 0.0
      %vm2425 = vcmp.ge.f32.partialorder %v2297, 0.0
      %vm2426 = vcmp.ge.f32.partialorder %v2298, 0.0
      %vm2427 = vcmp.ge.f32.partialorder %v2299, 0.0
      %vm2428 = vcmp.ge.f32.partialorder %v2300, 0.0
      %vm2429 = vcmp.ge.f32.partialorder %v2301, 0.0
      %vm2430 = vcmp.ge.f32.partialorder %v2302, 0.0
      %vm2431 = vcmp.ge.f32.partialorder %v2303, 0.0
      %vm2432 = vcmp.ge.f32.partialorder %v2304, 0.0
      %vm2433 = vcmp.ge.f32.partialorder %v2305, 0.0
      %vm2434 = vcmp.ge.f32.partialorder %v2306, 0.0
      %vm2435 = vcmp.ge.f32.partialorder %v2307, 0.0
      %vm2436 = vcmp.ge.f32.partialorder %v2308, 0.0
      %vm2437 = vcmp.ge.f32.partialorder %v2309, 0.0
      %vm2438 = vcmp.ge.f32.partialorder %v2310, 0.0
      %vm2439 = vcmp.ge.f32.partialorder %v2311, 0.0
      %vm2440 = vcmp.ge.f32.partialorder %v2312, 0.0
      %vm2441 = vcmp.ge.f32.partialorder %v2313, 0.0
      %vm2442 = vcmp.ge.f32.partialorder %v2314, 0.0
      %vm2443 = vcmp.ge.f32.partialorder %v2315, 0.0
      %vm2444 = vcmp.ge.f32.partialorder %v2316, 0.0
      %vm2445 = vcmp.ge.f32.partialorder %v2317, 0.0
      %vm2446 = vcmp.ge.f32.partialorder %v2318, 0.0
      %vm2447 = vcmp.ge.f32.partialorder %v2319, 0.0
      %vm2448 = vcmp.ge.f32.partialorder %v2320, 0.0
      %vm2449 = vcmp.ge.f32.partialorder %v2321, 0.0
      %v2450 = vmul.f32 %v2194, 0.01
      %v2451 = vmul.f32 %v2195, 0.01
      %v2452 = vmul.f32 %v2196, 0.01
      %v2453 = vmul.f32 %v2197, 0.01
      %v2454 = vmul.f32 %v2198, 0.01
      %v2455 = vmul.f32 %v2199, 0.01
      %v2456 = vmul.f32 %v2200, 0.01
      %v2457 = vmul.f32 %v2201, 0.01
      %v2458 = vmul.f32 %v2202, 0.01
      %v2459 = vmul.f32 %v2203, 0.01
      %v2460 = vmul.f32 %v2204, 0.01
      %v2461 = vmul.f32 %v2205, 0.01
      %v2462 = vmul.f32 %v2206, 0.01
      %v2463 = vmul.f32 %v2207, 0.01
      %v2464 = vmul.f32 %v2208, 0.01
      %v2465 = vmul.f32 %v2209, 0.01
      %v2466 = vmul.f32 %v2210, 0.01
      %v2467 = vmul.f32 %v2211, 0.01
      %v2468 = vmul.f32 %v2212, 0.01
      %v2469 = vmul.f32 %v2213, 0.01
      %v2470 = vmul.f32 %v2214, 0.01
      %v2471 = vmul.f32 %v2215, 0.01
      %v2472 = vmul.f32 %v2216, 0.01
      %v2473 = vmul.f32 %v2217, 0.01
      %v2474 = vmul.f32 %v2218, 0.01
      %v2475 = vmul.f32 %v2219, 0.01
      %v2476 = vmul.f32 %v2220, 0.01
      %v2477 = vmul.f32 %v2221, 0.01
      %v2478 = vmul.f32 %v2222, 0.01
      %v2479 = vmul.f32 %v2223, 0.01
      %v2480 = vmul.f32 %v2224, 0.01
      %v2481 = vmul.f32 %v2225, 0.01
      %v2482 = vmul.f32 %v2226, 0.01
      %v2483 = vmul.f32 %v2227, 0.01
      %v2484 = vmul.f32 %v2228, 0.01
      %v2485 = vmul.f32 %v2229, 0.01
      %v2486 = vmul.f32 %v2230, 0.01
      %v2487 = vmul.f32 %v2231, 0.01
      %v2488 = vmul.f32 %v2232, 0.01
      %v2489 = vmul.f32 %v2233, 0.01
      %v2490 = vmul.f32 %v2234, 0.01
      %v2491 = vmul.f32 %v2235, 0.01
      %v2492 = vmul.f32 %v2236, 0.01
      %v2493 = vmul.f32 %v2237, 0.01
      %v2494 = vmul.f32 %v2238, 0.01
      %v2495 = vmul.f32 %v2239, 0.01
      %v2496 = vmul.f32 %v2240, 0.01
      %v2497 = vmul.f32 %v2241, 0.01
      %v2498 = vmul.f32 %v2242, 0.01
      %v2499 = vmul.f32 %v2243, 0.01
      %v2500 = vmul.f32 %v2244, 0.01
      %v2501 = vmul.f32 %v2245, 0.01
      %v2502 = vmul.f32 %v2246, 0.01
      %v2503 = vmul.f32 %v2247, 0.01
      %v2504 = vmul.f32 %v2248, 0.01
      %v2505 = vmul.f32 %v2249, 0.01
      %v2506 = vmul.f32 %v2250, 0.01
      %v2507 = vmul.f32 %v2251, 0.01
      %v2508 = vmul.f32 %v2252, 0.01
      %v2509 = vmul.f32 %v2253, 0.01
      %v2510 = vmul.f32 %v2254, 0.01
      %v2511 = vmul.f32 %v2255, 0.01
      %v2512 = vmul.f32 %v2256, 0.01
      %v2513 = vmul.f32 %v2257, 0.01
      %v2514 = vmul.f32 %v2258, 0.01
      %v2515 = vmul.f32 %v2259, 0.01
      %v2516 = vmul.f32 %v2260, 0.01
      %v2517 = vmul.f32 %v2261, 0.01
      %v2518 = vmul.f32 %v2262, 0.01
      %v2519 = vmul.f32 %v2263, 0.01
      %v2520 = vmul.f32 %v2264, 0.01
      %v2521 = vmul.f32 %v2265, 0.01
      %v2522 = vmul.f32 %v2266, 0.01
      %v2523 = vmul.f32 %v2267, 0.01
      %v2524 = vmul.f32 %v2268, 0.01
      %v2525 = vmul.f32 %v2269, 0.01
      %v2526 = vmul.f32 %v2270, 0.01
      %v2527 = vmul.f32 %v2271, 0.01
      %v2528 = vmul.f32 %v2272, 0.01
      %v2529 = vmul.f32 %v2273, 0.01
      %v2530 = vmul.f32 %v2274, 0.01
      %v2531 = vmul.f32 %v2275, 0.01
      %v2532 = vmul.f32 %v2276, 0.01
      %v2533 = vmul.f32 %v2277, 0.01
      %v2534 = vmul.f32 %v2278, 0.01
      %v2535 = vmul.f32 %v2279, 0.01
      %v2536 = vmul.f32 %v2280, 0.01
      %v2537 = vmul.f32 %v2281, 0.01
      %v2538 = vmul.f32 %v2282, 0.01
      %v2539 = vmul.f32 %v2283, 0.01
      %v2540 = vmul.f32 %v2284, 0.01
      %v2541 = vmul.f32 %v2285, 0.01
      %v2542 = vmul.f32 %v2286, 0.01
      %v2543 = vmul.f32 %v2287, 0.01
      %v2544 = vmul.f32 %v2288, 0.01
      %v2545 = vmul.f32 %v2289, 0.01
      %v2546 = vmul.f32 %v2290, 0.01
      %v2547 = vmul.f32 %v2291, 0.01
      %v2548 = vmul.f32 %v2292, 0.01
      %v2549 = vmul.f32 %v2293, 0.01
      %v2550 = vmul.f32 %v2294, 0.01
      %v2551 = vmul.f32 %v2295, 0.01
      %v2552 = vmul.f32 %v2296, 0.01
      %v2553 = vmul.f32 %v2297, 0.01
      %v2554 = vmul.f32 %v2298, 0.01
      %v2555 = vmul.f32 %v2299, 0.01
      %v2556 = vmul.f32 %v2300, 0.01
      %v2557 = vmul.f32 %v2301, 0.01
      %v2558 = vmul.f32 %v2302, 0.01
      %v2559 = vmul.f32 %v2303, 0.01
      %v2560 = vmul.f32 %v2304, 0.01
      %v2561 = vmul.f32 %v2305, 0.01
      %v2562 = vmul.f32 %v2306, 0.01
      %v2563 = vmul.f32 %v2307, 0.01
      %v2564 = vmul.f32 %v2308, 0.01
      %v2565 = vmul.f32 %v2309, 0.01
      %v2566 = vmul.f32 %v2310, 0.01
      %v2567 = vmul.f32 %v2311, 0.01
      %v2568 = vmul.f32 %v2312, 0.01
      %v2569 = vmul.f32 %v2313, 0.01
      %v2570 = vmul.f32 %v2314, 0.01
      %v2571 = vmul.f32 %v2315, 0.01
      %v2572 = vmul.f32 %v2316, 0.01
      %v2573 = vmul.f32 %v2317, 0.01
      %v2574 = vmul.f32 %v2318, 0.01
      %v2575 = vmul.f32 %v2319, 0.01
      %v2576 = vmul.f32 %v2320, 0.01
      %v2577 = vmul.f32 %v2321, 0.01
      %v2578 = vsel %vm2322, %v2194, %v2450
      %v2579 = vsel %vm2323, %v2195, %v2451
      %v2580 = vsel %vm2324, %v2196, %v2452
      %v2581 = vsel %vm2325, %v2197, %v2453
      %v2582 = vsel %vm2326, %v2198, %v2454
      %v2583 = vsel %vm2327, %v2199, %v2455
      %v2584 = vsel %vm2328, %v2200, %v2456
      %v2585 = vsel %vm2329, %v2201, %v2457
      %v2586 = vsel %vm2330, %v2202, %v2458
      %v2587 = vsel %vm2331, %v2203, %v2459
      %v2588 = vsel %vm2332, %v2204, %v2460
      %v2589 = vsel %vm2333, %v2205, %v2461
      %v2590 = vsel %vm2334, %v2206, %v2462
      %v2591 = vsel %vm2335, %v2207, %v2463
      %v2592 = vsel %vm2336, %v2208, %v2464
      %v2593 = vsel %vm2337, %v2209, %v2465
      %v2594 = vsel %vm2338, %v2210, %v2466
      %v2595 = vsel %vm2339, %v2211, %v2467
      %v2596 = vsel %vm2340, %v2212, %v2468
      %v2597 = vsel %vm2341, %v2213, %v2469
      %v2598 = vsel %vm2342, %v2214, %v2470
      %v2599 = vsel %vm2343, %v2215, %v2471
      %v2600 = vsel %vm2344, %v2216, %v2472
      %v2601 = vsel %vm2345, %v2217, %v2473
      %v2602 = vsel %vm2346, %v2218, %v2474
      %v2603 = vsel %vm2347, %v2219, %v2475
      %v2604 = vsel %vm2348, %v2220, %v2476
      %v2605 = vsel %vm2349, %v2221, %v2477
      %v2606 = vsel %vm2350, %v2222, %v2478
      %v2607 = vsel %vm2351, %v2223, %v2479
      %v2608 = vsel %vm2352, %v2224, %v2480
      %v2609 = vsel %vm2353, %v2225, %v2481
      %v2610 = vsel %vm2354, %v2226, %v2482
      %v2611 = vsel %vm2355, %v2227, %v2483
      %v2612 = vsel %vm2356, %v2228, %v2484
      %v2613 = vsel %vm2357, %v2229, %v2485
      %v2614 = vsel %vm2358, %v2230, %v2486
      %v2615 = vsel %vm2359, %v2231, %v2487
      %v2616 = vsel %vm2360, %v2232, %v2488
      %v2617 = vsel %vm2361, %v2233, %v2489
      %v2618 = vsel %vm2362, %v2234, %v2490
      %v2619 = vsel %vm2363, %v2235, %v2491
      %v2620 = vsel %vm2364, %v2236, %v2492
      %v2621 = vsel %vm2365, %v2237, %v2493
      %v2622 = vsel %vm2366, %v2238, %v2494
      %v2623 = vsel %vm2367, %v2239, %v2495
      %v2624 = vsel %vm2368, %v2240, %v2496
      %v2625 = vsel %vm2369, %v2241, %v2497
      %v2626 = vsel %vm2370, %v2242, %v2498
      %v2627 = vsel %vm2371, %v2243, %v2499
      %v2628 = vsel %vm2372, %v2244, %v2500
      %v2629 = vsel %vm2373, %v2245, %v2501
      %v2630 = vsel %vm2374, %v2246, %v2502
      %v2631 = vsel %vm2375, %v2247, %v2503
      %v2632 = vsel %vm2376, %v2248, %v2504
      %v2633 = vsel %vm2377, %v2249, %v2505
      %v2634 = vsel %vm2378, %v2250, %v2506
      %v2635 = vsel %vm2379, %v2251, %v2507
      %v2636 = vsel %vm2380, %v2252, %v2508
      %v2637 = vsel %vm2381, %v2253, %v2509
      %v2638 = vsel %vm2382, %v2254, %v2510
      %v2639 = vsel %vm2383, %v2255, %v2511
      %v2640 = vsel %vm2384, %v2256, %v2512
      %v2641 = vsel %vm2385, %v2257, %v2513
      %v2642 = vsel %vm2386, %v2258, %v2514
      %v2643 = vsel %vm2387, %v2259, %v2515
      %v2644 = vsel %vm2388, %v2260, %v2516
      %v2645 = vsel %vm2389, %v2261, %v2517
      %v2646 = vsel %vm2390, %v2262, %v2518
      %v2647 = vsel %vm2391, %v2263, %v2519
      %v2648 = vsel %vm2392, %v2264, %v2520
      %v2649 = vsel %vm2393, %v2265, %v2521
      %v2650 = vsel %vm2394, %v2266, %v2522
      %v2651 = vsel %vm2395, %v2267, %v2523
      %v2652 = vsel %vm2396, %v2268, %v2524
      %v2653 = vsel %vm2397, %v2269, %v2525
      %v2654 = vsel %vm2398, %v2270, %v2526
      %v2655 = vsel %vm2399, %v2271, %v2527
      %v2656 = vsel %vm2400, %v2272, %v2528
      %v2657 = vsel %vm2401, %v2273, %v2529
      %v2658 = vsel %vm2402, %v2274, %v2530
      %v2659 = vsel %vm2403, %v2275, %v2531
      %v2660 = vsel %vm2404, %v2276, %v2532
      %v2661 = vsel %vm2405, %v2277, %v2533
      %v2662 = vsel %vm2406, %v2278, %v2534
      %v2663 = vsel %vm2407, %v2279, %v2535
      %v2664 = vsel %vm2408, %v2280, %v2536
      %v2665 = vsel %vm2409, %v2281, %v2537
      %v2666 = vsel %vm2410, %v2282, %v2538
      %v2667 = vsel %vm2411, %v2283, %v2539
      %v2668 = vsel %vm2412, %v2284, %v2540
      %v2669 = vsel %vm2413, %v2285, %v2541
      %v2670 = vsel %vm2414, %v2286, %v2542
      %v2671 = vsel %vm2415, %v2287, %v2543
      %v2672 = vsel %vm2416, %v2288, %v2544
      %v2673 = vsel %vm2417, %v2289, %v2545
      %v2674 = vsel %vm2418, %v2290, %v2546
      %v2675 = vsel %vm2419, %v2291, %v2547
      %v2676 = vsel %vm2420, %v2292, %v2548
      %v2677 = vsel %vm2421, %v2293, %v2549
      %v2678 = vsel %vm2422, %v2294, %v2550
      %v2679 = vsel %vm2423, %v2295, %v2551
      %v2680 = vsel %vm2424, %v2296, %v2552
      %v2681 = vsel %vm2425, %v2297, %v2553
      %v2682 = vsel %vm2426, %v2298, %v2554
      %v2683 = vsel %vm2427, %v2299, %v2555
      %v2684 = vsel %vm2428, %v2300, %v2556
      %v2685 = vsel %vm2429, %v2301, %v2557
      %v2686 = vsel %vm2430, %v2302, %v2558
      %v2687 = vsel %vm2431, %v2303, %v2559
      %v2688 = vsel %vm2432, %v2304, %v2560
      %v2689 = vsel %vm2433, %v2305, %v2561
      %v2690 = vsel %vm2434, %v2306, %v2562
      %v2691 = vsel %vm2435, %v2307, %v2563
      %v2692 = vsel %vm2436, %v2308, %v2564
      %v2693 = vsel %vm2437, %v2309, %v2565
      %v2694 = vsel %vm2438, %v2310, %v2566
      %v2695 = vsel %vm2439, %v2311, %v2567
      %v2696 = vsel %vm2440, %v2312, %v2568
      %v2697 = vsel %vm2441, %v2313, %v2569
      %v2698 = vsel %vm2442, %v2314, %v2570
      %v2699 = vsel %vm2443, %v2315, %v2571
      %v2700 = vsel %vm2444, %v2316, %v2572
      %v2701 = vsel %vm2445, %v2317, %v2573
      %v2702 = vsel %vm2446, %v2318, %v2574
      %v2703 = vsel %vm2447, %v2319, %v2575
      %v2704 = vsel %vm2448, %v2320, %v2576
      %v2705 = vsel %vm2449, %v2321, %v2577
      %2706 = vst [vmem:[%s143] sm:$0xff] %v2578
      %2707 = vst [vmem:[%s143 + $0x8] sm:$0xff] %v2579
      %2708 = vst [vmem:[%s143 + $0x10] sm:$0xff] %v2580
      %2709 = vst [vmem:[%s143 + $0x18] sm:$0xff] %v2581
      %2710 = vst [vmem:[%s143 + $0x20] sm:$0xff] %v2582
      %2711 = vst [vmem:[%s143 + $0x28] sm:$0xff] %v2583
      %2712 = vst [vmem:[%s143 + $0x30] sm:$0xff] %v2584
      %2713 = vst [vmem:[%s143 + $0x38] sm:$0xff] %v2585
      %2714 = vst [vmem:[%s143 + $0x40] sm:$0xff] %v2586
      %2715 = vst [vmem:[%s143 + $0x48] sm:$0xff] %v2587
      %2716 = vst [vmem:[%s143 + $0x50] sm:$0xff] %v2588
      %2717 = vst [vmem:[%s143 + $0x58] sm:$0xff] %v2589
      %2718 = vst [vmem:[%s143 + $0x60] sm:$0xff] %v2590
      %2719 = vst [vmem:[%s143 + $0x68] sm:$0xff] %v2591
      %2720 = vst [vmem:[%s143 + $0x70] sm:$0xff] %v2592
      %2721 = vst [vmem:[%s143 + $0x78] sm:$0xff] %v2593
      %2722 = vst [vmem:[%s143 + $0x80] sm:$0xff] %v2594
      %2723 = vst [vmem:[%s143 + $0x88] sm:$0xff] %v2595
      %2724 = vst [vmem:[%s143 + $0x90] sm:$0xff] %v2596
      %2725 = vst [vmem:[%s143 + $0x98] sm:$0xff] %v2597
      %2726 = vst [vmem:[%s143 + $0xa0] sm:$0xff] %v2598
      %2727 = vst [vmem:[%s143 + $0xa8] sm:$0xff] %v2599
      %2728 = vst [vmem:[%s143 + $0xb0] sm:$0xff] %v2600
      %2729 = vst [vmem:[%s143 + $0xb8] sm:$0xff] %v2601
      %2730 = vst [vmem:[%s143 + $0xc0] sm:$0xff] %v2602
      %2731 = vst [vmem:[%s143 + $0xc8] sm:$0xff] %v2603
      %2732 = vst [vmem:[%s143 + $0xd0] sm:$0xff] %v2604
      %2733 = vst [vmem:[%s143 + $0xd8] sm:$0xff] %v2605
      %2734 = vst [vmem:[%s143 + $0xe0] sm:$0xff] %v2606
      %2735 = vst [vmem:[%s143 + $0xe8] sm:$0xff] %v2607
      %2736 = vst [vmem:[%s143 + $0xf0] sm:$0xff] %v2608
      %2737 = vst [vmem:[%s143 + $0xf8] sm:$0xff] %v2609
      %2738 = vst [vmem:[%s143 + $0x100] sm:$0xff] %v2610
      %2739 = vst [vmem:[%s143 + $0x108] sm:$0xff] %v2611
      %2740 = vst [vmem:[%s143 + $0x110] sm:$0xff] %v2612
      %2741 = vst [vmem:[%s143 + $0x118] sm:$0xff] %v2613
      %2742 = vst [vmem:[%s143 + $0x120] sm:$0xff] %v2614
      %2743 = vst [vmem:[%s143 + $0x128] sm:$0xff] %v2615
      %2744 = vst [vmem:[%s143 + $0x130] sm:$0xff] %v2616
      %2745 = vst [vmem:[%s143 + $0x138] sm:$0xff] %v2617
      %2746 = vst [vmem:[%s143 + $0x140] sm:$0xff] %v2618
      %2747 = vst [vmem:[%s143 + $0x148] sm:$0xff] %v2619
      %2748 = vst [vmem:[%s143 + $0x150] sm:$0xff] %v2620
      %2749 = vst [vmem:[%s143 + $0x158] sm:$0xff] %v2621
      %2750 = vst [vmem:[%s143 + $0x160] sm:$0xff] %v2622
      %2751 = vst [vmem:[%s143 + $0x168] sm:$0xff] %v2623
      %2752 = vst [vmem:[%s143 + $0x170] sm:$0xff] %v2624
      %2753 = vst [vmem:[%s143 + $0x178] sm:$0xff] %v2625
      %2754 = vst [vmem:[%s143 + $0x180] sm:$0xff] %v2626
      %2755 = vst [vmem:[%s143 + $0x188] sm:$0xff] %v2627
      %2756 = vst [vmem:[%s143 + $0x190] sm:$0xff] %v2628
      %2757 = vst [vmem:[%s143 + $0x198] sm:$0xff] %v2629
      %2758 = vst [vmem:[%s143 + $0x1a0] sm:$0xff] %v2630
      %2759 = vst [vmem:[%s143 + $0x1a8] sm:$0xff] %v2631
      %2760 = vst [vmem:[%s143 + $0x1b0] sm:$0xff] %v2632
      %2761 = vst [vmem:[%s143 + $0x1b8] sm:$0xff] %v2633
      %2762 = vst [vmem:[%s143 + $0x1c0] sm:$0xff] %v2634
      %2763 = vst [vmem:[%s143 + $0x1c8] sm:$0xff] %v2635
      %2764 = vst [vmem:[%s143 + $0x1d0] sm:$0xff] %v2636
      %2765 = vst [vmem:[%s143 + $0x1d8] sm:$0xff] %v2637
      %2766 = vst [vmem:[%s143 + $0x1e0] sm:$0xff] %v2638
      %2767 = vst [vmem:[%s143 + $0x1e8] sm:$0xff] %v2639
      %2768 = vst [vmem:[%s143 + $0x1f0] sm:$0xff] %v2640
      %2769 = vst [vmem:[%s143 + $0x1f8] sm:$0xff] %v2641
      %2770 = vst [vmem:[%s143 + $0x200] sm:$0xff] %v2642
      %2771 = vst [vmem:[%s143 + $0x208] sm:$0xff] %v2643
      %2772 = vst [vmem:[%s143 + $0x210] sm:$0xff] %v2644
      %2773 = vst [vmem:[%s143 + $0x218] sm:$0xff] %v2645
      %2774 = vst [vmem:[%s143 + $0x220] sm:$0xff] %v2646
      %2775 = vst [vmem:[%s143 + $0x228] sm:$0xff] %v2647
      %2776 = vst [vmem:[%s143 + $0x230] sm:$0xff] %v2648
      %2777 = vst [vmem:[%s143 + $0x238] sm:$0xff] %v2649
      %2778 = vst [vmem:[%s143 + $0x240] sm:$0xff] %v2650
      %2779 = vst [vmem:[%s143 + $0x248] sm:$0xff] %v2651
      %2780 = vst [vmem:[%s143 + $0x250] sm:$0xff] %v2652
      %2781 = vst [vmem:[%s143 + $0x258] sm:$0xff] %v2653
      %2782 = vst [vmem:[%s143 + $0x260] sm:$0xff] %v2654
      %2783 = vst [vmem:[%s143 + $0x268] sm:$0xff] %v2655
      %2784 = vst [vmem:[%s143 + $0x270] sm:$0xff] %v2656
      %2785 = vst [vmem:[%s143 + $0x278] sm:$0xff] %v2657
      %2786 = vst [vmem:[%s143 + $0x280] sm:$0xff] %v2658
      %2787 = vst [vmem:[%s143 + $0x288] sm:$0xff] %v2659
      %2788 = vst [vmem:[%s143 + $0x290] sm:$0xff] %v2660
      %2789 = vst [vmem:[%s143 + $0x298] sm:$0xff] %v2661
      %2790 = vst [vmem:[%s143 + $0x2a0] sm:$0xff] %v2662
      %2791 = vst [vmem:[%s143 + $0x2a8] sm:$0xff] %v2663
      %2792 = vst [vmem:[%s143 + $0x2b0] sm:$0xff] %v2664
      %2793 = vst [vmem:[%s143 + $0x2b8] sm:$0xff] %v2665
      %2794 = vst [vmem:[%s143 + $0x2c0] sm:$0xff] %v2666
      %2795 = vst [vmem:[%s143 + $0x2c8] sm:$0xff] %v2667
      %2796 = vst [vmem:[%s143 + $0x2d0] sm:$0xff] %v2668
      %2797 = vst [vmem:[%s143 + $0x2d8] sm:$0xff] %v2669
      %2798 = vst [vmem:[%s143 + $0x2e0] sm:$0xff] %v2670
      %2799 = vst [vmem:[%s143 + $0x2e8] sm:$0xff] %v2671
      %2800 = vst [vmem:[%s143 + $0x2f0] sm:$0xff] %v2672
      %2801 = vst [vmem:[%s143 + $0x2f8] sm:$0xff] %v2673
      %2802 = vst [vmem:[%s143 + $0x300] sm:$0xff] %v2674
      %2803 = vst [vmem:[%s143 + $0x308] sm:$0xff] %v2675
      %2804 = vst [vmem:[%s143 + $0x310] sm:$0xff] %v2676
      %2805 = vst [vmem:[%s143 + $0x318] sm:$0xff] %v2677
      %2806 = vst [vmem:[%s143 + $0x320] sm:$0xff] %v2678
      %2807 = vst [vmem:[%s143 + $0x328] sm:$0xff] %v2679
      %2808 = vst [vmem:[%s143 + $0x330] sm:$0xff] %v2680
      %2809 = vst [vmem:[%s143 + $0x338] sm:$0xff] %v2681
      %2810 = vst [vmem:[%s143 + $0x340] sm:$0xff] %v2682
      %2811 = vst [vmem:[%s143 + $0x348] sm:$0xff] %v2683
      %2812 = vst [vmem:[%s143 + $0x350] sm:$0xff] %v2684
      %2813 = vst [vmem:[%s143 + $0x358] sm:$0xff] %v2685
      %2814 = vst [vmem:[%s143 + $0x360] sm:$0xff] %v2686
      %2815 = vst [vmem:[%s143 + $0x368] sm:$0xff] %v2687
      %2816 = vst [vmem:[%s143 + $0x370] sm:$0xff] %v2688
      %2817 = vst [vmem:[%s143 + $0x378] sm:$0xff] %v2689
      %2818 = vst [vmem:[%s143 + $0x380] sm:$0xff] %v2690
      %2819 = vst [vmem:[%s143 + $0x388] sm:$0xff] %v2691
      %2820 = vst [vmem:[%s143 + $0x390] sm:$0xff] %v2692
      %2821 = vst [vmem:[%s143 + $0x398] sm:$0xff] %v2693
      %2822 = vst [vmem:[%s143 + $0x3a0] sm:$0xff] %v2694
      %2823 = vst [vmem:[%s143 + $0x3a8] sm:$0xff] %v2695
      %2824 = vst [vmem:[%s143 + $0x3b0] sm:$0xff] %v2696
      %2825 = vst [vmem:[%s143 + $0x3b8] sm:$0xff] %v2697
      %2826 = vst [vmem:[%s143 + $0x3c0] sm:$0xff] %v2698
      %2827 = vst [vmem:[%s143 + $0x3c8] sm:$0xff] %v2699
      %2828 = vst [vmem:[%s143 + $0x3d0] sm:$0xff] %v2700
      %2829 = vst [vmem:[%s143 + $0x3d8] sm:$0xff] %v2701
      %2830 = vst [vmem:[%s143 + $0x3e0] sm:$0xff] %v2702
      %2831 = vst [vmem:[%s143 + $0x3e8] sm:$0xff] %v2703
      %2832 = vst [vmem:[%s143 + $0x3f0] sm:$0xff] %v2704
      %2833 = vst [vmem:[%s143 + $0x3f8] sm:$0xff] %v2705
      %p2834 = scmp.lt.s32.totalorder %s13, 1
      %s2835 = scalar_select %p2834, %s13, 1
      %s2836 = smul.addr %s2835, 128
      %s2837 = smul.addr %s2836, 8
      %s2838 = scalar_lea.vmem %s2, %s2837
      // Predicated region
      $region29: #{style_encoder_mlp.10} parent=27 // pred_check
        %p2839 = pneg %p78
      $region30: #{style_encoder_mlp.10} parent=27 // pred_check_branch
        %2841 = sbr.rel (%p2839) target = $region32
      $region31: #{style_encoder_mlp.10} parent=27 // pred_region
        _
      $region32: #{style_encoder_mlp.10} parent=27 // pred_fallthru
        _
    $region28: #{style_encoder_mlp.10} parent=5 // pred_fallthru
      _
    %p2842 = scmp.le.s32.totalorder 2, %s8
    // Predicated region
    $region33: #{style_encoder_mlp.10} parent=5 // pred_check
      %p2843 = pneg %p2842
    $region34: #{style_encoder_mlp.10} parent=5 // pred_check_branch
      %2845 = sbr.rel (%p2843) target = $region36
    $region35: #{style_encoder_mlp.10} parent=5 // pred_region
      %s2846 = ssub.s32 %s8, 2
      // Predicated region
      $region37: #{style_encoder_mlp.10} parent=35 // pred_check
        %p2847 = pneg %p84
      $region38: #{style_encoder_mlp.10} parent=35 // pred_check_branch
        %2849 = sbr.rel (%p2847) target = $region40
      $region39: #{style_encoder_mlp.10} parent=35 // pred_region
        %p2850 = scmp.lt.s32.totalorder %s14, 1
        %s2851 = scalar_select %p2850, %s14, 1
        %s2852 = smul.addr %s2851, 128
        %s2853 = smul.addr %s2852, 8
        %s2854 = scalar_lea.vmem %s2, %s2853
      $region40: #{style_encoder_mlp.10} parent=35 // pred_fallthru
        _
    $region36: #{style_encoder_mlp.10} parent=5 // pred_fallthru
      _
  $region6: #{style_encoder_mlp.10} parent=0 // loop_footer
    %s12 = sadd.s32 1, %s8
  $region7: #{style_encoder_mlp.10} parent=0 // loop_footer_branch
    %7 = sbr.rel target = $region3
  $region8: #{style_encoder_mlp.10} parent=0 // loop_exit
    _

// kernel: style_encoder_mlp.11
$region0: #{style_encoder_mlp.11}
  #allocation0 [shape = 'u32[]', space=smem, size = 0x4, offset = 0x4, fixed_abs, tag = 'smem constant byte address 0x4 - core index']
  #allocation1 [shape = 'u32[144,128]{1,0:T(1,128)}', space=vmem, size = 0x12000, scoped, tag = 'internal scratch']
  %s0 = inlined_call_operand.vmem [shape: bf16[2,256,128], index: 0, kind: input, shape index: {}]
  %s1 = inlined_call_operand.vmem [shape: bf16[128,128], index: 1, kind: input, shape index: {}]
  %s2 = inlined_call_operand.vmem [shape: f32[2,256,128], index: 2, kind: output, shape index: {}]
  %s3 = sld [smem:[#allocation0]]
  $region41: #{style_encoder_mlp.11} parent=0
    _
  %s5 = ssub.s32 1, %s3
  %s6 = scalar_select 0, %s5, %s3
  loop: start=0, step=1, limit=4
  $region2: #{style_encoder_mlp.11} parent=0 // loop_pre_header
    _
  $region3: #{style_encoder_mlp.11} parent=0 // loop_header
    %s8 = sphi 0, %s12
    %p9 = scmp.ge.s32.totalorder %s8, 4
    %s18 = sphi 0, %s20
    %s21 = sphi 0, %s18
    %s22 = sphi 0, %s21
    %s38 = sphi 0, %s22
    %s42 = sphi 0, %s42
    %s44 = sphi 0, %s42
    %s45 = sphi 0, %s44
    %s59 = sphi 0, %s45
    %s65 = sphi 0, %s67
    %s68 = sphi 0, %s65
    %s69 = sphi 0, %s68
    %s85 = sphi 0, %s69
  $region4: #{style_encoder_mlp.11} parent=0 // loop_header_branch
    %11 = sbr.rel (%p9) target = $region8
  $region5: #{style_encoder_mlp.11} parent=0 // loop_body
    %s13 = ssub.s32 %s8, 1
    %s14 = ssub.s32 %s8, 2
    %s15 = sadd.s32 %s8, 1
    %s16 = ssub.s32 %s8, %s15
    %p17 = scmp.eq.s32.totalorder %s16, 0
    %s19 = sadd.s32 %s18, 1
    %s20 = scalar_select %p17, %s18, %s19
    %p23 = pneg %p17
    %p24 = scmp.eq.s32.totalorder %s8, 1
    %p25 = por %p23, %p24
    %p26 = scmp.ne.s32.totalorder %s18, %s21
    %p27 = scmp.eq.s32.totalorder %s8, 0
    %p28 = por %p26, %p27
    %p29 = scmp.ne.s32.totalorder %s18, %s21
    %p30 = scmp.eq.s32.totalorder %s13, 1
    %p31 = por %p29, %p30
    %p32 = scmp.ne.s32.totalorder %s21, %s22
    %p33 = scmp.eq.s32.totalorder %s13, 0
    %p34 = por %p32, %p33
    %p35 = scmp.ne.s32.totalorder %s21, %s22
    %p36 = scmp.eq.s32.totalorder %s14, 1
    %p37 = por %p35, %p36
    %p39 = scmp.ne.s32.totalorder %s22, %s38
    %p40 = scmp.eq.s32.totalorder %s14, 0
    %p41 = por %p39, %p40
    %s43 = sadd.s32 %s42, 1
    %p46 = scmp.eq.s32.totalorder %s8, 1
    %p47 = scmp.ne.s32.totalorder %s42, %s44
    %p48 = scmp.eq.s32.totalorder %s8, 0
    %p49 = por %p47, %p48
    %p50 = scmp.ne.s32.totalorder %s42, %s44
    %p51 = scmp.eq.s32.totalorder %s13, 1
    %p52 = por %p50, %p51
    %p53 = scmp.ne.s32.totalorder %s44, %s45
    %p54 = scmp.eq.s32.totalorder %s13, 0
    %p55 = por %p53, %p54
    %p56 = scmp.ne.s32.totalorder %s44, %s45
    %p57 = scmp.eq.s32.totalorder %s14, 1
    %p58 = por %p56, %p57
    %p60 = scmp.ne.s32.totalorder %s45, %s59
    %p61 = scmp.eq.s32.totalorder %s14, 0
    %p62 = por %p60, %p61
    %s63 = ssub.s32 %s8, %s15
    %p64 = scmp.eq.s32.totalorder %s63, 0
    %s66 = sadd.s32 %s65, 1
    %s67 = scalar_select %p64, %s65, %s66
    %p70 = pneg %p64
    %p71 = scmp.eq.s32.totalorder %s8, 1
    %p72 = por %p70, %p71
    %p73 = scmp.ne.s32.totalorder %s65, %s68
    %p74 = scmp.eq.s32.totalorder %s8, 0
    %p75 = por %p73, %p74
    %p76 = scmp.ne.s32.totalorder %s65, %s68
    %p77 = scmp.eq.s32.totalorder %s13, 1
    %p78 = por %p76, %p77
    %p79 = scmp.ne.s32.totalorder %s68, %s69
    %p80 = scmp.eq.s32.totalorder %s13, 0
    %p81 = por %p79, %p80
    %p82 = scmp.ne.s32.totalorder %s68, %s69
    %p83 = scmp.eq.s32.totalorder %s14, 1
    %p84 = por %p82, %p83
    %p86 = scmp.ne.s32.totalorder %s69, %s85
    %p87 = scmp.eq.s32.totalorder %s14, 0
    %p88 = por %p86, %p87
    %p89 = scmp.le.s32.totalorder 1, %s8
    %p90 = scmp.lt.s32.totalorder %s8, 3
    %p91 = pnand %p89, %p90
    %p92 = pneg %p91
    // Predicated region
    $region9: #{style_encoder_mlp.11} parent=5 // pred_check
      _
    $region10: #{style_encoder_mlp.11} parent=5 // pred_check_branch
      %94 = sbr.rel (%p91) target = $region12
    $region11: #{style_encoder_mlp.11} parent=5 // pred_region
      %s95 = ssub.s32 %s8, 1
      // Predicated region
      $region13: #{style_encoder_mlp.11} parent=11 // pred_check
        %p96 = pneg %p55
      $region14: #{style_encoder_mlp.11} parent=11 // pred_check_branch
        %98 = sbr.rel (%p96) target = $region16
      $region15: #{style_encoder_mlp.11} parent=11 // pred_region
        _
      $region16: #{style_encoder_mlp.11} parent=11 // pred_fallthru
        _
    $region12: #{style_encoder_mlp.11} parent=5 // pred_fallthru
      _
    %p99 = scmp.lt.s32.totalorder %s8, 2
    // Predicated region
    $region17: #{style_encoder_mlp.11} parent=5 // pred_check
      %p100 = pneg %p99
    $region18: #{style_encoder_mlp.11} parent=5 // pred_check_branch
      %102 = sbr.rel (%p100) target = $region20
    $region19: #{style_encoder_mlp.11} parent=5 // pred_region
      // Predicated region
      $region21: #{style_encoder_mlp.11} parent=19 // pred_check
        %p103 = pneg %p28
      $region22: #{style_encoder_mlp.11} parent=19 // pred_check_branch
        %105 = sbr.rel (%p103) target = $region24
      $region23: #{style_encoder_mlp.11} parent=19 // pred_region
        %p106 = scmp.lt.s32.totalorder %s8, 1
        %s107 = scalar_select %p106, %s8, 1
        %s108 = smul.addr %s107, 32
        %s109 = smul.addr %s108, 4
        %s110 = scalar_lea.vmem %s0, %s109
      $region24: #{style_encoder_mlp.11} parent=19 // pred_fallthru
        _
    $region20: #{style_encoder_mlp.11} parent=5 // pred_fallthru
      _
    %p111 = scmp.le.s32.totalorder 1, %s8
    %p112 = scmp.lt.s32.totalorder %s8, 3
    %p113 = pnand %p111, %p112
    %p114 = pneg %p113
    // Predicated region
    $region25: #{style_encoder_mlp.11} parent=5 // pred_check
      _
    $region26: #{style_encoder_mlp.11} parent=5 // pred_check_branch
      %116 = sbr.rel (%p113) target = $region28
    $region27: #{style_encoder_mlp.11} parent=5 // pred_region
      %s117 = ssub.s32 %s8, 1
      %p118 = scmp.lt.s32.totalorder %s13, 1
      %s119 = scalar_select %p118, %s13, 1
      %s120 = smul.addr %s119, 32
      %s121 = smul.addr %s120, 4
      %s122 = scalar_lea.vmem %s0, %s121
      %p123 = pneg %p34
      %p124 = pneg %p31
      %p125 = pneg %p55
      %p126 = pneg %p52
      %p127 = pneg %p81
      %p128 = pneg %p78
      %p129 = scmp.lt.s32.totalorder %s13, 1
      %s130 = scalar_select %p129, %s13, 1
      %s131 = smul.addr %s130, 32
      %s132 = smul.addr %s131, 8
      %s133 = scalar_lea.vmem %s2, %s132
      %p134 = scmp.lt.s32.totalorder %s13, 1
      %s135 = scalar_select %p134, %s13, 1
      %s136 = smul.addr %s135, 32
      %s137 = smul.addr %s136, 4
      %s138 = scalar_lea.vmem %s0, %s137
      %p139 = scmp.lt.s32.totalorder %s13, 1
      %s140 = scalar_select %p139, %s13, 1
      %s141 = smul.addr %s140, 32
      %s142 = smul.addr %s141, 8
      %s143 = scalar_lea.vmem %s2, %s142
      %v145 = vld [vmem:[%s138] sm:$0xf]
      %v146 = vld [vmem:[%s138 + $0x4] sm:$0xf]
      %v147 = vld [vmem:[%s138 + $0x8] sm:$0xf]
      %v148 = vld [vmem:[%s138 + $0xc] sm:$0xf]
      %v149 = vld [vmem:[%s138 + $0x10] sm:$0xf]
      %v150 = vld [vmem:[%s138 + $0x14] sm:$0xf]
      %v151 = vld [vmem:[%s138 + $0x18] sm:$0xf]
      %v152 = vld [vmem:[%s138 + $0x1c] sm:$0xf]
      %v153 = vld [vmem:[%s138 + $0x20] sm:$0xf]
      %v154 = vld [vmem:[%s138 + $0x24] sm:$0xf]
      %v155 = vld [vmem:[%s138 + $0x28] sm:$0xf]
      %v156 = vld [vmem:[%s138 + $0x2c] sm:$0xf]
      %v157 = vld [vmem:[%s138 + $0x30] sm:$0xf]
      %v158 = vld [vmem:[%s138 + $0x34] sm:$0xf]
      %v159 = vld [vmem:[%s138 + $0x38] sm:$0xf]
      %v160 = vld [vmem:[%s138 + $0x3c] sm:$0xf]
      %v161 = vld [vmem:[%s138 + $0x40] sm:$0xf]
      %v162 = vld [vmem:[%s138 + $0x44] sm:$0xf]
      %v163 = vld [vmem:[%s138 + $0x48] sm:$0xf]
      %v164 = vld [vmem:[%s138 + $0x4c] sm:$0xf]
      %v165 = vld [vmem:[%s138 + $0x50] sm:$0xf]
      %v166 = vld [vmem:[%s138 + $0x54] sm:$0xf]
      %v167 = vld [vmem:[%s138 + $0x58] sm:$0xf]
      %v168 = vld [vmem:[%s138 + $0x5c] sm:$0xf]
      %v169 = vld [vmem:[%s138 + $0x60] sm:$0xf]
      %v170 = vld [vmem:[%s138 + $0x64] sm:$0xf]
      %v171 = vld [vmem:[%s138 + $0x68] sm:$0xf]
      %v172 = vld [vmem:[%s138 + $0x6c] sm:$0xf]
      %v173 = vld [vmem:[%s138 + $0x70] sm:$0xf]
      %v174 = vld [vmem:[%s138 + $0x74] sm:$0xf]
      %v175 = vld [vmem:[%s138 + $0x78] sm:$0xf]
      %v176 = vld [vmem:[%s138 + $0x7c] sm:$0xf]
      %v177 = vld [vmem:[%s1] sm:$0xf]
      %v178 = vld [vmem:[%s1 + $0x4] sm:$0xf]
      %v179 = vld [vmem:[%s1 + $0x8] sm:$0xf]
      %v180 = vld [vmem:[%s1 + $0xc] sm:$0xf]
      %v181 = vld [vmem:[%s1 + $0x10] sm:$0xf]
      %v182 = vld [vmem:[%s1 + $0x14] sm:$0xf]
      %v183 = vld [vmem:[%s1 + $0x18] sm:$0xf]
      %v184 = vld [vmem:[%s1 + $0x1c] sm:$0xf]
      %v185 = vld [vmem:[%s1 + $0x20] sm:$0xf]
      %v186 = vld [vmem:[%s1 + $0x24] sm:$0xf]
      %v187 = vld [vmem:[%s1 + $0x28] sm:$0xf]
      %v188 = vld [vmem:[%s1 + $0x2c] sm:$0xf]
      %v189 = vld [vmem:[%s1 + $0x30] sm:$0xf]
      %v190 = vld [vmem:[%s1 + $0x34] sm:$0xf]
      %v191 = vld [vmem:[%s1 + $0x38] sm:$0xf]
      %v192 = vld [vmem:[%s1 + $0x3c] sm:$0xf]
      %v225 = vunpack.c.l.b16 %v145
      %v226 = vunpack.c.l.b16 %v146
      %v227 = vunpack.c.l.b16 %v147
      %v228 = vunpack.c.l.b16 %v148
      %v229 = vunpack.c.l.b16 %v149
      %v230 = vunpack.c.l.b16 %v150
      %v231 = vunpack.c.l.b16 %v151
      %v232 = vunpack.c.l.b16 %v152
      %v233 = vunpack.c.l.b16 %v153
      %v234 = vunpack.c.l.b16 %v154
      %v235 = vunpack.c.l.b16 %v155
      %v236 = vunpack.c.l.b16 %v156
      %v237 = vunpack.c.l.b16 %v157
      %v238 = vunpack.c.l.b16 %v158
      %v239 = vunpack.c.l.b16 %v159
      %v240 = vunpack.c.l.b16 %v160
      %v241 = vunpack.c.l.b16 %v161
      %v242 = vunpack.c.l.b16 %v162
      %v243 = vunpack.c.l.b16 %v163
      %v244 = vunpack.c.l.b16 %v164
      %v245 = vunpack.c.l.b16 %v165
      %v246 = vunpack.c.l.b16 %v166
      %v247 = vunpack.c.l.b16 %v167
      %v248 = vunpack.c.l.b16 %v168
      %v249 = vunpack.c.l.b16 %v169
      %v250 = vunpack.c.l.b16 %v170
      %v251 = vunpack.c.l.b16 %v171
      %v252 = vunpack.c.l.b16 %v172
      %v253 = vunpack.c.l.b16 %v173
      %v254 = vunpack.c.l.b16 %v174
      %v255 = vunpack.c.l.b16 %v175
      %v256 = vunpack.c.l.b16 %v176
      %v257 = vpack.c.b16 %v226, %v225
      %v258 = vpack.c.b16 %v228, %v227
      %v259 = vpack.c.b16 %v230, %v229
      %v260 = vpack.c.b16 %v232, %v231
      %v261 = vpack.c.b16 %v234, %v233
      %v262 = vpack.c.b16 %v236, %v235
      %v263 = vpack.c.b16 %v238, %v237
      %v264 = vpack.c.b16 %v240, %v239
      %v265 = vpack.c.b16 %v242, %v241
      %v266 = vpack.c.b16 %v244, %v243
      %v267 = vpack.c.b16 %v246, %v245
      %v268 = vpack.c.b16 %v248, %v247
      %v269 = vpack.c.b16 %v250, %v249
      %v270 = vpack.c.b16 %v252, %v251
      %v271 = vpack.c.b16 %v254, %v253
      %v272 = vpack.c.b16 %v256, %v255
      %v305 = vunpack.c.l.b16 %v177
      %v306 = vunpack.c.l.b16 %v178
      %v307 = vunpack.c.l.b16 %v179
      %v308 = vunpack.c.l.b16 %v180
      %v309 = vunpack.c.l.b16 %v181
      %v310 = vunpack.c.l.b16 %v182
      %v311 = vunpack.c.l.b16 %v183
      %v312 = vunpack.c.l.b16 %v184
      %v313 = vunpack.c.l.b16 %v185
      %v314 = vunpack.c.l.b16 %v186
      %v315 = vunpack.c.l.b16 %v187
      %v316 = vunpack.c.l.b16 %v188
      %v317 = vunpack.c.l.b16 %v189
      %v318 = vunpack.c.l.b16 %v190
      %v319 = vunpack.c.l.b16 %v191
      %v320 = vunpack.c.l.b16 %v192
      %v321 = vpack.c.b16 %v306, %v305
      %v322 = vpack.c.b16 %v308, %v307
      %v323 = vpack.c.b16 %v310, %v309
      %v324 = vpack.c.b16 %v312, %v311
      %v325 = vpack.c.b16 %v314, %v313
      %v326 = vpack.c.b16 %v316, %v315
      %v327 = vpack.c.b16 %v318, %v317
      %v328 = vpack.c.b16 %v320, %v319
      %337 = vmatprep.subr.bf16.mxu0 0
      %338 = vmatpush1.bf16.msra.mxu0 %v321
      %339 = vmatprep.subr.bf16.mxu0 0
      %340 = vmatpush1.bf16.msra.mxu0 %v322
      %341 = vmatprep.subr.bf16.mxu0 0
      %342 = vmatpush1.bf16.msra.mxu0 %v323
      %343 = vmatprep.subr.bf16.mxu0 0
      %344 = vmatpush1.bf16.msra.mxu0 %v324
      %345 = vmatprep.subr.bf16.mxu0 0
      %346 = vmatpush1.bf16.msra.mxu0 %v325
      %347 = vmatprep.subr.bf16.mxu0 0
      %348 = vmatpush1.bf16.msra.mxu0 %v326
      %349 = vmatprep.subr.bf16.mxu0 0
      %350 = vmatpush1.bf16.msra.mxu0 %v327
      %351 = vmatprep.subr.bf16.mxu0 0
      %352 = vmatpush1.bf16.msra.mxu0 %v328
      %353 = vmatprep.subr.bf16.mxu0 0
      %354 = vmatpush1.bf16.msra.mxu0 0
      %355 = vmatprep.subr.bf16.mxu0 0
      %356 = vmatpush1.bf16.msra.mxu0 0
      %357 = vmatprep.subr.bf16.mxu0 0
      %358 = vmatpush1.bf16.msra.mxu0 0
      %359 = vmatprep.subr.bf16.mxu0 0
      %360 = vmatpush1.bf16.msra.mxu0 0
      %361 = vmatprep.subr.bf16.mxu0 0
      %362 = vmatpush1.bf16.msra.mxu0 0
      %363 = vmatprep.subr.bf16.mxu0 0
      %364 = vmatpush1.bf16.msra.mxu0 0
      %365 = vmatprep.subr.bf16.mxu0 0
      %366 = vmatpush1.bf16.msra.mxu0 0
      %367 = vmatprep.subr.bf16.mxu0 0
      %368 = vmatpush1.bf16.msra.mxu0 0
      %369 = vmatprep.mubr.bf16.mxu0 0
      %370 = vmatmul.mubr.bf16.gmra.mrb[0].mxu0 %v257
      %v371 = vpop.f32.mrb[0].mxu0
      %v372 = vadd.f32 0.0, %v371
      %v373 = vpop.f32.mrb[0].mxu0
      %v374 = vpop.f32.mrb[0].mxu0
      %v375 = vadd.f32 0.0, %v374
      %v376 = vpop.f32.mrb[0].mxu0
      %377 = vmatprep.mubr.bf16.mxu0 0
      %378 = vmatmul.mubr.bf16.gmra.mrb[0].mxu0 %v258
      %v379 = vpop.f32.mrb[0].mxu0
      %v380 = vadd.f32 0.0, %v379
      %v381 = vpop.f32.mrb[0].mxu0
      %v382 = vpop.f32.mrb[0].mxu0
      %v383 = vadd.f32 0.0, %v382
      %v384 = vpop.f32.mrb[0].mxu0
      %385 = vmatprep.mubr.bf16.mxu0 0
      %386 = vmatmul.mubr.bf16.gmra.mrb[0].mxu0 %v259
      %v387 = vpop.f32.mrb[0].mxu0
      %v388 = vadd.f32 0.0, %v387
      %v389 = vpop.f32.mrb[0].mxu0
      %v390 = vpop.f32.mrb[0].mxu0
      %v391 = vadd.f32 0.0, %v390
      %v392 = vpop.f32.mrb[0].mxu0
      %393 = vmatprep.mubr.bf16.mxu0 0
      %394 = vmatmul.mubr.bf16.gmra.mrb[0].mxu0 %v260
      %v395 = vpop.f32.mrb[0].mxu0
      %v396 = vadd.f32 0.0, %v395
      %v397 = vpop.f32.mrb[0].mxu0
      %v398 = vpop.f32.mrb[0].mxu0
      %v399 = vadd.f32 0.0, %v398
      %v400 = vpop.f32.mrb[0].mxu0
      %401 = vmatprep.mubr.bf16.mxu0 0
      %402 = vmatmul.mubr.bf16.gmra.mrb[0].mxu0 %v261
      %v403 = vpop.f32.mrb[0].mxu0
      %v404 = vadd.f32 0.0, %v403
      %v405 = vpop.f32.mrb[0].mxu0
      %v406 = vpop.f32.mrb[0].mxu0
      %v407 = vadd.f32 0.0, %v406
      %v408 = vpop.f32.mrb[0].mxu0
      %409 = vmatprep.mubr.bf16.mxu0 0
      %410 = vmatmul.mubr.bf16.gmra.mrb[0].mxu0 %v262
      %v411 = vpop.f32.mrb[0].mxu0
      %v412 = vadd.f32 0.0, %v411
      %v413 = vpop.f32.mrb[0].mxu0
      %v414 = vpop.f32.mrb[0].mxu0
      %v415 = vadd.f32 0.0, %v414
      %v416 = vpop.f32.mrb[0].mxu0
      %417 = vmatprep.mubr.bf16.mxu0 0
      %418 = vmatmul.mubr.bf16.gmra.mrb[0].mxu0 %v263
      %v419 = vpop.f32.mrb[0].mxu0
      %v420 = vadd.f32 0.0, %v419
      %v421 = vpop.f32.mrb[0].mxu0
      %v422 = vpop.f32.mrb[0].mxu0
      %v423 = vadd.f32 0.0, %v422
      %v424 = vpop.f32.mrb[0].mxu0
      %425 = vmatprep.mubr.bf16.mxu0 0
      %426 = vmatmul.mubr.bf16.gmra.mrb[0].mxu0 %v264
      %v427 = vpop.f32.mrb[0].mxu0
      %v428 = vadd.f32 0.0, %v427
      %v429 = vpop.f32.mrb[0].mxu0
      %v430 = vpop.f32.mrb[0].mxu0
      %v431 = vadd.f32 0.0, %v430
      %v432 = vpop.f32.mrb[0].mxu0
      %433 = vmatprep.mubr.bf16.mxu0 0
      %434 = vmatmul.mubr.bf16.gmra.mrb[0].mxu0 %v265
      %v435 = vpop.f32.mrb[0].mxu0
      %v436 = vadd.f32 0.0, %v435
      %v437 = vpop.f32.mrb[0].mxu0
      %v438 = vpop.f32.mrb[0].mxu0
      %v439 = vadd.f32 0.0, %v438
      %v440 = vpop.f32.mrb[0].mxu0
      %441 = vmatprep.mubr.bf16.mxu0 0
      %442 = vmatmul.mubr.bf16.gmra.mrb[0].mxu0 %v266
      %v443 = vpop.f32.mrb[0].mxu0
      %v444 = vadd.f32 0.0, %v443
      %v445 = vpop.f32.mrb[0].mxu0
      %v446 = vpop.f32.mrb[0].mxu0
      %v447 = vadd.f32 0.0, %v446
      %v448 = vpop.f32.mrb[0].mxu0
      %449 = vmatprep.mubr.bf16.mxu0 0
      %450 = vmatmul.mubr.bf16.gmra.mrb[0].mxu0 %v267
      %v451 = vpop.f32.mrb[0].mxu0
      %v452 = vadd.f32 0.0, %v451
      %v453 = vpop.f32.mrb[0].mxu0
      %v454 = vpop.f32.mrb[0].mxu0
      %v455 = vadd.f32 0.0, %v454
      %v456 = vpop.f32.mrb[0].mxu0
      %457 = vmatprep.mubr.bf16.mxu0 0
      %458 = vmatmul.mubr.bf16.gmra.mrb[0].mxu0 %v268
      %v459 = vpop.f32.mrb[0].mxu0
      %v460 = vadd.f32 0.0, %v459
      %v461 = vpop.f32.mrb[0].mxu0
      %v462 = vpop.f32.mrb[0].mxu0
      %v463 = vadd.f32 0.0, %v462
      %v464 = vpop.f32.mrb[0].mxu0
      %465 = vmatprep.mubr.bf16.mxu0 0
      %466 = vmatmul.mubr.bf16.gmra.mrb[0].mxu0 %v269
      %v467 = vpop.f32.mrb[0].mxu0
      %v468 = vadd.f32 0.0, %v467
      %v469 = vpop.f32.mrb[0].mxu0
      %v470 = vpop.f32.mrb[0].mxu0
      %v471 = vadd.f32 0.0, %v470
      %v472 = vpop.f32.mrb[0].mxu0
      %473 = vmatprep.mubr.bf16.mxu0 0
      %474 = vmatmul.mubr.bf16.gmra.mrb[0].mxu0 %v270
      %v475 = vpop.f32.mrb[0].mxu0
      %v476 = vadd.f32 0.0, %v475
      %v477 = vpop.f32.mrb[0].mxu0
      %v478 = vpop.f32.mrb[0].mxu0
      %v479 = vadd.f32 0.0, %v478
      %v480 = vpop.f32.mrb[0].mxu0
      %481 = vmatprep.mubr.bf16.mxu0 0
      %482 = vmatmul.mubr.bf16.gmra.mrb[0].mxu0 %v271
      %v483 = vpop.f32.mrb[0].mxu0
      %v484 = vadd.f32 0.0, %v483
      %v485 = vpop.f32.mrb[0].mxu0
      %v486 = vpop.f32.mrb[0].mxu0
      %v487 = vadd.f32 0.0, %v486
      %v488 = vpop.f32.mrb[0].mxu0
      %489 = vmatprep.mubr.bf16.mxu0 0
      %490 = vmatmul.mubr.bf16.gmra.mrb[0].mxu0 %v272
      %v491 = vpop.f32.mrb[0].mxu0
      %v492 = vadd.f32 0.0, %v491
      %v493 = vpop.f32.mrb[0].mxu0
      %v494 = vpop.f32.mrb[0].mxu0
      %v495 = vadd.f32 0.0, %v494
      %v496 = vpop.f32.mrb[0].mxu0
      %497 = vdwg.mxu0
      %v498 = vadd.f32 %v372, %v375
      %v499 = vadd.f32 %v498, %v380
      %v500 = vadd.f32 %v499, %v383
      %v501 = vadd.f32 %v500, %v388
      %v502 = vadd.f32 %v501, %v391
      %v503 = vadd.f32 %v502, %v396
      %v504 = vadd.f32 %v503, %v399
      %v505 = vadd.f32 %v504, %v404
      %v506 = vadd.f32 %v505, %v407
      %v507 = vadd.f32 %v506, %v412
      %v508 = vadd.f32 %v507, %v415
      %v509 = vadd.f32 %v508, %v420
      %v510 = vadd.f32 %v509, %v423
      %v511 = vadd.f32 %v510, %v428
      %v512 = vadd.f32 %v511, %v431
      %v513 = vadd.f32 %v512, %v436
      %v514 = vadd.f32 %v513, %v439
      %v515 = vadd.f32 %v514, %v444
      %v516 = vadd.f32 %v515, %v447
      %v517 = vadd.f32 %v516, %v452
      %v518 = vadd.f32 %v517, %v455
      %v519 = vadd.f32 %v518, %v460
      %v520 = vadd.f32 %v519, %v463
      %v521 = vadd.f32 %v520, %v468
      %v522 = vadd.f32 %v521, %v471
      %v523 = vadd.f32 %v522, %v476
      %v524 = vadd.f32 %v523, %v479
      %v525 = vadd.f32 %v524, %v484
      %v526 = vadd.f32 %v525, %v487
      %v527 = vadd.f32 %v526, %v492
      %v528 = vadd.f32 %v527, %v495
      %v529 = vrot.slane %v528, 4
      %v530 = vadd.f32 %v528, %v529
      %v531 = vrot.slane %v530, 2
      %v532 = vadd.f32 %v530, %v531
      %v533 = vrot.slane %v532, 1
      %v534 = vadd.f32 %v532, %v533
      %v535 = vrcp.pop 256.0
      %v536 = vmul.f32 %v534, %v535
      %v537 = vsub.f32 %v372, %v536
      %v538 = vsub.f32 %v375, %v536
      %v539 = vsub.f32 %v380, %v536
      %v540 = vsub.f32 %v383, %v536
      %v541 = vsub.f32 %v388, %v536
      %v542 = vsub.f32 %v391, %v536
      %v543 = vsub.f32 %v396, %v536
      %v544 = vsub.f32 %v399, %v536
      %v545 = vsub.f32 %v404, %v536
      %v546 = vsub.f32 %v407, %v536
      %v547 = vsub.f32 %v412, %v536
      %v548 = vsub.f32 %v415, %v536
      %v549 = vsub.f32 %v420, %v536
      %v550 = vsub.f32 %v423, %v536
      %v551 = vsub.f32 %v428, %v536
      %v552 = vsub.f32 %v431, %v536
      %v553 = vsub.f32 %v436, %v536
      %v554 = vsub.f32 %v439, %v536
      %v555 = vsub.f32 %v444, %v536
      %v556 = vsub.f32 %v447, %v536
      %v557 = vsub.f32 %v452, %v536
      %v558 = vsub.f32 %v455, %v536
      %v559 = vsub.f32 %v460, %v536
      %v560 = vsub.f32 %v463, %v536
      %v561 = vsub.f32 %v468, %v536
      %v562 = vsub.f32 %v471, %v536
      %v563 = vsub.f32 %v476, %v536
      %v564 = vsub.f32 %v479, %v536
      %v565 = vsub.f32 %v484, %v536
      %v566 = vsub.f32 %v487, %v536
      %v567 = vsub.f32 %v492, %v536
      %v568 = vsub.f32 %v495, %v536
      %v569 = vmul.f32 %v537, %v537
      %v570 = vmul.f32 %v538, %v538
      %v571 = vmul.f32 %v539, %v539
      %v572 = vmul.f32 %v540, %v540
      %v573 = vmul.f32 %v541, %v541
      %v574 = vmul.f32 %v542, %v542
      %v575 = vmul.f32 %v543, %v543
      %v576 = vmul.f32 %v544, %v544
      %v577 = vmul.f32 %v545, %v545
      %v578 = vmul.f32 %v546, %v546
      %v579 = vmul.f32 %v547, %v547
      %v580 = vmul.f32 %v548, %v548
      %v581 = vmul.f32 %v549, %v549
      %v582 = vmul.f32 %v550, %v550
      %v583 = vmul.f32 %v551, %v551
      %v584 = vmul.f32 %v552, %v552
      %v585 = vmul.f32 %v553, %v553
      %v586 = vmul.f32 %v554, %v554
      %v587 = vmul.f32 %v555, %v555
      %v588 = vmul.f32 %v556, %v556
      %v589 = vmul.f32 %v557, %v557
      %v590 = vmul.f32 %v558, %v558
      %v591 = vmul.f32 %v559, %v559
      %v592 = vmul.f32 %v560, %v560
      %v593 = vmul.f32 %v561, %v561
      %v594 = vmul.f32 %v562, %v562
      %v595 = vmul.f32 %v563, %v563
      %v596 = vmul.f32 %v564, %v564
      %v597 = vmul.f32 %v565, %v565
      %v598 = vmul.f32 %v566, %v566
      %v599 = vmul.f32 %v567, %v567
      %v600 = vmul.f32 %v568, %v568
      %v601 = vadd.f32 %v569, %v570
      %v602 = vadd.f32 %v601, %v571
      %v603 = vadd.f32 %v602, %v572
      %v604 = vadd.f32 %v603, %v573
      %v605 = vadd.f32 %v604, %v574
      %v606 = vadd.f32 %v605, %v575
      %v607 = vadd.f32 %v606, %v576
      %v608 = vadd.f32 %v607, %v577
      %v609 = vadd.f32 %v608, %v578
      %v610 = vadd.f32 %v609, %v579
      %v611 = vadd.f32 %v610, %v580
      %v612 = vadd.f32 %v611, %v581
      %v613 = vadd.f32 %v612, %v582
      %v614 = vadd.f32 %v613, %v583
      %v615 = vadd.f32 %v614, %v584
      %v616 = vadd.f32 %v615, %v585
      %v617 = vadd.f32 %v616, %v586
      %v618 = vadd.f32 %v617, %v587
      %v619 = vadd.f32 %v618, %v588
      %v620 = vadd.f32 %v619, %v589
      %v621 = vadd.f32 %v620, %v590
      %v622 = vadd.f32 %v621, %v591
      %v623 = vadd.f32 %v622, %v592
      %v624 = vadd.f32 %v623, %v593
      %v625 = vadd.f32 %v624, %v594
      %v626 = vadd.f32 %v625, %v595
      %v627 = vadd.f32 %v626, %v596
      %v628 = vadd.f32 %v627, %v597
      %v629 = vadd.f32 %v628, %v598
      %v630 = vadd.f32 %v629, %v599
      %v631 = vadd.f32 %v630, %v600
      %v632 = vrot.slane %v631, 4
      %v633 = vadd.f32 %v631, %v632
      %v634 = vrot.slane %v633, 2
      %v635 = vadd.f32 %v633, %v634
      %v636 = vrot.slane %v635, 1
      %v637 = vadd.f32 %v635, %v636
      %v638 = vmul.f32 %v637, %v535
      %v639 = vadd.f32 %v638, 1e-05
      %v640 = vrsqrt.pop %v639
      %v641 = vmul.f32 %v537, %v640
      %v642 = vmul.f32 %v538, %v640
      %v643 = vmul.f32 %v539, %v640
      %v644 = vmul.f32 %v540, %v640
      %v645 = vmul.f32 %v541, %v640
      %v646 = vmul.f32 %v542, %v640
      %v647 = vmul.f32 %v543, %v640
      %v648 = vmul.f32 %v544, %v640
      %v649 = vmul.f32 %v545, %v640
      %v650 = vmul.f32 %v546, %v640
      %v651 = vmul.f32 %v547, %v640
      %v652 = vmul.f32 %v548, %v640
      %v653 = vmul.f32 %v549, %v640
      %v654 = vmul.f32 %v550, %v640
      %v655 = vmul.f32 %v551, %v640
      %v656 = vmul.f32 %v552, %v640
      %v657 = vmul.f32 %v553, %v640
      %v658 = vmul.f32 %v554, %v640
      %v659 = vmul.f32 %v555, %v640
      %v660 = vmul.f32 %v556, %v640
      %v661 = vmul.f32 %v557, %v640
      %v662 = vmul.f32 %v558, %v640
      %v663 = vmul.f32 %v559, %v640
      %v664 = vmul.f32 %v560, %v640
      %v665 = vmul.f32 %v561, %v640
      %v666 = vmul.f32 %v562, %v640
      %v667 = vmul.f32 %v563, %v640
      %v668 = vmul.f32 %v564, %v640
      %v669 = vmul.f32 %v565, %v640
      %v670 = vmul.f32 %v566, %v640
      %v671 = vmul.f32 %v567, %v640
      %v672 = vmul.f32 %v568, %v640
      %vm673 = vcmp.ge.f32.partialorder %v641, 0.0
      %vm674 = vcmp.ge.f32.partialorder %v642, 0.0
      %vm675 = vcmp.ge.f32.partialorder %v643, 0.0
      %vm676 = vcmp.ge.f32.partialorder %v644, 0.0
      %vm677 = vcmp.ge.f32.partialorder %v645, 0.0
      %vm678 = vcmp.ge.f32.partialorder %v646, 0.0
      %vm679 = vcmp.ge.f32.partialorder %v647, 0.0
      %vm680 = vcmp.ge.f32.partialorder %v648, 0.0
      %vm681 = vcmp.ge.f32.partialorder %v649, 0.0
      %vm682 = vcmp.ge.f32.partialorder %v650, 0.0
      %vm683 = vcmp.ge.f32.partialorder %v651, 0.0
      %vm684 = vcmp.ge.f32.partialorder %v652, 0.0
      %vm685 = vcmp.ge.f32.partialorder %v653, 0.0
      %vm686 = vcmp.ge.f32.partialorder %v654, 0.0
      %vm687 = vcmp.ge.f32.partialorder %v655, 0.0
      %vm688 = vcmp.ge.f32.partialorder %v656, 0.0
      %vm689 = vcmp.ge.f32.partialorder %v657, 0.0
      %vm690 = vcmp.ge.f32.partialorder %v658, 0.0
      %vm691 = vcmp.ge.f32.partialorder %v659, 0.0
      %vm692 = vcmp.ge.f32.partialorder %v660, 0.0
      %vm693 = vcmp.ge.f32.partialorder %v661, 0.0
      %vm694 = vcmp.ge.f32.partialorder %v662, 0.0
      %vm695 = vcmp.ge.f32.partialorder %v663, 0.0
      %vm696 = vcmp.ge.f32.partialorder %v664, 0.0
      %vm697 = vcmp.ge.f32.partialorder %v665, 0.0
      %vm698 = vcmp.ge.f32.partialorder %v666, 0.0
      %vm699 = vcmp.ge.f32.partialorder %v667, 0.0
      %vm700 = vcmp.ge.f32.partialorder %v668, 0.0
      %vm701 = vcmp.ge.f32.partialorder %v669, 0.0
      %vm702 = vcmp.ge.f32.partialorder %v670, 0.0
      %vm703 = vcmp.ge.f32.partialorder %v671, 0.0
      %vm704 = vcmp.ge.f32.partialorder %v672, 0.0
      %v705 = vmul.f32 %v641, 0.01
      %v706 = vmul.f32 %v642, 0.01
      %v707 = vmul.f32 %v643, 0.01
      %v708 = vmul.f32 %v644, 0.01
      %v709 = vmul.f32 %v645, 0.01
      %v710 = vmul.f32 %v646, 0.01
      %v711 = vmul.f32 %v647, 0.01
      %v712 = vmul.f32 %v648, 0.01
      %v713 = vmul.f32 %v649, 0.01
      %v714 = vmul.f32 %v650, 0.01
      %v715 = vmul.f32 %v651, 0.01
      %v716 = vmul.f32 %v652, 0.01
      %v717 = vmul.f32 %v653, 0.01
      %v718 = vmul.f32 %v654, 0.01
      %v719 = vmul.f32 %v655, 0.01
      %v720 = vmul.f32 %v656, 0.01
      %v721 = vmul.f32 %v657, 0.01
      %v722 = vmul.f32 %v658, 0.01
      %v723 = vmul.f32 %v659, 0.01
      %v724 = vmul.f32 %v660, 0.01
      %v725 = vmul.f32 %v661, 0.01
      %v726 = vmul.f32 %v662, 0.01
      %v727 = vmul.f32 %v663, 0.01
      %v728 = vmul.f32 %v664, 0.01
      %v729 = vmul.f32 %v665, 0.01
      %v730 = vmul.f32 %v666, 0.01
      %v731 = vmul.f32 %v667, 0.01
      %v732 = vmul.f32 %v668, 0.01
      %v733 = vmul.f32 %v669, 0.01
      %v734 = vmul.f32 %v670, 0.01
      %v735 = vmul.f32 %v671, 0.01
      %v736 = vmul.f32 %v672, 0.01
      %v737 = vsel %vm673, %v641, %v705
      %v738 = vsel %vm674, %v642, %v706
      %v739 = vsel %vm675, %v643, %v707
      %v740 = vsel %vm676, %v644, %v708
      %v741 = vsel %vm677, %v645, %v709
      %v742 = vsel %vm678, %v646, %v710
      %v743 = vsel %vm679, %v647, %v711
      %v744 = vsel %vm680, %v648, %v712
      %v745 = vsel %vm681, %v649, %v713
      %v746 = vsel %vm682, %v650, %v714
      %v747 = vsel %vm683, %v651, %v715
      %v748 = vsel %vm684, %v652, %v716
      %v749 = vsel %vm685, %v653, %v717
      %v750 = vsel %vm686, %v654, %v718
      %v751 = vsel %vm687, %v655, %v719
      %v752 = vsel %vm688, %v656, %v720
      %v753 = vsel %vm689, %v657, %v721
      %v754 = vsel %vm690, %v658, %v722
      %v755 = vsel %vm691, %v659, %v723
      %v756 = vsel %vm692, %v660, %v724
      %v757 = vsel %vm693, %v661, %v725
      %v758 = vsel %vm694, %v662, %v726
      %v759 = vsel %vm695, %v663, %v727
      %v760 = vsel %vm696, %v664, %v728
      %v761 = vsel %vm697, %v665, %v729
      %v762 = vsel %vm698, %v666, %v730
      %v763 = vsel %vm699, %v667, %v731
      %v764 = vsel %vm700, %v668, %v732
      %v765 = vsel %vm701, %v669, %v733
      %v766 = vsel %vm702, %v670, %v734
      %v767 = vsel %vm703, %v671, %v735
      %v768 = vsel %vm704, %v672, %v736
      %769 = vst [vmem:[%s143] sm:$0xff] %v737
      %770 = vst [vmem:[%s143 + $0x8] sm:$0xff] %v738
      %771 = vst [vmem:[%s143 + $0x10] sm:$0xff] %v739
      %772 = vst [vmem:[%s143 + $0x18] sm:$0xff] %v740
      %773 = vst [vmem:[%s143 + $0x20] sm:$0xff] %v741
      %774 = vst [vmem:[%s143 + $0x28] sm:$0xff] %v742
      %775 = vst [vmem:[%s143 + $0x30] sm:$0xff] %v743
      %776 = vst [vmem:[%s143 + $0x38] sm:$0xff] %v744
      %777 = vst [vmem:[%s143 + $0x40] sm:$0xff] %v745
      %778 = vst [vmem:[%s143 + $0x48] sm:$0xff] %v746
      %779 = vst [vmem:[%s143 + $0x50] sm:$0xff] %v747
      %780 = vst [vmem:[%s143 + $0x58] sm:$0xff] %v748
      %781 = vst [vmem:[%s143 + $0x60] sm:$0xff] %v749
      %782 = vst [vmem:[%s143 + $0x68] sm:$0xff] %v750
      %783 = vst [vmem:[%s143 + $0x70] sm:$0xff] %v751
      %784 = vst [vmem:[%s143 + $0x78] sm:$0xff] %v752
      %785 = vst [vmem:[%s143 + $0x80] sm:$0xff] %v753
      %786 = vst [vmem:[%s143 + $0x88] sm:$0xff] %v754
      %787 = vst [vmem:[%s143 + $0x90] sm:$0xff] %v755
      %788 = vst [vmem:[%s143 + $0x98] sm:$0xff] %v756
      %789 = vst [vmem:[%s143 + $0xa0] sm:$0xff] %v757
      %790 = vst [vmem:[%s143 + $0xa8] sm:$0xff] %v758
      %791 = vst [vmem:[%s143 + $0xb0] sm:$0xff] %v759
      %792 = vst [vmem:[%s143 + $0xb8] sm:$0xff] %v760
      %793 = vst [vmem:[%s143 + $0xc0] sm:$0xff] %v761
      %794 = vst [vmem:[%s143 + $0xc8] sm:$0xff] %v762
      %795 = vst [vmem:[%s143 + $0xd0] sm:$0xff] %v763
      %796 = vst [vmem:[%s143 + $0xd8] sm:$0xff] %v764
      %797 = vst [vmem:[%s143 + $0xe0] sm:$0xff] %v765
      %798 = vst [vmem:[%s143 + $0xe8] sm:$0xff] %v766
      %799 = vst [vmem:[%s143 + $0xf0] sm:$0xff] %v767
      %800 = vst [vmem:[%s143 + $0xf8] sm:$0xff] %v768
      %p801 = scmp.lt.s32.totalorder %s13, 1
      %s802 = scalar_select %p801, %s13, 1
      %s803 = smul.addr %s802, 32
      %s804 = smul.addr %s803, 8
      %s805 = scalar_lea.vmem %s2, %s804
      // Predicated region
      $region29: #{style_encoder_mlp.11} parent=27 // pred_check
        %p806 = pneg %p78
      $region30: #{style_encoder_mlp.11} parent=27 // pred_check_branch
        %808 = sbr.rel (%p806) target = $region32
      $region31: #{style_encoder_mlp.11} parent=27 // pred_region
        _
      $region32: #{style_encoder_mlp.11} parent=27 // pred_fallthru
        _
    $region28: #{style_encoder_mlp.11} parent=5 // pred_fallthru
      _
    %p809 = scmp.le.s32.totalorder 2, %s8
    // Predicated region
    $region33: #{style_encoder_mlp.11} parent=5 // pred_check
      %p810 = pneg %p809
    $region34: #{style_encoder_mlp.11} parent=5 // pred_check_branch
      %812 = sbr.rel (%p810) target = $region36
    $region35: #{style_encoder_mlp.11} parent=5 // pred_region
      %s813 = ssub.s32 %s8, 2
      // Predicated region
      $region37: #{style_encoder_mlp.11} parent=35 // pred_check
        %p814 = pneg %p84
      $region38: #{style_encoder_mlp.11} parent=35 // pred_check_branch
        %816 = sbr.rel (%p814) target = $region40
      $region39: #{style_encoder_mlp.11} parent=35 // pred_region
        %p817 = scmp.lt.s32.totalorder %s14, 1
        %s818 = scalar_select %p817, %s14, 1
        %s819 = smul.addr %s818, 32
        %s820 = smul.addr %s819, 8
        %s821 = scalar_lea.vmem %s2, %s820
      $region40: #{style_encoder_mlp.11} parent=35 // pred_fallthru
        _
    $region36: #{style_encoder_mlp.11} parent=5 // pred_fallthru
      _
  $region6: #{style_encoder_mlp.11} parent=0 // loop_footer
    %s12 = sadd.s32 1, %s8
  $region7: #{style_encoder_mlp.11} parent=0 // loop_footer_branch
    %7 = sbr.rel target = $region3
  $region8: #{style_encoder_mlp.11} parent=0 // loop_exit
    _

// kernel: style_encoder_mlp.12
$region0: #{style_encoder_mlp.12}
  #allocation0 [shape = 'u32[]', space=smem, size = 0x4, offset = 0x4, fixed_abs, tag = 'smem constant byte address 0x4 - core index']
  #allocation1 [shape = 'u32[144,128]{1,0:T(1,128)}', space=vmem, size = 0x12000, scoped, tag = 'internal scratch']
  %s0 = inlined_call_operand.vmem [shape: bf16[2,64,256], index: 0, kind: input, shape index: {}]
  %s1 = inlined_call_operand.vmem [shape: bf16[256,128], index: 1, kind: input, shape index: {}]
  %s2 = inlined_call_operand.vmem [shape: f32[2,64,128], index: 2, kind: output, shape index: {}]
  %s3 = sld [smem:[#allocation0]]
  $region41: #{style_encoder_mlp.12} parent=0
    _
  %s5 = ssub.s32 1, %s3
  %s6 = scalar_select 0, %s5, %s3
  loop: start=0, step=1, limit=4
  $region2: #{style_encoder_mlp.12} parent=0 // loop_pre_header
    _
  $region3: #{style_encoder_mlp.12} parent=0 // loop_header
    %s8 = sphi 0, %s12
    %p9 = scmp.ge.s32.totalorder %s8, 4
    %s18 = sphi 0, %s20
    %s21 = sphi 0, %s18
    %s22 = sphi 0, %s21
    %s38 = sphi 0, %s22
    %s42 = sphi 0, %s42
    %s44 = sphi 0, %s42
    %s45 = sphi 0, %s44
    %s59 = sphi 0, %s45
    %s65 = sphi 0, %s67
    %s68 = sphi 0, %s65
    %s69 = sphi 0, %s68
    %s85 = sphi 0, %s69
  $region4: #{style_encoder_mlp.12} parent=0 // loop_header_branch
    %11 = sbr.rel (%p9) target = $region8
  $region5: #{style_encoder_mlp.12} parent=0 // loop_body
    %s13 = ssub.s32 %s8, 1
    %s14 = ssub.s32 %s8, 2
    %s15 = sadd.s32 %s8, 1
    %s16 = ssub.s32 %s8, %s15
    %p17 = scmp.eq.s32.totalorder %s16, 0
    %s19 = sadd.s32 %s18, 1
    %s20 = scalar_select %p17, %s18, %s19
    %p23 = pneg %p17
    %p24 = scmp.eq.s32.totalorder %s8, 1
    %p25 = por %p23, %p24
    %p26 = scmp.ne.s32.totalorder %s18, %s21
    %p27 = scmp.eq.s32.totalorder %s8, 0
    %p28 = por %p26, %p27
    %p29 = scmp.ne.s32.totalorder %s18, %s21
    %p30 = scmp.eq.s32.totalorder %s13, 1
    %p31 = por %p29, %p30
    %p32 = scmp.ne.s32.totalorder %s21, %s22
    %p33 = scmp.eq.s32.totalorder %s13, 0
    %p34 = por %p32, %p33
    %p35 = scmp.ne.s32.totalorder %s21, %s22
    %p36 = scmp.eq.s32.totalorder %s14, 1
    %p37 = por %p35, %p36
    %p39 = scmp.ne.s32.totalorder %s22, %s38
    %p40 = scmp.eq.s32.totalorder %s14, 0
    %p41 = por %p39, %p40
    %s43 = sadd.s32 %s42, 1
    %p46 = scmp.eq.s32.totalorder %s8, 1
    %p47 = scmp.ne.s32.totalorder %s42, %s44
    %p48 = scmp.eq.s32.totalorder %s8, 0
    %p49 = por %p47, %p48
    %p50 = scmp.ne.s32.totalorder %s42, %s44
    %p51 = scmp.eq.s32.totalorder %s13, 1
    %p52 = por %p50, %p51
    %p53 = scmp.ne.s32.totalorder %s44, %s45
    %p54 = scmp.eq.s32.totalorder %s13, 0
    %p55 = por %p53, %p54
    %p56 = scmp.ne.s32.totalorder %s44, %s45
    %p57 = scmp.eq.s32.totalorder %s14, 1
    %p58 = por %p56, %p57
    %p60 = scmp.ne.s32.totalorder %s45, %s59
    %p61 = scmp.eq.s32.totalorder %s14, 0
    %p62 = por %p60, %p61
    %s63 = ssub.s32 %s8, %s15
    %p64 = scmp.eq.s32.totalorder %s63, 0
    %s66 = sadd.s32 %s65, 1
    %s67 = scalar_select %p64, %s65, %s66
    %p70 = pneg %p64
    %p71 = scmp.eq.s32.totalorder %s8, 1
    %p72 = por %p70, %p71
    %p73 = scmp.ne.s32.totalorder %s65, %s68
    %p74 = scmp.eq.s32.totalorder %s8, 0
    %p75 = por %p73, %p74
    %p76 = scmp.ne.s32.totalorder %s65, %s68
    %p77 = scmp.eq.s32.totalorder %s13, 1
    %p78 = por %p76, %p77
    %p79 = scmp.ne.s32.totalorder %s68, %s69
    %p80 = scmp.eq.s32.totalorder %s13, 0
    %p81 = por %p79, %p80
    %p82 = scmp.ne.s32.totalorder %s68, %s69
    %p83 = scmp.eq.s32.totalorder %s14, 1
    %p84 = por %p82, %p83
    %p86 = scmp.ne.s32.totalorder %s69, %s85
    %p87 = scmp.eq.s32.totalorder %s14, 0
    %p88 = por %p86, %p87
    %p89 = scmp.le.s32.totalorder 1, %s8
    %p90 = scmp.lt.s32.totalorder %s8, 3
    %p91 = pnand %p89, %p90
    %p92 = pneg %p91
    // Predicated region
    $region9: #{style_encoder_mlp.12} parent=5 // pred_check
      _
    $region10: #{style_encoder_mlp.12} parent=5 // pred_check_branch
      %94 = sbr.rel (%p91) target = $region12
    $region11: #{style_encoder_mlp.12} parent=5 // pred_region
      %s95 = ssub.s32 %s8, 1
      // Predicated region
      $region13: #{style_encoder_mlp.12} parent=11 // pred_check
        %p96 = pneg %p55
      $region14: #{style_encoder_mlp.12} parent=11 // pred_check_branch
        %98 = sbr.rel (%p96) target = $region16
      $region15: #{style_encoder_mlp.12} parent=11 // pred_region
        _
      $region16: #{style_encoder_mlp.12} parent=11 // pred_fallthru
        _
    $region12: #{style_encoder_mlp.12} parent=5 // pred_fallthru
      _
    %p99 = scmp.lt.s32.totalorder %s8, 2
    // Predicated region
    $region17: #{style_encoder_mlp.12} parent=5 // pred_check
      %p100 = pneg %p99
    $region18: #{style_encoder_mlp.12} parent=5 // pred_check_branch
      %102 = sbr.rel (%p100) target = $region20
    $region19: #{style_encoder_mlp.12} parent=5 // pred_region
      // Predicated region
      $region21: #{style_encoder_mlp.12} parent=19 // pred_check
        %p103 = pneg %p28
      $region22: #{style_encoder_mlp.12} parent=19 // pred_check_branch
        %105 = sbr.rel (%p103) target = $region24
      $region23: #{style_encoder_mlp.12} parent=19 // pred_region
        %p106 = scmp.lt.s32.totalorder %s8, 1
        %s107 = scalar_select %p106, %s8, 1
        %s108 = smul.addr %s107, 16
        %s109 = smul.addr %s108, 4
        %s110 = scalar_lea.vmem %s0, %s109
      $region24: #{style_encoder_mlp.12} parent=19 // pred_fallthru
        _
    $region20: #{style_encoder_mlp.12} parent=5 // pred_fallthru
      _
    %p111 = scmp.le.s32.totalorder 1, %s8
    %p112 = scmp.lt.s32.totalorder %s8, 3
    %p113 = pnand %p111, %p112
    %p114 = pneg %p113
    // Predicated region
    $region25: #{style_encoder_mlp.12} parent=5 // pred_check
      _
    $region26: #{style_encoder_mlp.12} parent=5 // pred_check_branch
      %116 = sbr.rel (%p113) target = $region28
    $region27: #{style_encoder_mlp.12} parent=5 // pred_region
      %s117 = ssub.s32 %s8, 1
      %p118 = scmp.lt.s32.totalorder %s13, 1
      %s119 = scalar_select %p118, %s13, 1
      %s120 = smul.addr %s119, 16
      %s121 = smul.addr %s120, 4
      %s122 = scalar_lea.vmem %s0, %s121
      %p123 = pneg %p34
      %p124 = pneg %p31
      %p125 = pneg %p55
      %p126 = pneg %p52
      %p127 = pneg %p81
      %p128 = pneg %p78
      %p129 = scmp.lt.s32.totalorder %s13, 1
      %s130 = scalar_select %p129, %s13, 1
      %s131 = smul.addr %s130, 8
      %s132 = smul.addr %s131, 8
      %s133 = scalar_lea.vmem %s2, %s132
      %p134 = scmp.lt.s32.totalorder %s13, 1
      %s135 = scalar_select %p134, %s13, 1
      %s136 = smul.addr %s135, 16
      %s137 = smul.addr %s136, 4
      %s138 = scalar_lea.vmem %s0, %s137
      %p139 = scmp.lt.s32.totalorder %s13, 1
      %s140 = scalar_select %p139, %s13, 1
      %s141 = smul.addr %s140, 8
      %s142 = smul.addr %s141, 8
      %s143 = scalar_lea.vmem %s2, %s142
      %v145 = vld [vmem:[%s138] sm:$0xff]
      %v146 = vld [vmem:[%s138 + $0x8] sm:$0xff]
      %v147 = vld [vmem:[%s138 + $0x10] sm:$0xff]
      %v148 = vld [vmem:[%s138 + $0x18] sm:$0xff]
      %v149 = vld [vmem:[%s138 + $0x20] sm:$0xff]
      %v150 = vld [vmem:[%s138 + $0x28] sm:$0xff]
      %v151 = vld [vmem:[%s138 + $0x30] sm:$0xff]
      %v152 = vld [vmem:[%s138 + $0x38] sm:$0xff]
      %v153 = vld [vmem:[%s1] sm:$0xf]
      %v154 = vld [vmem:[%s1 + $0x4] sm:$0xf]
      %v155 = vld [vmem:[%s1 + $0x8] sm:$0xf]
      %v156 = vld [vmem:[%s1 + $0xc] sm:$0xf]
      %v157 = vld [vmem:[%s1 + $0x10] sm:$0xf]
      %v158 = vld [vmem:[%s1 + $0x14] sm:$0xf]
      %v159 = vld [vmem:[%s1 + $0x18] sm:$0xf]
      %v160 = vld [vmem:[%s1 + $0x1c] sm:$0xf]
      %v161 = vld [vmem:[%s1 + $0x20] sm:$0xf]
      %v162 = vld [vmem:[%s1 + $0x24] sm:$0xf]
      %v163 = vld [vmem:[%s1 + $0x28] sm:$0xf]
      %v164 = vld [vmem:[%s1 + $0x2c] sm:$0xf]
      %v165 = vld [vmem:[%s1 + $0x30] sm:$0xf]
      %v166 = vld [vmem:[%s1 + $0x34] sm:$0xf]
      %v167 = vld [vmem:[%s1 + $0x38] sm:$0xf]
      %v168 = vld [vmem:[%s1 + $0x3c] sm:$0xf]
      %v169 = vld [vmem:[%s1 + $0x40] sm:$0xf]
      %v170 = vld [vmem:[%s1 + $0x44] sm:$0xf]
      %v171 = vld [vmem:[%s1 + $0x48] sm:$0xf]
      %v172 = vld [vmem:[%s1 + $0x4c] sm:$0xf]
      %v173 = vld [vmem:[%s1 + $0x50] sm:$0xf]
      %v174 = vld [vmem:[%s1 + $0x54] sm:$0xf]
      %v175 = vld [vmem:[%s1 + $0x58] sm:$0xf]
      %v176 = vld [vmem:[%s1 + $0x5c] sm:$0xf]
      %v177 = vld [vmem:[%s1 + $0x60] sm:$0xf]
      %v178 = vld [vmem:[%s1 + $0x64] sm:$0xf]
      %v179 = vld [vmem:[%s1 + $0x68] sm:$0xf]
      %v180 = vld [vmem:[%s1 + $0x6c] sm:$0xf]
      %v181 = vld [vmem:[%s1 + $0x70] sm:$0xf]
      %v182 = vld [vmem:[%s1 + $0x74] sm:$0xf]
      %v183 = vld [vmem:[%s1 + $0x78] sm:$0xf]
      %v184 = vld [vmem:[%s1 + $0x7c] sm:$0xf]
      %v193 = vunpack.c.l.b16 %v145
      %v194 = vunpack.c.h.b16 %v145
      %v195 = vunpack.c.l.b16 %v146
      %v196 = vunpack.c.h.b16 %v146
      %v197 = vunpack.c.l.b16 %v147
      %v198 = vunpack.c.h.b16 %v147
      %v199 = vunpack.c.l.b16 %v148
      %v200 = vunpack.c.h.b16 %v148
      %v201 = vunpack.c.l.b16 %v149
      %v202 = vunpack.c.h.b16 %v149
      %v203 = vunpack.c.l.b16 %v150
      %v204 = vunpack.c.h.b16 %v150
      %v205 = vunpack.c.l.b16 %v151
      %v206 = vunpack.c.h.b16 %v151
      %v207 = vunpack.c.l.b16 %v152
      %v208 = vunpack.c.h.b16 %v152
      %v209 = vpack.c.b16 %v195, %v193
      %v210 = vpack.c.b16 %v196, %v194
      %v211 = vpack.c.b16 %v199, %v197
      %v212 = vpack.c.b16 %v200, %v198
      %v213 = vpack.c.b16 %v203, %v201
      %v214 = vpack.c.b16 %v204, %v202
      %v215 = vpack.c.b16 %v207, %v205
      %v216 = vpack.c.b16 %v208, %v206
      %v257 = vunpack.c.l.b16 %v153
      %v258 = vunpack.c.l.b16 %v154
      %v259 = vunpack.c.l.b16 %v155
      %v260 = vunpack.c.l.b16 %v156
      %v261 = vunpack.c.l.b16 %v157
      %v262 = vunpack.c.l.b16 %v158
      %v263 = vunpack.c.l.b16 %v159
      %v264 = vunpack.c.l.b16 %v160
      %v265 = vunpack.c.l.b16 %v161
      %v266 = vunpack.c.l.b16 %v162
      %v267 = vunpack.c.l.b16 %v163
      %v268 = vunpack.c.l.b16 %v164
      %v269 = vunpack.c.l.b16 %v165
      %v270 = vunpack.c.l.b16 %v166
      %v271 = vunpack.c.l.b16 %v167
      %v272 = vunpack.c.l.b16 %v168
      %v273 = vunpack.c.l.b16 %v169
      %v274 = vunpack.c.l.b16 %v170
      %v275 = vunpack.c.l.b16 %v171
      %v276 = vunpack.c.l.b16 %v172
      %v277 = vunpack.c.l.b16 %v173
      %v278 = vunpack.c.l.b16 %v174
      %v279 = vunpack.c.l.b16 %v175
      %v280 = vunpack.c.l.b16 %v176
      %v281 = vunpack.c.l.b16 %v177
      %v282 = vunpack.c.l.b16 %v178
      %v283 = vunpack.c.l.b16 %v179
      %v284 = vunpack.c.l.b16 %v180
      %v285 = vunpack.c.l.b16 %v181
      %v286 = vunpack.c.l.b16 %v182
      %v287 = vunpack.c.l.b16 %v183
      %v288 = vunpack.c.l.b16 %v184
      %v289 = vpack.c.b16 %v258, %v257
      %v290 = vpack.c.b16 %v260, %v259
      %v291 = vpack.c.b16 %v262, %v261
      %v292 = vpack.c.b16 %v264, %v263
      %v293 = vpack.c.b16 %v266, %v265
      %v294 = vpack.c.b16 %v268, %v267
      %v295 = vpack.c.b16 %v270, %v269
      %v296 = vpack.c.b16 %v272, %v271
      %v297 = vpack.c.b16 %v274, %v273
      %v298 = vpack.c.b16 %v276, %v275
      %v299 = vpack.c.b16 %v278, %v277
      %v300 = vpack.c.b16 %v280, %v279
      %v301 = vpack.c.b16 %v282, %v281
      %v302 = vpack.c.b16 %v284, %v283
      %v303 = vpack.c.b16 %v286, %v285
      %v304 = vpack.c.b16 %v288, %v287
      %321 = vmatprep.subr.bf16.mxu0 0
      %322 = vmatpush1.bf16.msra.mxu0 %v289
      %323 = vmatprep.subr.bf16.mxu0 0
      %324 = vmatpush1.bf16.msra.mxu0 %v290
      %325 = vmatprep.subr.bf16.mxu0 0
      %326 = vmatpush1.bf16.msra.mxu0 %v291
      %327 = vmatprep.subr.bf16.mxu0 0
      %328 = vmatpush1.bf16.msra.mxu0 %v292
      %329 = vmatprep.subr.bf16.mxu0 0
      %330 = vmatpush1.bf16.msra.mxu0 %v293
      %331 = vmatprep.subr.bf16.mxu0 0
      %332 = vmatpush1.bf16.msra.mxu0 %v294
      %333 = vmatprep.subr.bf16.mxu0 0
      %334 = vmatpush1.bf16.msra.mxu0 %v295
      %335 = vmatprep.subr.bf16.mxu0 0
      %336 = vmatpush1.bf16.msra.mxu0 %v296
      %337 = vmatprep.subr.bf16.mxu0 0
      %338 = vmatpush1.bf16.msra.mxu0 %v297
      %339 = vmatprep.subr.bf16.mxu0 0
      %340 = vmatpush1.bf16.msra.mxu0 %v298
      %341 = vmatprep.subr.bf16.mxu0 0
      %342 = vmatpush1.bf16.msra.mxu0 %v299
      %343 = vmatprep.subr.bf16.mxu0 0
      %344 = vmatpush1.bf16.msra.mxu0 %v300
      %345 = vmatprep.subr.bf16.mxu0 0
      %346 = vmatpush1.bf16.msra.mxu0 %v301
      %347 = vmatprep.subr.bf16.mxu0 0
      %348 = vmatpush1.bf16.msra.mxu0 %v302
      %349 = vmatprep.subr.bf16.mxu0 0
      %350 = vmatpush1.bf16.msra.mxu0 %v303
      %351 = vmatprep.subr.bf16.mxu0 0
      %352 = vmatpush1.bf16.msra.mxu0 %v304
      %353 = vmatprep.mubr.bf16.mxu0 %v210
      %354 = vmatmul.mubr.bf16.gmra.mrb[0].mxu0 %v209
      %v355 = vpop.f32.mrb[0].mxu0
      %v356 = vadd.f32 0.0, %v355
      %v357 = vpop.f32.mrb[0].mxu0
      %v358 = vpop.f32.mrb[0].mxu0
      %v359 = vadd.f32 0.0, %v358
      %v360 = vpop.f32.mrb[0].mxu0
      %361 = vmatprep.mubr.bf16.mxu0 %v212
      %362 = vmatmul.mubr.bf16.gmra.mrb[0].mxu0 %v211
      %v363 = vpop.f32.mrb[0].mxu0
      %v364 = vadd.f32 0.0, %v363
      %v365 = vpop.f32.mrb[0].mxu0
      %v366 = vpop.f32.mrb[0].mxu0
      %v367 = vadd.f32 0.0, %v366
      %v368 = vpop.f32.mrb[0].mxu0
      %369 = vmatprep.mubr.bf16.mxu0 %v214
      %370 = vmatmul.mubr.bf16.gmra.mrb[0].mxu0 %v213
      %v371 = vpop.f32.mrb[0].mxu0
      %v372 = vadd.f32 0.0, %v371
      %v373 = vpop.f32.mrb[0].mxu0
      %v374 = vpop.f32.mrb[0].mxu0
      %v375 = vadd.f32 0.0, %v374
      %v376 = vpop.f32.mrb[0].mxu0
      %377 = vmatprep.mubr.bf16.mxu0 %v216
      %378 = vmatmul.mubr.bf16.gmra.mrb[0].mxu0 %v215
      %v379 = vpop.f32.mrb[0].mxu0
      %v380 = vadd.f32 0.0, %v379
      %v381 = vpop.f32.mrb[0].mxu0
      %v382 = vpop.f32.mrb[0].mxu0
      %v383 = vadd.f32 0.0, %v382
      %v384 = vpop.f32.mrb[0].mxu0
      %385 = vdwg.mxu0
      %v386 = vadd.f32 %v356, %v359
      %v387 = vadd.f32 %v386, %v364
      %v388 = vadd.f32 %v387, %v367
      %v389 = vadd.f32 %v388, %v372
      %v390 = vadd.f32 %v389, %v375
      %v391 = vadd.f32 %v390, %v380
      %v392 = vadd.f32 %v391, %v383
      %v393 = vrot.slane %v392, 4
      %v394 = vadd.f32 %v392, %v393
      %v395 = vrot.slane %v394, 2
      %v396 = vadd.f32 %v394, %v395
      %v397 = vrot.slane %v396, 1
      %v398 = vadd.f32 %v396, %v397
      %v399 = vrcp.pop 64.0
      %v400 = vmul.f32 %v398, %v399
      %v401 = vsub.f32 %v356, %v400
      %v402 = vsub.f32 %v359, %v400
      %v403 = vsub.f32 %v364, %v400
      %v404 = vsub.f32 %v367, %v400
      %v405 = vsub.f32 %v372, %v400
      %v406 = vsub.f32 %v375, %v400
      %v407 = vsub.f32 %v380, %v400
      %v408 = vsub.f32 %v383, %v400
      %v409 = vmul.f32 %v401, %v401
      %v410 = vmul.f32 %v402, %v402
      %v411 = vmul.f32 %v403, %v403
      %v412 = vmul.f32 %v404, %v404
      %v413 = vmul.f32 %v405, %v405
      %v414 = vmul.f32 %v406, %v406
      %v415 = vmul.f32 %v407, %v407
      %v416 = vmul.f32 %v408, %v408
      %v417 = vadd.f32 %v409, %v410
      %v418 = vadd.f32 %v417, %v411
      %v419 = vadd.f32 %v418, %v412
      %v420 = vadd.f32 %v419, %v413
      %v421 = vadd.f32 %v420, %v414
      %v422 = vadd.f32 %v421, %v415
      %v423 = vadd.f32 %v422, %v416
      %v424 = vrot.slane %v423, 4
      %v425 = vadd.f32 %v423, %v424
      %v426 = vrot.slane %v425, 2
      %v427 = vadd.f32 %v425, %v426
      %v428 = vrot.slane %v427, 1
      %v429 = vadd.f32 %v427, %v428
      %v430 = vmul.f32 %v429, %v399
      %v431 = vadd.f32 %v430, 1e-05
      %v432 = vrsqrt.pop %v431
      %v433 = vmul.f32 %v401, %v432
      %v434 = vmul.f32 %v402, %v432
      %v435 = vmul.f32 %v403, %v432
      %v436 = vmul.f32 %v404, %v432
      %v437 = vmul.f32 %v405, %v432
      %v438 = vmul.f32 %v406, %v432
      %v439 = vmul.f32 %v407, %v432
      %v440 = vmul.f32 %v408, %v432
      %vm441 = vcmp.ge.f32.partialorder %v433, 0.0
      %vm442 = vcmp.ge.f32.partialorder %v434, 0.0
      %vm443 = vcmp.ge.f32.partialorder %v435, 0.0
      %vm444 = vcmp.ge.f32.partialorder %v436, 0.0
      %vm445 = vcmp.ge.f32.partialorder %v437, 0.0
      %vm446 = vcmp.ge.f32.partialorder %v438, 0.0
      %vm447 = vcmp.ge.f32.partialorder %v439, 0.0
      %vm448 = vcmp.ge.f32.partialorder %v440, 0.0
      %v449 = vmul.f32 %v433, 0.01
      %v450 = vmul.f32 %v434, 0.01
      %v451 = vmul.f32 %v435, 0.01
      %v452 = vmul.f32 %v436, 0.01
      %v453 = vmul.f32 %v437, 0.01
      %v454 = vmul.f32 %v438, 0.01
      %v455 = vmul.f32 %v439, 0.01
      %v456 = vmul.f32 %v440, 0.01
      %v457 = vsel %vm441, %v433, %v449
      %v458 = vsel %vm442, %v434, %v450
      %v459 = vsel %vm443, %v435, %v451
      %v460 = vsel %vm444, %v436, %v452
      %v461 = vsel %vm445, %v437, %v453
      %v462 = vsel %vm446, %v438, %v454
      %v463 = vsel %vm447, %v439, %v455
      %v464 = vsel %vm448, %v440, %v456
      %465 = vst [vmem:[%s143] sm:$0xff] %v457
      %466 = vst [vmem:[%s143 + $0x8] sm:$0xff] %v458
      %467 = vst [vmem:[%s143 + $0x10] sm:$0xff] %v459
      %468 = vst [vmem:[%s143 + $0x18] sm:$0xff] %v460
      %469 = vst [vmem:[%s143 + $0x20] sm:$0xff] %v461
      %470 = vst [vmem:[%s143 + $0x28] sm:$0xff] %v462
      %471 = vst [vmem:[%s143 + $0x30] sm:$0xff] %v463
      %472 = vst [vmem:[%s143 + $0x38] sm:$0xff] %v464
      %p473 = scmp.lt.s32.totalorder %s13, 1
      %s474 = scalar_select %p473, %s13, 1
      %s475 = smul.addr %s474, 8
      %s476 = smul.addr %s475, 8
      %s477 = scalar_lea.vmem %s2, %s476
      // Predicated region
      $region29: #{style_encoder_mlp.12} parent=27 // pred_check
        %p478 = pneg %p78
      $region30: #{style_encoder_mlp.12} parent=27 // pred_check_branch
        %480 = sbr.rel (%p478) target = $region32
      $region31: #{style_encoder_mlp.12} parent=27 // pred_region
        _
      $region32: #{style_encoder_mlp.12} parent=27 // pred_fallthru
        _
    $region28: #{style_encoder_mlp.12} parent=5 // pred_fallthru
      _
    %p481 = scmp.le.s32.totalorder 2, %s8
    // Predicated region
    $region33: #{style_encoder_mlp.12} parent=5 // pred_check
      %p482 = pneg %p481
    $region34: #{style_encoder_mlp.12} parent=5 // pred_check_branch
      %484 = sbr.rel (%p482) target = $region36
    $region35: #{style_encoder_mlp.12} parent=5 // pred_region
      %s485 = ssub.s32 %s8, 2
      // Predicated region
      $region37: #{style_encoder_mlp.12} parent=35 // pred_check
        %p486 = pneg %p84
      $region38: #{style_encoder_mlp.12} parent=35 // pred_check_branch
        %488 = sbr.rel (%p486) target = $region40
      $region39: #{style_encoder_mlp.12} parent=35 // pred_region
        %p489 = scmp.lt.s32.totalorder %s14, 1
        %s490 = scalar_select %p489, %s14, 1
        %s491 = smul.addr %s490, 8
        %s492 = smul.addr %s491, 8
        %s493 = scalar_lea.vmem %s2, %s492
      $region40: #{style_encoder_mlp.12} parent=35 // pred_fallthru
        _
    $region36: #{style_encoder_mlp.12} parent=5 // pred_fallthru
      _
  $region6: #{style_encoder_mlp.12} parent=0 // loop_footer
    %s12 = sadd.s32 1, %s8
  $region7: #{style_encoder_mlp.12} parent=0 // loop_footer_branch
    %7 = sbr.rel target = $region3
  $region8: #{style_encoder_mlp.12} parent=0 // loop_exit
    _

// kernel: style_encoder_mlp.13
$region0: #{style_encoder_mlp.13}
  #allocation0 [shape = 'u32[]', space=smem, size = 0x4, offset = 0x4, fixed_abs, tag = 'smem constant byte address 0x4 - core index']
  #allocation1 [shape = 'u32[144,128]{1,0:T(1,128)}', space=vmem, size = 0x12000, scoped, tag = 'internal scratch']
  %s0 = inlined_call_operand.vmem [shape: bf16[2,16,512], index: 0, kind: input, shape index: {}]
  %s1 = inlined_call_operand.vmem [shape: bf16[512,128], index: 1, kind: input, shape index: {}]
  %s2 = inlined_call_operand.vmem [shape: f32[2,16,128], index: 2, kind: output, shape index: {}]
  %s3 = sld [smem:[#allocation0]]
  $region41: #{style_encoder_mlp.13} parent=0
    _
  %s5 = ssub.s32 1, %s3
  %s6 = scalar_select 0, %s5, %s3
  loop: start=0, step=1, limit=4
  $region2: #{style_encoder_mlp.13} parent=0 // loop_pre_header
    _
  $region3: #{style_encoder_mlp.13} parent=0 // loop_header
    %s8 = sphi 0, %s12
    %p9 = scmp.ge.s32.totalorder %s8, 4
    %s18 = sphi 0, %s20
    %s21 = sphi 0, %s18
    %s22 = sphi 0, %s21
    %s38 = sphi 0, %s22
    %s42 = sphi 0, %s42
    %s44 = sphi 0, %s42
    %s45 = sphi 0, %s44
    %s59 = sphi 0, %s45
    %s65 = sphi 0, %s67
    %s68 = sphi 0, %s65
    %s69 = sphi 0, %s68
    %s85 = sphi 0, %s69
  $region4: #{style_encoder_mlp.13} parent=0 // loop_header_branch
    %11 = sbr.rel (%p9) target = $region8
  $region5: #{style_encoder_mlp.13} parent=0 // loop_body
    %s13 = ssub.s32 %s8, 1
    %s14 = ssub.s32 %s8, 2
    %s15 = sadd.s32 %s8, 1
    %s16 = ssub.s32 %s8, %s15
    %p17 = scmp.eq.s32.totalorder %s16, 0
    %s19 = sadd.s32 %s18, 1
    %s20 = scalar_select %p17, %s18, %s19
    %p23 = pneg %p17
    %p24 = scmp.eq.s32.totalorder %s8, 1
    %p25 = por %p23, %p24
    %p26 = scmp.ne.s32.totalorder %s18, %s21
    %p27 = scmp.eq.s32.totalorder %s8, 0
    %p28 = por %p26, %p27
    %p29 = scmp.ne.s32.totalorder %s18, %s21
    %p30 = scmp.eq.s32.totalorder %s13, 1
    %p31 = por %p29, %p30
    %p32 = scmp.ne.s32.totalorder %s21, %s22
    %p33 = scmp.eq.s32.totalorder %s13, 0
    %p34 = por %p32, %p33
    %p35 = scmp.ne.s32.totalorder %s21, %s22
    %p36 = scmp.eq.s32.totalorder %s14, 1
    %p37 = por %p35, %p36
    %p39 = scmp.ne.s32.totalorder %s22, %s38
    %p40 = scmp.eq.s32.totalorder %s14, 0
    %p41 = por %p39, %p40
    %s43 = sadd.s32 %s42, 1
    %p46 = scmp.eq.s32.totalorder %s8, 1
    %p47 = scmp.ne.s32.totalorder %s42, %s44
    %p48 = scmp.eq.s32.totalorder %s8, 0
    %p49 = por %p47, %p48
    %p50 = scmp.ne.s32.totalorder %s42, %s44
    %p51 = scmp.eq.s32.totalorder %s13, 1
    %p52 = por %p50, %p51
    %p53 = scmp.ne.s32.totalorder %s44, %s45
    %p54 = scmp.eq.s32.totalorder %s13, 0
    %p55 = por %p53, %p54
    %p56 = scmp.ne.s32.totalorder %s44, %s45
    %p57 = scmp.eq.s32.totalorder %s14, 1
    %p58 = por %p56, %p57
    %p60 = scmp.ne.s32.totalorder %s45, %s59
    %p61 = scmp.eq.s32.totalorder %s14, 0
    %p62 = por %p60, %p61
    %s63 = ssub.s32 %s8, %s15
    %p64 = scmp.eq.s32.totalorder %s63, 0
    %s66 = sadd.s32 %s65, 1
    %s67 = scalar_select %p64, %s65, %s66
    %p70 = pneg %p64
    %p71 = scmp.eq.s32.totalorder %s8, 1
    %p72 = por %p70, %p71
    %p73 = scmp.ne.s32.totalorder %s65, %s68
    %p74 = scmp.eq.s32.totalorder %s8, 0
    %p75 = por %p73, %p74
    %p76 = scmp.ne.s32.totalorder %s65, %s68
    %p77 = scmp.eq.s32.totalorder %s13, 1
    %p78 = por %p76, %p77
    %p79 = scmp.ne.s32.totalorder %s68, %s69
    %p80 = scmp.eq.s32.totalorder %s13, 0
    %p81 = por %p79, %p80
    %p82 = scmp.ne.s32.totalorder %s68, %s69
    %p83 = scmp.eq.s32.totalorder %s14, 1
    %p84 = por %p82, %p83
    %p86 = scmp.ne.s32.totalorder %s69, %s85
    %p87 = scmp.eq.s32.totalorder %s14, 0
    %p88 = por %p86, %p87
    %p89 = scmp.le.s32.totalorder 1, %s8
    %p90 = scmp.lt.s32.totalorder %s8, 3
    %p91 = pnand %p89, %p90
    %p92 = pneg %p91
    // Predicated region
    $region9: #{style_encoder_mlp.13} parent=5 // pred_check
      _
    $region10: #{style_encoder_mlp.13} parent=5 // pred_check_branch
      %94 = sbr.rel (%p91) target = $region12
    $region11: #{style_encoder_mlp.13} parent=5 // pred_region
      %s95 = ssub.s32 %s8, 1
      // Predicated region
      $region13: #{style_encoder_mlp.13} parent=11 // pred_check
        %p96 = pneg %p55
      $region14: #{style_encoder_mlp.13} parent=11 // pred_check_branch
        %98 = sbr.rel (%p96) target = $region16
      $region15: #{style_encoder_mlp.13} parent=11 // pred_region
        _
      $region16: #{style_encoder_mlp.13} parent=11 // pred_fallthru
        _
    $region12: #{style_encoder_mlp.13} parent=5 // pred_fallthru
      _
    %p99 = scmp.lt.s32.totalorder %s8, 2
    // Predicated region
    $region17: #{style_encoder_mlp.13} parent=5 // pred_check
      %p100 = pneg %p99
    $region18: #{style_encoder_mlp.13} parent=5 // pred_check_branch
      %102 = sbr.rel (%p100) target = $region20
    $region19: #{style_encoder_mlp.13} parent=5 // pred_region
      // Predicated region
      $region21: #{style_encoder_mlp.13} parent=19 // pred_check
        %p103 = pneg %p28
      $region22: #{style_encoder_mlp.13} parent=19 // pred_check_branch
        %105 = sbr.rel (%p103) target = $region24
      $region23: #{style_encoder_mlp.13} parent=19 // pred_region
        %p106 = scmp.lt.s32.totalorder %s8, 1
        %s107 = scalar_select %p106, %s8, 1
        %s108 = smul.addr %s107, 8
        %s109 = smul.addr %s108, 4
        %s110 = scalar_lea.vmem %s0, %s109
      $region24: #{style_encoder_mlp.13} parent=19 // pred_fallthru
        _
    $region20: #{style_encoder_mlp.13} parent=5 // pred_fallthru
      _
    %p111 = scmp.le.s32.totalorder 1, %s8
    %p112 = scmp.lt.s32.totalorder %s8, 3
    %p113 = pnand %p111, %p112
    %p114 = pneg %p113
    // Predicated region
    $region25: #{style_encoder_mlp.13} parent=5 // pred_check
      _
    $region26: #{style_encoder_mlp.13} parent=5 // pred_check_branch
      %116 = sbr.rel (%p113) target = $region28
    $region27: #{style_encoder_mlp.13} parent=5 // pred_region
      %s117 = ssub.s32 %s8, 1
      %p118 = scmp.lt.s32.totalorder %s13, 1
      %s119 = scalar_select %p118, %s13, 1
      %s120 = smul.addr %s119, 8
      %s121 = smul.addr %s120, 4
      %s122 = scalar_lea.vmem %s0, %s121
      %p123 = pneg %p34
      %p124 = pneg %p31
      %p125 = pneg %p55
      %p126 = pneg %p52
      %p127 = pneg %p81
      %p128 = pneg %p78
      %p129 = scmp.lt.s32.totalorder %s13, 1
      %s130 = scalar_select %p129, %s13, 1
      %s131 = smul.addr %s130, 2
      %s132 = smul.addr %s131, 8
      %s133 = scalar_lea.vmem %s2, %s132
      %p134 = scmp.lt.s32.totalorder %s13, 1
      %s135 = scalar_select %p134, %s13, 1
      %s136 = smul.addr %s135, 8
      %s137 = smul.addr %s136, 4
      %s138 = scalar_lea.vmem %s0, %s137
      %p139 = scmp.lt.s32.totalorder %s13, 1
      %s140 = scalar_select %p139, %s13, 1
      %s141 = smul.addr %s140, 2
      %s142 = smul.addr %s141, 8
      %s143 = scalar_lea.vmem %s2, %s142
      %v145 = vld [vmem:[%s138] sm:$0xff]
      %v146 = vld [vmem:[%s138 + $0x8] sm:$0xff]
      %v147 = vld [vmem:[%s138 + $0x10] sm:$0xff]
      %v148 = vld [vmem:[%s138 + $0x18] sm:$0xff]
      %v149 = vld [vmem:[%s1] sm:$0xf]
      %v150 = vld [vmem:[%s1 + $0x4] sm:$0xf]
      %v151 = vld [vmem:[%s1 + $0x8] sm:$0xf]
      %v152 = vld [vmem:[%s1 + $0xc] sm:$0xf]
      %v153 = vld [vmem:[%s1 + $0x10] sm:$0xf]
      %v154 = vld [vmem:[%s1 + $0x14] sm:$0xf]
      %v155 = vld [vmem:[%s1 + $0x18] sm:$0xf]
      %v156 = vld [vmem:[%s1 + $0x1c] sm:$0xf]
      %v157 = vld [vmem:[%s1 + $0x20] sm:$0xf]
      %v158 = vld [vmem:[%s1 + $0x24] sm:$0xf]
      %v159 = vld [vmem:[%s1 + $0x28] sm:$0xf]
      %v160 = vld [vmem:[%s1 + $0x2c] sm:$0xf]
      %v161 = vld [vmem:[%s1 + $0x30] sm:$0xf]
      %v162 = vld [vmem:[%s1 + $0x34] sm:$0xf]
      %v163 = vld [vmem:[%s1 + $0x38] sm:$0xf]
      %v164 = vld [vmem:[%s1 + $0x3c] sm:$0xf]
      %v165 = vld [vmem:[%s1 + $0x40] sm:$0xf]
      %v166 = vld [vmem:[%s1 + $0x44] sm:$0xf]
      %v167 = vld [vmem:[%s1 + $0x48] sm:$0xf]
      %v168 = vld [vmem:[%s1 + $0x4c] sm:$0xf]
      %v169 = vld [vmem:[%s1 + $0x50] sm:$0xf]
      %v170 = vld [vmem:[%s1 + $0x54] sm:$0xf]
      %v171 = vld [vmem:[%s1 + $0x58] sm:$0xf]
      %v172 = vld [vmem:[%s1 + $0x5c] sm:$0xf]
      %v173 = vld [vmem:[%s1 + $0x60] sm:$0xf]
      %v174 = vld [vmem:[%s1 + $0x64] sm:$0xf]
      %v175 = vld [vmem:[%s1 + $0x68] sm:$0xf]
      %v176 = vld [vmem:[%s1 + $0x6c] sm:$0xf]
      %v177 = vld [vmem:[%s1 + $0x70] sm:$0xf]
      %v178 = vld [vmem:[%s1 + $0x74] sm:$0xf]
      %v179 = vld [vmem:[%s1 + $0x78] sm:$0xf]
      %v180 = vld [vmem:[%s1 + $0x7c] sm:$0xf]
      %v181 = vld [vmem:[%s1 + $0x80] sm:$0xf]
      %v182 = vld [vmem:[%s1 + $0x84] sm:$0xf]
      %v183 = vld [vmem:[%s1 + $0x88] sm:$0xf]
      %v184 = vld [vmem:[%s1 + $0x8c] sm:$0xf]
      %v185 = vld [vmem:[%s1 + $0x90] sm:$0xf]
      %v186 = vld [vmem:[%s1 + $0x94] sm:$0xf]
      %v187 = vld [vmem:[%s1 + $0x98] sm:$0xf]
      %v188 = vld [vmem:[%s1 + $0x9c] sm:$0xf]
      %v189 = vld [vmem:[%s1 + $0xa0] sm:$0xf]
      %v190 = vld [vmem:[%s1 + $0xa4] sm:$0xf]
      %v191 = vld [vmem:[%s1 + $0xa8] sm:$0xf]
      %v192 = vld [vmem:[%s1 + $0xac] sm:$0xf]
      %v193 = vld [vmem:[%s1 + $0xb0] sm:$0xf]
      %v194 = vld [vmem:[%s1 + $0xb4] sm:$0xf]
      %v195 = vld [vmem:[%s1 + $0xb8] sm:$0xf]
      %v196 = vld [vmem:[%s1 + $0xbc] sm:$0xf]
      %v197 = vld [vmem:[%s1 + $0xc0] sm:$0xf]
      %v198 = vld [vmem:[%s1 + $0xc4] sm:$0xf]
      %v199 = vld [vmem:[%s1 + $0xc8] sm:$0xf]
      %v200 = vld [vmem:[%s1 + $0xcc] sm:$0xf]
      %v201 = vld [vmem:[%s1 + $0xd0] sm:$0xf]
      %v202 = vld [vmem:[%s1 + $0xd4] sm:$0xf]
      %v203 = vld [vmem:[%s1 + $0xd8] sm:$0xf]
      %v204 = vld [vmem:[%s1 + $0xdc] sm:$0xf]
      %v205 = vld [vmem:[%s1 + $0xe0] sm:$0xf]
      %v206 = vld [vmem:[%s1 + $0xe4] sm:$0xf]
      %v207 = vld [vmem:[%s1 + $0xe8] sm:$0xf]
      %v208 = vld [vmem:[%s1 + $0xec] sm:$0xf]
      %v209 = vld [vmem:[%s1 + $0xf0] sm:$0xf]
      %v210 = vld [vmem:[%s1 + $0xf4] sm:$0xf]
      %v211 = vld [vmem:[%s1 + $0xf8] sm:$0xf]
      %v212 = vld [vmem:[%s1 + $0xfc] sm:$0xf]
      %v217 = vunpack.c.l.b16 %v145
      %v218 = vunpack.c.h.b16 %v145
      %v219 = vunpack.c.l.b16 %v146
      %v220 = vunpack.c.h.b16 %v146
      %v221 = vunpack.c.l.b16 %v147
      %v222 = vunpack.c.h.b16 %v147
      %v223 = vunpack.c.l.b16 %v148
      %v224 = vunpack.c.h.b16 %v148
      %v225 = vpack.c.b16 %v221, %v217
      %v226 = vpack.c.b16 %v222, %v218
      %v227 = vpack.c.b16 %v223, %v219
      %v228 = vpack.c.b16 %v224, %v220
      %v297 = vunpack.c.l.b16 %v149
      %v298 = vunpack.c.l.b16 %v150
      %v299 = vunpack.c.l.b16 %v151
      %v300 = vunpack.c.l.b16 %v152
      %v301 = vunpack.c.l.b16 %v153
      %v302 = vunpack.c.l.b16 %v154
      %v303 = vunpack.c.l.b16 %v155
      %v304 = vunpack.c.l.b16 %v156
      %v305 = vunpack.c.l.b16 %v157
      %v306 = vunpack.c.l.b16 %v158
      %v307 = vunpack.c.l.b16 %v159
      %v308 = vunpack.c.l.b16 %v160
      %v309 = vunpack.c.l.b16 %v161
      %v310 = vunpack.c.l.b16 %v162
      %v311 = vunpack.c.l.b16 %v163
      %v312 = vunpack.c.l.b16 %v164
      %v313 = vunpack.c.l.b16 %v165
      %v314 = vunpack.c.l.b16 %v166
      %v315 = vunpack.c.l.b16 %v167
      %v316 = vunpack.c.l.b16 %v168
      %v317 = vunpack.c.l.b16 %v169
      %v318 = vunpack.c.l.b16 %v170
      %v319 = vunpack.c.l.b16 %v171
      %v320 = vunpack.c.l.b16 %v172
      %v321 = vunpack.c.l.b16 %v173
      %v322 = vunpack.c.l.b16 %v174
      %v323 = vunpack.c.l.b16 %v175
      %v324 = vunpack.c.l.b16 %v176
      %v325 = vunpack.c.l.b16 %v177
      %v326 = vunpack.c.l.b16 %v178
      %v327 = vunpack.c.l.b16 %v179
      %v328 = vunpack.c.l.b16 %v180
      %v329 = vunpack.c.l.b16 %v181
      %v330 = vunpack.c.l.b16 %v182
      %v331 = vunpack.c.l.b16 %v183
      %v332 = vunpack.c.l.b16 %v184
      %v333 = vunpack.c.l.b16 %v185
      %v334 = vunpack.c.l.b16 %v186
      %v335 = vunpack.c.l.b16 %v187
      %v336 = vunpack.c.l.b16 %v188
      %v337 = vunpack.c.l.b16 %v189
      %v338 = vunpack.c.l.b16 %v190
      %v339 = vunpack.c.l.b16 %v191
      %v340 = vunpack.c.l.b16 %v192
      %v341 = vunpack.c.l.b16 %v193
      %v342 = vunpack.c.l.b16 %v194
      %v343 = vunpack.c.l.b16 %v195
      %v344 = vunpack.c.l.b16 %v196
      %v345 = vunpack.c.l.b16 %v197
      %v346 = vunpack.c.l.b16 %v198
      %v347 = vunpack.c.l.b16 %v199
      %v348 = vunpack.c.l.b16 %v200
      %v349 = vunpack.c.l.b16 %v201
      %v350 = vunpack.c.l.b16 %v202
      %v351 = vunpack.c.l.b16 %v203
      %v352 = vunpack.c.l.b16 %v204
      %v353 = vunpack.c.l.b16 %v205
      %v354 = vunpack.c.l.b16 %v206
      %v355 = vunpack.c.l.b16 %v207
      %v356 = vunpack.c.l.b16 %v208
      %v357 = vunpack.c.l.b16 %v209
      %v358 = vunpack.c.l.b16 %v210
      %v359 = vunpack.c.l.b16 %v211
      %v360 = vunpack.c.l.b16 %v212
      %v361 = vpack.c.b16 %v298, %v297
      %v362 = vpack.c.b16 %v300, %v299
      %v363 = vpack.c.b16 %v302, %v301
      %v364 = vpack.c.b16 %v304, %v303
      %v365 = vpack.c.b16 %v306, %v305
      %v366 = vpack.c.b16 %v308, %v307
      %v367 = vpack.c.b16 %v310, %v309
      %v368 = vpack.c.b16 %v312, %v311
      %v369 = vpack.c.b16 %v314, %v313
      %v370 = vpack.c.b16 %v316, %v315
      %v371 = vpack.c.b16 %v318, %v317
      %v372 = vpack.c.b16 %v320, %v319
      %v373 = vpack.c.b16 %v322, %v321
      %v374 = vpack.c.b16 %v324, %v323
      %v375 = vpack.c.b16 %v326, %v325
      %v376 = vpack.c.b16 %v328, %v327
      %v377 = vpack.c.b16 %v330, %v329
      %v378 = vpack.c.b16 %v332, %v331
      %v379 = vpack.c.b16 %v334, %v333
      %v380 = vpack.c.b16 %v336, %v335
      %v381 = vpack.c.b16 %v338, %v337
      %v382 = vpack.c.b16 %v340, %v339
      %v383 = vpack.c.b16 %v342, %v341
      %v384 = vpack.c.b16 %v344, %v343
      %v385 = vpack.c.b16 %v346, %v345
      %v386 = vpack.c.b16 %v348, %v347
      %v387 = vpack.c.b16 %v350, %v349
      %v388 = vpack.c.b16 %v352, %v351
      %v389 = vpack.c.b16 %v354, %v353
      %v390 = vpack.c.b16 %v356, %v355
      %v391 = vpack.c.b16 %v358, %v357
      %v392 = vpack.c.b16 %v360, %v359
      %425 = vmatprep.subr.bf16.mxu0 0
      %426 = vmatpush1.bf16.msra.mxu0 %v361
      %427 = vmatprep.subr.bf16.mxu0 0
      %428 = vmatpush1.bf16.msra.mxu0 %v362
      %429 = vmatprep.subr.bf16.mxu0 0
      %430 = vmatpush1.bf16.msra.mxu0 %v363
      %431 = vmatprep.subr.bf16.mxu0 0
      %432 = vmatpush1.bf16.msra.mxu0 %v364
      %433 = vmatprep.subr.bf16.mxu0 0
      %434 = vmatpush1.bf16.msra.mxu0 %v365
      %435 = vmatprep.subr.bf16.mxu0 0
      %436 = vmatpush1.bf16.msra.mxu0 %v366
      %437 = vmatprep.subr.bf16.mxu0 0
      %438 = vmatpush1.bf16.msra.mxu0 %v367
      %439 = vmatprep.subr.bf16.mxu0 0
      %440 = vmatpush1.bf16.msra.mxu0 %v368
      %441 = vmatprep.subr.bf16.mxu0 0
      %442 = vmatpush1.bf16.msra.mxu0 %v369
      %443 = vmatprep.subr.bf16.mxu0 0
      %444 = vmatpush1.bf16.msra.mxu0 %v370
      %445 = vmatprep.subr.bf16.mxu0 0
      %446 = vmatpush1.bf16.msra.mxu0 %v371
      %447 = vmatprep.subr.bf16.mxu0 0
      %448 = vmatpush1.bf16.msra.mxu0 %v372
      %449 = vmatprep.subr.bf16.mxu0 0
      %450 = vmatpush1.bf16.msra.mxu0 %v373
      %451 = vmatprep.subr.bf16.mxu0 0
      %452 = vmatpush1.bf16.msra.mxu0 %v374
      %453 = vmatprep.subr.bf16.mxu0 0
      %454 = vmatpush1.bf16.msra.mxu0 %v375
      %455 = vmatprep.subr.bf16.mxu0 0
      %456 = vmatpush1.bf16.msra.mxu0 %v376
      %457 = vmatprep.mubr.bf16.mxu0 %v226
      %458 = vmatmul.mubr.bf16.gmra.mrb[0].mxu0 %v225
      %v459 = vpop.f32.mrb[0].mxu0
      %v460 = vadd.f32 0.0, %v459
      %v461 = vpop.f32.mrb[0].mxu0
      %v462 = vpop.f32.mrb[0].mxu0
      %v463 = vadd.f32 0.0, %v462
      %v464 = vpop.f32.mrb[0].mxu0
      %465 = vdwg.mxu0
      %466 = vmatprep.subr.bf16.mxu0 0
      %467 = vmatpush1.bf16.msra.mxu0 %v377
      %468 = vmatprep.subr.bf16.mxu0 0
      %469 = vmatpush1.bf16.msra.mxu0 %v378
      %470 = vmatprep.subr.bf16.mxu0 0
      %471 = vmatpush1.bf16.msra.mxu0 %v379
      %472 = vmatprep.subr.bf16.mxu0 0
      %473 = vmatpush1.bf16.msra.mxu0 %v380
      %474 = vmatprep.subr.bf16.mxu0 0
      %475 = vmatpush1.bf16.msra.mxu0 %v381
      %476 = vmatprep.subr.bf16.mxu0 0
      %477 = vmatpush1.bf16.msra.mxu0 %v382
      %478 = vmatprep.subr.bf16.mxu0 0
      %479 = vmatpush1.bf16.msra.mxu0 %v383
      %480 = vmatprep.subr.bf16.mxu0 0
      %481 = vmatpush1.bf16.msra.mxu0 %v384
      %482 = vmatprep.subr.bf16.mxu0 0
      %483 = vmatpush1.bf16.msra.mxu0 %v385
      %484 = vmatprep.subr.bf16.mxu0 0
      %485 = vmatpush1.bf16.msra.mxu0 %v386
      %486 = vmatprep.subr.bf16.mxu0 0
      %487 = vmatpush1.bf16.msra.mxu0 %v387
      %488 = vmatprep.subr.bf16.mxu0 0
      %489 = vmatpush1.bf16.msra.mxu0 %v388
      %490 = vmatprep.subr.bf16.mxu0 0
      %491 = vmatpush1.bf16.msra.mxu0 %v389
      %492 = vmatprep.subr.bf16.mxu0 0
      %493 = vmatpush1.bf16.msra.mxu0 %v390
      %494 = vmatprep.subr.bf16.mxu0 0
      %495 = vmatpush1.bf16.msra.mxu0 %v391
      %496 = vmatprep.subr.bf16.mxu0 0
      %497 = vmatpush1.bf16.msra.mxu0 %v392
      %498 = vmatprep.mubr.bf16.mxu0 %v228
      %499 = vmatmul.mubr.bf16.gmra.mrb[0].mxu0 %v227
      %v500 = vpop.f32.mrb[0].mxu0
      %v501 = vadd.f32 %v460, %v500
      %v502 = vpop.f32.mrb[0].mxu0
      %v503 = vpop.f32.mrb[0].mxu0
      %v504 = vadd.f32 %v463, %v503
      %v505 = vpop.f32.mrb[0].mxu0
      %506 = vdwg.mxu0
      %v507 = vadd.f32 %v501, %v504
      %v508 = vrot.slane %v507, 4
      %v509 = vadd.f32 %v507, %v508
      %v510 = vrot.slane %v509, 2
      %v511 = vadd.f32 %v509, %v510
      %v512 = vrot.slane %v511, 1
      %v513 = vadd.f32 %v511, %v512
      %v514 = vrcp.pop 16.0
      %v515 = vmul.f32 %v513, %v514
      %v516 = vsub.f32 %v501, %v515
      %v517 = vsub.f32 %v504, %v515
      %v518 = vmul.f32 %v516, %v516
      %v519 = vmul.f32 %v517, %v517
      %v520 = vadd.f32 %v518, %v519
      %v521 = vrot.slane %v520, 4
      %v522 = vadd.f32 %v520, %v521
      %v523 = vrot.slane %v522, 2
      %v524 = vadd.f32 %v522, %v523
      %v525 = vrot.slane %v524, 1
      %v526 = vadd.f32 %v524, %v525
      %v527 = vmul.f32 %v526, %v514
      %v528 = vadd.f32 %v527, 1e-05
      %v529 = vrsqrt.pop %v528
      %v530 = vmul.f32 %v516, %v529
      %v531 = vmul.f32 %v517, %v529
      %vm532 = vcmp.ge.f32.partialorder %v530, 0.0
      %vm533 = vcmp.ge.f32.partialorder %v531, 0.0
      %v534 = vmul.f32 %v530, 0.01
      %v535 = vmul.f32 %v531, 0.01
      %v536 = vsel %vm532, %v530, %v534
      %v537 = vsel %vm533, %v531, %v535
      %538 = vst [vmem:[%s143] sm:$0xff] %v536
      %539 = vst [vmem:[%s143 + $0x8] sm:$0xff] %v537
      %p540 = scmp.lt.s32.totalorder %s13, 1
      %s541 = scalar_select %p540, %s13, 1
      %s542 = smul.addr %s541, 2
      %s543 = smul.addr %s542, 8
      %s544 = scalar_lea.vmem %s2, %s543
      // Predicated region
      $region29: #{style_encoder_mlp.13} parent=27 // pred_check
        %p545 = pneg %p78
      $region30: #{style_encoder_mlp.13} parent=27 // pred_check_branch
        %547 = sbr.rel (%p545) target = $region32
      $region31: #{style_encoder_mlp.13} parent=27 // pred_region
        _
      $region32: #{style_encoder_mlp.13} parent=27 // pred_fallthru
        _
    $region28: #{style_encoder_mlp.13} parent=5 // pred_fallthru
      _
    %p548 = scmp.le.s32.totalorder 2, %s8
    // Predicated region
    $region33: #{style_encoder_mlp.13} parent=5 // pred_check
      %p549 = pneg %p548
    $region34: #{style_encoder_mlp.13} parent=5 // pred_check_branch
      %551 = sbr.rel (%p549) target = $region36
    $region35: #{style_encoder_mlp.13} parent=5 // pred_region
      %s552 = ssub.s32 %s8, 2
      // Predicated region
      $region37: #{style_encoder_mlp.13} parent=35 // pred_check
        %p553 = pneg %p84
      $region38: #{style_encoder_mlp.13} parent=35 // pred_check_branch
        %555 = sbr.rel (%p553) target = $region40
      $region39: #{style_encoder_mlp.13} parent=35 // pred_region
        %p556 = scmp.lt.s32.totalorder %s14, 1
        %s557 = scalar_select %p556, %s14, 1
        %s558 = smul.addr %s557, 2
        %s559 = smul.addr %s558, 8
        %s560 = scalar_lea.vmem %s2, %s559
      $region40: #{style_encoder_mlp.13} parent=35 // pred_fallthru
        _
    $region36: #{style_encoder_mlp.13} parent=5 // pred_fallthru
      _
  $region6: #{style_encoder_mlp.13} parent=0 // loop_footer
    %s12 = sadd.s32 1, %s8
  $region7: #{style_encoder_mlp.13} parent=0 // loop_footer_branch
    %7 = sbr.rel target = $region3
  $region8: #{style_encoder_mlp.13} parent=0 // loop_exit
    _

// kernel: style_encoder_mlp.14
$region0: #{style_encoder_mlp.14}
  #allocation0 [shape = 'u32[]', space=smem, size = 0x4, offset = 0x4, fixed_abs, tag = 'smem constant byte address 0x4 - core index']
  #allocation1 [shape = 'u32[144,128]{1,0:T(1,128)}', space=vmem, size = 0x12000, scoped, tag = 'internal scratch']
  %s0 = inlined_call_operand.vmem [shape: bf16[2,4,1024], index: 0, kind: input, shape index: {}]
  %s1 = inlined_call_operand.vmem [shape: bf16[1024,128], index: 1, kind: input, shape index: {}]
  %s2 = inlined_call_operand.vmem [shape: f32[2,4,128], index: 2, kind: output, shape index: {}]
  %s3 = sld [smem:[#allocation0]]
  $region41: #{style_encoder_mlp.14} parent=0
    _
  %s5 = ssub.s32 1, %s3
  %s6 = scalar_select 0, %s5, %s3
  loop: start=0, step=1, limit=4
  $region2: #{style_encoder_mlp.14} parent=0 // loop_pre_header
    _
  $region3: #{style_encoder_mlp.14} parent=0 // loop_header
    %s8 = sphi 0, %s12
    %p9 = scmp.ge.s32.totalorder %s8, 4
    %s18 = sphi 0, %s20
    %s21 = sphi 0, %s18
    %s22 = sphi 0, %s21
    %s38 = sphi 0, %s22
    %s42 = sphi 0, %s42
    %s44 = sphi 0, %s42
    %s45 = sphi 0, %s44
    %s59 = sphi 0, %s45
    %s65 = sphi 0, %s67
    %s68 = sphi 0, %s65
    %s69 = sphi 0, %s68
    %s85 = sphi 0, %s69
  $region4: #{style_encoder_mlp.14} parent=0 // loop_header_branch
    %11 = sbr.rel (%p9) target = $region8
  $region5: #{style_encoder_mlp.14} parent=0 // loop_body
    %s13 = ssub.s32 %s8, 1
    %s14 = ssub.s32 %s8, 2
    %s15 = sadd.s32 %s8, 1
    %s16 = ssub.s32 %s8, %s15
    %p17 = scmp.eq.s32.totalorder %s16, 0
    %s19 = sadd.s32 %s18, 1
    %s20 = scalar_select %p17, %s18, %s19
    %p23 = pneg %p17
    %p24 = scmp.eq.s32.totalorder %s8, 1
    %p25 = por %p23, %p24
    %p26 = scmp.ne.s32.totalorder %s18, %s21
    %p27 = scmp.eq.s32.totalorder %s8, 0
    %p28 = por %p26, %p27
    %p29 = scmp.ne.s32.totalorder %s18, %s21
    %p30 = scmp.eq.s32.totalorder %s13, 1
    %p31 = por %p29, %p30
    %p32 = scmp.ne.s32.totalorder %s21, %s22
    %p33 = scmp.eq.s32.totalorder %s13, 0
    %p34 = por %p32, %p33
    %p35 = scmp.ne.s32.totalorder %s21, %s22
    %p36 = scmp.eq.s32.totalorder %s14, 1
    %p37 = por %p35, %p36
    %p39 = scmp.ne.s32.totalorder %s22, %s38
    %p40 = scmp.eq.s32.totalorder %s14, 0
    %p41 = por %p39, %p40
    %s43 = sadd.s32 %s42, 1
    %p46 = scmp.eq.s32.totalorder %s8, 1
    %p47 = scmp.ne.s32.totalorder %s42, %s44
    %p48 = scmp.eq.s32.totalorder %s8, 0
    %p49 = por %p47, %p48
    %p50 = scmp.ne.s32.totalorder %s42, %s44
    %p51 = scmp.eq.s32.totalorder %s13, 1
    %p52 = por %p50, %p51
    %p53 = scmp.ne.s32.totalorder %s44, %s45
    %p54 = scmp.eq.s32.totalorder %s13, 0
    %p55 = por %p53, %p54
    %p56 = scmp.ne.s32.totalorder %s44, %s45
    %p57 = scmp.eq.s32.totalorder %s14, 1
    %p58 = por %p56, %p57
    %p60 = scmp.ne.s32.totalorder %s45, %s59
    %p61 = scmp.eq.s32.totalorder %s14, 0
    %p62 = por %p60, %p61
    %s63 = ssub.s32 %s8, %s15
    %p64 = scmp.eq.s32.totalorder %s63, 0
    %s66 = sadd.s32 %s65, 1
    %s67 = scalar_select %p64, %s65, %s66
    %p70 = pneg %p64
    %p71 = scmp.eq.s32.totalorder %s8, 1
    %p72 = por %p70, %p71
    %p73 = scmp.ne.s32.totalorder %s65, %s68
    %p74 = scmp.eq.s32.totalorder %s8, 0
    %p75 = por %p73, %p74
    %p76 = scmp.ne.s32.totalorder %s65, %s68
    %p77 = scmp.eq.s32.totalorder %s13, 1
    %p78 = por %p76, %p77
    %p79 = scmp.ne.s32.totalorder %s68, %s69
    %p80 = scmp.eq.s32.totalorder %s13, 0
    %p81 = por %p79, %p80
    %p82 = scmp.ne.s32.totalorder %s68, %s69
    %p83 = scmp.eq.s32.totalorder %s14, 1
    %p84 = por %p82, %p83
    %p86 = scmp.ne.s32.totalorder %s69, %s85
    %p87 = scmp.eq.s32.totalorder %s14, 0
    %p88 = por %p86, %p87
    %p89 = scmp.le.s32.totalorder 1, %s8
    %p90 = scmp.lt.s32.totalorder %s8, 3
    %p91 = pnand %p89, %p90
    %p92 = pneg %p91
    // Predicated region
    $region9: #{style_encoder_mlp.14} parent=5 // pred_check
      _
    $region10: #{style_encoder_mlp.14} parent=5 // pred_check_branch
      %94 = sbr.rel (%p91) target = $region12
    $region11: #{style_encoder_mlp.14} parent=5 // pred_region
      %s95 = ssub.s32 %s8, 1
      // Predicated region
      $region13: #{style_encoder_mlp.14} parent=11 // pred_check
        %p96 = pneg %p55
      $region14: #{style_encoder_mlp.14} parent=11 // pred_check_branch
        %98 = sbr.rel (%p96) target = $region16
      $region15: #{style_encoder_mlp.14} parent=11 // pred_region
        _
      $region16: #{style_encoder_mlp.14} parent=11 // pred_fallthru
        _
    $region12: #{style_encoder_mlp.14} parent=5 // pred_fallthru
      _
    %p99 = scmp.lt.s32.totalorder %s8, 2
    // Predicated region
    $region17: #{style_encoder_mlp.14} parent=5 // pred_check
      %p100 = pneg %p99
    $region18: #{style_encoder_mlp.14} parent=5 // pred_check_branch
      %102 = sbr.rel (%p100) target = $region20
    $region19: #{style_encoder_mlp.14} parent=5 // pred_region
      // Predicated region
      $region21: #{style_encoder_mlp.14} parent=19 // pred_check
        %p103 = pneg %p28
      $region22: #{style_encoder_mlp.14} parent=19 // pred_check_branch
        %105 = sbr.rel (%p103) target = $region24
      $region23: #{style_encoder_mlp.14} parent=19 // pred_region
        %p106 = scmp.lt.s32.totalorder %s8, 1
        %s107 = scalar_select %p106, %s8, 1
        %s108 = smul.addr %s107, 8
        %s109 = smul.addr %s108, 2
        %s110 = scalar_lea.vmem %s0, %s109
      $region24: #{style_encoder_mlp.14} parent=19 // pred_fallthru
        _
    $region20: #{style_encoder_mlp.14} parent=5 // pred_fallthru
      _
    %p111 = scmp.le.s32.totalorder 1, %s8
    %p112 = scmp.lt.s32.totalorder %s8, 3
    %p113 = pnand %p111, %p112
    %p114 = pneg %p113
    // Predicated region
    $region25: #{style_encoder_mlp.14} parent=5 // pred_check
      _
    $region26: #{style_encoder_mlp.14} parent=5 // pred_check_branch
      %116 = sbr.rel (%p113) target = $region28
    $region27: #{style_encoder_mlp.14} parent=5 // pred_region
      %s117 = ssub.s32 %s8, 1
      %p118 = scmp.lt.s32.totalorder %s13, 1
      %s119 = scalar_select %p118, %s13, 1
      %s120 = smul.addr %s119, 8
      %s121 = smul.addr %s120, 2
      %s122 = scalar_lea.vmem %s0, %s121
      %p123 = pneg %p34
      %p124 = pneg %p31
      %p125 = pneg %p55
      %p126 = pneg %p52
      %p127 = pneg %p81
      %p128 = pneg %p78
      %p129 = scmp.lt.s32.totalorder %s13, 1
      %s130 = scalar_select %p129, %s13, 1
      %s131 = smul.addr %s130, 4
      %s132 = scalar_lea.vmem %s2, %s131
      %p133 = scmp.lt.s32.totalorder %s13, 1
      %s134 = scalar_select %p133, %s13, 1
      %s135 = smul.addr %s134, 8
      %s136 = smul.addr %s135, 2
      %s137 = scalar_lea.vmem %s0, %s136
      %p138 = scmp.lt.s32.totalorder %s13, 1
      %s139 = scalar_select %p138, %s13, 1
      %s140 = smul.addr %s139, 4
      %s141 = scalar_lea.vmem %s2, %s140
      %v143 = vld [vmem:[%s137] sm:$0xff]
      %v144 = vld [vmem:[%s137 + $0x8] sm:$0xff]
      %v145 = vld [vmem:[%s1] sm:$0xf]
      %v146 = vld [vmem:[%s1 + $0x4] sm:$0xf]
      %v147 = vld [vmem:[%s1 + $0x8] sm:$0xf]
      %v148 = vld [vmem:[%s1 + $0xc] sm:$0xf]
      %v149 = vld [vmem:[%s1 + $0x10] sm:$0xf]
      %v150 = vld [vmem:[%s1 + $0x14] sm:$0xf]
      %v151 = vld [vmem:[%s1 + $0x18] sm:$0xf]
      %v152 = vld [vmem:[%s1 + $0x1c] sm:$0xf]
      %v153 = vld [vmem:[%s1 + $0x20] sm:$0xf]
      %v154 = vld [vmem:[%s1 + $0x24] sm:$0xf]
      %v155 = vld [vmem:[%s1 + $0x28] sm:$0xf]
      %v156 = vld [vmem:[%s1 + $0x2c] sm:$0xf]
      %v157 = vld [vmem:[%s1 + $0x30] sm:$0xf]
      %v158 = vld [vmem:[%s1 + $0x34] sm:$0xf]
      %v159 = vld [vmem:[%s1 + $0x38] sm:$0xf]
      %v160 = vld [vmem:[%s1 + $0x3c] sm:$0xf]
      %v161 = vld [vmem:[%s1 + $0x40] sm:$0xf]
      %v162 = vld [vmem:[%s1 + $0x44] sm:$0xf]
      %v163 = vld [vmem:[%s1 + $0x48] sm:$0xf]
      %v164 = vld [vmem:[%s1 + $0x4c] sm:$0xf]
      %v165 = vld [vmem:[%s1 + $0x50] sm:$0xf]
      %v166 = vld [vmem:[%s1 + $0x54] sm:$0xf]
      %v167 = vld [vmem:[%s1 + $0x58] sm:$0xf]
      %v168 = vld [vmem:[%s1 + $0x5c] sm:$0xf]
      %v169 = vld [vmem:[%s1 + $0x60] sm:$0xf]
      %v170 = vld [vmem:[%s1 + $0x64] sm:$0xf]
      %v171 = vld [vmem:[%s1 + $0x68] sm:$0xf]
      %v172 = vld [vmem:[%s1 + $0x6c] sm:$0xf]
      %v173 = vld [vmem:[%s1 + $0x70] sm:$0xf]
      %v174 = vld [vmem:[%s1 + $0x74] sm:$0xf]
      %v175 = vld [vmem:[%s1 + $0x78] sm:$0xf]
      %v176 = vld [vmem:[%s1 + $0x7c] sm:$0xf]
      %v177 = vld [vmem:[%s1 + $0x80] sm:$0xf]
      %v178 = vld [vmem:[%s1 + $0x84] sm:$0xf]
      %v179 = vld [vmem:[%s1 + $0x88] sm:$0xf]
      %v180 = vld [vmem:[%s1 + $0x8c] sm:$0xf]
      %v181 = vld [vmem:[%s1 + $0x90] sm:$0xf]
      %v182 = vld [vmem:[%s1 + $0x94] sm:$0xf]
      %v183 = vld [vmem:[%s1 + $0x98] sm:$0xf]
      %v184 = vld [vmem:[%s1 + $0x9c] sm:$0xf]
      %v185 = vld [vmem:[%s1 + $0xa0] sm:$0xf]
      %v186 = vld [vmem:[%s1 + $0xa4] sm:$0xf]
      %v187 = vld [vmem:[%s1 + $0xa8] sm:$0xf]
      %v188 = vld [vmem:[%s1 + $0xac] sm:$0xf]
      %v189 = vld [vmem:[%s1 + $0xb0] sm:$0xf]
      %v190 = vld [vmem:[%s1 + $0xb4] sm:$0xf]
      %v191 = vld [vmem:[%s1 + $0xb8] sm:$0xf]
      %v192 = vld [vmem:[%s1 + $0xbc] sm:$0xf]
      %v193 = vld [vmem:[%s1 + $0xc0] sm:$0xf]
      %v194 = vld [vmem:[%s1 + $0xc4] sm:$0xf]
      %v195 = vld [vmem:[%s1 + $0xc8] sm:$0xf]
      %v196 = vld [vmem:[%s1 + $0xcc] sm:$0xf]
      %v197 = vld [vmem:[%s1 + $0xd0] sm:$0xf]
      %v198 = vld [vmem:[%s1 + $0xd4] sm:$0xf]
      %v199 = vld [vmem:[%s1 + $0xd8] sm:$0xf]
      %v200 = vld [vmem:[%s1 + $0xdc] sm:$0xf]
      %v201 = vld [vmem:[%s1 + $0xe0] sm:$0xf]
      %v202 = vld [vmem:[%s1 + $0xe4] sm:$0xf]
      %v203 = vld [vmem:[%s1 + $0xe8] sm:$0xf]
      %v204 = vld [vmem:[%s1 + $0xec] sm:$0xf]
      %v205 = vld [vmem:[%s1 + $0xf0] sm:$0xf]
      %v206 = vld [vmem:[%s1 + $0xf4] sm:$0xf]
      %v207 = vld [vmem:[%s1 + $0xf8] sm:$0xf]
      %v208 = vld [vmem:[%s1 + $0xfc] sm:$0xf]
      %v209 = vld [vmem:[%s1 + $0x100] sm:$0xf]
      %v210 = vld [vmem:[%s1 + $0x104] sm:$0xf]
      %v211 = vld [vmem:[%s1 + $0x108] sm:$0xf]
      %v212 = vld [vmem:[%s1 + $0x10c] sm:$0xf]
      %v213 = vld [vmem:[%s1 + $0x110] sm:$0xf]
      %v214 = vld [vmem:[%s1 + $0x114] sm:$0xf]
      %v215 = vld [vmem:[%s1 + $0x118] sm:$0xf]
      %v216 = vld [vmem:[%s1 + $0x11c] sm:$0xf]
      %v217 = vld [vmem:[%s1 + $0x120] sm:$0xf]
      %v218 = vld [vmem:[%s1 + $0x124] sm:$0xf]
      %v219 = vld [vmem:[%s1 + $0x128] sm:$0xf]
      %v220 = vld [vmem:[%s1 + $0x12c] sm:$0xf]
      %v221 = vld [vmem:[%s1 + $0x130] sm:$0xf]
      %v222 = vld [vmem:[%s1 + $0x134] sm:$0xf]
      %v223 = vld [vmem:[%s1 + $0x138] sm:$0xf]
      %v224 = vld [vmem:[%s1 + $0x13c] sm:$0xf]
      %v225 = vld [vmem:[%s1 + $0x140] sm:$0xf]
      %v226 = vld [vmem:[%s1 + $0x144] sm:$0xf]
      %v227 = vld [vmem:[%s1 + $0x148] sm:$0xf]
      %v228 = vld [vmem:[%s1 + $0x14c] sm:$0xf]
      %v229 = vld [vmem:[%s1 + $0x150] sm:$0xf]
      %v230 = vld [vmem:[%s1 + $0x154] sm:$0xf]
      %v231 = vld [vmem:[%s1 + $0x158] sm:$0xf]
      %v232 = vld [vmem:[%s1 + $0x15c] sm:$0xf]
      %v233 = vld [vmem:[%s1 + $0x160] sm:$0xf]
      %v234 = vld [vmem:[%s1 + $0x164] sm:$0xf]
      %v235 = vld [vmem:[%s1 + $0x168] sm:$0xf]
      %v236 = vld [vmem:[%s1 + $0x16c] sm:$0xf]
      %v237 = vld [vmem:[%s1 + $0x170] sm:$0xf]
      %v238 = vld [vmem:[%s1 + $0x174] sm:$0xf]
      %v239 = vld [vmem:[%s1 + $0x178] sm:$0xf]
      %v240 = vld [vmem:[%s1 + $0x17c] sm:$0xf]
      %v241 = vld [vmem:[%s1 + $0x180] sm:$0xf]
      %v242 = vld [vmem:[%s1 + $0x184] sm:$0xf]
      %v243 = vld [vmem:[%s1 + $0x188] sm:$0xf]
      %v244 = vld [vmem:[%s1 + $0x18c] sm:$0xf]
      %v245 = vld [vmem:[%s1 + $0x190] sm:$0xf]
      %v246 = vld [vmem:[%s1 + $0x194] sm:$0xf]
      %v247 = vld [vmem:[%s1 + $0x198] sm:$0xf]
      %v248 = vld [vmem:[%s1 + $0x19c] sm:$0xf]
      %v249 = vld [vmem:[%s1 + $0x1a0] sm:$0xf]
      %v250 = vld [vmem:[%s1 + $0x1a4] sm:$0xf]
      %v251 = vld [vmem:[%s1 + $0x1a8] sm:$0xf]
      %v252 = vld [vmem:[%s1 + $0x1ac] sm:$0xf]
      %v253 = vld [vmem:[%s1 + $0x1b0] sm:$0xf]
      %v254 = vld [vmem:[%s1 + $0x1b4] sm:$0xf]
      %v255 = vld [vmem:[%s1 + $0x1b8] sm:$0xf]
      %v256 = vld [vmem:[%s1 + $0x1bc] sm:$0xf]
      %v257 = vld [vmem:[%s1 + $0x1c0] sm:$0xf]
      %v258 = vld [vmem:[%s1 + $0x1c4] sm:$0xf]
      %v259 = vld [vmem:[%s1 + $0x1c8] sm:$0xf]
      %v260 = vld [vmem:[%s1 + $0x1cc] sm:$0xf]
      %v261 = vld [vmem:[%s1 + $0x1d0] sm:$0xf]
      %v262 = vld [vmem:[%s1 + $0x1d4] sm:$0xf]
      %v263 = vld [vmem:[%s1 + $0x1d8] sm:$0xf]
      %v264 = vld [vmem:[%s1 + $0x1dc] sm:$0xf]
      %v265 = vld [vmem:[%s1 + $0x1e0] sm:$0xf]
      %v266 = vld [vmem:[%s1 + $0x1e4] sm:$0xf]
      %v267 = vld [vmem:[%s1 + $0x1e8] sm:$0xf]
      %v268 = vld [vmem:[%s1 + $0x1ec] sm:$0xf]
      %v269 = vld [vmem:[%s1 + $0x1f0] sm:$0xf]
      %v270 = vld [vmem:[%s1 + $0x1f4] sm:$0xf]
      %v271 = vld [vmem:[%s1 + $0x1f8] sm:$0xf]
      %v272 = vld [vmem:[%s1 + $0x1fc] sm:$0xf]
      %v275 = vcombine.high %v143, %v143
      %v277 = vunpack.c.l.s4 1983009808
      %v278 = vunpack.c.0.s8 %v277
      %v279 = vlaneseq
      %v280 = vshrl.u32 %v279, 7
      %v281 = vsub.s32 %v278, %v280
      %v282 = vrot.slane %v143, %v281
      %v284 = vunpack.c.l.s4 1983009808
      %v285 = vunpack.c.0.s8 %v284
      %v286 = vlaneseq
      %v287 = vshrl.u32 %v286, 7
      %v288 = vsub.s32 %v285, %v287
      %v289 = vrot.slane %v275, %v288
      %v290 = vcombine.high %v282, %v282
      %v291 = vcombine.high %v289, %v289
      %v292 = vcombine.high %v144, %v144
      %v294 = vunpack.c.l.s4 1983009808
      %v295 = vunpack.c.0.s8 %v294
      %v296 = vlaneseq
      %v297 = vshrl.u32 %v296, 7
      %v298 = vsub.s32 %v295, %v297
      %v299 = vrot.slane %v144, %v298
      %v301 = vunpack.c.l.s4 1983009808
      %v302 = vunpack.c.0.s8 %v301
      %v303 = vlaneseq
      %v304 = vshrl.u32 %v303, 7
      %v305 = vsub.s32 %v302, %v304
      %v306 = vrot.slane %v292, %v305
      %v307 = vcombine.high %v299, %v299
      %v308 = vcombine.high %v306, %v306
      %v445 = vunpack.c.l.b16 %v145
      %v446 = vunpack.c.l.b16 %v146
      %v447 = vunpack.c.l.b16 %v147
      %v448 = vunpack.c.l.b16 %v148
      %v449 = vunpack.c.l.b16 %v149
      %v450 = vunpack.c.l.b16 %v150
      %v451 = vunpack.c.l.b16 %v151
      %v452 = vunpack.c.l.b16 %v152
      %v453 = vunpack.c.l.b16 %v153
      %v454 = vunpack.c.l.b16 %v154
      %v455 = vunpack.c.l.b16 %v155
      %v456 = vunpack.c.l.b16 %v156
      %v457 = vunpack.c.l.b16 %v157
      %v458 = vunpack.c.l.b16 %v158
      %v459 = vunpack.c.l.b16 %v159
      %v460 = vunpack.c.l.b16 %v160
      %v461 = vunpack.c.l.b16 %v161
      %v462 = vunpack.c.l.b16 %v162
      %v463 = vunpack.c.l.b16 %v163
      %v464 = vunpack.c.l.b16 %v164
      %v465 = vunpack.c.l.b16 %v165
      %v466 = vunpack.c.l.b16 %v166
      %v467 = vunpack.c.l.b16 %v167
      %v468 = vunpack.c.l.b16 %v168
      %v469 = vunpack.c.l.b16 %v169
      %v470 = vunpack.c.l.b16 %v170
      %v471 = vunpack.c.l.b16 %v171
      %v472 = vunpack.c.l.b16 %v172
      %v473 = vunpack.c.l.b16 %v173
      %v474 = vunpack.c.l.b16 %v174
      %v475 = vunpack.c.l.b16 %v175
      %v476 = vunpack.c.l.b16 %v176
      %v477 = vunpack.c.l.b16 %v177
      %v478 = vunpack.c.l.b16 %v178
      %v479 = vunpack.c.l.b16 %v179
      %v480 = vunpack.c.l.b16 %v180
      %v481 = vunpack.c.l.b16 %v181
      %v482 = vunpack.c.l.b16 %v182
      %v483 = vunpack.c.l.b16 %v183
      %v484 = vunpack.c.l.b16 %v184
      %v485 = vunpack.c.l.b16 %v185
      %v486 = vunpack.c.l.b16 %v186
      %v487 = vunpack.c.l.b16 %v187
      %v488 = vunpack.c.l.b16 %v188
      %v489 = vunpack.c.l.b16 %v189
      %v490 = vunpack.c.l.b16 %v190
      %v491 = vunpack.c.l.b16 %v191
      %v492 = vunpack.c.l.b16 %v192
      %v493 = vunpack.c.l.b16 %v193
      %v494 = vunpack.c.l.b16 %v194
      %v495 = vunpack.c.l.b16 %v195
      %v496 = vunpack.c.l.b16 %v196
      %v497 = vunpack.c.l.b16 %v197
      %v498 = vunpack.c.l.b16 %v198
      %v499 = vunpack.c.l.b16 %v199
      %v500 = vunpack.c.l.b16 %v200
      %v501 = vunpack.c.l.b16 %v201
      %v502 = vunpack.c.l.b16 %v202
      %v503 = vunpack.c.l.b16 %v203
      %v504 = vunpack.c.l.b16 %v204
      %v505 = vunpack.c.l.b16 %v205
      %v506 = vunpack.c.l.b16 %v206
      %v507 = vunpack.c.l.b16 %v207
      %v508 = vunpack.c.l.b16 %v208
      %v509 = vunpack.c.l.b16 %v209
      %v510 = vunpack.c.l.b16 %v210
      %v511 = vunpack.c.l.b16 %v211
      %v512 = vunpack.c.l.b16 %v212
      %v513 = vunpack.c.l.b16 %v213
      %v514 = vunpack.c.l.b16 %v214
      %v515 = vunpack.c.l.b16 %v215
      %v516 = vunpack.c.l.b16 %v216
      %v517 = vunpack.c.l.b16 %v217
      %v518 = vunpack.c.l.b16 %v218
      %v519 = vunpack.c.l.b16 %v219
      %v520 = vunpack.c.l.b16 %v220
      %v521 = vunpack.c.l.b16 %v221
      %v522 = vunpack.c.l.b16 %v222
      %v523 = vunpack.c.l.b16 %v223
      %v524 = vunpack.c.l.b16 %v224
      %v525 = vunpack.c.l.b16 %v225
      %v526 = vunpack.c.l.b16 %v226
      %v527 = vunpack.c.l.b16 %v227
      %v528 = vunpack.c.l.b16 %v228
      %v529 = vunpack.c.l.b16 %v229
      %v530 = vunpack.c.l.b16 %v230
      %v531 = vunpack.c.l.b16 %v231
      %v532 = vunpack.c.l.b16 %v232
      %v533 = vunpack.c.l.b16 %v233
      %v534 = vunpack.c.l.b16 %v234
      %v535 = vunpack.c.l.b16 %v235
      %v536 = vunpack.c.l.b16 %v236
      %v537 = vunpack.c.l.b16 %v237
      %v538 = vunpack.c.l.b16 %v238
      %v539 = vunpack.c.l.b16 %v239
      %v540 = vunpack.c.l.b16 %v240
      %v541 = vunpack.c.l.b16 %v241
      %v542 = vunpack.c.l.b16 %v242
      %v543 = vunpack.c.l.b16 %v243
      %v544 = vunpack.c.l.b16 %v244
      %v545 = vunpack.c.l.b16 %v245
      %v546 = vunpack.c.l.b16 %v246
      %v547 = vunpack.c.l.b16 %v247
      %v548 = vunpack.c.l.b16 %v248
      %v549 = vunpack.c.l.b16 %v249
      %v550 = vunpack.c.l.b16 %v250
      %v551 = vunpack.c.l.b16 %v251
      %v552 = vunpack.c.l.b16 %v252
      %v553 = vunpack.c.l.b16 %v253
      %v554 = vunpack.c.l.b16 %v254
      %v555 = vunpack.c.l.b16 %v255
      %v556 = vunpack.c.l.b16 %v256
      %v557 = vunpack.c.l.b16 %v257
      %v558 = vunpack.c.l.b16 %v258
      %v559 = vunpack.c.l.b16 %v259
      %v560 = vunpack.c.l.b16 %v260
      %v561 = vunpack.c.l.b16 %v261
      %v562 = vunpack.c.l.b16 %v262
      %v563 = vunpack.c.l.b16 %v263
      %v564 = vunpack.c.l.b16 %v264
      %v565 = vunpack.c.l.b16 %v265
      %v566 = vunpack.c.l.b16 %v266
      %v567 = vunpack.c.l.b16 %v267
      %v568 = vunpack.c.l.b16 %v268
      %v569 = vunpack.c.l.b16 %v269
      %v570 = vunpack.c.l.b16 %v270
      %v571 = vunpack.c.l.b16 %v271
      %v572 = vunpack.c.l.b16 %v272
      %v573 = vpack.c.b16 %v446, %v445
      %v574 = vpack.c.b16 %v448, %v447
      %v575 = vpack.c.b16 %v450, %v449
      %v576 = vpack.c.b16 %v452, %v451
      %v577 = vpack.c.b16 %v454, %v453
      %v578 = vpack.c.b16 %v456, %v455
      %v579 = vpack.c.b16 %v458, %v457
      %v580 = vpack.c.b16 %v460, %v459
      %v581 = vpack.c.b16 %v462, %v461
      %v582 = vpack.c.b16 %v464, %v463
      %v583 = vpack.c.b16 %v466, %v465
      %v584 = vpack.c.b16 %v468, %v467
      %v585 = vpack.c.b16 %v470, %v469
      %v586 = vpack.c.b16 %v472, %v471
      %v587 = vpack.c.b16 %v474, %v473
      %v588 = vpack.c.b16 %v476, %v475
      %v589 = vpack.c.b16 %v478, %v477
      %v590 = vpack.c.b16 %v480, %v479
      %v591 = vpack.c.b16 %v482, %v481
      %v592 = vpack.c.b16 %v484, %v483
      %v593 = vpack.c.b16 %v486, %v485
      %v594 = vpack.c.b16 %v488, %v487
      %v595 = vpack.c.b16 %v490, %v489
      %v596 = vpack.c.b16 %v492, %v491
      %v597 = vpack.c.b16 %v494, %v493
      %v598 = vpack.c.b16 %v496, %v495
      %v599 = vpack.c.b16 %v498, %v497
      %v600 = vpack.c.b16 %v500, %v499
      %v601 = vpack.c.b16 %v502, %v501
      %v602 = vpack.c.b16 %v504, %v503
      %v603 = vpack.c.b16 %v506, %v505
      %v604 = vpack.c.b16 %v508, %v507
      %v605 = vpack.c.b16 %v510, %v509
      %v606 = vpack.c.b16 %v512, %v511
      %v607 = vpack.c.b16 %v514, %v513
      %v608 = vpack.c.b16 %v516, %v515
      %v609 = vpack.c.b16 %v518, %v517
      %v610 = vpack.c.b16 %v520, %v519
      %v611 = vpack.c.b16 %v522, %v521
      %v612 = vpack.c.b16 %v524, %v523
      %v613 = vpack.c.b16 %v526, %v525
      %v614 = vpack.c.b16 %v528, %v527
      %v615 = vpack.c.b16 %v530, %v529
      %v616 = vpack.c.b16 %v532, %v531
      %v617 = vpack.c.b16 %v534, %v533
      %v618 = vpack.c.b16 %v536, %v535
      %v619 = vpack.c.b16 %v538, %v537
      %v620 = vpack.c.b16 %v540, %v539
      %v621 = vpack.c.b16 %v542, %v541
      %v622 = vpack.c.b16 %v544, %v543
      %v623 = vpack.c.b16 %v546, %v545
      %v624 = vpack.c.b16 %v548, %v547
      %v625 = vpack.c.b16 %v550, %v549
      %v626 = vpack.c.b16 %v552, %v551
      %v627 = vpack.c.b16 %v554, %v553
      %v628 = vpack.c.b16 %v556, %v555
      %v629 = vpack.c.b16 %v558, %v557
      %v630 = vpack.c.b16 %v560, %v559
      %v631 = vpack.c.b16 %v562, %v561
      %v632 = vpack.c.b16 %v564, %v563
      %v633 = vpack.c.b16 %v566, %v565
      %v634 = vpack.c.b16 %v568, %v567
      %v635 = vpack.c.b16 %v570, %v569
      %v636 = vpack.c.b16 %v572, %v571
      %701 = vmatprep.subr.bf16.mxu0 0
      %702 = vmatpush1.bf16.msra.mxu0 %v573
      %703 = vmatprep.subr.bf16.mxu0 0
      %704 = vmatpush1.bf16.msra.mxu0 %v574
      %705 = vmatprep.subr.bf16.mxu0 0
      %706 = vmatpush1.bf16.msra.mxu0 %v575
      %707 = vmatprep.subr.bf16.mxu0 0
      %708 = vmatpush1.bf16.msra.mxu0 %v576
      %709 = vmatprep.subr.bf16.mxu0 0
      %710 = vmatpush1.bf16.msra.mxu0 %v577
      %711 = vmatprep.subr.bf16.mxu0 0
      %712 = vmatpush1.bf16.msra.mxu0 %v578
      %713 = vmatprep.subr.bf16.mxu0 0
      %714 = vmatpush1.bf16.msra.mxu0 %v579
      %715 = vmatprep.subr.bf16.mxu0 0
      %716 = vmatpush1.bf16.msra.mxu0 %v580
      %717 = vmatprep.subr.bf16.mxu0 0
      %718 = vmatpush1.bf16.msra.mxu0 %v581
      %719 = vmatprep.subr.bf16.mxu0 0
      %720 = vmatpush1.bf16.msra.mxu0 %v582
      %721 = vmatprep.subr.bf16.mxu0 0
      %722 = vmatpush1.bf16.msra.mxu0 %v583
      %723 = vmatprep.subr.bf16.mxu0 0
      %724 = vmatpush1.bf16.msra.mxu0 %v584
      %725 = vmatprep.subr.bf16.mxu0 0
      %726 = vmatpush1.bf16.msra.mxu0 %v585
      %727 = vmatprep.subr.bf16.mxu0 0
      %728 = vmatpush1.bf16.msra.mxu0 %v586
      %729 = vmatprep.subr.bf16.mxu0 0
      %730 = vmatpush1.bf16.msra.mxu0 %v587
      %731 = vmatprep.subr.bf16.mxu0 0
      %732 = vmatpush1.bf16.msra.mxu0 %v588
      %733 = vmatprep.mubr.bf16.mxu0 %v290
      %734 = vmatmul.mubr.bf16.gmra.mrb[0].mxu0 %v282
      %v735 = vpop.f32.mrb[0].mxu0
      %v736 = vadd.f32 0.0, %v735
      %v737 = vpop.f32.mrb[0].mxu0
      %v738 = vpop.f32.mrb[0].mxu0
      %v739 = vpop.f32.mrb[0].mxu0
      %740 = vdwg.mxu0
      %741 = vmatprep.subr.bf16.mxu0 0
      %742 = vmatpush1.bf16.msra.mxu0 %v589
      %743 = vmatprep.subr.bf16.mxu0 0
      %744 = vmatpush1.bf16.msra.mxu0 %v590
      %745 = vmatprep.subr.bf16.mxu0 0
      %746 = vmatpush1.bf16.msra.mxu0 %v591
      %747 = vmatprep.subr.bf16.mxu0 0
      %748 = vmatpush1.bf16.msra.mxu0 %v592
      %749 = vmatprep.subr.bf16.mxu0 0
      %750 = vmatpush1.bf16.msra.mxu0 %v593
      %751 = vmatprep.subr.bf16.mxu0 0
      %752 = vmatpush1.bf16.msra.mxu0 %v594
      %753 = vmatprep.subr.bf16.mxu0 0
      %754 = vmatpush1.bf16.msra.mxu0 %v595
      %755 = vmatprep.subr.bf16.mxu0 0
      %756 = vmatpush1.bf16.msra.mxu0 %v596
      %757 = vmatprep.subr.bf16.mxu0 0
      %758 = vmatpush1.bf16.msra.mxu0 %v597
      %759 = vmatprep.subr.bf16.mxu0 0
      %760 = vmatpush1.bf16.msra.mxu0 %v598
      %761 = vmatprep.subr.bf16.mxu0 0
      %762 = vmatpush1.bf16.msra.mxu0 %v599
      %763 = vmatprep.subr.bf16.mxu0 0
      %764 = vmatpush1.bf16.msra.mxu0 %v600
      %765 = vmatprep.subr.bf16.mxu0 0
      %766 = vmatpush1.bf16.msra.mxu0 %v601
      %767 = vmatprep.subr.bf16.mxu0 0
      %768 = vmatpush1.bf16.msra.mxu0 %v602
      %769 = vmatprep.subr.bf16.mxu0 0
      %770 = vmatpush1.bf16.msra.mxu0 %v603
      %771 = vmatprep.subr.bf16.mxu0 0
      %772 = vmatpush1.bf16.msra.mxu0 %v604
      %773 = vmatprep.mubr.bf16.mxu0 %v291
      %774 = vmatmul.mubr.bf16.gmra.mrb[0].mxu0 %v289
      %v775 = vpop.f32.mrb[0].mxu0
      %v776 = vadd.f32 %v736, %v775
      %v777 = vpop.f32.mrb[0].mxu0
      %v778 = vpop.f32.mrb[0].mxu0
      %v779 = vpop.f32.mrb[0].mxu0
      %780 = vdwg.mxu0
      %781 = vmatprep.subr.bf16.mxu0 0
      %782 = vmatpush1.bf16.msra.mxu0 %v605
      %783 = vmatprep.subr.bf16.mxu0 0
      %784 = vmatpush1.bf16.msra.mxu0 %v606
      %785 = vmatprep.subr.bf16.mxu0 0
      %786 = vmatpush1.bf16.msra.mxu0 %v607
      %787 = vmatprep.subr.bf16.mxu0 0
      %788 = vmatpush1.bf16.msra.mxu0 %v608
      %789 = vmatprep.subr.bf16.mxu0 0
      %790 = vmatpush1.bf16.msra.mxu0 %v609
      %791 = vmatprep.subr.bf16.mxu0 0
      %792 = vmatpush1.bf16.msra.mxu0 %v610
      %793 = vmatprep.subr.bf16.mxu0 0
      %794 = vmatpush1.bf16.msra.mxu0 %v611
      %795 = vmatprep.subr.bf16.mxu0 0
      %796 = vmatpush1.bf16.msra.mxu0 %v612
      %797 = vmatprep.subr.bf16.mxu0 0
      %798 = vmatpush1.bf16.msra.mxu0 %v613
      %799 = vmatprep.subr.bf16.mxu0 0
      %800 = vmatpush1.bf16.msra.mxu0 %v614
      %801 = vmatprep.subr.bf16.mxu0 0
      %802 = vmatpush1.bf16.msra.mxu0 %v615
      %803 = vmatprep.subr.bf16.mxu0 0
      %804 = vmatpush1.bf16.msra.mxu0 %v616
      %805 = vmatprep.subr.bf16.mxu0 0
      %806 = vmatpush1.bf16.msra.mxu0 %v617
      %807 = vmatprep.subr.bf16.mxu0 0
      %808 = vmatpush1.bf16.msra.mxu0 %v618
      %809 = vmatprep.subr.bf16.mxu0 0
      %810 = vmatpush1.bf16.msra.mxu0 %v619
      %811 = vmatprep.subr.bf16.mxu0 0
      %812 = vmatpush1.bf16.msra.mxu0 %v620
      %813 = vmatprep.mubr.bf16.mxu0 %v307
      %814 = vmatmul.mubr.bf16.gmra.mrb[0].mxu0 %v299
      %v815 = vpop.f32.mrb[0].mxu0
      %v816 = vadd.f32 %v776, %v815
      %v817 = vpop.f32.mrb[0].mxu0
      %v818 = vpop.f32.mrb[0].mxu0
      %v819 = vpop.f32.mrb[0].mxu0
      %820 = vdwg.mxu0
      %821 = vmatprep.subr.bf16.mxu0 0
      %822 = vmatpush1.bf16.msra.mxu0 %v621
      %823 = vmatprep.subr.bf16.mxu0 0
      %824 = vmatpush1.bf16.msra.mxu0 %v622
      %825 = vmatprep.subr.bf16.mxu0 0
      %826 = vmatpush1.bf16.msra.mxu0 %v623
      %827 = vmatprep.subr.bf16.mxu0 0
      %828 = vmatpush1.bf16.msra.mxu0 %v624
      %829 = vmatprep.subr.bf16.mxu0 0
      %830 = vmatpush1.bf16.msra.mxu0 %v625
      %831 = vmatprep.subr.bf16.mxu0 0
      %832 = vmatpush1.bf16.msra.mxu0 %v626
      %833 = vmatprep.subr.bf16.mxu0 0
      %834 = vmatpush1.bf16.msra.mxu0 %v627
      %835 = vmatprep.subr.bf16.mxu0 0
      %836 = vmatpush1.bf16.msra.mxu0 %v628
      %837 = vmatprep.subr.bf16.mxu0 0
      %838 = vmatpush1.bf16.msra.mxu0 %v629
      %839 = vmatprep.subr.bf16.mxu0 0
      %840 = vmatpush1.bf16.msra.mxu0 %v630
      %841 = vmatprep.subr.bf16.mxu0 0
      %842 = vmatpush1.bf16.msra.mxu0 %v631
      %843 = vmatprep.subr.bf16.mxu0 0
      %844 = vmatpush1.bf16.msra.mxu0 %v632
      %845 = vmatprep.subr.bf16.mxu0 0
      %846 = vmatpush1.bf16.msra.mxu0 %v633
      %847 = vmatprep.subr.bf16.mxu0 0
      %848 = vmatpush1.bf16.msra.mxu0 %v634
      %849 = vmatprep.subr.bf16.mxu0 0
      %850 = vmatpush1.bf16.msra.mxu0 %v635
      %851 = vmatprep.subr.bf16.mxu0 0
      %852 = vmatpush1.bf16.msra.mxu0 %v636
      %853 = vmatprep.mubr.bf16.mxu0 %v308
      %854 = vmatmul.mubr.bf16.gmra.mrb[0].mxu0 %v306
      %v855 = vpop.f32.mrb[0].mxu0
      %v856 = vadd.f32 %v816, %v855
      %v857 = vpop.f32.mrb[0].mxu0
      %v858 = vpop.f32.mrb[0].mxu0
      %v859 = vpop.f32.mrb[0].mxu0
      %860 = vdwg.mxu0
      %vm861 = vcmask 1043456
      %v862 = vsel %vm861, %v856, 0.0
      %v863 = vrot.slane %v862, 4
      %v864 = vadd.f32 %v862, %v863
      %v865 = vrot.slane %v864, 2
      %v866 = vadd.f32 %v864, %v865
      %v867 = vrot.slane %v866, 1
      %v868 = vadd.f32 %v866, %v867
      %v869 = vrcp.pop 4.0
      %v870 = vmul.f32 %v868, %v869
      %v871 = vsub.f32 %v856, %v870
      %v872 = vmul.f32 %v871, %v871
      %v873 = vsel %vm861, %v872, 0.0
      %v874 = vrot.slane %v873, 4
      %v875 = vadd.f32 %v873, %v874
      %v876 = vrot.slane %v875, 2
      %v877 = vadd.f32 %v875, %v876
      %v878 = vrot.slane %v877, 1
      %v879 = vadd.f32 %v877, %v878
      %v880 = vmul.f32 %v879, %v869
      %v881 = vadd.f32 %v880, 1e-05
      %v882 = vrsqrt.pop %v881
      %v883 = vmul.f32 %v871, %v882
      %vm884 = vcmp.ge.f32.partialorder %v883, 0.0
      %v885 = vmul.f32 %v883, 0.01
      %v886 = vsel %vm884, %v883, %v885
      %887 = vst [vmem:[%s141] sm:$0xf] %v886
      %p888 = scmp.lt.s32.totalorder %s13, 1
      %s889 = scalar_select %p888, %s13, 1
      %s890 = smul.addr %s889, 4
      %s891 = scalar_lea.vmem %s2, %s890
      // Predicated region
      $region29: #{style_encoder_mlp.14} parent=27 // pred_check
        %p892 = pneg %p78
      $region30: #{style_encoder_mlp.14} parent=27 // pred_check_branch
        %894 = sbr.rel (%p892) target = $region32
      $region31: #{style_encoder_mlp.14} parent=27 // pred_region
        _
      $region32: #{style_encoder_mlp.14} parent=27 // pred_fallthru
        _
    $region28: #{style_encoder_mlp.14} parent=5 // pred_fallthru
      _
    %p895 = scmp.le.s32.totalorder 2, %s8
    // Predicated region
    $region33: #{style_encoder_mlp.14} parent=5 // pred_check
      %p896 = pneg %p895
    $region34: #{style_encoder_mlp.14} parent=5 // pred_check_branch
      %898 = sbr.rel (%p896) target = $region36
    $region35: #{style_encoder_mlp.14} parent=5 // pred_region
      %s899 = ssub.s32 %s8, 2
      // Predicated region
      $region37: #{style_encoder_mlp.14} parent=35 // pred_check
        %p900 = pneg %p84
      $region38: #{style_encoder_mlp.14} parent=35 // pred_check_branch
        %902 = sbr.rel (%p900) target = $region40
      $region39: #{style_encoder_mlp.14} parent=35 // pred_region
        %p903 = scmp.lt.s32.totalorder %s14, 1
        %s904 = scalar_select %p903, %s14, 1
        %s905 = smul.addr %s904, 4
        %s906 = scalar_lea.vmem %s2, %s905
      $region40: #{style_encoder_mlp.14} parent=35 // pred_fallthru
        _
    $region36: #{style_encoder_mlp.14} parent=5 // pred_fallthru
      _
  $region6: #{style_encoder_mlp.14} parent=0 // loop_footer
    %s12 = sadd.s32 1, %s8
  $region7: #{style_encoder_mlp.14} parent=0 // loop_footer_branch
    %7 = sbr.rel target = $region3
  $region8: #{style_encoder_mlp.14} parent=0 // loop_exit
    _

// kernel: reverse.3
$region0: #{reverse.3}
  #allocation0 [shape = 's32[1]{0}', space=sflag, size = 0x4, scoped, tag = 'scoped memory for reverse.3']
  %s0 = inlined_call_operand.vmem [shape: bf16[3,3,64,576], index: 0, kind: input, shape index: {}]
  %s1 = inlined_call_operand.vmem [shape: bf16[3,3,64,576], index: 1, kind: output, shape index: {}]
  %s2 = scalar_lea.vmem %s0, 1280
  %v3 = vld [vmem:[%s2] sm:$0xf]
  %v4 = vunpack.c.l.bf16 %v3
  %v5 = vunpack.c.h.bf16 %v3
  %s6 = scalar_lea.vmem %s0, 800
  %v7 = vld [vmem:[%s6] sm:$0xf]
  %v8 = vunpack.c.l.bf16 %v7
  %v9 = vunpack.c.h.bf16 %v7
  %s10 = scalar_lea.vmem %s1, 480
  %s11 = scalar_lea.vmem %s0, 320
  %v12 = vld [vmem:[%s11] sm:$0xf]
  %v13 = vunpack.c.l.bf16 %v12
  %v14 = vunpack.c.h.bf16 %v12
  %s15 = scalar_lea.vmem %s1, 960
  %s16 = scalar_lea.vmem %s0, 1120
  %v17 = vld [vmem:[%s16] sm:$0xf]
  %v18 = vunpack.c.l.bf16 %v17
  %v19 = vunpack.c.h.bf16 %v17
  %s20 = scalar_lea.vmem %s1, 160
  %s21 = scalar_lea.vmem %s0, 640
  %v22 = vld [vmem:[%s21] sm:$0xf]
  %v23 = vunpack.c.l.bf16 %v22
  %v24 = vunpack.c.h.bf16 %v22
  %s25 = scalar_lea.vmem %s1, 640
  %s26 = scalar_lea.vmem %s0, 160
  %v27 = vld [vmem:[%s26] sm:$0xf]
  %v28 = vunpack.c.l.bf16 %v27
  %v29 = vunpack.c.h.bf16 %v27
  %s30 = scalar_lea.vmem %s1, 1120
  %s31 = scalar_lea.vmem %s0, 960
  %v32 = vld [vmem:[%s31] sm:$0xf]
  %v33 = vunpack.c.l.bf16 %v32
  %v34 = vunpack.c.h.bf16 %v32
  %s35 = scalar_lea.vmem %s1, 320
  %s36 = scalar_lea.vmem %s0, 480
  %v37 = vld [vmem:[%s36] sm:$0xf]
  %v38 = vunpack.c.l.bf16 %v37
  %v39 = vunpack.c.h.bf16 %v37
  %s40 = scalar_lea.vmem %s1, 800
  %v41 = vld [vmem:[%s0] sm:$0xf]
  %v42 = vunpack.c.l.bf16 %v41
  %v43 = vunpack.c.h.bf16 %v41
  %s44 = scalar_lea.vmem %s1, 1280
  %s45 = scalar_lea.vmem %s0, 1300
  %v46 = vld [vmem:[%s45] sm:$0xf]
  %v47 = vunpack.c.l.bf16 %v46
  %v48 = vunpack.c.h.bf16 %v46
  %s49 = scalar_lea.vmem %s1, 20
  %s50 = scalar_lea.vmem %s0, 820
  %v51 = vld [vmem:[%s50] sm:$0xf]
  %v52 = vunpack.c.l.bf16 %v51
  %v53 = vunpack.c.h.bf16 %v51
  %s54 = scalar_lea.vmem %s1, 500
  %s55 = scalar_lea.vmem %s0, 340
  %v56 = vld [vmem:[%s55] sm:$0xf]
  %v57 = vunpack.c.l.bf16 %v56
  %v58 = vunpack.c.h.bf16 %v56
  %s59 = scalar_lea.vmem %s1, 980
  %s60 = scalar_lea.vmem %s0, 1140
  %v61 = vld [vmem:[%s60] sm:$0xf]
  %v62 = vunpack.c.l.bf16 %v61
  %v63 = vunpack.c.h.bf16 %v61
  %s64 = scalar_lea.vmem %s1, 180
  %s65 = scalar_lea.vmem %s0, 660
  %v66 = vld [vmem:[%s65] sm:$0xf]
  %v67 = vunpack.c.l.bf16 %v66
  %v68 = vunpack.c.h.bf16 %v66
  %s69 = scalar_lea.vmem %s1, 660
  %s70 = scalar_lea.vmem %s0, 180
  %v71 = vld [vmem:[%s70] sm:$0xf]
  %v72 = vunpack.c.l.bf16 %v71
  %v73 = vunpack.c.h.bf16 %v71
  %s74 = scalar_lea.vmem %s1, 1140
  %s75 = scalar_lea.vmem %s0, 980
  %v76 = vld [vmem:[%s75] sm:$0xf]
  %v77 = vunpack.c.l.bf16 %v76
  %v78 = vunpack.c.h.bf16 %v76
  %s79 = scalar_lea.vmem %s1, 340
  %s80 = scalar_lea.vmem %s0, 500
  %v81 = vld [vmem:[%s80] sm:$0xf]
  %v82 = vunpack.c.l.bf16 %v81
  %v83 = vunpack.c.h.bf16 %v81
  %s84 = scalar_lea.vmem %s1, 820
  %s85 = scalar_lea.vmem %s0, 20
  %v86 = vld [vmem:[%s85] sm:$0xf]
  %v87 = vunpack.c.l.bf16 %v86
  %v88 = vunpack.c.h.bf16 %v86
  %s89 = scalar_lea.vmem %s1, 1300
  %s90 = scalar_lea.vmem %s0, 1320
  %v91 = vld [vmem:[%s90] sm:$0xf]
  %v92 = vunpack.c.l.bf16 %v91
  %v93 = vunpack.c.h.bf16 %v91
  %s94 = scalar_lea.vmem %s1, 40
  %s95 = scalar_lea.vmem %s0, 840
  %v96 = vld [vmem:[%s95] sm:$0xf]
  %v97 = vunpack.c.l.bf16 %v96
  %v98 = vunpack.c.h.bf16 %v96
  %s99 = scalar_lea.vmem %s1, 520
  %s100 = scalar_lea.vmem %s0, 360
  %v101 = vld [vmem:[%s100] sm:$0xf]
  %v102 = vunpack.c.l.bf16 %v101
  %v103 = vunpack.c.h.bf16 %v101
  %s104 = scalar_lea.vmem %s1, 1000
  %s105 = scalar_lea.vmem %s0, 1160
  %v106 = vld [vmem:[%s105] sm:$0xf]
  %v107 = vunpack.c.l.bf16 %v106
  %v108 = vunpack.c.h.bf16 %v106
  %s109 = scalar_lea.vmem %s1, 200
  %s110 = scalar_lea.vmem %s0, 680
  %v111 = vld [vmem:[%s110] sm:$0xf]
  %v112 = vunpack.c.l.bf16 %v111
  %v113 = vunpack.c.h.bf16 %v111
  %s114 = scalar_lea.vmem %s1, 680
  %s115 = scalar_lea.vmem %s0, 200
  %v116 = vld [vmem:[%s115] sm:$0xf]
  %v117 = vunpack.c.l.bf16 %v116
  %v118 = vunpack.c.h.bf16 %v116
  %s119 = scalar_lea.vmem %s1, 1160
  %s120 = scalar_lea.vmem %s0, 1000
  %v121 = vld [vmem:[%s120] sm:$0xf]
  %v122 = vunpack.c.l.bf16 %v121
  %v123 = vunpack.c.h.bf16 %v121
  %s124 = scalar_lea.vmem %s1, 360
  %s125 = scalar_lea.vmem %s0, 520
  %v126 = vld [vmem:[%s125] sm:$0xf]
  %v127 = vunpack.c.l.bf16 %v126
  %v128 = vunpack.c.h.bf16 %v126
  %s129 = scalar_lea.vmem %s1, 840
  %s130 = scalar_lea.vmem %s0, 40
  %v131 = vld [vmem:[%s130] sm:$0xf]
  %v132 = vunpack.c.l.bf16 %v131
  %v133 = vunpack.c.h.bf16 %v131
  %s134 = scalar_lea.vmem %s1, 1320
  %s135 = scalar_lea.vmem %s0, 1340
  %v136 = vld [vmem:[%s135] sm:$0xf]
  %v137 = vunpack.c.l.bf16 %v136
  %v138 = vunpack.c.h.bf16 %v136
  %s139 = scalar_lea.vmem %s1, 60
  %s140 = scalar_lea.vmem %s0, 860
  %v141 = vld [vmem:[%s140] sm:$0xf]
  %v142 = vunpack.c.l.bf16 %v141
  %v143 = vunpack.c.h.bf16 %v141
  %s144 = scalar_lea.vmem %s1, 540
  %s145 = scalar_lea.vmem %s0, 380
  %v146 = vld [vmem:[%s145] sm:$0xf]
  %v147 = vunpack.c.l.bf16 %v146
  %v148 = vunpack.c.h.bf16 %v146
  %s149 = scalar_lea.vmem %s1, 1020
  %s150 = scalar_lea.vmem %s0, 1180
  %v151 = vld [vmem:[%s150] sm:$0xf]
  %v152 = vunpack.c.l.bf16 %v151
  %v153 = vunpack.c.h.bf16 %v151
  %s154 = scalar_lea.vmem %s1, 220
  %s155 = scalar_lea.vmem %s0, 700
  %v156 = vld [vmem:[%s155] sm:$0xf]
  %v157 = vunpack.c.l.bf16 %v156
  %v158 = vunpack.c.h.bf16 %v156
  %s159 = scalar_lea.vmem %s1, 700
  %s160 = scalar_lea.vmem %s0, 220
  %v161 = vld [vmem:[%s160] sm:$0xf]
  %v162 = vunpack.c.l.bf16 %v161
  %v163 = vunpack.c.h.bf16 %v161
  %s164 = scalar_lea.vmem %s1, 1180
  %s165 = scalar_lea.vmem %s0, 1020
  %v166 = vld [vmem:[%s165] sm:$0xf]
  %v167 = vunpack.c.l.bf16 %v166
  %v168 = vunpack.c.h.bf16 %v166
  %s169 = scalar_lea.vmem %s1, 380
  %s170 = scalar_lea.vmem %s0, 540
  %v171 = vld [vmem:[%s170] sm:$0xf]
  %v172 = vunpack.c.l.bf16 %v171
  %v173 = vunpack.c.h.bf16 %v171
  %s174 = scalar_lea.vmem %s1, 860
  %s175 = scalar_lea.vmem %s0, 60
  %v176 = vld [vmem:[%s175] sm:$0xf]
  %v177 = vunpack.c.l.bf16 %v176
  %v178 = vunpack.c.h.bf16 %v176
  %s179 = scalar_lea.vmem %s1, 1340
  %s180 = scalar_lea.vmem %s0, 1360
  %v181 = vld [vmem:[%s180] sm:$0xf]
  %v182 = vunpack.c.l.bf16 %v181
  %v183 = vunpack.c.h.bf16 %v181
  %s184 = scalar_lea.vmem %s1, 80
  %s185 = scalar_lea.vmem %s0, 880
  %v186 = vld [vmem:[%s185] sm:$0xf]
  %v187 = vunpack.c.l.bf16 %v186
  %v188 = vunpack.c.h.bf16 %v186
  %s189 = scalar_lea.vmem %s1, 560
  %s190 = scalar_lea.vmem %s0, 400
  %v191 = vld [vmem:[%s190] sm:$0xf]
  %v192 = vunpack.c.l.bf16 %v191
  %v193 = vunpack.c.h.bf16 %v191
  %s194 = scalar_lea.vmem %s1, 1040
  %s195 = scalar_lea.vmem %s0, 1200
  %v196 = vld [vmem:[%s195] sm:$0xf]
  %v197 = vunpack.c.l.bf16 %v196
  %v198 = vunpack.c.h.bf16 %v196
  %s199 = scalar_lea.vmem %s1, 240
  %s200 = scalar_lea.vmem %s0, 720
  %v201 = vld [vmem:[%s200] sm:$0xf]
  %v202 = vunpack.c.l.bf16 %v201
  %v203 = vunpack.c.h.bf16 %v201
  %s204 = scalar_lea.vmem %s1, 720
  %s205 = scalar_lea.vmem %s0, 240
  %v206 = vld [vmem:[%s205] sm:$0xf]
  %v207 = vunpack.c.l.bf16 %v206
  %v208 = vunpack.c.h.bf16 %v206
  %s209 = scalar_lea.vmem %s1, 1200
  %s210 = scalar_lea.vmem %s0, 1040
  %v211 = vld [vmem:[%s210] sm:$0xf]
  %v212 = vunpack.c.l.bf16 %v211
  %v213 = vunpack.c.h.bf16 %v211
  %s214 = scalar_lea.vmem %s1, 400
  %s215 = scalar_lea.vmem %s0, 560
  %v216 = vld [vmem:[%s215] sm:$0xf]
  %v217 = vunpack.c.l.bf16 %v216
  %v218 = vunpack.c.h.bf16 %v216
  %s219 = scalar_lea.vmem %s1, 880
  %s220 = scalar_lea.vmem %s0, 80
  %v221 = vld [vmem:[%s220] sm:$0xf]
  %v222 = vunpack.c.l.bf16 %v221
  %v223 = vunpack.c.h.bf16 %v221
  %s224 = scalar_lea.vmem %s1, 1360
  %s225 = scalar_lea.vmem %s0, 1380
  %v226 = vld [vmem:[%s225] sm:$0xf]
  %v227 = vunpack.c.l.bf16 %v226
  %v228 = vunpack.c.h.bf16 %v226
  %s229 = scalar_lea.vmem %s1, 100
  %s230 = scalar_lea.vmem %s0, 900
  %v231 = vld [vmem:[%s230] sm:$0xf]
  %v232 = vunpack.c.l.bf16 %v231
  %v233 = vunpack.c.h.bf16 %v231
  %s234 = scalar_lea.vmem %s1, 580
  %s235 = scalar_lea.vmem %s0, 420
  %v236 = vld [vmem:[%s235] sm:$0xf]
  %v237 = vunpack.c.l.bf16 %v236
  %v238 = vunpack.c.h.bf16 %v236
  %s239 = scalar_lea.vmem %s1, 1060
  %s240 = scalar_lea.vmem %s0, 1220
  %v241 = vld [vmem:[%s240] sm:$0xf]
  %v242 = vunpack.c.l.bf16 %v241
  %v243 = vunpack.c.h.bf16 %v241
  %s244 = scalar_lea.vmem %s1, 260
  %s245 = scalar_lea.vmem %s0, 740
  %v246 = vld [vmem:[%s245] sm:$0xf]
  %v247 = vunpack.c.l.bf16 %v246
  %v248 = vunpack.c.h.bf16 %v246
  %s249 = scalar_lea.vmem %s1, 740
  %s250 = scalar_lea.vmem %s0, 260
  %v251 = vld [vmem:[%s250] sm:$0xf]
  %v252 = vunpack.c.l.bf16 %v251
  %v253 = vunpack.c.h.bf16 %v251
  %s254 = scalar_lea.vmem %s1, 1220
  %s255 = scalar_lea.vmem %s0, 1060
  %v256 = vld [vmem:[%s255] sm:$0xf]
  %v257 = vunpack.c.l.bf16 %v256
  %v258 = vunpack.c.h.bf16 %v256
  %s259 = scalar_lea.vmem %s1, 420
  %s260 = scalar_lea.vmem %s0, 580
  %v261 = vld [vmem:[%s260] sm:$0xf]
  %v262 = vunpack.c.l.bf16 %v261
  %v263 = vunpack.c.h.bf16 %v261
  %s264 = scalar_lea.vmem %s1, 900
  %s265 = scalar_lea.vmem %s0, 100
  %v266 = vld [vmem:[%s265] sm:$0xf]
  %v267 = vunpack.c.l.bf16 %v266
  %v268 = vunpack.c.h.bf16 %v266
  %s269 = scalar_lea.vmem %s1, 1380
  %s270 = scalar_lea.vmem %s0, 1400
  %v271 = vld [vmem:[%s270] sm:$0xf]
  %v272 = vunpack.c.l.bf16 %v271
  %v273 = vunpack.c.h.bf16 %v271
  %s274 = scalar_lea.vmem %s1, 120
  %s275 = scalar_lea.vmem %s0, 920
  %v276 = vld [vmem:[%s275] sm:$0xf]
  %v277 = vunpack.c.l.bf16 %v276
  %v278 = vunpack.c.h.bf16 %v276
  %s279 = scalar_lea.vmem %s1, 600
  %s280 = scalar_lea.vmem %s0, 440
  %v281 = vld [vmem:[%s280] sm:$0xf]
  %v282 = vunpack.c.l.bf16 %v281
  %v283 = vunpack.c.h.bf16 %v281
  %s284 = scalar_lea.vmem %s1, 1080
  %s285 = scalar_lea.vmem %s0, 1240
  %v286 = vld [vmem:[%s285] sm:$0xf]
  %v287 = vunpack.c.l.bf16 %v286
  %v288 = vunpack.c.h.bf16 %v286
  %s289 = scalar_lea.vmem %s1, 280
  %s290 = scalar_lea.vmem %s0, 760
  %v291 = vld [vmem:[%s290] sm:$0xf]
  %v292 = vunpack.c.l.bf16 %v291
  %v293 = vunpack.c.h.bf16 %v291
  %s294 = scalar_lea.vmem %s1, 760
  %s295 = scalar_lea.vmem %s0, 280
  %v296 = vld [vmem:[%s295] sm:$0xf]
  %v297 = vunpack.c.l.bf16 %v296
  %v298 = vunpack.c.h.bf16 %v296
  %s299 = scalar_lea.vmem %s1, 1240
  %s300 = scalar_lea.vmem %s0, 1080
  %v301 = vld [vmem:[%s300] sm:$0xf]
  %v302 = vunpack.c.l.bf16 %v301
  %v303 = vunpack.c.h.bf16 %v301
  %s304 = scalar_lea.vmem %s1, 440
  %s305 = scalar_lea.vmem %s0, 600
  %v306 = vld [vmem:[%s305] sm:$0xf]
  %v307 = vunpack.c.l.bf16 %v306
  %v308 = vunpack.c.h.bf16 %v306
  %s309 = scalar_lea.vmem %s1, 920
  %s310 = scalar_lea.vmem %s0, 120
  %v311 = vld [vmem:[%s310] sm:$0xf]
  %v312 = vunpack.c.l.bf16 %v311
  %v313 = vunpack.c.h.bf16 %v311
  %s314 = scalar_lea.vmem %s1, 1400
  %s315 = scalar_lea.vmem %s0, 1420
  %v316 = vld [vmem:[%s315] sm:$0xf]
  %v317 = vunpack.c.l.bf16 %v316
  %v318 = vunpack.c.h.bf16 %v316
  %s319 = scalar_lea.vmem %s1, 140
  %s320 = scalar_lea.vmem %s0, 940
  %v321 = vld [vmem:[%s320] sm:$0xf]
  %v322 = vunpack.c.l.bf16 %v321
  %v323 = vunpack.c.h.bf16 %v321
  %s324 = scalar_lea.vmem %s1, 620
  %s325 = scalar_lea.vmem %s0, 460
  %v326 = vld [vmem:[%s325] sm:$0xf]
  %v327 = vunpack.c.l.bf16 %v326
  %v328 = vunpack.c.h.bf16 %v326
  %s329 = scalar_lea.vmem %s1, 1100
  %s330 = scalar_lea.vmem %s0, 1260
  %v331 = vld [vmem:[%s330] sm:$0xf]
  %v332 = vunpack.c.l.bf16 %v331
  %v333 = vunpack.c.h.bf16 %v331
  %s334 = scalar_lea.vmem %s1, 300
  %s335 = scalar_lea.vmem %s0, 780
  %v336 = vld [vmem:[%s335] sm:$0xf]
  %v337 = vunpack.c.l.bf16 %v336
  %v338 = vunpack.c.h.bf16 %v336
  %s339 = scalar_lea.vmem %s1, 780
  %s340 = scalar_lea.vmem %s0, 300
  %v341 = vld [vmem:[%s340] sm:$0xf]
  %v342 = vunpack.c.l.bf16 %v341
  %v343 = vunpack.c.h.bf16 %v341
  %s344 = scalar_lea.vmem %s1, 1260
  %s345 = scalar_lea.vmem %s0, 1100
  %v346 = vld [vmem:[%s345] sm:$0xf]
  %v347 = vunpack.c.l.bf16 %v346
  %v348 = vunpack.c.h.bf16 %v346
  %s349 = scalar_lea.vmem %s1, 460
  %s350 = scalar_lea.vmem %s0, 620
  %v351 = vld [vmem:[%s350] sm:$0xf]
  %v352 = vunpack.c.l.bf16 %v351
  %v353 = vunpack.c.h.bf16 %v351
  %s354 = scalar_lea.vmem %s1, 940
  %s355 = scalar_lea.vmem %s0, 140
  %v356 = vld [vmem:[%s355] sm:$0xf]
  %v357 = vunpack.c.l.bf16 %v356
  %v358 = vunpack.c.h.bf16 %v356
  %s359 = scalar_lea.vmem %s1, 1420
  %s360 = scalar_lea.vmem %s0, 1284
  %v361 = vld [vmem:[%s360] sm:$0xf]
  %v362 = vunpack.c.l.bf16 %v361
  %v363 = vunpack.c.h.bf16 %v361
  %s364 = scalar_lea.vmem %s1, 4
  %s366 = ssub.s32 0, 4
  %s367 = scalar_lea.vmem %s364, %s366
  %v368 = vpack.c.bf16 %v362, %v4
  %369 = vst [vmem:[%s367] sm:$0xff] %v368
  %s370 = scalar_lea.vmem %s0, 804
  %v371 = vld [vmem:[%s370] sm:$0xf]
  %v372 = vunpack.c.l.bf16 %v371
  %v373 = vunpack.c.h.bf16 %v371
  %s374 = scalar_lea.vmem %s1, 484
  %s376 = ssub.s32 0, 4
  %s377 = scalar_lea.vmem %s374, %s376
  %v378 = vpack.c.bf16 %v372, %v8
  %379 = vst [vmem:[%s377] sm:$0xff] %v378
  %s380 = scalar_lea.vmem %s0, 324
  %v381 = vld [vmem:[%s380] sm:$0xf]
  %v382 = vunpack.c.l.bf16 %v381
  %v383 = vunpack.c.h.bf16 %v381
  %s384 = scalar_lea.vmem %s1, 964
  %s386 = ssub.s32 0, 4
  %s387 = scalar_lea.vmem %s384, %s386
  %v388 = vpack.c.bf16 %v382, %v13
  %389 = vst [vmem:[%s387] sm:$0xff] %v388
  %s390 = scalar_lea.vmem %s0, 1124
  %v391 = vld [vmem:[%s390] sm:$0xf]
  %v392 = vunpack.c.l.bf16 %v391
  %v393 = vunpack.c.h.bf16 %v391
  %s394 = scalar_lea.vmem %s1, 164
  %s396 = ssub.s32 0, 4
  %s397 = scalar_lea.vmem %s394, %s396
  %v398 = vpack.c.bf16 %v392, %v18
  %399 = vst [vmem:[%s397] sm:$0xff] %v398
  %s400 = scalar_lea.vmem %s0, 644
  %v401 = vld [vmem:[%s400] sm:$0xf]
  %v402 = vunpack.c.l.bf16 %v401
  %v403 = vunpack.c.h.bf16 %v401
  %s404 = scalar_lea.vmem %s1, 644
  %s406 = ssub.s32 0, 4
  %s407 = scalar_lea.vmem %s404, %s406
  %v408 = vpack.c.bf16 %v402, %v23
  %409 = vst [vmem:[%s407] sm:$0xff] %v408
  %s410 = scalar_lea.vmem %s0, 164
  %v411 = vld [vmem:[%s410] sm:$0xf]
  %v412 = vunpack.c.l.bf16 %v411
  %v413 = vunpack.c.h.bf16 %v411
  %s414 = scalar_lea.vmem %s1, 1124
  %s416 = ssub.s32 0, 4
  %s417 = scalar_lea.vmem %s414, %s416
  %v418 = vpack.c.bf16 %v412, %v28
  %419 = vst [vmem:[%s417] sm:$0xff] %v418
  %s420 = scalar_lea.vmem %s0, 964
  %v421 = vld [vmem:[%s420] sm:$0xf]
  %v422 = vunpack.c.l.bf16 %v421
  %v423 = vunpack.c.h.bf16 %v421
  %s424 = scalar_lea.vmem %s1, 324
  %s426 = ssub.s32 0, 4
  %s427 = scalar_lea.vmem %s424, %s426
  %v428 = vpack.c.bf16 %v422, %v33
  %429 = vst [vmem:[%s427] sm:$0xff] %v428
  %s430 = scalar_lea.vmem %s0, 484
  %v431 = vld [vmem:[%s430] sm:$0xf]
  %v432 = vunpack.c.l.bf16 %v431
  %v433 = vunpack.c.h.bf16 %v431
  %s434 = scalar_lea.vmem %s1, 804
  %s436 = ssub.s32 0, 4
  %s437 = scalar_lea.vmem %s434, %s436
  %v438 = vpack.c.bf16 %v432, %v38
  %439 = vst [vmem:[%s437] sm:$0xff] %v438
  %s440 = scalar_lea.vmem %s0, 4
  %v441 = vld [vmem:[%s440] sm:$0xf]
  %v442 = vunpack.c.l.bf16 %v441
  %v443 = vunpack.c.h.bf16 %v441
  %s444 = scalar_lea.vmem %s1, 1284
  %s446 = ssub.s32 0, 4
  %s447 = scalar_lea.vmem %s444, %s446
  %v448 = vpack.c.bf16 %v442, %v42
  %449 = vst [vmem:[%s447] sm:$0xff] %v448
  %s450 = scalar_lea.vmem %s0, 1304
  %v451 = vld [vmem:[%s450] sm:$0xf]
  %v452 = vunpack.c.l.bf16 %v451
  %v453 = vunpack.c.h.bf16 %v451
  %s454 = scalar_lea.vmem %s1, 24
  %s456 = ssub.s32 0, 4
  %s457 = scalar_lea.vmem %s454, %s456
  %v458 = vpack.c.bf16 %v452, %v47
  %459 = vst [vmem:[%s457] sm:$0xff] %v458
  %s460 = scalar_lea.vmem %s0, 824
  %v461 = vld [vmem:[%s460] sm:$0xf]
  %v462 = vunpack.c.l.bf16 %v461
  %v463 = vunpack.c.h.bf16 %v461
  %s464 = scalar_lea.vmem %s1, 504
  %s466 = ssub.s32 0, 4
  %s467 = scalar_lea.vmem %s464, %s466
  %v468 = vpack.c.bf16 %v462, %v52
  %469 = vst [vmem:[%s467] sm:$0xff] %v468
  %s470 = scalar_lea.vmem %s0, 344
  %v471 = vld [vmem:[%s470] sm:$0xf]
  %v472 = vunpack.c.l.bf16 %v471
  %v473 = vunpack.c.h.bf16 %v471
  %s474 = scalar_lea.vmem %s1, 984
  %s476 = ssub.s32 0, 4
  %s477 = scalar_lea.vmem %s474, %s476
  %v478 = vpack.c.bf16 %v472, %v57
  %479 = vst [vmem:[%s477] sm:$0xff] %v478
  %s480 = scalar_lea.vmem %s0, 1144
  %v481 = vld [vmem:[%s480] sm:$0xf]
  %v482 = vunpack.c.l.bf16 %v481
  %v483 = vunpack.c.h.bf16 %v481
  %s484 = scalar_lea.vmem %s1, 184
  %s486 = ssub.s32 0, 4
  %s487 = scalar_lea.vmem %s484, %s486
  %v488 = vpack.c.bf16 %v482, %v62
  %489 = vst [vmem:[%s487] sm:$0xff] %v488
  %s490 = scalar_lea.vmem %s0, 664
  %v491 = vld [vmem:[%s490] sm:$0xf]
  %v492 = vunpack.c.l.bf16 %v491
  %v493 = vunpack.c.h.bf16 %v491
  %s494 = scalar_lea.vmem %s1, 664
  %s496 = ssub.s32 0, 4
  %s497 = scalar_lea.vmem %s494, %s496
  %v498 = vpack.c.bf16 %v492, %v67
  %499 = vst [vmem:[%s497] sm:$0xff] %v498
  %s500 = scalar_lea.vmem %s0, 184
  %v501 = vld [vmem:[%s500] sm:$0xf]
  %v502 = vunpack.c.l.bf16 %v501
  %v503 = vunpack.c.h.bf16 %v501
  %s504 = scalar_lea.vmem %s1, 1144
  %s506 = ssub.s32 0, 4
  %s507 = scalar_lea.vmem %s504, %s506
  %v508 = vpack.c.bf16 %v502, %v72
  %509 = vst [vmem:[%s507] sm:$0xff] %v508
  %s510 = scalar_lea.vmem %s0, 984
  %v511 = vld [vmem:[%s510] sm:$0xf]
  %v512 = vunpack.c.l.bf16 %v511
  %v513 = vunpack.c.h.bf16 %v511
  %s514 = scalar_lea.vmem %s1, 344
  %s516 = ssub.s32 0, 4
  %s517 = scalar_lea.vmem %s514, %s516
  %v518 = vpack.c.bf16 %v512, %v77
  %519 = vst [vmem:[%s517] sm:$0xff] %v518
  %s520 = scalar_lea.vmem %s0, 504
  %v521 = vld [vmem:[%s520] sm:$0xf]
  %v522 = vunpack.c.l.bf16 %v521
  %v523 = vunpack.c.h.bf16 %v521
  %s524 = scalar_lea.vmem %s1, 824
  %s526 = ssub.s32 0, 4
  %s527 = scalar_lea.vmem %s524, %s526
  %v528 = vpack.c.bf16 %v522, %v82
  %529 = vst [vmem:[%s527] sm:$0xff] %v528
  %s530 = scalar_lea.vmem %s0, 24
  %v531 = vld [vmem:[%s530] sm:$0xf]
  %v532 = vunpack.c.l.bf16 %v531
  %v533 = vunpack.c.h.bf16 %v531
  %s534 = scalar_lea.vmem %s1, 1304
  %s536 = ssub.s32 0, 4
  %s537 = scalar_lea.vmem %s534, %s536
  %v538 = vpack.c.bf16 %v532, %v87
  %539 = vst [vmem:[%s537] sm:$0xff] %v538
  %s540 = scalar_lea.vmem %s0, 1324
  %v541 = vld [vmem:[%s540] sm:$0xf]
  %v542 = vunpack.c.l.bf16 %v541
  %v543 = vunpack.c.h.bf16 %v541
  %s544 = scalar_lea.vmem %s1, 44
  %s546 = ssub.s32 0, 4
  %s547 = scalar_lea.vmem %s544, %s546
  %v548 = vpack.c.bf16 %v542, %v92
  %549 = vst [vmem:[%s547] sm:$0xff] %v548
  %s550 = scalar_lea.vmem %s0, 844
  %v551 = vld [vmem:[%s550] sm:$0xf]
  %v552 = vunpack.c.l.bf16 %v551
  %v553 = vunpack.c.h.bf16 %v551
  %s554 = scalar_lea.vmem %s1, 524
  %s556 = ssub.s32 0, 4
  %s557 = scalar_lea.vmem %s554, %s556
  %v558 = vpack.c.bf16 %v552, %v97
  %559 = vst [vmem:[%s557] sm:$0xff] %v558
  %s560 = scalar_lea.vmem %s0, 364
  %v561 = vld [vmem:[%s560] sm:$0xf]
  %v562 = vunpack.c.l.bf16 %v561
  %v563 = vunpack.c.h.bf16 %v561
  %s564 = scalar_lea.vmem %s1, 1004
  %s566 = ssub.s32 0, 4
  %s567 = scalar_lea.vmem %s564, %s566
  %v568 = vpack.c.bf16 %v562, %v102
  %569 = vst [vmem:[%s567] sm:$0xff] %v568
  %s570 = scalar_lea.vmem %s0, 1164
  %v571 = vld [vmem:[%s570] sm:$0xf]
  %v572 = vunpack.c.l.bf16 %v571
  %v573 = vunpack.c.h.bf16 %v571
  %s574 = scalar_lea.vmem %s1, 204
  %s576 = ssub.s32 0, 4
  %s577 = scalar_lea.vmem %s574, %s576
  %v578 = vpack.c.bf16 %v572, %v107
  %579 = vst [vmem:[%s577] sm:$0xff] %v578
  %s580 = scalar_lea.vmem %s0, 684
  %v581 = vld [vmem:[%s580] sm:$0xf]
  %v582 = vunpack.c.l.bf16 %v581
  %v583 = vunpack.c.h.bf16 %v581
  %s584 = scalar_lea.vmem %s1, 684
  %s586 = ssub.s32 0, 4
  %s587 = scalar_lea.vmem %s584, %s586
  %v588 = vpack.c.bf16 %v582, %v112
  %589 = vst [vmem:[%s587] sm:$0xff] %v588
  %s590 = scalar_lea.vmem %s0, 204
  %v591 = vld [vmem:[%s590] sm:$0xf]
  %v592 = vunpack.c.l.bf16 %v591
  %v593 = vunpack.c.h.bf16 %v591
  %s594 = scalar_lea.vmem %s1, 1164
  %s596 = ssub.s32 0, 4
  %s597 = scalar_lea.vmem %s594, %s596
  %v598 = vpack.c.bf16 %v592, %v117
  %599 = vst [vmem:[%s597] sm:$0xff] %v598
  %s600 = scalar_lea.vmem %s0, 1004
  %v601 = vld [vmem:[%s600] sm:$0xf]
  %v602 = vunpack.c.l.bf16 %v601
  %v603 = vunpack.c.h.bf16 %v601
  %s604 = scalar_lea.vmem %s1, 364
  %s606 = ssub.s32 0, 4
  %s607 = scalar_lea.vmem %s604, %s606
  %v608 = vpack.c.bf16 %v602, %v122
  %609 = vst [vmem:[%s607] sm:$0xff] %v608
  %s610 = scalar_lea.vmem %s0, 524
  %v611 = vld [vmem:[%s610] sm:$0xf]
  %v612 = vunpack.c.l.bf16 %v611
  %v613 = vunpack.c.h.bf16 %v611
  %s614 = scalar_lea.vmem %s1, 844
  %s616 = ssub.s32 0, 4
  %s617 = scalar_lea.vmem %s614, %s616
  %v618 = vpack.c.bf16 %v612, %v127
  %619 = vst [vmem:[%s617] sm:$0xff] %v618
  %s620 = scalar_lea.vmem %s0, 44
  %v621 = vld [vmem:[%s620] sm:$0xf]
  %v622 = vunpack.c.l.bf16 %v621
  %v623 = vunpack.c.h.bf16 %v621
  %s624 = scalar_lea.vmem %s1, 1324
  %s626 = ssub.s32 0, 4
  %s627 = scalar_lea.vmem %s624, %s626
  %v628 = vpack.c.bf16 %v622, %v132
  %629 = vst [vmem:[%s627] sm:$0xff] %v628
  %s630 = scalar_lea.vmem %s0, 1344
  %v631 = vld [vmem:[%s630] sm:$0xf]
  %v632 = vunpack.c.l.bf16 %v631
  %v633 = vunpack.c.h.bf16 %v631
  %s634 = scalar_lea.vmem %s1, 64
  %s636 = ssub.s32 0, 4
  %s637 = scalar_lea.vmem %s634, %s636
  %v638 = vpack.c.bf16 %v632, %v137
  %639 = vst [vmem:[%s637] sm:$0xff] %v638
  %s640 = scalar_lea.vmem %s0, 864
  %v641 = vld [vmem:[%s640] sm:$0xf]
  %v642 = vunpack.c.l.bf16 %v641
  %v643 = vunpack.c.h.bf16 %v641
  %s644 = scalar_lea.vmem %s1, 544
  %s646 = ssub.s32 0, 4
  %s647 = scalar_lea.vmem %s644, %s646
  %v648 = vpack.c.bf16 %v642, %v142
  %649 = vst [vmem:[%s647] sm:$0xff] %v648
  %s650 = scalar_lea.vmem %s0, 384
  %v651 = vld [vmem:[%s650] sm:$0xf]
  %v652 = vunpack.c.l.bf16 %v651
  %v653 = vunpack.c.h.bf16 %v651
  %s654 = scalar_lea.vmem %s1, 1024
  %s656 = ssub.s32 0, 4
  %s657 = scalar_lea.vmem %s654, %s656
  %v658 = vpack.c.bf16 %v652, %v147
  %659 = vst [vmem:[%s657] sm:$0xff] %v658
  %s660 = scalar_lea.vmem %s0, 1184
  %v661 = vld [vmem:[%s660] sm:$0xf]
  %v662 = vunpack.c.l.bf16 %v661
  %v663 = vunpack.c.h.bf16 %v661
  %s664 = scalar_lea.vmem %s1, 224
  %s666 = ssub.s32 0, 4
  %s667 = scalar_lea.vmem %s664, %s666
  %v668 = vpack.c.bf16 %v662, %v152
  %669 = vst [vmem:[%s667] sm:$0xff] %v668
  %s670 = scalar_lea.vmem %s0, 704
  %v671 = vld [vmem:[%s670] sm:$0xf]
  %v672 = vunpack.c.l.bf16 %v671
  %v673 = vunpack.c.h.bf16 %v671
  %s674 = scalar_lea.vmem %s1, 704
  %s676 = ssub.s32 0, 4
  %s677 = scalar_lea.vmem %s674, %s676
  %v678 = vpack.c.bf16 %v672, %v157
  %679 = vst [vmem:[%s677] sm:$0xff] %v678
  %s680 = scalar_lea.vmem %s0, 224
  %v681 = vld [vmem:[%s680] sm:$0xf]
  %v682 = vunpack.c.l.bf16 %v681
  %v683 = vunpack.c.h.bf16 %v681
  %s684 = scalar_lea.vmem %s1, 1184
  %s686 = ssub.s32 0, 4
  %s687 = scalar_lea.vmem %s684, %s686
  %v688 = vpack.c.bf16 %v682, %v162
  %689 = vst [vmem:[%s687] sm:$0xff] %v688
  %s690 = scalar_lea.vmem %s0, 1024
  %v691 = vld [vmem:[%s690] sm:$0xf]
  %v692 = vunpack.c.l.bf16 %v691
  %v693 = vunpack.c.h.bf16 %v691
  %s694 = scalar_lea.vmem %s1, 384
  %s696 = ssub.s32 0, 4
  %s697 = scalar_lea.vmem %s694, %s696
  %v698 = vpack.c.bf16 %v692, %v167
  %699 = vst [vmem:[%s697] sm:$0xff] %v698
  %s700 = scalar_lea.vmem %s0, 544
  %v701 = vld [vmem:[%s700] sm:$0xf]
  %v702 = vunpack.c.l.bf16 %v701
  %v703 = vunpack.c.h.bf16 %v701
  %s704 = scalar_lea.vmem %s1, 864
  %s706 = ssub.s32 0, 4
  %s707 = scalar_lea.vmem %s704, %s706
  %v708 = vpack.c.bf16 %v702, %v172
  %709 = vst [vmem:[%s707] sm:$0xff] %v708
  %s710 = scalar_lea.vmem %s0, 64
  %v711 = vld [vmem:[%s710] sm:$0xf]
  %v712 = vunpack.c.l.bf16 %v711
  %v713 = vunpack.c.h.bf16 %v711
  %s714 = scalar_lea.vmem %s1, 1344
  %s716 = ssub.s32 0, 4
  %s717 = scalar_lea.vmem %s714, %s716
  %v718 = vpack.c.bf16 %v712, %v177
  %719 = vst [vmem:[%s717] sm:$0xff] %v718
  %s720 = scalar_lea.vmem %s0, 1364
  %v721 = vld [vmem:[%s720] sm:$0xf]
  %v722 = vunpack.c.l.bf16 %v721
  %v723 = vunpack.c.h.bf16 %v721
  %s724 = scalar_lea.vmem %s1, 84
  %s726 = ssub.s32 0, 4
  %s727 = scalar_lea.vmem %s724, %s726
  %v728 = vpack.c.bf16 %v722, %v182
  %729 = vst [vmem:[%s727] sm:$0xff] %v728
  %s730 = scalar_lea.vmem %s0, 884
  %v731 = vld [vmem:[%s730] sm:$0xf]
  %v732 = vunpack.c.l.bf16 %v731
  %v733 = vunpack.c.h.bf16 %v731
  %s734 = scalar_lea.vmem %s1, 564
  %s736 = ssub.s32 0, 4
  %s737 = scalar_lea.vmem %s734, %s736
  %v738 = vpack.c.bf16 %v732, %v187
  %739 = vst [vmem:[%s737] sm:$0xff] %v738
  %s740 = scalar_lea.vmem %s0, 404
  %v741 = vld [vmem:[%s740] sm:$0xf]
  %v742 = vunpack.c.l.bf16 %v741
  %v743 = vunpack.c.h.bf16 %v741
  %s744 = scalar_lea.vmem %s1, 1044
  %s746 = ssub.s32 0, 4
  %s747 = scalar_lea.vmem %s744, %s746
  %v748 = vpack.c.bf16 %v742, %v192
  %749 = vst [vmem:[%s747] sm:$0xff] %v748
  %s750 = scalar_lea.vmem %s0, 1204
  %v751 = vld [vmem:[%s750] sm:$0xf]
  %v752 = vunpack.c.l.bf16 %v751
  %v753 = vunpack.c.h.bf16 %v751
  %s754 = scalar_lea.vmem %s1, 244
  %s756 = ssub.s32 0, 4
  %s757 = scalar_lea.vmem %s754, %s756
  %v758 = vpack.c.bf16 %v752, %v197
  %759 = vst [vmem:[%s757] sm:$0xff] %v758
  %s760 = scalar_lea.vmem %s0, 724
  %v761 = vld [vmem:[%s760] sm:$0xf]
  %v762 = vunpack.c.l.bf16 %v761
  %v763 = vunpack.c.h.bf16 %v761
  %s764 = scalar_lea.vmem %s1, 724
  %s766 = ssub.s32 0, 4
  %s767 = scalar_lea.vmem %s764, %s766
  %v768 = vpack.c.bf16 %v762, %v202
  %769 = vst [vmem:[%s767] sm:$0xff] %v768
  %s770 = scalar_lea.vmem %s0, 244
  %v771 = vld [vmem:[%s770] sm:$0xf]
  %v772 = vunpack.c.l.bf16 %v771
  %v773 = vunpack.c.h.bf16 %v771
  %s774 = scalar_lea.vmem %s1, 1204
  %s776 = ssub.s32 0, 4
  %s777 = scalar_lea.vmem %s774, %s776
  %v778 = vpack.c.bf16 %v772, %v207
  %779 = vst [vmem:[%s777] sm:$0xff] %v778
  %s780 = scalar_lea.vmem %s0, 1044
  %v781 = vld [vmem:[%s780] sm:$0xf]
  %v782 = vunpack.c.l.bf16 %v781
  %v783 = vunpack.c.h.bf16 %v781
  %s784 = scalar_lea.vmem %s1, 404
  %s786 = ssub.s32 0, 4
  %s787 = scalar_lea.vmem %s784, %s786
  %v788 = vpack.c.bf16 %v782, %v212
  %789 = vst [vmem:[%s787] sm:$0xff] %v788
  %s790 = scalar_lea.vmem %s0, 564
  %v791 = vld [vmem:[%s790] sm:$0xf]
  %v792 = vunpack.c.l.bf16 %v791
  %v793 = vunpack.c.h.bf16 %v791
  %s794 = scalar_lea.vmem %s1, 884
  %s796 = ssub.s32 0, 4
  %s797 = scalar_lea.vmem %s794, %s796
  %v798 = vpack.c.bf16 %v792, %v217
  %799 = vst [vmem:[%s797] sm:$0xff] %v798
  %s800 = scalar_lea.vmem %s0, 84
  %v801 = vld [vmem:[%s800] sm:$0xf]
  %v802 = vunpack.c.l.bf16 %v801
  %v803 = vunpack.c.h.bf16 %v801
  %s804 = scalar_lea.vmem %s1, 1364
  %s806 = ssub.s32 0, 4
  %s807 = scalar_lea.vmem %s804, %s806
  %v808 = vpack.c.bf16 %v802, %v222
  %809 = vst [vmem:[%s807] sm:$0xff] %v808
  %s810 = scalar_lea.vmem %s0, 1384
  %v811 = vld [vmem:[%s810] sm:$0xf]
  %v812 = vunpack.c.l.bf16 %v811
  %v813 = vunpack.c.h.bf16 %v811
  %s814 = scalar_lea.vmem %s1, 104
  %s816 = ssub.s32 0, 4
  %s817 = scalar_lea.vmem %s814, %s816
  %v818 = vpack.c.bf16 %v812, %v227
  %819 = vst [vmem:[%s817] sm:$0xff] %v818
  %s820 = scalar_lea.vmem %s0, 904
  %v821 = vld [vmem:[%s820] sm:$0xf]
  %v822 = vunpack.c.l.bf16 %v821
  %v823 = vunpack.c.h.bf16 %v821
  %s824 = scalar_lea.vmem %s1, 584
  %s826 = ssub.s32 0, 4
  %s827 = scalar_lea.vmem %s824, %s826
  %v828 = vpack.c.bf16 %v822, %v232
  %829 = vst [vmem:[%s827] sm:$0xff] %v828
  %s830 = scalar_lea.vmem %s0, 424
  %v831 = vld [vmem:[%s830] sm:$0xf]
  %v832 = vunpack.c.l.bf16 %v831
  %v833 = vunpack.c.h.bf16 %v831
  %s834 = scalar_lea.vmem %s1, 1064
  %s836 = ssub.s32 0, 4
  %s837 = scalar_lea.vmem %s834, %s836
  %v838 = vpack.c.bf16 %v832, %v237
  %839 = vst [vmem:[%s837] sm:$0xff] %v838
  %s840 = scalar_lea.vmem %s0, 1224
  %v841 = vld [vmem:[%s840] sm:$0xf]
  %v842 = vunpack.c.l.bf16 %v841
  %v843 = vunpack.c.h.bf16 %v841
  %s844 = scalar_lea.vmem %s1, 264
  %s846 = ssub.s32 0, 4
  %s847 = scalar_lea.vmem %s844, %s846
  %v848 = vpack.c.bf16 %v842, %v242
  %849 = vst [vmem:[%s847] sm:$0xff] %v848
  %s850 = scalar_lea.vmem %s0, 744
  %v851 = vld [vmem:[%s850] sm:$0xf]
  %v852 = vunpack.c.l.bf16 %v851
  %v853 = vunpack.c.h.bf16 %v851
  %s854 = scalar_lea.vmem %s1, 744
  %s856 = ssub.s32 0, 4
  %s857 = scalar_lea.vmem %s854, %s856
  %v858 = vpack.c.bf16 %v852, %v247
  %859 = vst [vmem:[%s857] sm:$0xff] %v858
  %s860 = scalar_lea.vmem %s0, 264
  %v861 = vld [vmem:[%s860] sm:$0xf]
  %v862 = vunpack.c.l.bf16 %v861
  %v863 = vunpack.c.h.bf16 %v861
  %s864 = scalar_lea.vmem %s1, 1224
  %s866 = ssub.s32 0, 4
  %s867 = scalar_lea.vmem %s864, %s866
  %v868 = vpack.c.bf16 %v862, %v252
  %869 = vst [vmem:[%s867] sm:$0xff] %v868
  %s870 = scalar_lea.vmem %s0, 1064
  %v871 = vld [vmem:[%s870] sm:$0xf]
  %v872 = vunpack.c.l.bf16 %v871
  %v873 = vunpack.c.h.bf16 %v871
  %s874 = scalar_lea.vmem %s1, 424
  %s876 = ssub.s32 0, 4
  %s877 = scalar_lea.vmem %s874, %s876
  %v878 = vpack.c.bf16 %v872, %v257
  %879 = vst [vmem:[%s877] sm:$0xff] %v878
  %s880 = scalar_lea.vmem %s0, 584
  %v881 = vld [vmem:[%s880] sm:$0xf]
  %v882 = vunpack.c.l.bf16 %v881
  %v883 = vunpack.c.h.bf16 %v881
  %s884 = scalar_lea.vmem %s1, 904
  %s886 = ssub.s32 0, 4
  %s887 = scalar_lea.vmem %s884, %s886
  %v888 = vpack.c.bf16 %v882, %v262
  %889 = vst [vmem:[%s887] sm:$0xff] %v888
  %s890 = scalar_lea.vmem %s0, 104
  %v891 = vld [vmem:[%s890] sm:$0xf]
  %v892 = vunpack.c.l.bf16 %v891
  %v893 = vunpack.c.h.bf16 %v891
  %s894 = scalar_lea.vmem %s1, 1384
  %s896 = ssub.s32 0, 4
  %s897 = scalar_lea.vmem %s894, %s896
  %v898 = vpack.c.bf16 %v892, %v267
  %899 = vst [vmem:[%s897] sm:$0xff] %v898
  %s900 = scalar_lea.vmem %s0, 1404
  %v901 = vld [vmem:[%s900] sm:$0xf]
  %v902 = vunpack.c.l.bf16 %v901
  %v903 = vunpack.c.h.bf16 %v901
  %s904 = scalar_lea.vmem %s1, 124
  %s906 = ssub.s32 0, 4
  %s907 = scalar_lea.vmem %s904, %s906
  %v908 = vpack.c.bf16 %v902, %v272
  %909 = vst [vmem:[%s907] sm:$0xff] %v908
  %s910 = scalar_lea.vmem %s0, 924
  %v911 = vld [vmem:[%s910] sm:$0xf]
  %v912 = vunpack.c.l.bf16 %v911
  %v913 = vunpack.c.h.bf16 %v911
  %s914 = scalar_lea.vmem %s1, 604
  %s916 = ssub.s32 0, 4
  %s917 = scalar_lea.vmem %s914, %s916
  %v918 = vpack.c.bf16 %v912, %v277
  %919 = vst [vmem:[%s917] sm:$0xff] %v918
  %s920 = scalar_lea.vmem %s0, 444
  %v921 = vld [vmem:[%s920] sm:$0xf]
  %v922 = vunpack.c.l.bf16 %v921
  %v923 = vunpack.c.h.bf16 %v921
  %s924 = scalar_lea.vmem %s1, 1084
  %s926 = ssub.s32 0, 4
  %s927 = scalar_lea.vmem %s924, %s926
  %v928 = vpack.c.bf16 %v922, %v282
  %929 = vst [vmem:[%s927] sm:$0xff] %v928
  %s930 = scalar_lea.vmem %s0, 1244
  %v931 = vld [vmem:[%s930] sm:$0xf]
  %v932 = vunpack.c.l.bf16 %v931
  %v933 = vunpack.c.h.bf16 %v931
  %s934 = scalar_lea.vmem %s1, 284
  %s936 = ssub.s32 0, 4
  %s937 = scalar_lea.vmem %s934, %s936
  %v938 = vpack.c.bf16 %v932, %v287
  %939 = vst [vmem:[%s937] sm:$0xff] %v938
  %s940 = scalar_lea.vmem %s0, 764
  %v941 = vld [vmem:[%s940] sm:$0xf]
  %v942 = vunpack.c.l.bf16 %v941
  %v943 = vunpack.c.h.bf16 %v941
  %s944 = scalar_lea.vmem %s1, 764
  %s946 = ssub.s32 0, 4
  %s947 = scalar_lea.vmem %s944, %s946
  %v948 = vpack.c.bf16 %v942, %v292
  %949 = vst [vmem:[%s947] sm:$0xff] %v948
  %s950 = scalar_lea.vmem %s0, 284
  %v951 = vld [vmem:[%s950] sm:$0xf]
  %v952 = vunpack.c.l.bf16 %v951
  %v953 = vunpack.c.h.bf16 %v951
  %s954 = scalar_lea.vmem %s1, 1244
  %s956 = ssub.s32 0, 4
  %s957 = scalar_lea.vmem %s954, %s956
  %v958 = vpack.c.bf16 %v952, %v297
  %959 = vst [vmem:[%s957] sm:$0xff] %v958
  %s960 = scalar_lea.vmem %s0, 1084
  %v961 = vld [vmem:[%s960] sm:$0xf]
  %v962 = vunpack.c.l.bf16 %v961
  %v963 = vunpack.c.h.bf16 %v961
  %s964 = scalar_lea.vmem %s1, 444
  %s966 = ssub.s32 0, 4
  %s967 = scalar_lea.vmem %s964, %s966
  %v968 = vpack.c.bf16 %v962, %v302
  %969 = vst [vmem:[%s967] sm:$0xff] %v968
  %s970 = scalar_lea.vmem %s0, 604
  %v971 = vld [vmem:[%s970] sm:$0xf]
  %v972 = vunpack.c.l.bf16 %v971
  %v973 = vunpack.c.h.bf16 %v971
  %s974 = scalar_lea.vmem %s1, 924
  %s976 = ssub.s32 0, 4
  %s977 = scalar_lea.vmem %s974, %s976
  %v978 = vpack.c.bf16 %v972, %v307
  %979 = vst [vmem:[%s977] sm:$0xff] %v978
  %s980 = scalar_lea.vmem %s0, 124
  %v981 = vld [vmem:[%s980] sm:$0xf]
  %v982 = vunpack.c.l.bf16 %v981
  %v983 = vunpack.c.h.bf16 %v981
  %s984 = scalar_lea.vmem %s1, 1404
  %s986 = ssub.s32 0, 4
  %s987 = scalar_lea.vmem %s984, %s986
  %v988 = vpack.c.bf16 %v982, %v312
  %989 = vst [vmem:[%s987] sm:$0xff] %v988
  %s990 = scalar_lea.vmem %s0, 1424
  %v991 = vld [vmem:[%s990] sm:$0xf]
  %v992 = vunpack.c.l.bf16 %v991
  %v993 = vunpack.c.h.bf16 %v991
  %s994 = scalar_lea.vmem %s1, 144
  %s996 = ssub.s32 0, 4
  %s997 = scalar_lea.vmem %s994, %s996
  %v998 = vpack.c.bf16 %v992, %v317
  %999 = vst [vmem:[%s997] sm:$0xff] %v998
  %s1000 = scalar_lea.vmem %s0, 944
  %v1001 = vld [vmem:[%s1000] sm:$0xf]
  %v1002 = vunpack.c.l.bf16 %v1001
  %v1003 = vunpack.c.h.bf16 %v1001
  %s1004 = scalar_lea.vmem %s1, 624
  %s1006 = ssub.s32 0, 4
  %s1007 = scalar_lea.vmem %s1004, %s1006
  %v1008 = vpack.c.bf16 %v1002, %v322
  %1009 = vst [vmem:[%s1007] sm:$0xff] %v1008
  %s1010 = scalar_lea.vmem %s0, 464
  %v1011 = vld [vmem:[%s1010] sm:$0xf]
  %v1012 = vunpack.c.l.bf16 %v1011
  %v1013 = vunpack.c.h.bf16 %v1011
  %s1014 = scalar_lea.vmem %s1, 1104
  %s1016 = ssub.s32 0, 4
  %s1017 = scalar_lea.vmem %s1014, %s1016
  %v1018 = vpack.c.bf16 %v1012, %v327
  %1019 = vst [vmem:[%s1017] sm:$0xff] %v1018
  %s1020 = scalar_lea.vmem %s0, 1264
  %v1021 = vld [vmem:[%s1020] sm:$0xf]
  %v1022 = vunpack.c.l.bf16 %v1021
  %v1023 = vunpack.c.h.bf16 %v1021
  %s1024 = scalar_lea.vmem %s1, 304
  %s1026 = ssub.s32 0, 4
  %s1027 = scalar_lea.vmem %s1024, %s1026
  %v1028 = vpack.c.bf16 %v1022, %v332
  %1029 = vst [vmem:[%s1027] sm:$0xff] %v1028
  %s1030 = scalar_lea.vmem %s0, 784
  %v1031 = vld [vmem:[%s1030] sm:$0xf]
  %v1032 = vunpack.c.l.bf16 %v1031
  %v1033 = vunpack.c.h.bf16 %v1031
  %s1034 = scalar_lea.vmem %s1, 784
  %s1036 = ssub.s32 0, 4
  %s1037 = scalar_lea.vmem %s1034, %s1036
  %v1038 = vpack.c.bf16 %v1032, %v337
  %1039 = vst [vmem:[%s1037] sm:$0xff] %v1038
  %s1040 = scalar_lea.vmem %s0, 304
  %v1041 = vld [vmem:[%s1040] sm:$0xf]
  %v1042 = vunpack.c.l.bf16 %v1041
  %v1043 = vunpack.c.h.bf16 %v1041
  %s1044 = scalar_lea.vmem %s1, 1264
  %s1046 = ssub.s32 0, 4
  %s1047 = scalar_lea.vmem %s1044, %s1046
  %v1048 = vpack.c.bf16 %v1042, %v342
  %1049 = vst [vmem:[%s1047] sm:$0xff] %v1048
  %s1050 = scalar_lea.vmem %s0, 1104
  %v1051 = vld [vmem:[%s1050] sm:$0xf]
  %v1052 = vunpack.c.l.bf16 %v1051
  %v1053 = vunpack.c.h.bf16 %v1051
  %s1054 = scalar_lea.vmem %s1, 464
  %s1056 = ssub.s32 0, 4
  %s1057 = scalar_lea.vmem %s1054, %s1056
  %v1058 = vpack.c.bf16 %v1052, %v347
  %1059 = vst [vmem:[%s1057] sm:$0xff] %v1058
  %s1060 = scalar_lea.vmem %s0, 624
  %v1061 = vld [vmem:[%s1060] sm:$0xf]
  %v1062 = vunpack.c.l.bf16 %v1061
  %v1063 = vunpack.c.h.bf16 %v1061
  %s1064 = scalar_lea.vmem %s1, 944
  %s1066 = ssub.s32 0, 4
  %s1067 = scalar_lea.vmem %s1064, %s1066
  %v1068 = vpack.c.bf16 %v1062, %v352
  %1069 = vst [vmem:[%s1067] sm:$0xff] %v1068
  %s1070 = scalar_lea.vmem %s0, 144
  %v1071 = vld [vmem:[%s1070] sm:$0xf]
  %v1072 = vunpack.c.l.bf16 %v1071
  %v1073 = vunpack.c.h.bf16 %v1071
  %s1074 = scalar_lea.vmem %s1, 1424
  %s1076 = ssub.s32 0, 4
  %s1077 = scalar_lea.vmem %s1074, %s1076
  %v1078 = vpack.c.bf16 %v1072, %v357
  %1079 = vst [vmem:[%s1077] sm:$0xff] %v1078
  %s1080 = scalar_lea.vmem %s0, 1288
  %v1081 = vld [vmem:[%s1080] sm:$0xf]
  %v1082 = vunpack.c.l.bf16 %v1081
  %v1083 = vunpack.c.h.bf16 %v1081
  %s1084 = scalar_lea.vmem %s1, 8
  %s1085 = scalar_lea.vmem %s0, 808
  %v1086 = vld [vmem:[%s1085] sm:$0xf]
  %v1087 = vunpack.c.l.bf16 %v1086
  %v1088 = vunpack.c.h.bf16 %v1086
  %s1089 = scalar_lea.vmem %s1, 488
  %s1090 = scalar_lea.vmem %s0, 328
  %v1091 = vld [vmem:[%s1090] sm:$0xf]
  %v1092 = vunpack.c.l.bf16 %v1091
  %v1093 = vunpack.c.h.bf16 %v1091
  %s1094 = scalar_lea.vmem %s1, 968
  %s1095 = scalar_lea.vmem %s0, 1128
  %v1096 = vld [vmem:[%s1095] sm:$0xf]
  %v1097 = vunpack.c.l.bf16 %v1096
  %v1098 = vunpack.c.h.bf16 %v1096
  %s1099 = scalar_lea.vmem %s1, 168
  %s1100 = scalar_lea.vmem %s0, 648
  %v1101 = vld [vmem:[%s1100] sm:$0xf]
  %v1102 = vunpack.c.l.bf16 %v1101
  %v1103 = vunpack.c.h.bf16 %v1101
  %s1104 = scalar_lea.vmem %s1, 648
  %s1105 = scalar_lea.vmem %s0, 168
  %v1106 = vld [vmem:[%s1105] sm:$0xf]
  %v1107 = vunpack.c.l.bf16 %v1106
  %v1108 = vunpack.c.h.bf16 %v1106
  %s1109 = scalar_lea.vmem %s1, 1128
  %s1110 = scalar_lea.vmem %s0, 968
  %v1111 = vld [vmem:[%s1110] sm:$0xf]
  %v1112 = vunpack.c.l.bf16 %v1111
  %v1113 = vunpack.c.h.bf16 %v1111
  %s1114 = scalar_lea.vmem %s1, 328
  %s1115 = scalar_lea.vmem %s0, 488
  %v1116 = vld [vmem:[%s1115] sm:$0xf]
  %v1117 = vunpack.c.l.bf16 %v1116
  %v1118 = vunpack.c.h.bf16 %v1116
  %s1119 = scalar_lea.vmem %s1, 808
  %s1120 = scalar_lea.vmem %s0, 8
  %v1121 = vld [vmem:[%s1120] sm:$0xf]
  %v1122 = vunpack.c.l.bf16 %v1121
  %v1123 = vunpack.c.h.bf16 %v1121
  %s1124 = scalar_lea.vmem %s1, 1288
  %s1125 = scalar_lea.vmem %s0, 1308
  %v1126 = vld [vmem:[%s1125] sm:$0xf]
  %v1127 = vunpack.c.l.bf16 %v1126
  %v1128 = vunpack.c.h.bf16 %v1126
  %s1129 = scalar_lea.vmem %s1, 28
  %s1130 = scalar_lea.vmem %s0, 828
  %v1131 = vld [vmem:[%s1130] sm:$0xf]
  %v1132 = vunpack.c.l.bf16 %v1131
  %v1133 = vunpack.c.h.bf16 %v1131
  %s1134 = scalar_lea.vmem %s1, 508
  %s1135 = scalar_lea.vmem %s0, 348
  %v1136 = vld [vmem:[%s1135] sm:$0xf]
  %v1137 = vunpack.c.l.bf16 %v1136
  %v1138 = vunpack.c.h.bf16 %v1136
  %s1139 = scalar_lea.vmem %s1, 988
  %s1140 = scalar_lea.vmem %s0, 1148
  %v1141 = vld [vmem:[%s1140] sm:$0xf]
  %v1142 = vunpack.c.l.bf16 %v1141
  %v1143 = vunpack.c.h.bf16 %v1141
  %s1144 = scalar_lea.vmem %s1, 188
  %s1145 = scalar_lea.vmem %s0, 668
  %v1146 = vld [vmem:[%s1145] sm:$0xf]
  %v1147 = vunpack.c.l.bf16 %v1146
  %v1148 = vunpack.c.h.bf16 %v1146
  %s1149 = scalar_lea.vmem %s1, 668
  %s1150 = scalar_lea.vmem %s0, 188
  %v1151 = vld [vmem:[%s1150] sm:$0xf]
  %v1152 = vunpack.c.l.bf16 %v1151
  %v1153 = vunpack.c.h.bf16 %v1151
  %s1154 = scalar_lea.vmem %s1, 1148
  %s1155 = scalar_lea.vmem %s0, 988
  %v1156 = vld [vmem:[%s1155] sm:$0xf]
  %v1157 = vunpack.c.l.bf16 %v1156
  %v1158 = vunpack.c.h.bf16 %v1156
  %s1159 = scalar_lea.vmem %s1, 348
  %s1160 = scalar_lea.vmem %s0, 508
  %v1161 = vld [vmem:[%s1160] sm:$0xf]
  %v1162 = vunpack.c.l.bf16 %v1161
  %v1163 = vunpack.c.h.bf16 %v1161
  %s1164 = scalar_lea.vmem %s1, 828
  %s1165 = scalar_lea.vmem %s0, 28
  %v1166 = vld [vmem:[%s1165] sm:$0xf]
  %v1167 = vunpack.c.l.bf16 %v1166
  %v1168 = vunpack.c.h.bf16 %v1166
  %s1169 = scalar_lea.vmem %s1, 1308
  %s1170 = scalar_lea.vmem %s0, 1328
  %v1171 = vld [vmem:[%s1170] sm:$0xf]
  %v1172 = vunpack.c.l.bf16 %v1171
  %v1173 = vunpack.c.h.bf16 %v1171
  %s1174 = scalar_lea.vmem %s1, 48
  %s1175 = scalar_lea.vmem %s0, 848
  %v1176 = vld [vmem:[%s1175] sm:$0xf]
  %v1177 = vunpack.c.l.bf16 %v1176
  %v1178 = vunpack.c.h.bf16 %v1176
  %s1179 = scalar_lea.vmem %s1, 528
  %s1180 = scalar_lea.vmem %s0, 368
  %v1181 = vld [vmem:[%s1180] sm:$0xf]
  %v1182 = vunpack.c.l.bf16 %v1181
  %v1183 = vunpack.c.h.bf16 %v1181
  %s1184 = scalar_lea.vmem %s1, 1008
  %s1185 = scalar_lea.vmem %s0, 1168
  %v1186 = vld [vmem:[%s1185] sm:$0xf]
  %v1187 = vunpack.c.l.bf16 %v1186
  %v1188 = vunpack.c.h.bf16 %v1186
  %s1189 = scalar_lea.vmem %s1, 208
  %s1190 = scalar_lea.vmem %s0, 688
  %v1191 = vld [vmem:[%s1190] sm:$0xf]
  %v1192 = vunpack.c.l.bf16 %v1191
  %v1193 = vunpack.c.h.bf16 %v1191
  %s1194 = scalar_lea.vmem %s1, 688
  %s1195 = scalar_lea.vmem %s0, 208
  %v1196 = vld [vmem:[%s1195] sm:$0xf]
  %v1197 = vunpack.c.l.bf16 %v1196
  %v1198 = vunpack.c.h.bf16 %v1196
  %s1199 = scalar_lea.vmem %s1, 1168
  %s1200 = scalar_lea.vmem %s0, 1008
  %v1201 = vld [vmem:[%s1200] sm:$0xf]
  %v1202 = vunpack.c.l.bf16 %v1201
  %v1203 = vunpack.c.h.bf16 %v1201
  %s1204 = scalar_lea.vmem %s1, 368
  %s1205 = scalar_lea.vmem %s0, 528
  %v1206 = vld [vmem:[%s1205] sm:$0xf]
  %v1207 = vunpack.c.l.bf16 %v1206
  %v1208 = vunpack.c.h.bf16 %v1206
  %s1209 = scalar_lea.vmem %s1, 848
  %s1210 = scalar_lea.vmem %s0, 48
  %v1211 = vld [vmem:[%s1210] sm:$0xf]
  %v1212 = vunpack.c.l.bf16 %v1211
  %v1213 = vunpack.c.h.bf16 %v1211
  %s1214 = scalar_lea.vmem %s1, 1328
  %s1215 = scalar_lea.vmem %s0, 1348
  %v1216 = vld [vmem:[%s1215] sm:$0xf]
  %v1217 = vunpack.c.l.bf16 %v1216
  %v1218 = vunpack.c.h.bf16 %v1216
  %s1219 = scalar_lea.vmem %s1, 68
  %s1220 = scalar_lea.vmem %s0, 868
  %v1221 = vld [vmem:[%s1220] sm:$0xf]
  %v1222 = vunpack.c.l.bf16 %v1221
  %v1223 = vunpack.c.h.bf16 %v1221
  %s1224 = scalar_lea.vmem %s1, 548
  %s1225 = scalar_lea.vmem %s0, 388
  %v1226 = vld [vmem:[%s1225] sm:$0xf]
  %v1227 = vunpack.c.l.bf16 %v1226
  %v1228 = vunpack.c.h.bf16 %v1226
  %s1229 = scalar_lea.vmem %s1, 1028
  %s1230 = scalar_lea.vmem %s0, 1188
  %v1231 = vld [vmem:[%s1230] sm:$0xf]
  %v1232 = vunpack.c.l.bf16 %v1231
  %v1233 = vunpack.c.h.bf16 %v1231
  %s1234 = scalar_lea.vmem %s1, 228
  %s1235 = scalar_lea.vmem %s0, 708
  %v1236 = vld [vmem:[%s1235] sm:$0xf]
  %v1237 = vunpack.c.l.bf16 %v1236
  %v1238 = vunpack.c.h.bf16 %v1236
  %s1239 = scalar_lea.vmem %s1, 708
  %s1240 = scalar_lea.vmem %s0, 228
  %v1241 = vld [vmem:[%s1240] sm:$0xf]
  %v1242 = vunpack.c.l.bf16 %v1241
  %v1243 = vunpack.c.h.bf16 %v1241
  %s1244 = scalar_lea.vmem %s1, 1188
  %s1245 = scalar_lea.vmem %s0, 1028
  %v1246 = vld [vmem:[%s1245] sm:$0xf]
  %v1247 = vunpack.c.l.bf16 %v1246
  %v1248 = vunpack.c.h.bf16 %v1246
  %s1249 = scalar_lea.vmem %s1, 388
  %s1250 = scalar_lea.vmem %s0, 548
  %v1251 = vld [vmem:[%s1250] sm:$0xf]
  %v1252 = vunpack.c.l.bf16 %v1251
  %v1253 = vunpack.c.h.bf16 %v1251
  %s1254 = scalar_lea.vmem %s1, 868
  %s1255 = scalar_lea.vmem %s0, 68
  %v1256 = vld [vmem:[%s1255] sm:$0xf]
  %v1257 = vunpack.c.l.bf16 %v1256
  %v1258 = vunpack.c.h.bf16 %v1256
  %s1259 = scalar_lea.vmem %s1, 1348
  %s1260 = scalar_lea.vmem %s0, 1368
  %v1261 = vld [vmem:[%s1260] sm:$0xf]
  %v1262 = vunpack.c.l.bf16 %v1261
  %v1263 = vunpack.c.h.bf16 %v1261
  %s1264 = scalar_lea.vmem %s1, 88
  %s1265 = scalar_lea.vmem %s0, 888
  %v1266 = vld [vmem:[%s1265] sm:$0xf]
  %v1267 = vunpack.c.l.bf16 %v1266
  %v1268 = vunpack.c.h.bf16 %v1266
  %s1269 = scalar_lea.vmem %s1, 568
  %s1270 = scalar_lea.vmem %s0, 408
  %v1271 = vld [vmem:[%s1270] sm:$0xf]
  %v1272 = vunpack.c.l.bf16 %v1271
  %v1273 = vunpack.c.h.bf16 %v1271
  %s1274 = scalar_lea.vmem %s1, 1048
  %s1275 = scalar_lea.vmem %s0, 1208
  %v1276 = vld [vmem:[%s1275] sm:$0xf]
  %v1277 = vunpack.c.l.bf16 %v1276
  %v1278 = vunpack.c.h.bf16 %v1276
  %s1279 = scalar_lea.vmem %s1, 248
  %s1280 = scalar_lea.vmem %s0, 728
  %v1281 = vld [vmem:[%s1280] sm:$0xf]
  %v1282 = vunpack.c.l.bf16 %v1281
  %v1283 = vunpack.c.h.bf16 %v1281
  %s1284 = scalar_lea.vmem %s1, 728
  %s1285 = scalar_lea.vmem %s0, 248
  %v1286 = vld [vmem:[%s1285] sm:$0xf]
  %v1287 = vunpack.c.l.bf16 %v1286
  %v1288 = vunpack.c.h.bf16 %v1286
  %s1289 = scalar_lea.vmem %s1, 1208
  %s1290 = scalar_lea.vmem %s0, 1048
  %v1291 = vld [vmem:[%s1290] sm:$0xf]
  %v1292 = vunpack.c.l.bf16 %v1291
  %v1293 = vunpack.c.h.bf16 %v1291
  %s1294 = scalar_lea.vmem %s1, 408
  %s1295 = scalar_lea.vmem %s0, 568
  %v1296 = vld [vmem:[%s1295] sm:$0xf]
  %v1297 = vunpack.c.l.bf16 %v1296
  %v1298 = vunpack.c.h.bf16 %v1296
  %s1299 = scalar_lea.vmem %s1, 888
  %s1300 = scalar_lea.vmem %s0, 88
  %v1301 = vld [vmem:[%s1300] sm:$0xf]
  %v1302 = vunpack.c.l.bf16 %v1301
  %v1303 = vunpack.c.h.bf16 %v1301
  %s1304 = scalar_lea.vmem %s1, 1368
  %s1305 = scalar_lea.vmem %s0, 1388
  %v1306 = vld [vmem:[%s1305] sm:$0xf]
  %v1307 = vunpack.c.l.bf16 %v1306
  %v1308 = vunpack.c.h.bf16 %v1306
  %s1309 = scalar_lea.vmem %s1, 108
  %s1310 = scalar_lea.vmem %s0, 908
  %v1311 = vld [vmem:[%s1310] sm:$0xf]
  %v1312 = vunpack.c.l.bf16 %v1311
  %v1313 = vunpack.c.h.bf16 %v1311
  %s1314 = scalar_lea.vmem %s1, 588
  %s1315 = scalar_lea.vmem %s0, 428
  %v1316 = vld [vmem:[%s1315] sm:$0xf]
  %v1317 = vunpack.c.l.bf16 %v1316
  %v1318 = vunpack.c.h.bf16 %v1316
  %s1319 = scalar_lea.vmem %s1, 1068
  %s1320 = scalar_lea.vmem %s0, 1228
  %v1321 = vld [vmem:[%s1320] sm:$0xf]
  %v1322 = vunpack.c.l.bf16 %v1321
  %v1323 = vunpack.c.h.bf16 %v1321
  %s1324 = scalar_lea.vmem %s1, 268
  %s1325 = scalar_lea.vmem %s0, 748
  %v1326 = vld [vmem:[%s1325] sm:$0xf]
  %v1327 = vunpack.c.l.bf16 %v1326
  %v1328 = vunpack.c.h.bf16 %v1326
  %s1329 = scalar_lea.vmem %s1, 748
  %s1330 = scalar_lea.vmem %s0, 268
  %v1331 = vld [vmem:[%s1330] sm:$0xf]
  %v1332 = vunpack.c.l.bf16 %v1331
  %v1333 = vunpack.c.h.bf16 %v1331
  %s1334 = scalar_lea.vmem %s1, 1228
  %s1335 = scalar_lea.vmem %s0, 1068
  %v1336 = vld [vmem:[%s1335] sm:$0xf]
  %v1337 = vunpack.c.l.bf16 %v1336
  %v1338 = vunpack.c.h.bf16 %v1336
  %s1339 = scalar_lea.vmem %s1, 428
  %s1340 = scalar_lea.vmem %s0, 588
  %v1341 = vld [vmem:[%s1340] sm:$0xf]
  %v1342 = vunpack.c.l.bf16 %v1341
  %v1343 = vunpack.c.h.bf16 %v1341
  %s1344 = scalar_lea.vmem %s1, 908
  %s1345 = scalar_lea.vmem %s0, 108
  %v1346 = vld [vmem:[%s1345] sm:$0xf]
  %v1347 = vunpack.c.l.bf16 %v1346
  %v1348 = vunpack.c.h.bf16 %v1346
  %s1349 = scalar_lea.vmem %s1, 1388
  %s1350 = scalar_lea.vmem %s0, 1408
  %v1351 = vld [vmem:[%s1350] sm:$0xf]
  %v1352 = vunpack.c.l.bf16 %v1351
  %v1353 = vunpack.c.h.bf16 %v1351
  %s1354 = scalar_lea.vmem %s1, 128
  %s1355 = scalar_lea.vmem %s0, 928
  %v1356 = vld [vmem:[%s1355] sm:$0xf]
  %v1357 = vunpack.c.l.bf16 %v1356
  %v1358 = vunpack.c.h.bf16 %v1356
  %s1359 = scalar_lea.vmem %s1, 608
  %s1360 = scalar_lea.vmem %s0, 448
  %v1361 = vld [vmem:[%s1360] sm:$0xf]
  %v1362 = vunpack.c.l.bf16 %v1361
  %v1363 = vunpack.c.h.bf16 %v1361
  %s1364 = scalar_lea.vmem %s1, 1088
  %s1365 = scalar_lea.vmem %s0, 1248
  %v1366 = vld [vmem:[%s1365] sm:$0xf]
  %v1367 = vunpack.c.l.bf16 %v1366
  %v1368 = vunpack.c.h.bf16 %v1366
  %s1369 = scalar_lea.vmem %s1, 288
  %s1370 = scalar_lea.vmem %s0, 768
  %v1371 = vld [vmem:[%s1370] sm:$0xf]
  %v1372 = vunpack.c.l.bf16 %v1371
  %v1373 = vunpack.c.h.bf16 %v1371
  %s1374 = scalar_lea.vmem %s1, 768
  %s1375 = scalar_lea.vmem %s0, 288
  %v1376 = vld [vmem:[%s1375] sm:$0xf]
  %v1377 = vunpack.c.l.bf16 %v1376
  %v1378 = vunpack.c.h.bf16 %v1376
  %s1379 = scalar_lea.vmem %s1, 1248
  %s1380 = scalar_lea.vmem %s0, 1088
  %v1381 = vld [vmem:[%s1380] sm:$0xf]
  %v1382 = vunpack.c.l.bf16 %v1381
  %v1383 = vunpack.c.h.bf16 %v1381
  %s1384 = scalar_lea.vmem %s1, 448
  %s1385 = scalar_lea.vmem %s0, 608
  %v1386 = vld [vmem:[%s1385] sm:$0xf]
  %v1387 = vunpack.c.l.bf16 %v1386
  %v1388 = vunpack.c.h.bf16 %v1386
  %s1389 = scalar_lea.vmem %s1, 928
  %s1390 = scalar_lea.vmem %s0, 128
  %v1391 = vld [vmem:[%s1390] sm:$0xf]
  %v1392 = vunpack.c.l.bf16 %v1391
  %v1393 = vunpack.c.h.bf16 %v1391
  %s1394 = scalar_lea.vmem %s1, 1408
  %s1395 = scalar_lea.vmem %s0, 1428
  %v1396 = vld [vmem:[%s1395] sm:$0xf]
  %v1397 = vunpack.c.l.bf16 %v1396
  %v1398 = vunpack.c.h.bf16 %v1396
  %s1399 = scalar_lea.vmem %s1, 148
  %s1400 = scalar_lea.vmem %s0, 948
  %v1401 = vld [vmem:[%s1400] sm:$0xf]
  %v1402 = vunpack.c.l.bf16 %v1401
  %v1403 = vunpack.c.h.bf16 %v1401
  %s1404 = scalar_lea.vmem %s1, 628
  %s1405 = scalar_lea.vmem %s0, 468
  %v1406 = vld [vmem:[%s1405] sm:$0xf]
  %v1407 = vunpack.c.l.bf16 %v1406
  %v1408 = vunpack.c.h.bf16 %v1406
  %s1409 = scalar_lea.vmem %s1, 1108
  %s1410 = scalar_lea.vmem %s0, 1268
  %v1411 = vld [vmem:[%s1410] sm:$0xf]
  %v1412 = vunpack.c.l.bf16 %v1411
  %v1413 = vunpack.c.h.bf16 %v1411
  %s1414 = scalar_lea.vmem %s1, 308
  %s1415 = scalar_lea.vmem %s0, 788
  %v1416 = vld [vmem:[%s1415] sm:$0xf]
  %v1417 = vunpack.c.l.bf16 %v1416
  %v1418 = vunpack.c.h.bf16 %v1416
  %s1419 = scalar_lea.vmem %s1, 788
  %s1420 = scalar_lea.vmem %s0, 308
  %v1421 = vld [vmem:[%s1420] sm:$0xf]
  %v1422 = vunpack.c.l.bf16 %v1421
  %v1423 = vunpack.c.h.bf16 %v1421
  %s1424 = scalar_lea.vmem %s1, 1268
  %s1425 = scalar_lea.vmem %s0, 1108
  %v1426 = vld [vmem:[%s1425] sm:$0xf]
  %v1427 = vunpack.c.l.bf16 %v1426
  %v1428 = vunpack.c.h.bf16 %v1426
  %s1429 = scalar_lea.vmem %s1, 468
  %s1430 = scalar_lea.vmem %s0, 628
  %v1431 = vld [vmem:[%s1430] sm:$0xf]
  %v1432 = vunpack.c.l.bf16 %v1431
  %v1433 = vunpack.c.h.bf16 %v1431
  %s1434 = scalar_lea.vmem %s1, 948
  %s1435 = scalar_lea.vmem %s0, 148
  %v1436 = vld [vmem:[%s1435] sm:$0xf]
  %v1437 = vunpack.c.l.bf16 %v1436
  %v1438 = vunpack.c.h.bf16 %v1436
  %s1439 = scalar_lea.vmem %s1, 1428
  %s1440 = scalar_lea.vmem %s0, 1292
  %v1441 = vld [vmem:[%s1440] sm:$0xf]
  %v1442 = vunpack.c.l.bf16 %v1441
  %v1443 = vunpack.c.h.bf16 %v1441
  %s1444 = scalar_lea.vmem %s1, 12
  %s1446 = ssub.s32 0, 4
  %s1447 = scalar_lea.vmem %s1444, %s1446
  %v1448 = vpack.c.bf16 %v1442, %v1082
  %1449 = vst [vmem:[%s1447] sm:$0xff] %v1448
  %s1450 = scalar_lea.vmem %s0, 812
  %v1451 = vld [vmem:[%s1450] sm:$0xf]
  %v1452 = vunpack.c.l.bf16 %v1451
  %v1453 = vunpack.c.h.bf16 %v1451
  %s1454 = scalar_lea.vmem %s1, 492
  %s1456 = ssub.s32 0, 4
  %s1457 = scalar_lea.vmem %s1454, %s1456
  %v1458 = vpack.c.bf16 %v1452, %v1087
  %1459 = vst [vmem:[%s1457] sm:$0xff] %v1458
  %s1460 = scalar_lea.vmem %s0, 332
  %v1461 = vld [vmem:[%s1460] sm:$0xf]
  %v1462 = vunpack.c.l.bf16 %v1461
  %v1463 = vunpack.c.h.bf16 %v1461
  %s1464 = scalar_lea.vmem %s1, 972
  %s1466 = ssub.s32 0, 4
  %s1467 = scalar_lea.vmem %s1464, %s1466
  %v1468 = vpack.c.bf16 %v1462, %v1092
  %1469 = vst [vmem:[%s1467] sm:$0xff] %v1468
  %s1470 = scalar_lea.vmem %s0, 1132
  %v1471 = vld [vmem:[%s1470] sm:$0xf]
  %v1472 = vunpack.c.l.bf16 %v1471
  %v1473 = vunpack.c.h.bf16 %v1471
  %s1474 = scalar_lea.vmem %s1, 172
  %s1476 = ssub.s32 0, 4
  %s1477 = scalar_lea.vmem %s1474, %s1476
  %v1478 = vpack.c.bf16 %v1472, %v1097
  %1479 = vst [vmem:[%s1477] sm:$0xff] %v1478
  %s1480 = scalar_lea.vmem %s0, 652
  %v1481 = vld [vmem:[%s1480] sm:$0xf]
  %v1482 = vunpack.c.l.bf16 %v1481
  %v1483 = vunpack.c.h.bf16 %v1481
  %s1484 = scalar_lea.vmem %s1, 652
  %s1486 = ssub.s32 0, 4
  %s1487 = scalar_lea.vmem %s1484, %s1486
  %v1488 = vpack.c.bf16 %v1482, %v1102
  %1489 = vst [vmem:[%s1487] sm:$0xff] %v1488
  %s1490 = scalar_lea.vmem %s0, 172
  %v1491 = vld [vmem:[%s1490] sm:$0xf]
  %v1492 = vunpack.c.l.bf16 %v1491
  %v1493 = vunpack.c.h.bf16 %v1491
  %s1494 = scalar_lea.vmem %s1, 1132
  %s1496 = ssub.s32 0, 4
  %s1497 = scalar_lea.vmem %s1494, %s1496
  %v1498 = vpack.c.bf16 %v1492, %v1107
  %1499 = vst [vmem:[%s1497] sm:$0xff] %v1498
  %s1500 = scalar_lea.vmem %s0, 972
  %v1501 = vld [vmem:[%s1500] sm:$0xf]
  %v1502 = vunpack.c.l.bf16 %v1501
  %v1503 = vunpack.c.h.bf16 %v1501
  %s1504 = scalar_lea.vmem %s1, 332
  %s1506 = ssub.s32 0, 4
  %s1507 = scalar_lea.vmem %s1504, %s1506
  %v1508 = vpack.c.bf16 %v1502, %v1112
  %1509 = vst [vmem:[%s1507] sm:$0xff] %v1508
  %s1510 = scalar_lea.vmem %s0, 492
  %v1511 = vld [vmem:[%s1510] sm:$0xf]
  %v1512 = vunpack.c.l.bf16 %v1511
  %v1513 = vunpack.c.h.bf16 %v1511
  %s1514 = scalar_lea.vmem %s1, 812
  %s1516 = ssub.s32 0, 4
  %s1517 = scalar_lea.vmem %s1514, %s1516
  %v1518 = vpack.c.bf16 %v1512, %v1117
  %1519 = vst [vmem:[%s1517] sm:$0xff] %v1518
  %s1520 = scalar_lea.vmem %s0, 12
  %v1521 = vld [vmem:[%s1520] sm:$0xf]
  %v1522 = vunpack.c.l.bf16 %v1521
  %v1523 = vunpack.c.h.bf16 %v1521
  %s1524 = scalar_lea.vmem %s1, 1292
  %s1526 = ssub.s32 0, 4
  %s1527 = scalar_lea.vmem %s1524, %s1526
  %v1528 = vpack.c.bf16 %v1522, %v1122
  %1529 = vst [vmem:[%s1527] sm:$0xff] %v1528
  %s1530 = scalar_lea.vmem %s0, 1312
  %v1531 = vld [vmem:[%s1530] sm:$0xf]
  %v1532 = vunpack.c.l.bf16 %v1531
  %v1533 = vunpack.c.h.bf16 %v1531
  %s1534 = scalar_lea.vmem %s1, 32
  %s1536 = ssub.s32 0, 4
  %s1537 = scalar_lea.vmem %s1534, %s1536
  %v1538 = vpack.c.bf16 %v1532, %v1127
  %1539 = vst [vmem:[%s1537] sm:$0xff] %v1538
  %s1540 = scalar_lea.vmem %s0, 832
  %v1541 = vld [vmem:[%s1540] sm:$0xf]
  %v1542 = vunpack.c.l.bf16 %v1541
  %v1543 = vunpack.c.h.bf16 %v1541
  %s1544 = scalar_lea.vmem %s1, 512
  %s1546 = ssub.s32 0, 4
  %s1547 = scalar_lea.vmem %s1544, %s1546
  %v1548 = vpack.c.bf16 %v1542, %v1132
  %1549 = vst [vmem:[%s1547] sm:$0xff] %v1548
  %s1550 = scalar_lea.vmem %s0, 352
  %v1551 = vld [vmem:[%s1550] sm:$0xf]
  %v1552 = vunpack.c.l.bf16 %v1551
  %v1553 = vunpack.c.h.bf16 %v1551
  %s1554 = scalar_lea.vmem %s1, 992
  %s1556 = ssub.s32 0, 4
  %s1557 = scalar_lea.vmem %s1554, %s1556
  %v1558 = vpack.c.bf16 %v1552, %v1137
  %1559 = vst [vmem:[%s1557] sm:$0xff] %v1558
  %s1560 = scalar_lea.vmem %s0, 1152
  %v1561 = vld [vmem:[%s1560] sm:$0xf]
  %v1562 = vunpack.c.l.bf16 %v1561
  %v1563 = vunpack.c.h.bf16 %v1561
  %s1564 = scalar_lea.vmem %s1, 192
  %s1566 = ssub.s32 0, 4
  %s1567 = scalar_lea.vmem %s1564, %s1566
  %v1568 = vpack.c.bf16 %v1562, %v1142
  %1569 = vst [vmem:[%s1567] sm:$0xff] %v1568
  %s1570 = scalar_lea.vmem %s0, 672
  %v1571 = vld [vmem:[%s1570] sm:$0xf]
  %v1572 = vunpack.c.l.bf16 %v1571
  %v1573 = vunpack.c.h.bf16 %v1571
  %s1574 = scalar_lea.vmem %s1, 672
  %s1576 = ssub.s32 0, 4
  %s1577 = scalar_lea.vmem %s1574, %s1576
  %v1578 = vpack.c.bf16 %v1572, %v1147
  %1579 = vst [vmem:[%s1577] sm:$0xff] %v1578
  %s1580 = scalar_lea.vmem %s0, 192
  %v1581 = vld [vmem:[%s1580] sm:$0xf]
  %v1582 = vunpack.c.l.bf16 %v1581
  %v1583 = vunpack.c.h.bf16 %v1581
  %s1584 = scalar_lea.vmem %s1, 1152
  %s1586 = ssub.s32 0, 4
  %s1587 = scalar_lea.vmem %s1584, %s1586
  %v1588 = vpack.c.bf16 %v1582, %v1152
  %1589 = vst [vmem:[%s1587] sm:$0xff] %v1588
  %s1590 = scalar_lea.vmem %s0, 992
  %v1591 = vld [vmem:[%s1590] sm:$0xf]
  %v1592 = vunpack.c.l.bf16 %v1591
  %v1593 = vunpack.c.h.bf16 %v1591
  %s1594 = scalar_lea.vmem %s1, 352
  %s1596 = ssub.s32 0, 4
  %s1597 = scalar_lea.vmem %s1594, %s1596
  %v1598 = vpack.c.bf16 %v1592, %v1157
  %1599 = vst [vmem:[%s1597] sm:$0xff] %v1598
  %s1600 = scalar_lea.vmem %s0, 512
  %v1601 = vld [vmem:[%s1600] sm:$0xf]
  %v1602 = vunpack.c.l.bf16 %v1601
  %v1603 = vunpack.c.h.bf16 %v1601
  %s1604 = scalar_lea.vmem %s1, 832
  %s1606 = ssub.s32 0, 4
  %s1607 = scalar_lea.vmem %s1604, %s1606
  %v1608 = vpack.c.bf16 %v1602, %v1162
  %1609 = vst [vmem:[%s1607] sm:$0xff] %v1608
  %s1610 = scalar_lea.vmem %s0, 32
  %v1611 = vld [vmem:[%s1610] sm:$0xf]
  %v1612 = vunpack.c.l.bf16 %v1611
  %v1613 = vunpack.c.h.bf16 %v1611
  %s1614 = scalar_lea.vmem %s1, 1312
  %s1616 = ssub.s32 0, 4
  %s1617 = scalar_lea.vmem %s1614, %s1616
  %v1618 = vpack.c.bf16 %v1612, %v1167
  %1619 = vst [vmem:[%s1617] sm:$0xff] %v1618
  %s1620 = scalar_lea.vmem %s0, 1332
  %v1621 = vld [vmem:[%s1620] sm:$0xf]
  %v1622 = vunpack.c.l.bf16 %v1621
  %v1623 = vunpack.c.h.bf16 %v1621
  %s1624 = scalar_lea.vmem %s1, 52
  %s1626 = ssub.s32 0, 4
  %s1627 = scalar_lea.vmem %s1624, %s1626
  %v1628 = vpack.c.bf16 %v1622, %v1172
  %1629 = vst [vmem:[%s1627] sm:$0xff] %v1628
  %s1630 = scalar_lea.vmem %s0, 852
  %v1631 = vld [vmem:[%s1630] sm:$0xf]
  %v1632 = vunpack.c.l.bf16 %v1631
  %v1633 = vunpack.c.h.bf16 %v1631
  %s1634 = scalar_lea.vmem %s1, 532
  %s1636 = ssub.s32 0, 4
  %s1637 = scalar_lea.vmem %s1634, %s1636
  %v1638 = vpack.c.bf16 %v1632, %v1177
  %1639 = vst [vmem:[%s1637] sm:$0xff] %v1638
  %s1640 = scalar_lea.vmem %s0, 372
  %v1641 = vld [vmem:[%s1640] sm:$0xf]
  %v1642 = vunpack.c.l.bf16 %v1641
  %v1643 = vunpack.c.h.bf16 %v1641
  %s1644 = scalar_lea.vmem %s1, 1012
  %s1646 = ssub.s32 0, 4
  %s1647 = scalar_lea.vmem %s1644, %s1646
  %v1648 = vpack.c.bf16 %v1642, %v1182
  %1649 = vst [vmem:[%s1647] sm:$0xff] %v1648
  %s1650 = scalar_lea.vmem %s0, 1172
  %v1651 = vld [vmem:[%s1650] sm:$0xf]
  %v1652 = vunpack.c.l.bf16 %v1651
  %v1653 = vunpack.c.h.bf16 %v1651
  %s1654 = scalar_lea.vmem %s1, 212
  %s1656 = ssub.s32 0, 4
  %s1657 = scalar_lea.vmem %s1654, %s1656
  %v1658 = vpack.c.bf16 %v1652, %v1187
  %1659 = vst [vmem:[%s1657] sm:$0xff] %v1658
  %s1660 = scalar_lea.vmem %s0, 692
  %v1661 = vld [vmem:[%s1660] sm:$0xf]
  %v1662 = vunpack.c.l.bf16 %v1661
  %v1663 = vunpack.c.h.bf16 %v1661
  %s1664 = scalar_lea.vmem %s1, 692
  %s1666 = ssub.s32 0, 4
  %s1667 = scalar_lea.vmem %s1664, %s1666
  %v1668 = vpack.c.bf16 %v1662, %v1192
  %1669 = vst [vmem:[%s1667] sm:$0xff] %v1668
  %s1670 = scalar_lea.vmem %s0, 212
  %v1671 = vld [vmem:[%s1670] sm:$0xf]
  %v1672 = vunpack.c.l.bf16 %v1671
  %v1673 = vunpack.c.h.bf16 %v1671
  %s1674 = scalar_lea.vmem %s1, 1172
  %s1676 = ssub.s32 0, 4
  %s1677 = scalar_lea.vmem %s1674, %s1676
  %v1678 = vpack.c.bf16 %v1672, %v1197
  %1679 = vst [vmem:[%s1677] sm:$0xff] %v1678
  %s1680 = scalar_lea.vmem %s0, 1012
  %v1681 = vld [vmem:[%s1680] sm:$0xf]
  %v1682 = vunpack.c.l.bf16 %v1681
  %v1683 = vunpack.c.h.bf16 %v1681
  %s1684 = scalar_lea.vmem %s1, 372
  %s1686 = ssub.s32 0, 4
  %s1687 = scalar_lea.vmem %s1684, %s1686
  %v1688 = vpack.c.bf16 %v1682, %v1202
  %1689 = vst [vmem:[%s1687] sm:$0xff] %v1688
  %s1690 = scalar_lea.vmem %s0, 532
  %v1691 = vld [vmem:[%s1690] sm:$0xf]
  %v1692 = vunpack.c.l.bf16 %v1691
  %v1693 = vunpack.c.h.bf16 %v1691
  %s1694 = scalar_lea.vmem %s1, 852
  %s1696 = ssub.s32 0, 4
  %s1697 = scalar_lea.vmem %s1694, %s1696
  %v1698 = vpack.c.bf16 %v1692, %v1207
  %1699 = vst [vmem:[%s1697] sm:$0xff] %v1698
  %s1700 = scalar_lea.vmem %s0, 52
  %v1701 = vld [vmem:[%s1700] sm:$0xf]
  %v1702 = vunpack.c.l.bf16 %v1701
  %v1703 = vunpack.c.h.bf16 %v1701
  %s1704 = scalar_lea.vmem %s1, 1332
  %s1706 = ssub.s32 0, 4
  %s1707 = scalar_lea.vmem %s1704, %s1706
  %v1708 = vpack.c.bf16 %v1702, %v1212
  %1709 = vst [vmem:[%s1707] sm:$0xff] %v1708
  %s1710 = scalar_lea.vmem %s0, 1352
  %v1711 = vld [vmem:[%s1710] sm:$0xf]
  %v1712 = vunpack.c.l.bf16 %v1711
  %v1713 = vunpack.c.h.bf16 %v1711
  %s1714 = scalar_lea.vmem %s1, 72
  %s1716 = ssub.s32 0, 4
  %s1717 = scalar_lea.vmem %s1714, %s1716
  %v1718 = vpack.c.bf16 %v1712, %v1217
  %1719 = vst [vmem:[%s1717] sm:$0xff] %v1718
  %s1720 = scalar_lea.vmem %s0, 872
  %v1721 = vld [vmem:[%s1720] sm:$0xf]
  %v1722 = vunpack.c.l.bf16 %v1721
  %v1723 = vunpack.c.h.bf16 %v1721
  %s1724 = scalar_lea.vmem %s1, 552
  %s1726 = ssub.s32 0, 4
  %s1727 = scalar_lea.vmem %s1724, %s1726
  %v1728 = vpack.c.bf16 %v1722, %v1222
  %1729 = vst [vmem:[%s1727] sm:$0xff] %v1728
  %s1730 = scalar_lea.vmem %s0, 392
  %v1731 = vld [vmem:[%s1730] sm:$0xf]
  %v1732 = vunpack.c.l.bf16 %v1731
  %v1733 = vunpack.c.h.bf16 %v1731
  %s1734 = scalar_lea.vmem %s1, 1032
  %s1736 = ssub.s32 0, 4
  %s1737 = scalar_lea.vmem %s1734, %s1736
  %v1738 = vpack.c.bf16 %v1732, %v1227
  %1739 = vst [vmem:[%s1737] sm:$0xff] %v1738
  %s1740 = scalar_lea.vmem %s0, 1192
  %v1741 = vld [vmem:[%s1740] sm:$0xf]
  %v1742 = vunpack.c.l.bf16 %v1741
  %v1743 = vunpack.c.h.bf16 %v1741
  %s1744 = scalar_lea.vmem %s1, 232
  %s1746 = ssub.s32 0, 4
  %s1747 = scalar_lea.vmem %s1744, %s1746
  %v1748 = vpack.c.bf16 %v1742, %v1232
  %1749 = vst [vmem:[%s1747] sm:$0xff] %v1748
  %s1750 = scalar_lea.vmem %s0, 712
  %v1751 = vld [vmem:[%s1750] sm:$0xf]
  %v1752 = vunpack.c.l.bf16 %v1751
  %v1753 = vunpack.c.h.bf16 %v1751
  %s1754 = scalar_lea.vmem %s1, 712
  %s1756 = ssub.s32 0, 4
  %s1757 = scalar_lea.vmem %s1754, %s1756
  %v1758 = vpack.c.bf16 %v1752, %v1237
  %1759 = vst [vmem:[%s1757] sm:$0xff] %v1758
  %s1760 = scalar_lea.vmem %s0, 232
  %v1761 = vld [vmem:[%s1760] sm:$0xf]
  %v1762 = vunpack.c.l.bf16 %v1761
  %v1763 = vunpack.c.h.bf16 %v1761
  %s1764 = scalar_lea.vmem %s1, 1192
  %s1766 = ssub.s32 0, 4
  %s1767 = scalar_lea.vmem %s1764, %s1766
  %v1768 = vpack.c.bf16 %v1762, %v1242
  %1769 = vst [vmem:[%s1767] sm:$0xff] %v1768
  %s1770 = scalar_lea.vmem %s0, 1032
  %v1771 = vld [vmem:[%s1770] sm:$0xf]
  %v1772 = vunpack.c.l.bf16 %v1771
  %v1773 = vunpack.c.h.bf16 %v1771
  %s1774 = scalar_lea.vmem %s1, 392
  %s1776 = ssub.s32 0, 4
  %s1777 = scalar_lea.vmem %s1774, %s1776
  %v1778 = vpack.c.bf16 %v1772, %v1247
  %1779 = vst [vmem:[%s1777] sm:$0xff] %v1778
  %s1780 = scalar_lea.vmem %s0, 552
  %v1781 = vld [vmem:[%s1780] sm:$0xf]
  %v1782 = vunpack.c.l.bf16 %v1781
  %v1783 = vunpack.c.h.bf16 %v1781
  %s1784 = scalar_lea.vmem %s1, 872
  %s1786 = ssub.s32 0, 4
  %s1787 = scalar_lea.vmem %s1784, %s1786
  %v1788 = vpack.c.bf16 %v1782, %v1252
  %1789 = vst [vmem:[%s1787] sm:$0xff] %v1788
  %s1790 = scalar_lea.vmem %s0, 72
  %v1791 = vld [vmem:[%s1790] sm:$0xf]
  %v1792 = vunpack.c.l.bf16 %v1791
  %v1793 = vunpack.c.h.bf16 %v1791
  %s1794 = scalar_lea.vmem %s1, 1352
  %s1796 = ssub.s32 0, 4
  %s1797 = scalar_lea.vmem %s1794, %s1796
  %v1798 = vpack.c.bf16 %v1792, %v1257
  %1799 = vst [vmem:[%s1797] sm:$0xff] %v1798
  %s1800 = scalar_lea.vmem %s0, 1372
  %v1801 = vld [vmem:[%s1800] sm:$0xf]
  %v1802 = vunpack.c.l.bf16 %v1801
  %v1803 = vunpack.c.h.bf16 %v1801
  %s1804 = scalar_lea.vmem %s1, 92
  %s1806 = ssub.s32 0, 4
  %s1807 = scalar_lea.vmem %s1804, %s1806
  %v1808 = vpack.c.bf16 %v1802, %v1262
  %1809 = vst [vmem:[%s1807] sm:$0xff] %v1808
  %s1810 = scalar_lea.vmem %s0, 892
  %v1811 = vld [vmem:[%s1810] sm:$0xf]
  %v1812 = vunpack.c.l.bf16 %v1811
  %v1813 = vunpack.c.h.bf16 %v1811
  %s1814 = scalar_lea.vmem %s1, 572
  %s1816 = ssub.s32 0, 4
  %s1817 = scalar_lea.vmem %s1814, %s1816
  %v1818 = vpack.c.bf16 %v1812, %v1267
  %1819 = vst [vmem:[%s1817] sm:$0xff] %v1818
  %s1820 = scalar_lea.vmem %s0, 412
  %v1821 = vld [vmem:[%s1820] sm:$0xf]
  %v1822 = vunpack.c.l.bf16 %v1821
  %v1823 = vunpack.c.h.bf16 %v1821
  %s1824 = scalar_lea.vmem %s1, 1052
  %s1826 = ssub.s32 0, 4
  %s1827 = scalar_lea.vmem %s1824, %s1826
  %v1828 = vpack.c.bf16 %v1822, %v1272
  %1829 = vst [vmem:[%s1827] sm:$0xff] %v1828
  %s1830 = scalar_lea.vmem %s0, 1212
  %v1831 = vld [vmem:[%s1830] sm:$0xf]
  %v1832 = vunpack.c.l.bf16 %v1831
  %v1833 = vunpack.c.h.bf16 %v1831
  %s1834 = scalar_lea.vmem %s1, 252
  %s1836 = ssub.s32 0, 4
  %s1837 = scalar_lea.vmem %s1834, %s1836
  %v1838 = vpack.c.bf16 %v1832, %v1277
  %1839 = vst [vmem:[%s1837] sm:$0xff] %v1838
  %s1840 = scalar_lea.vmem %s0, 732
  %v1841 = vld [vmem:[%s1840] sm:$0xf]
  %v1842 = vunpack.c.l.bf16 %v1841
  %v1843 = vunpack.c.h.bf16 %v1841
  %s1844 = scalar_lea.vmem %s1, 732
  %s1846 = ssub.s32 0, 4
  %s1847 = scalar_lea.vmem %s1844, %s1846
  %v1848 = vpack.c.bf16 %v1842, %v1282
  %1849 = vst [vmem:[%s1847] sm:$0xff] %v1848
  %s1850 = scalar_lea.vmem %s0, 252
  %v1851 = vld [vmem:[%s1850] sm:$0xf]
  %v1852 = vunpack.c.l.bf16 %v1851
  %v1853 = vunpack.c.h.bf16 %v1851
  %s1854 = scalar_lea.vmem %s1, 1212
  %s1856 = ssub.s32 0, 4
  %s1857 = scalar_lea.vmem %s1854, %s1856
  %v1858 = vpack.c.bf16 %v1852, %v1287
  %1859 = vst [vmem:[%s1857] sm:$0xff] %v1858
  %s1860 = scalar_lea.vmem %s0, 1052
  %v1861 = vld [vmem:[%s1860] sm:$0xf]
  %v1862 = vunpack.c.l.bf16 %v1861
  %v1863 = vunpack.c.h.bf16 %v1861
  %s1864 = scalar_lea.vmem %s1, 412
  %s1866 = ssub.s32 0, 4
  %s1867 = scalar_lea.vmem %s1864, %s1866
  %v1868 = vpack.c.bf16 %v1862, %v1292
  %1869 = vst [vmem:[%s1867] sm:$0xff] %v1868
  %s1870 = scalar_lea.vmem %s0, 572
  %v1871 = vld [vmem:[%s1870] sm:$0xf]
  %v1872 = vunpack.c.l.bf16 %v1871
  %v1873 = vunpack.c.h.bf16 %v1871
  %s1874 = scalar_lea.vmem %s1, 892
  %s1876 = ssub.s32 0, 4
  %s1877 = scalar_lea.vmem %s1874, %s1876
  %v1878 = vpack.c.bf16 %v1872, %v1297
  %1879 = vst [vmem:[%s1877] sm:$0xff] %v1878
  %s1880 = scalar_lea.vmem %s0, 92
  %v1881 = vld [vmem:[%s1880] sm:$0xf]
  %v1882 = vunpack.c.l.bf16 %v1881
  %v1883 = vunpack.c.h.bf16 %v1881
  %s1884 = scalar_lea.vmem %s1, 1372
  %s1886 = ssub.s32 0, 4
  %s1887 = scalar_lea.vmem %s1884, %s1886
  %v1888 = vpack.c.bf16 %v1882, %v1302
  %1889 = vst [vmem:[%s1887] sm:$0xff] %v1888
  %s1890 = scalar_lea.vmem %s0, 1392
  %v1891 = vld [vmem:[%s1890] sm:$0xf]
  %v1892 = vunpack.c.l.bf16 %v1891
  %v1893 = vunpack.c.h.bf16 %v1891
  %s1894 = scalar_lea.vmem %s1, 112
  %s1896 = ssub.s32 0, 4
  %s1897 = scalar_lea.vmem %s1894, %s1896
  %v1898 = vpack.c.bf16 %v1892, %v1307
  %1899 = vst [vmem:[%s1897] sm:$0xff] %v1898
  %s1900 = scalar_lea.vmem %s0, 912
  %v1901 = vld [vmem:[%s1900] sm:$0xf]
  %v1902 = vunpack.c.l.bf16 %v1901
  %v1903 = vunpack.c.h.bf16 %v1901
  %s1904 = scalar_lea.vmem %s1, 592
  %s1906 = ssub.s32 0, 4
  %s1907 = scalar_lea.vmem %s1904, %s1906
  %v1908 = vpack.c.bf16 %v1902, %v1312
  %1909 = vst [vmem:[%s1907] sm:$0xff] %v1908
  %s1910 = scalar_lea.vmem %s0, 432
  %v1911 = vld [vmem:[%s1910] sm:$0xf]
  %v1912 = vunpack.c.l.bf16 %v1911
  %v1913 = vunpack.c.h.bf16 %v1911
  %s1914 = scalar_lea.vmem %s1, 1072
  %s1916 = ssub.s32 0, 4
  %s1917 = scalar_lea.vmem %s1914, %s1916
  %v1918 = vpack.c.bf16 %v1912, %v1317
  %1919 = vst [vmem:[%s1917] sm:$0xff] %v1918
  %s1920 = scalar_lea.vmem %s0, 1232
  %v1921 = vld [vmem:[%s1920] sm:$0xf]
  %v1922 = vunpack.c.l.bf16 %v1921
  %v1923 = vunpack.c.h.bf16 %v1921
  %s1924 = scalar_lea.vmem %s1, 272
  %s1926 = ssub.s32 0, 4
  %s1927 = scalar_lea.vmem %s1924, %s1926
  %v1928 = vpack.c.bf16 %v1922, %v1322
  %1929 = vst [vmem:[%s1927] sm:$0xff] %v1928
  %s1930 = scalar_lea.vmem %s0, 752
  %v1931 = vld [vmem:[%s1930] sm:$0xf]
  %v1932 = vunpack.c.l.bf16 %v1931
  %v1933 = vunpack.c.h.bf16 %v1931
  %s1934 = scalar_lea.vmem %s1, 752
  %s1936 = ssub.s32 0, 4
  %s1937 = scalar_lea.vmem %s1934, %s1936
  %v1938 = vpack.c.bf16 %v1932, %v1327
  %1939 = vst [vmem:[%s1937] sm:$0xff] %v1938
  %s1940 = scalar_lea.vmem %s0, 272
  %v1941 = vld [vmem:[%s1940] sm:$0xf]
  %v1942 = vunpack.c.l.bf16 %v1941
  %v1943 = vunpack.c.h.bf16 %v1941
  %s1944 = scalar_lea.vmem %s1, 1232
  %s1946 = ssub.s32 0, 4
  %s1947 = scalar_lea.vmem %s1944, %s1946
  %v1948 = vpack.c.bf16 %v1942, %v1332
  %1949 = vst [vmem:[%s1947] sm:$0xff] %v1948
  %s1950 = scalar_lea.vmem %s0, 1072
  %v1951 = vld [vmem:[%s1950] sm:$0xf]
  %v1952 = vunpack.c.l.bf16 %v1951
  %v1953 = vunpack.c.h.bf16 %v1951
  %s1954 = scalar_lea.vmem %s1, 432
  %s1956 = ssub.s32 0, 4
  %s1957 = scalar_lea.vmem %s1954, %s1956
  %v1958 = vpack.c.bf16 %v1952, %v1337
  %1959 = vst [vmem:[%s1957] sm:$0xff] %v1958
  %s1960 = scalar_lea.vmem %s0, 592
  %v1961 = vld [vmem:[%s1960] sm:$0xf]
  %v1962 = vunpack.c.l.bf16 %v1961
  %v1963 = vunpack.c.h.bf16 %v1961
  %s1964 = scalar_lea.vmem %s1, 912
  %s1966 = ssub.s32 0, 4
  %s1967 = scalar_lea.vmem %s1964, %s1966
  %v1968 = vpack.c.bf16 %v1962, %v1342
  %1969 = vst [vmem:[%s1967] sm:$0xff] %v1968
  %s1970 = scalar_lea.vmem %s0, 112
  %v1971 = vld [vmem:[%s1970] sm:$0xf]
  %v1972 = vunpack.c.l.bf16 %v1971
  %v1973 = vunpack.c.h.bf16 %v1971
  %s1974 = scalar_lea.vmem %s1, 1392
  %s1976 = ssub.s32 0, 4
  %s1977 = scalar_lea.vmem %s1974, %s1976
  %v1978 = vpack.c.bf16 %v1972, %v1347
  %1979 = vst [vmem:[%s1977] sm:$0xff] %v1978
  %s1980 = scalar_lea.vmem %s0, 1412
  %v1981 = vld [vmem:[%s1980] sm:$0xf]
  %v1982 = vunpack.c.l.bf16 %v1981
  %v1983 = vunpack.c.h.bf16 %v1981
  %s1984 = scalar_lea.vmem %s1, 132
  %s1986 = ssub.s32 0, 4
  %s1987 = scalar_lea.vmem %s1984, %s1986
  %v1988 = vpack.c.bf16 %v1982, %v1352
  %1989 = vst [vmem:[%s1987] sm:$0xff] %v1988
  %s1990 = scalar_lea.vmem %s0, 932
  %v1991 = vld [vmem:[%s1990] sm:$0xf]
  %v1992 = vunpack.c.l.bf16 %v1991
  %v1993 = vunpack.c.h.bf16 %v1991
  %s1994 = scalar_lea.vmem %s1, 612
  %s1996 = ssub.s32 0, 4
  %s1997 = scalar_lea.vmem %s1994, %s1996
  %v1998 = vpack.c.bf16 %v1992, %v1357
  %1999 = vst [vmem:[%s1997] sm:$0xff] %v1998
  %s2000 = scalar_lea.vmem %s0, 452
  %v2001 = vld [vmem:[%s2000] sm:$0xf]
  %v2002 = vunpack.c.l.bf16 %v2001
  %v2003 = vunpack.c.h.bf16 %v2001
  %s2004 = scalar_lea.vmem %s1, 1092
  %s2006 = ssub.s32 0, 4
  %s2007 = scalar_lea.vmem %s2004, %s2006
  %v2008 = vpack.c.bf16 %v2002, %v1362
  %2009 = vst [vmem:[%s2007] sm:$0xff] %v2008
  %s2010 = scalar_lea.vmem %s0, 1252
  %v2011 = vld [vmem:[%s2010] sm:$0xf]
  %v2012 = vunpack.c.l.bf16 %v2011
  %v2013 = vunpack.c.h.bf16 %v2011
  %s2014 = scalar_lea.vmem %s1, 292
  %s2016 = ssub.s32 0, 4
  %s2017 = scalar_lea.vmem %s2014, %s2016
  %v2018 = vpack.c.bf16 %v2012, %v1367
  %2019 = vst [vmem:[%s2017] sm:$0xff] %v2018
  %s2020 = scalar_lea.vmem %s0, 772
  %v2021 = vld [vmem:[%s2020] sm:$0xf]
  %v2022 = vunpack.c.l.bf16 %v2021
  %v2023 = vunpack.c.h.bf16 %v2021
  %s2024 = scalar_lea.vmem %s1, 772
  %s2026 = ssub.s32 0, 4
  %s2027 = scalar_lea.vmem %s2024, %s2026
  %v2028 = vpack.c.bf16 %v2022, %v1372
  %2029 = vst [vmem:[%s2027] sm:$0xff] %v2028
  %s2030 = scalar_lea.vmem %s0, 292
  %v2031 = vld [vmem:[%s2030] sm:$0xf]
  %v2032 = vunpack.c.l.bf16 %v2031
  %v2033 = vunpack.c.h.bf16 %v2031
  %s2034 = scalar_lea.vmem %s1, 1252
  %s2036 = ssub.s32 0, 4
  %s2037 = scalar_lea.vmem %s2034, %s2036
  %v2038 = vpack.c.bf16 %v2032, %v1377
  %2039 = vst [vmem:[%s2037] sm:$0xff] %v2038
  %s2040 = scalar_lea.vmem %s0, 1092
  %v2041 = vld [vmem:[%s2040] sm:$0xf]
  %v2042 = vunpack.c.l.bf16 %v2041
  %v2043 = vunpack.c.h.bf16 %v2041
  %s2044 = scalar_lea.vmem %s1, 452
  %s2046 = ssub.s32 0, 4
  %s2047 = scalar_lea.vmem %s2044, %s2046
  %v2048 = vpack.c.bf16 %v2042, %v1382
  %2049 = vst [vmem:[%s2047] sm:$0xff] %v2048
  %s2050 = scalar_lea.vmem %s0, 612
  %v2051 = vld [vmem:[%s2050] sm:$0xf]
  %v2052 = vunpack.c.l.bf16 %v2051
  %v2053 = vunpack.c.h.bf16 %v2051
  %s2054 = scalar_lea.vmem %s1, 932
  %s2056 = ssub.s32 0, 4
  %s2057 = scalar_lea.vmem %s2054, %s2056
  %v2058 = vpack.c.bf16 %v2052, %v1387
  %2059 = vst [vmem:[%s2057] sm:$0xff] %v2058
  %s2060 = scalar_lea.vmem %s0, 132
  %v2061 = vld [vmem:[%s2060] sm:$0xf]
  %v2062 = vunpack.c.l.bf16 %v2061
  %v2063 = vunpack.c.h.bf16 %v2061
  %s2064 = scalar_lea.vmem %s1, 1412
  %s2066 = ssub.s32 0, 4
  %s2067 = scalar_lea.vmem %s2064, %s2066
  %v2068 = vpack.c.bf16 %v2062, %v1392
  %2069 = vst [vmem:[%s2067] sm:$0xff] %v2068
  %s2070 = scalar_lea.vmem %s0, 1432
  %v2071 = vld [vmem:[%s2070] sm:$0xf]
  %v2072 = vunpack.c.l.bf16 %v2071
  %v2073 = vunpack.c.h.bf16 %v2071
  %s2074 = scalar_lea.vmem %s1, 152
  %s2076 = ssub.s32 0, 4
  %s2077 = scalar_lea.vmem %s2074, %s2076
  %v2078 = vpack.c.bf16 %v2072, %v1397
  %2079 = vst [vmem:[%s2077] sm:$0xff] %v2078
  %s2080 = scalar_lea.vmem %s0, 952
  %v2081 = vld [vmem:[%s2080] sm:$0xf]
  %v2082 = vunpack.c.l.bf16 %v2081
  %v2083 = vunpack.c.h.bf16 %v2081
  %s2084 = scalar_lea.vmem %s1, 632
  %s2086 = ssub.s32 0, 4
  %s2087 = scalar_lea.vmem %s2084, %s2086
  %v2088 = vpack.c.bf16 %v2082, %v1402
  %2089 = vst [vmem:[%s2087] sm:$0xff] %v2088
  %s2090 = scalar_lea.vmem %s0, 472
  %v2091 = vld [vmem:[%s2090] sm:$0xf]
  %v2092 = vunpack.c.l.bf16 %v2091
  %v2093 = vunpack.c.h.bf16 %v2091
  %s2094 = scalar_lea.vmem %s1, 1112
  %s2096 = ssub.s32 0, 4
  %s2097 = scalar_lea.vmem %s2094, %s2096
  %v2098 = vpack.c.bf16 %v2092, %v1407
  %2099 = vst [vmem:[%s2097] sm:$0xff] %v2098
  %s2100 = scalar_lea.vmem %s0, 1272
  %v2101 = vld [vmem:[%s2100] sm:$0xf]
  %v2102 = vunpack.c.l.bf16 %v2101
  %v2103 = vunpack.c.h.bf16 %v2101
  %s2104 = scalar_lea.vmem %s1, 312
  %s2106 = ssub.s32 0, 4
  %s2107 = scalar_lea.vmem %s2104, %s2106
  %v2108 = vpack.c.bf16 %v2102, %v1412
  %2109 = vst [vmem:[%s2107] sm:$0xff] %v2108
  %s2110 = scalar_lea.vmem %s0, 792
  %v2111 = vld [vmem:[%s2110] sm:$0xf]
  %v2112 = vunpack.c.l.bf16 %v2111
  %v2113 = vunpack.c.h.bf16 %v2111
  %s2114 = scalar_lea.vmem %s1, 792
  %s2116 = ssub.s32 0, 4
  %s2117 = scalar_lea.vmem %s2114, %s2116
  %v2118 = vpack.c.bf16 %v2112, %v1417
  %2119 = vst [vmem:[%s2117] sm:$0xff] %v2118
  %s2120 = scalar_lea.vmem %s0, 312
  %v2121 = vld [vmem:[%s2120] sm:$0xf]
  %v2122 = vunpack.c.l.bf16 %v2121
  %v2123 = vunpack.c.h.bf16 %v2121
  %s2124 = scalar_lea.vmem %s1, 1272
  %s2126 = ssub.s32 0, 4
  %s2127 = scalar_lea.vmem %s2124, %s2126
  %v2128 = vpack.c.bf16 %v2122, %v1422
  %2129 = vst [vmem:[%s2127] sm:$0xff] %v2128
  %s2130 = scalar_lea.vmem %s0, 1112
  %v2131 = vld [vmem:[%s2130] sm:$0xf]
  %v2132 = vunpack.c.l.bf16 %v2131
  %v2133 = vunpack.c.h.bf16 %v2131
  %s2134 = scalar_lea.vmem %s1, 472
  %s2136 = ssub.s32 0, 4
  %s2137 = scalar_lea.vmem %s2134, %s2136
  %v2138 = vpack.c.bf16 %v2132, %v1427
  %2139 = vst [vmem:[%s2137] sm:$0xff] %v2138
  %s2140 = scalar_lea.vmem %s0, 632
  %v2141 = vld [vmem:[%s2140] sm:$0xf]
  %v2142 = vunpack.c.l.bf16 %v2141
  %v2143 = vunpack.c.h.bf16 %v2141
  %s2144 = scalar_lea.vmem %s1, 952
  %s2146 = ssub.s32 0, 4
  %s2147 = scalar_lea.vmem %s2144, %s2146
  %v2148 = vpack.c.bf16 %v2142, %v1432
  %2149 = vst [vmem:[%s2147] sm:$0xff] %v2148
  %s2150 = scalar_lea.vmem %s0, 152
  %v2151 = vld [vmem:[%s2150] sm:$0xf]
  %v2152 = vunpack.c.l.bf16 %v2151
  %v2153 = vunpack.c.h.bf16 %v2151
  %s2154 = scalar_lea.vmem %s1, 1432
  %s2156 = ssub.s32 0, 4
  %s2157 = scalar_lea.vmem %s2154, %s2156
  %v2158 = vpack.c.bf16 %v2152, %v1437
  %2159 = vst [vmem:[%s2157] sm:$0xff] %v2158
  %s2160 = scalar_lea.vmem %s0, 1296
  %v2161 = vld [vmem:[%s2160] sm:$0xf]
  %v2162 = vunpack.c.l.bf16 %v2161
  %v2163 = vunpack.c.h.bf16 %v2161
  %s2164 = scalar_lea.vmem %s1, 16
  %v2165 = vpack.c.bf16 0.0, %v2162
  %2166 = vst [vmem:[%s2164] sm:$0xf] %v2165
  %s2167 = scalar_lea.vmem %s0, 816
  %v2168 = vld [vmem:[%s2167] sm:$0xf]
  %v2169 = vunpack.c.l.bf16 %v2168
  %v2170 = vunpack.c.h.bf16 %v2168
  %s2171 = scalar_lea.vmem %s1, 496
  %v2172 = vpack.c.bf16 0.0, %v2169
  %2173 = vst [vmem:[%s2171] sm:$0xf] %v2172
  %s2174 = scalar_lea.vmem %s0, 336
  %v2175 = vld [vmem:[%s2174] sm:$0xf]
  %v2176 = vunpack.c.l.bf16 %v2175
  %v2177 = vunpack.c.h.bf16 %v2175
  %s2178 = scalar_lea.vmem %s1, 976
  %v2179 = vpack.c.bf16 0.0, %v2176
  %2180 = vst [vmem:[%s2178] sm:$0xf] %v2179
  %s2181 = scalar_lea.vmem %s0, 1136
  %v2182 = vld [vmem:[%s2181] sm:$0xf]
  %v2183 = vunpack.c.l.bf16 %v2182
  %v2184 = vunpack.c.h.bf16 %v2182
  %s2185 = scalar_lea.vmem %s1, 176
  %v2186 = vpack.c.bf16 0.0, %v2183
  %2187 = vst [vmem:[%s2185] sm:$0xf] %v2186
  %s2188 = scalar_lea.vmem %s0, 656
  %v2189 = vld [vmem:[%s2188] sm:$0xf]
  %v2190 = vunpack.c.l.bf16 %v2189
  %v2191 = vunpack.c.h.bf16 %v2189
  %s2192 = scalar_lea.vmem %s1, 656
  %v2193 = vpack.c.bf16 0.0, %v2190
  %2194 = vst [vmem:[%s2192] sm:$0xf] %v2193
  %s2195 = scalar_lea.vmem %s0, 176
  %v2196 = vld [vmem:[%s2195] sm:$0xf]
  %v2197 = vunpack.c.l.bf16 %v2196
  %v2198 = vunpack.c.h.bf16 %v2196
  %s2199 = scalar_lea.vmem %s1, 1136
  %v2200 = vpack.c.bf16 0.0, %v2197
  %2201 = vst [vmem:[%s2199] sm:$0xf] %v2200
  %s2202 = scalar_lea.vmem %s0, 976
  %v2203 = vld [vmem:[%s2202] sm:$0xf]
  %v2204 = vunpack.c.l.bf16 %v2203
  %v2205 = vunpack.c.h.bf16 %v2203
  %s2206 = scalar_lea.vmem %s1, 336
  %v2207 = vpack.c.bf16 0.0, %v2204
  %2208 = vst [vmem:[%s2206] sm:$0xf] %v2207
  %s2209 = scalar_lea.vmem %s0, 496
  %v2210 = vld [vmem:[%s2209] sm:$0xf]
  %v2211 = vunpack.c.l.bf16 %v2210
  %v2212 = vunpack.c.h.bf16 %v2210
  %s2213 = scalar_lea.vmem %s1, 816
  %v2214 = vpack.c.bf16 0.0, %v2211
  %2215 = vst [vmem:[%s2213] sm:$0xf] %v2214
  %s2216 = scalar_lea.vmem %s0, 16
  %v2217 = vld [vmem:[%s2216] sm:$0xf]
  %v2218 = vunpack.c.l.bf16 %v2217
  %v2219 = vunpack.c.h.bf16 %v2217
  %s2220 = scalar_lea.vmem %s1, 1296
  %v2221 = vpack.c.bf16 0.0, %v2218
  %2222 = vst [vmem:[%s2220] sm:$0xf] %v2221
  %s2223 = scalar_lea.vmem %s0, 1316
  %v2224 = vld [vmem:[%s2223] sm:$0xf]
  %v2225 = vunpack.c.l.bf16 %v2224
  %v2226 = vunpack.c.h.bf16 %v2224
  %s2227 = scalar_lea.vmem %s1, 36
  %v2228 = vpack.c.bf16 0.0, %v2225
  %2229 = vst [vmem:[%s2227] sm:$0xf] %v2228
  %s2230 = scalar_lea.vmem %s0, 836
  %v2231 = vld [vmem:[%s2230] sm:$0xf]
  %v2232 = vunpack.c.l.bf16 %v2231
  %v2233 = vunpack.c.h.bf16 %v2231
  %s2234 = scalar_lea.vmem %s1, 516
  %v2235 = vpack.c.bf16 0.0, %v2232
  %2236 = vst [vmem:[%s2234] sm:$0xf] %v2235
  %s2237 = scalar_lea.vmem %s0, 356
  %v2238 = vld [vmem:[%s2237] sm:$0xf]
  %v2239 = vunpack.c.l.bf16 %v2238
  %v2240 = vunpack.c.h.bf16 %v2238
  %s2241 = scalar_lea.vmem %s1, 996
  %v2242 = vpack.c.bf16 0.0, %v2239
  %2243 = vst [vmem:[%s2241] sm:$0xf] %v2242
  %s2244 = scalar_lea.vmem %s0, 1156
  %v2245 = vld [vmem:[%s2244] sm:$0xf]
  %v2246 = vunpack.c.l.bf16 %v2245
  %v2247 = vunpack.c.h.bf16 %v2245
  %s2248 = scalar_lea.vmem %s1, 196
  %v2249 = vpack.c.bf16 0.0, %v2246
  %2250 = vst [vmem:[%s2248] sm:$0xf] %v2249
  %s2251 = scalar_lea.vmem %s0, 676
  %v2252 = vld [vmem:[%s2251] sm:$0xf]
  %v2253 = vunpack.c.l.bf16 %v2252
  %v2254 = vunpack.c.h.bf16 %v2252
  %s2255 = scalar_lea.vmem %s1, 676
  %v2256 = vpack.c.bf16 0.0, %v2253
  %2257 = vst [vmem:[%s2255] sm:$0xf] %v2256
  %s2258 = scalar_lea.vmem %s0, 196
  %v2259 = vld [vmem:[%s2258] sm:$0xf]
  %v2260 = vunpack.c.l.bf16 %v2259
  %v2261 = vunpack.c.h.bf16 %v2259
  %s2262 = scalar_lea.vmem %s1, 1156
  %v2263 = vpack.c.bf16 0.0, %v2260
  %2264 = vst [vmem:[%s2262] sm:$0xf] %v2263
  %s2265 = scalar_lea.vmem %s0, 996
  %v2266 = vld [vmem:[%s2265] sm:$0xf]
  %v2267 = vunpack.c.l.bf16 %v2266
  %v2268 = vunpack.c.h.bf16 %v2266
  %s2269 = scalar_lea.vmem %s1, 356
  %v2270 = vpack.c.bf16 0.0, %v2267
  %2271 = vst [vmem:[%s2269] sm:$0xf] %v2270
  %s2272 = scalar_lea.vmem %s0, 516
  %v2273 = vld [vmem:[%s2272] sm:$0xf]
  %v2274 = vunpack.c.l.bf16 %v2273
  %v2275 = vunpack.c.h.bf16 %v2273
  %s2276 = scalar_lea.vmem %s1, 836
  %v2277 = vpack.c.bf16 0.0, %v2274
  %2278 = vst [vmem:[%s2276] sm:$0xf] %v2277
  %s2279 = scalar_lea.vmem %s0, 36
  %v2280 = vld [vmem:[%s2279] sm:$0xf]
  %v2281 = vunpack.c.l.bf16 %v2280
  %v2282 = vunpack.c.h.bf16 %v2280
  %s2283 = scalar_lea.vmem %s1, 1316
  %v2284 = vpack.c.bf16 0.0, %v2281
  %2285 = vst [vmem:[%s2283] sm:$0xf] %v2284
  %s2286 = scalar_lea.vmem %s0, 1336
  %v2287 = vld [vmem:[%s2286] sm:$0xf]
  %v2288 = vunpack.c.l.bf16 %v2287
  %v2289 = vunpack.c.h.bf16 %v2287
  %s2290 = scalar_lea.vmem %s1, 56
  %v2291 = vpack.c.bf16 0.0, %v2288
  %2292 = vst [vmem:[%s2290] sm:$0xf] %v2291
  %s2293 = scalar_lea.vmem %s0, 856
  %v2294 = vld [vmem:[%s2293] sm:$0xf]
  %v2295 = vunpack.c.l.bf16 %v2294
  %v2296 = vunpack.c.h.bf16 %v2294
  %s2297 = scalar_lea.vmem %s1, 536
  %v2298 = vpack.c.bf16 0.0, %v2295
  %2299 = vst [vmem:[%s2297] sm:$0xf] %v2298
  %s2300 = scalar_lea.vmem %s0, 376
  %v2301 = vld [vmem:[%s2300] sm:$0xf]
  %v2302 = vunpack.c.l.bf16 %v2301
  %v2303 = vunpack.c.h.bf16 %v2301
  %s2304 = scalar_lea.vmem %s1, 1016
  %v2305 = vpack.c.bf16 0.0, %v2302
  %2306 = vst [vmem:[%s2304] sm:$0xf] %v2305
  %s2307 = scalar_lea.vmem %s0, 1176
  %v2308 = vld [vmem:[%s2307] sm:$0xf]
  %v2309 = vunpack.c.l.bf16 %v2308
  %v2310 = vunpack.c.h.bf16 %v2308
  %s2311 = scalar_lea.vmem %s1, 216
  %v2312 = vpack.c.bf16 0.0, %v2309
  %2313 = vst [vmem:[%s2311] sm:$0xf] %v2312
  %s2314 = scalar_lea.vmem %s0, 696
  %v2315 = vld [vmem:[%s2314] sm:$0xf]
  %v2316 = vunpack.c.l.bf16 %v2315
  %v2317 = vunpack.c.h.bf16 %v2315
  %s2318 = scalar_lea.vmem %s1, 696
  %v2319 = vpack.c.bf16 0.0, %v2316
  %2320 = vst [vmem:[%s2318] sm:$0xf] %v2319
  %s2321 = scalar_lea.vmem %s0, 216
  %v2322 = vld [vmem:[%s2321] sm:$0xf]
  %v2323 = vunpack.c.l.bf16 %v2322
  %v2324 = vunpack.c.h.bf16 %v2322
  %s2325 = scalar_lea.vmem %s1, 1176
  %v2326 = vpack.c.bf16 0.0, %v2323
  %2327 = vst [vmem:[%s2325] sm:$0xf] %v2326
  %s2328 = scalar_lea.vmem %s0, 1016
  %v2329 = vld [vmem:[%s2328] sm:$0xf]
  %v2330 = vunpack.c.l.bf16 %v2329
  %v2331 = vunpack.c.h.bf16 %v2329
  %s2332 = scalar_lea.vmem %s1, 376
  %v2333 = vpack.c.bf16 0.0, %v2330
  %2334 = vst [vmem:[%s2332] sm:$0xf] %v2333
  %s2335 = scalar_lea.vmem %s0, 536
  %v2336 = vld [vmem:[%s2335] sm:$0xf]
  %v2337 = vunpack.c.l.bf16 %v2336
  %v2338 = vunpack.c.h.bf16 %v2336
  %s2339 = scalar_lea.vmem %s1, 856
  %v2340 = vpack.c.bf16 0.0, %v2337
  %2341 = vst [vmem:[%s2339] sm:$0xf] %v2340
  %s2342 = scalar_lea.vmem %s0, 56
  %v2343 = vld [vmem:[%s2342] sm:$0xf]
  %v2344 = vunpack.c.l.bf16 %v2343
  %v2345 = vunpack.c.h.bf16 %v2343
  %s2346 = scalar_lea.vmem %s1, 1336
  %v2347 = vpack.c.bf16 0.0, %v2344
  %2348 = vst [vmem:[%s2346] sm:$0xf] %v2347
  %s2349 = scalar_lea.vmem %s0, 1356
  %v2350 = vld [vmem:[%s2349] sm:$0xf]
  %v2351 = vunpack.c.l.bf16 %v2350
  %v2352 = vunpack.c.h.bf16 %v2350
  %s2353 = scalar_lea.vmem %s1, 76
  %v2354 = vpack.c.bf16 0.0, %v2351
  %2355 = vst [vmem:[%s2353] sm:$0xf] %v2354
  %s2356 = scalar_lea.vmem %s0, 876
  %v2357 = vld [vmem:[%s2356] sm:$0xf]
  %v2358 = vunpack.c.l.bf16 %v2357
  %v2359 = vunpack.c.h.bf16 %v2357
  %s2360 = scalar_lea.vmem %s1, 556
  %v2361 = vpack.c.bf16 0.0, %v2358
  %2362 = vst [vmem:[%s2360] sm:$0xf] %v2361
  %s2363 = scalar_lea.vmem %s0, 396
  %v2364 = vld [vmem:[%s2363] sm:$0xf]
  %v2365 = vunpack.c.l.bf16 %v2364
  %v2366 = vunpack.c.h.bf16 %v2364
  %s2367 = scalar_lea.vmem %s1, 1036
  %v2368 = vpack.c.bf16 0.0, %v2365
  %2369 = vst [vmem:[%s2367] sm:$0xf] %v2368
  %s2370 = scalar_lea.vmem %s0, 1196
  %v2371 = vld [vmem:[%s2370] sm:$0xf]
  %v2372 = vunpack.c.l.bf16 %v2371
  %v2373 = vunpack.c.h.bf16 %v2371
  %s2374 = scalar_lea.vmem %s1, 236
  %v2375 = vpack.c.bf16 0.0, %v2372
  %2376 = vst [vmem:[%s2374] sm:$0xf] %v2375
  %s2377 = scalar_lea.vmem %s0, 716
  %v2378 = vld [vmem:[%s2377] sm:$0xf]
  %v2379 = vunpack.c.l.bf16 %v2378
  %v2380 = vunpack.c.h.bf16 %v2378
  %s2381 = scalar_lea.vmem %s1, 716
  %v2382 = vpack.c.bf16 0.0, %v2379
  %2383 = vst [vmem:[%s2381] sm:$0xf] %v2382
  %s2384 = scalar_lea.vmem %s0, 236
  %v2385 = vld [vmem:[%s2384] sm:$0xf]
  %v2386 = vunpack.c.l.bf16 %v2385
  %v2387 = vunpack.c.h.bf16 %v2385
  %s2388 = scalar_lea.vmem %s1, 1196
  %v2389 = vpack.c.bf16 0.0, %v2386
  %2390 = vst [vmem:[%s2388] sm:$0xf] %v2389
  %s2391 = scalar_lea.vmem %s0, 1036
  %v2392 = vld [vmem:[%s2391] sm:$0xf]
  %v2393 = vunpack.c.l.bf16 %v2392
  %v2394 = vunpack.c.h.bf16 %v2392
  %s2395 = scalar_lea.vmem %s1, 396
  %v2396 = vpack.c.bf16 0.0, %v2393
  %2397 = vst [vmem:[%s2395] sm:$0xf] %v2396
  %s2398 = scalar_lea.vmem %s0, 556
  %v2399 = vld [vmem:[%s2398] sm:$0xf]
  %v2400 = vunpack.c.l.bf16 %v2399
  %v2401 = vunpack.c.h.bf16 %v2399
  %s2402 = scalar_lea.vmem %s1, 876
  %v2403 = vpack.c.bf16 0.0, %v2400
  %2404 = vst [vmem:[%s2402] sm:$0xf] %v2403
  %s2405 = scalar_lea.vmem %s0, 76
  %v2406 = vld [vmem:[%s2405] sm:$0xf]
  %v2407 = vunpack.c.l.bf16 %v2406
  %v2408 = vunpack.c.h.bf16 %v2406
  %s2409 = scalar_lea.vmem %s1, 1356
  %v2410 = vpack.c.bf16 0.0, %v2407
  %2411 = vst [vmem:[%s2409] sm:$0xf] %v2410
  %s2412 = scalar_lea.vmem %s0, 1376
  %v2413 = vld [vmem:[%s2412] sm:$0xf]
  %v2414 = vunpack.c.l.bf16 %v2413
  %v2415 = vunpack.c.h.bf16 %v2413
  %s2416 = scalar_lea.vmem %s1, 96
  %v2417 = vpack.c.bf16 0.0, %v2414
  %2418 = vst [vmem:[%s2416] sm:$0xf] %v2417
  %s2419 = scalar_lea.vmem %s0, 896
  %v2420 = vld [vmem:[%s2419] sm:$0xf]
  %v2421 = vunpack.c.l.bf16 %v2420
  %v2422 = vunpack.c.h.bf16 %v2420
  %s2423 = scalar_lea.vmem %s1, 576
  %v2424 = vpack.c.bf16 0.0, %v2421
  %2425 = vst [vmem:[%s2423] sm:$0xf] %v2424
  %s2426 = scalar_lea.vmem %s0, 416
  %v2427 = vld [vmem:[%s2426] sm:$0xf]
  %v2428 = vunpack.c.l.bf16 %v2427
  %v2429 = vunpack.c.h.bf16 %v2427
  %s2430 = scalar_lea.vmem %s1, 1056
  %v2431 = vpack.c.bf16 0.0, %v2428
  %2432 = vst [vmem:[%s2430] sm:$0xf] %v2431
  %s2433 = scalar_lea.vmem %s0, 1216
  %v2434 = vld [vmem:[%s2433] sm:$0xf]
  %v2435 = vunpack.c.l.bf16 %v2434
  %v2436 = vunpack.c.h.bf16 %v2434
  %s2437 = scalar_lea.vmem %s1, 256
  %v2438 = vpack.c.bf16 0.0, %v2435
  %2439 = vst [vmem:[%s2437] sm:$0xf] %v2438
  %s2440 = scalar_lea.vmem %s0, 736
  %v2441 = vld [vmem:[%s2440] sm:$0xf]
  %v2442 = vunpack.c.l.bf16 %v2441
  %v2443 = vunpack.c.h.bf16 %v2441
  %s2444 = scalar_lea.vmem %s1, 736
  %v2445 = vpack.c.bf16 0.0, %v2442
  %2446 = vst [vmem:[%s2444] sm:$0xf] %v2445
  %s2447 = scalar_lea.vmem %s0, 256
  %v2448 = vld [vmem:[%s2447] sm:$0xf]
  %v2449 = vunpack.c.l.bf16 %v2448
  %v2450 = vunpack.c.h.bf16 %v2448
  %s2451 = scalar_lea.vmem %s1, 1216
  %v2452 = vpack.c.bf16 0.0, %v2449
  %2453 = vst [vmem:[%s2451] sm:$0xf] %v2452
  %s2454 = scalar_lea.vmem %s0, 1056
  %v2455 = vld [vmem:[%s2454] sm:$0xf]
  %v2456 = vunpack.c.l.bf16 %v2455
  %v2457 = vunpack.c.h.bf16 %v2455
  %s2458 = scalar_lea.vmem %s1, 416
  %v2459 = vpack.c.bf16 0.0, %v2456
  %2460 = vst [vmem:[%s2458] sm:$0xf] %v2459
  %s2461 = scalar_lea.vmem %s0, 576
  %v2462 = vld [vmem:[%s2461] sm:$0xf]
  %v2463 = vunpack.c.l.bf16 %v2462
  %v2464 = vunpack.c.h.bf16 %v2462
  %s2465 = scalar_lea.vmem %s1, 896
  %v2466 = vpack.c.bf16 0.0, %v2463
  %2467 = vst [vmem:[%s2465] sm:$0xf] %v2466
  %s2468 = scalar_lea.vmem %s0, 96
  %v2469 = vld [vmem:[%s2468] sm:$0xf]
  %v2470 = vunpack.c.l.bf16 %v2469
  %v2471 = vunpack.c.h.bf16 %v2469
  %s2472 = scalar_lea.vmem %s1, 1376
  %v2473 = vpack.c.bf16 0.0, %v2470
  %2474 = vst [vmem:[%s2472] sm:$0xf] %v2473
  %s2475 = scalar_lea.vmem %s0, 1396
  %v2476 = vld [vmem:[%s2475] sm:$0xf]
  %v2477 = vunpack.c.l.bf16 %v2476
  %v2478 = vunpack.c.h.bf16 %v2476
  %s2479 = scalar_lea.vmem %s1, 116
  %v2480 = vpack.c.bf16 0.0, %v2477
  %2481 = vst [vmem:[%s2479] sm:$0xf] %v2480
  %s2482 = scalar_lea.vmem %s0, 916
  %v2483 = vld [vmem:[%s2482] sm:$0xf]
  %v2484 = vunpack.c.l.bf16 %v2483
  %v2485 = vunpack.c.h.bf16 %v2483
  %s2486 = scalar_lea.vmem %s1, 596
  %v2487 = vpack.c.bf16 0.0, %v2484
  %2488 = vst [vmem:[%s2486] sm:$0xf] %v2487
  %s2489 = scalar_lea.vmem %s0, 436
  %v2490 = vld [vmem:[%s2489] sm:$0xf]
  %v2491 = vunpack.c.l.bf16 %v2490
  %v2492 = vunpack.c.h.bf16 %v2490
  %s2493 = scalar_lea.vmem %s1, 1076
  %v2494 = vpack.c.bf16 0.0, %v2491
  %2495 = vst [vmem:[%s2493] sm:$0xf] %v2494
  %s2496 = scalar_lea.vmem %s0, 1236
  %v2497 = vld [vmem:[%s2496] sm:$0xf]
  %v2498 = vunpack.c.l.bf16 %v2497
  %v2499 = vunpack.c.h.bf16 %v2497
  %s2500 = scalar_lea.vmem %s1, 276
  %v2501 = vpack.c.bf16 0.0, %v2498
  %2502 = vst [vmem:[%s2500] sm:$0xf] %v2501
  %s2503 = scalar_lea.vmem %s0, 756
  %v2504 = vld [vmem:[%s2503] sm:$0xf]
  %v2505 = vunpack.c.l.bf16 %v2504
  %v2506 = vunpack.c.h.bf16 %v2504
  %s2507 = scalar_lea.vmem %s1, 756
  %v2508 = vpack.c.bf16 0.0, %v2505
  %2509 = vst [vmem:[%s2507] sm:$0xf] %v2508
  %s2510 = scalar_lea.vmem %s0, 276
  %v2511 = vld [vmem:[%s2510] sm:$0xf]
  %v2512 = vunpack.c.l.bf16 %v2511
  %v2513 = vunpack.c.h.bf16 %v2511
  %s2514 = scalar_lea.vmem %s1, 1236
  %v2515 = vpack.c.bf16 0.0, %v2512
  %2516 = vst [vmem:[%s2514] sm:$0xf] %v2515
  %s2517 = scalar_lea.vmem %s0, 1076
  %v2518 = vld [vmem:[%s2517] sm:$0xf]
  %v2519 = vunpack.c.l.bf16 %v2518
  %v2520 = vunpack.c.h.bf16 %v2518
  %s2521 = scalar_lea.vmem %s1, 436
  %v2522 = vpack.c.bf16 0.0, %v2519
  %2523 = vst [vmem:[%s2521] sm:$0xf] %v2522
  %s2524 = scalar_lea.vmem %s0, 596
  %v2525 = vld [vmem:[%s2524] sm:$0xf]
  %v2526 = vunpack.c.l.bf16 %v2525
  %v2527 = vunpack.c.h.bf16 %v2525
  %s2528 = scalar_lea.vmem %s1, 916
  %v2529 = vpack.c.bf16 0.0, %v2526
  %2530 = vst [vmem:[%s2528] sm:$0xf] %v2529
  %s2531 = scalar_lea.vmem %s0, 116
  %v2532 = vld [vmem:[%s2531] sm:$0xf]
  %v2533 = vunpack.c.l.bf16 %v2532
  %v2534 = vunpack.c.h.bf16 %v2532
  %s2535 = scalar_lea.vmem %s1, 1396
  %v2536 = vpack.c.bf16 0.0, %v2533
  %2537 = vst [vmem:[%s2535] sm:$0xf] %v2536
  %s2538 = scalar_lea.vmem %s0, 1416
  %v2539 = vld [vmem:[%s2538] sm:$0xf]
  %v2540 = vunpack.c.l.bf16 %v2539
  %v2541 = vunpack.c.h.bf16 %v2539
  %s2542 = scalar_lea.vmem %s1, 136
  %v2543 = vpack.c.bf16 0.0, %v2540
  %2544 = vst [vmem:[%s2542] sm:$0xf] %v2543
  %s2545 = scalar_lea.vmem %s0, 936
  %v2546 = vld [vmem:[%s2545] sm:$0xf]
  %v2547 = vunpack.c.l.bf16 %v2546
  %v2548 = vunpack.c.h.bf16 %v2546
  %s2549 = scalar_lea.vmem %s1, 616
  %v2550 = vpack.c.bf16 0.0, %v2547
  %2551 = vst [vmem:[%s2549] sm:$0xf] %v2550
  %s2552 = scalar_lea.vmem %s0, 456
  %v2553 = vld [vmem:[%s2552] sm:$0xf]
  %v2554 = vunpack.c.l.bf16 %v2553
  %v2555 = vunpack.c.h.bf16 %v2553
  %s2556 = scalar_lea.vmem %s1, 1096
  %v2557 = vpack.c.bf16 0.0, %v2554
  %2558 = vst [vmem:[%s2556] sm:$0xf] %v2557
  %s2559 = scalar_lea.vmem %s0, 1256
  %v2560 = vld [vmem:[%s2559] sm:$0xf]
  %v2561 = vunpack.c.l.bf16 %v2560
  %v2562 = vunpack.c.h.bf16 %v2560
  %s2563 = scalar_lea.vmem %s1, 296
  %v2564 = vpack.c.bf16 0.0, %v2561
  %2565 = vst [vmem:[%s2563] sm:$0xf] %v2564
  %s2566 = scalar_lea.vmem %s0, 776
  %v2567 = vld [vmem:[%s2566] sm:$0xf]
  %v2568 = vunpack.c.l.bf16 %v2567
  %v2569 = vunpack.c.h.bf16 %v2567
  %s2570 = scalar_lea.vmem %s1, 776
  %v2571 = vpack.c.bf16 0.0, %v2568
  %2572 = vst [vmem:[%s2570] sm:$0xf] %v2571
  %s2573 = scalar_lea.vmem %s0, 296
  %v2574 = vld [vmem:[%s2573] sm:$0xf]
  %v2575 = vunpack.c.l.bf16 %v2574
  %v2576 = vunpack.c.h.bf16 %v2574
  %s2577 = scalar_lea.vmem %s1, 1256
  %v2578 = vpack.c.bf16 0.0, %v2575
  %2579 = vst [vmem:[%s2577] sm:$0xf] %v2578
  %s2580 = scalar_lea.vmem %s0, 1096
  %v2581 = vld [vmem:[%s2580] sm:$0xf]
  %v2582 = vunpack.c.l.bf16 %v2581
  %v2583 = vunpack.c.h.bf16 %v2581
  %s2584 = scalar_lea.vmem %s1, 456
  %v2585 = vpack.c.bf16 0.0, %v2582
  %2586 = vst [vmem:[%s2584] sm:$0xf] %v2585
  %s2587 = scalar_lea.vmem %s0, 616
  %v2588 = vld [vmem:[%s2587] sm:$0xf]
  %v2589 = vunpack.c.l.bf16 %v2588
  %v2590 = vunpack.c.h.bf16 %v2588
  %s2591 = scalar_lea.vmem %s1, 936
  %v2592 = vpack.c.bf16 0.0, %v2589
  %2593 = vst [vmem:[%s2591] sm:$0xf] %v2592
  %s2594 = scalar_lea.vmem %s0, 136
  %v2595 = vld [vmem:[%s2594] sm:$0xf]
  %v2596 = vunpack.c.l.bf16 %v2595
  %v2597 = vunpack.c.h.bf16 %v2595
  %s2598 = scalar_lea.vmem %s1, 1416
  %v2599 = vpack.c.bf16 0.0, %v2596
  %2600 = vst [vmem:[%s2598] sm:$0xf] %v2599
  %s2601 = scalar_lea.vmem %s0, 1436
  %v2602 = vld [vmem:[%s2601] sm:$0xf]
  %v2603 = vunpack.c.l.bf16 %v2602
  %v2604 = vunpack.c.h.bf16 %v2602
  %s2605 = scalar_lea.vmem %s1, 156
  %v2606 = vpack.c.bf16 0.0, %v2603
  %2607 = vst [vmem:[%s2605] sm:$0xf] %v2606
  %s2608 = scalar_lea.vmem %s0, 956
  %v2609 = vld [vmem:[%s2608] sm:$0xf]
  %v2610 = vunpack.c.l.bf16 %v2609
  %v2611 = vunpack.c.h.bf16 %v2609
  %s2612 = scalar_lea.vmem %s1, 636
  %v2613 = vpack.c.bf16 0.0, %v2610
  %2614 = vst [vmem:[%s2612] sm:$0xf] %v2613
  %s2615 = scalar_lea.vmem %s0, 476
  %v2616 = vld [vmem:[%s2615] sm:$0xf]
  %v2617 = vunpack.c.l.bf16 %v2616
  %v2618 = vunpack.c.h.bf16 %v2616
  %s2619 = scalar_lea.vmem %s1, 1116
  %v2620 = vpack.c.bf16 0.0, %v2617
  %2621 = vst [vmem:[%s2619] sm:$0xf] %v2620
  %s2622 = scalar_lea.vmem %s0, 1276
  %v2623 = vld [vmem:[%s2622] sm:$0xf]
  %v2624 = vunpack.c.l.bf16 %v2623
  %v2625 = vunpack.c.h.bf16 %v2623
  %s2626 = scalar_lea.vmem %s1, 316
  %v2627 = vpack.c.bf16 0.0, %v2624
  %2628 = vst [vmem:[%s2626] sm:$0xf] %v2627
  %s2629 = scalar_lea.vmem %s0, 796
  %v2630 = vld [vmem:[%s2629] sm:$0xf]
  %v2631 = vunpack.c.l.bf16 %v2630
  %v2632 = vunpack.c.h.bf16 %v2630
  %s2633 = scalar_lea.vmem %s1, 796
  %v2634 = vpack.c.bf16 0.0, %v2631
  %2635 = vst [vmem:[%s2633] sm:$0xf] %v2634
  %s2636 = scalar_lea.vmem %s0, 316
  %v2637 = vld [vmem:[%s2636] sm:$0xf]
  %v2638 = vunpack.c.l.bf16 %v2637
  %v2639 = vunpack.c.h.bf16 %v2637
  %s2640 = scalar_lea.vmem %s1, 1276
  %v2641 = vpack.c.bf16 0.0, %v2638
  %2642 = vst [vmem:[%s2640] sm:$0xf] %v2641
  %s2643 = scalar_lea.vmem %s0, 1116
  %v2644 = vld [vmem:[%s2643] sm:$0xf]
  %v2645 = vunpack.c.l.bf16 %v2644
  %v2646 = vunpack.c.h.bf16 %v2644
  %s2647 = scalar_lea.vmem %s1, 476
  %v2648 = vpack.c.bf16 0.0, %v2645
  %2649 = vst [vmem:[%s2647] sm:$0xf] %v2648
  %s2650 = scalar_lea.vmem %s0, 636
  %v2651 = vld [vmem:[%s2650] sm:$0xf]
  %v2652 = vunpack.c.l.bf16 %v2651
  %v2653 = vunpack.c.h.bf16 %v2651
  %s2654 = scalar_lea.vmem %s1, 956
  %v2655 = vpack.c.bf16 0.0, %v2652
  %2656 = vst [vmem:[%s2654] sm:$0xf] %v2655
  %s2657 = scalar_lea.vmem %s0, 156
  %v2658 = vld [vmem:[%s2657] sm:$0xf]
  %v2659 = vunpack.c.l.bf16 %v2658
  %v2660 = vunpack.c.h.bf16 %v2658
  %s2661 = scalar_lea.vmem %s1, 1436
  %v2662 = vpack.c.bf16 0.0, %v2659
  %2663 = vst [vmem:[%s2661] sm:$0xf] %v2662

// kernel: style_encoder_mlp.15
$region0: #{style_encoder_mlp.15}
  #allocation0 [shape = 'u32[]', space=smem, size = 0x4, offset = 0x4, fixed_abs, tag = 'smem constant byte address 0x4 - core index']
  #allocation1 [shape = 'u32[144,128]{1,0:T(1,128)}', space=vmem, size = 0x12000, scoped, tag = 'internal scratch']
  %s0 = inlined_call_operand.vmem [shape: bf16[2,4,576], index: 0, kind: input, shape index: {}]
  %s1 = inlined_call_operand.vmem [shape: bf16[576,128], index: 1, kind: input, shape index: {}]
  %s2 = inlined_call_operand.vmem [shape: f32[2,4,128], index: 2, kind: output, shape index: {}]
  %s3 = sld [smem:[#allocation0]]
  $region41: #{style_encoder_mlp.15} parent=0
    _
  %s5 = ssub.s32 1, %s3
  %s6 = scalar_select 0, %s5, %s3
  loop: start=0, step=1, limit=4
  $region2: #{style_encoder_mlp.15} parent=0 // loop_pre_header
    _
  $region3: #{style_encoder_mlp.15} parent=0 // loop_header
    %s8 = sphi 0, %s12
    %p9 = scmp.ge.s32.totalorder %s8, 4
    %s18 = sphi 0, %s20
    %s21 = sphi 0, %s18
    %s22 = sphi 0, %s21
    %s38 = sphi 0, %s22
    %s42 = sphi 0, %s42
    %s44 = sphi 0, %s42
    %s45 = sphi 0, %s44
    %s59 = sphi 0, %s45
    %s65 = sphi 0, %s67
    %s68 = sphi 0, %s65
    %s69 = sphi 0, %s68
    %s85 = sphi 0, %s69
  $region4: #{style_encoder_mlp.15} parent=0 // loop_header_branch
    %11 = sbr.rel (%p9) target = $region8
  $region5: #{style_encoder_mlp.15} parent=0 // loop_body
    %s13 = ssub.s32 %s8, 1
    %s14 = ssub.s32 %s8, 2
    %s15 = sadd.s32 %s8, 1
    %s16 = ssub.s32 %s8, %s15
    %p17 = scmp.eq.s32.totalorder %s16, 0
    %s19 = sadd.s32 %s18, 1
    %s20 = scalar_select %p17, %s18, %s19
    %p23 = pneg %p17
    %p24 = scmp.eq.s32.totalorder %s8, 1
    %p25 = por %p23, %p24
    %p26 = scmp.ne.s32.totalorder %s18, %s21
    %p27 = scmp.eq.s32.totalorder %s8, 0
    %p28 = por %p26, %p27
    %p29 = scmp.ne.s32.totalorder %s18, %s21
    %p30 = scmp.eq.s32.totalorder %s13, 1
    %p31 = por %p29, %p30
    %p32 = scmp.ne.s32.totalorder %s21, %s22
    %p33 = scmp.eq.s32.totalorder %s13, 0
    %p34 = por %p32, %p33
    %p35 = scmp.ne.s32.totalorder %s21, %s22
    %p36 = scmp.eq.s32.totalorder %s14, 1
    %p37 = por %p35, %p36
    %p39 = scmp.ne.s32.totalorder %s22, %s38
    %p40 = scmp.eq.s32.totalorder %s14, 0
    %p41 = por %p39, %p40
    %s43 = sadd.s32 %s42, 1
    %p46 = scmp.eq.s32.totalorder %s8, 1
    %p47 = scmp.ne.s32.totalorder %s42, %s44
    %p48 = scmp.eq.s32.totalorder %s8, 0
    %p49 = por %p47, %p48
    %p50 = scmp.ne.s32.totalorder %s42, %s44
    %p51 = scmp.eq.s32.totalorder %s13, 1
    %p52 = por %p50, %p51
    %p53 = scmp.ne.s32.totalorder %s44, %s45
    %p54 = scmp.eq.s32.totalorder %s13, 0
    %p55 = por %p53, %p54
    %p56 = scmp.ne.s32.totalorder %s44, %s45
    %p57 = scmp.eq.s32.totalorder %s14, 1
    %p58 = por %p56, %p57
    %p60 = scmp.ne.s32.totalorder %s45, %s59
    %p61 = scmp.eq.s32.totalorder %s14, 0
    %p62 = por %p60, %p61
    %s63 = ssub.s32 %s8, %s15
    %p64 = scmp.eq.s32.totalorder %s63, 0
    %s66 = sadd.s32 %s65, 1
    %s67 = scalar_select %p64, %s65, %s66
    %p70 = pneg %p64
    %p71 = scmp.eq.s32.totalorder %s8, 1
    %p72 = por %p70, %p71
    %p73 = scmp.ne.s32.totalorder %s65, %s68
    %p74 = scmp.eq.s32.totalorder %s8, 0
    %p75 = por %p73, %p74
    %p76 = scmp.ne.s32.totalorder %s65, %s68
    %p77 = scmp.eq.s32.totalorder %s13, 1
    %p78 = por %p76, %p77
    %p79 = scmp.ne.s32.totalorder %s68, %s69
    %p80 = scmp.eq.s32.totalorder %s13, 0
    %p81 = por %p79, %p80
    %p82 = scmp.ne.s32.totalorder %s68, %s69
    %p83 = scmp.eq.s32.totalorder %s14, 1
    %p84 = por %p82, %p83
    %p86 = scmp.ne.s32.totalorder %s69, %s85
    %p87 = scmp.eq.s32.totalorder %s14, 0
    %p88 = por %p86, %p87
    %p89 = scmp.le.s32.totalorder 1, %s8
    %p90 = scmp.lt.s32.totalorder %s8, 3
    %p91 = pnand %p89, %p90
    %p92 = pneg %p91
    // Predicated region
    $region9: #{style_encoder_mlp.15} parent=5 // pred_check
      _
    $region10: #{style_encoder_mlp.15} parent=5 // pred_check_branch
      %94 = sbr.rel (%p91) target = $region12
    $region11: #{style_encoder_mlp.15} parent=5 // pred_region
      %s95 = ssub.s32 %s8, 1
      // Predicated region
      $region13: #{style_encoder_mlp.15} parent=11 // pred_check
        %p96 = pneg %p55
      $region14: #{style_encoder_mlp.15} parent=11 // pred_check_branch
        %98 = sbr.rel (%p96) target = $region16
      $region15: #{style_encoder_mlp.15} parent=11 // pred_region
        _
      $region16: #{style_encoder_mlp.15} parent=11 // pred_fallthru
        _
    $region12: #{style_encoder_mlp.15} parent=5 // pred_fallthru
      _
    %p99 = scmp.lt.s32.totalorder %s8, 2
    // Predicated region
    $region17: #{style_encoder_mlp.15} parent=5 // pred_check
      %p100 = pneg %p99
    $region18: #{style_encoder_mlp.15} parent=5 // pred_check_branch
      %102 = sbr.rel (%p100) target = $region20
    $region19: #{style_encoder_mlp.15} parent=5 // pred_region
      // Predicated region
      $region21: #{style_encoder_mlp.15} parent=19 // pred_check
        %p103 = pneg %p28
      $region22: #{style_encoder_mlp.15} parent=19 // pred_check_branch
        %105 = sbr.rel (%p103) target = $region24
      $region23: #{style_encoder_mlp.15} parent=19 // pred_region
        %p106 = scmp.lt.s32.totalorder %s8, 1
        %s107 = scalar_select %p106, %s8, 1
        %s108 = smul.addr %s107, 5
        %s109 = smul.addr %s108, 2
        %s110 = scalar_lea.vmem %s0, %s109
      $region24: #{style_encoder_mlp.15} parent=19 // pred_fallthru
        _
    $region20: #{style_encoder_mlp.15} parent=5 // pred_fallthru
      _
    %p111 = scmp.le.s32.totalorder 1, %s8
    %p112 = scmp.lt.s32.totalorder %s8, 3
    %p113 = pnand %p111, %p112
    %p114 = pneg %p113
    // Predicated region
    $region25: #{style_encoder_mlp.15} parent=5 // pred_check
      _
    $region26: #{style_encoder_mlp.15} parent=5 // pred_check_branch
      %116 = sbr.rel (%p113) target = $region28
    $region27: #{style_encoder_mlp.15} parent=5 // pred_region
      %s117 = ssub.s32 %s8, 1
      %p118 = scmp.lt.s32.totalorder %s13, 1
      %s119 = scalar_select %p118, %s13, 1
      %s120 = smul.addr %s119, 5
      %s121 = smul.addr %s120, 2
      %s122 = scalar_lea.vmem %s0, %s121
      %p123 = pneg %p34
      %p124 = pneg %p31
      %p125 = pneg %p55
      %p126 = pneg %p52
      %p127 = pneg %p81
      %p128 = pneg %p78
      %p129 = scmp.lt.s32.totalorder %s13, 1
      %s130 = scalar_select %p129, %s13, 1
      %s131 = smul.addr %s130, 4
      %s132 = scalar_lea.vmem %s2, %s131
      %p133 = scmp.lt.s32.totalorder %s13, 1
      %s134 = scalar_select %p133, %s13, 1
      %s135 = smul.addr %s134, 5
      %s136 = smul.addr %s135, 2
      %s137 = scalar_lea.vmem %s0, %s136
      %p138 = scmp.lt.s32.totalorder %s13, 1
      %s139 = scalar_select %p138, %s13, 1
      %s140 = smul.addr %s139, 4
      %s141 = scalar_lea.vmem %s2, %s140
      %v143 = vld [vmem:[%s137] sm:$0xff]
      %v144 = vld [vmem:[%s137 + $0x8] sm:$0x3]
      %v145 = vld [vmem:[%s1] sm:$0xf]
      %v146 = vld [vmem:[%s1 + $0x4] sm:$0xf]
      %v147 = vld [vmem:[%s1 + $0x8] sm:$0xf]
      %v148 = vld [vmem:[%s1 + $0xc] sm:$0xf]
      %v149 = vld [vmem:[%s1 + $0x10] sm:$0xf]
      %v150 = vld [vmem:[%s1 + $0x14] sm:$0xf]
      %v151 = vld [vmem:[%s1 + $0x18] sm:$0xf]
      %v152 = vld [vmem:[%s1 + $0x1c] sm:$0xf]
      %v153 = vld [vmem:[%s1 + $0x20] sm:$0xf]
      %v154 = vld [vmem:[%s1 + $0x24] sm:$0xf]
      %v155 = vld [vmem:[%s1 + $0x28] sm:$0xf]
      %v156 = vld [vmem:[%s1 + $0x2c] sm:$0xf]
      %v157 = vld [vmem:[%s1 + $0x30] sm:$0xf]
      %v158 = vld [vmem:[%s1 + $0x34] sm:$0xf]
      %v159 = vld [vmem:[%s1 + $0x38] sm:$0xf]
      %v160 = vld [vmem:[%s1 + $0x3c] sm:$0xf]
      %v161 = vld [vmem:[%s1 + $0x40] sm:$0xf]
      %v162 = vld [vmem:[%s1 + $0x44] sm:$0xf]
      %v163 = vld [vmem:[%s1 + $0x48] sm:$0xf]
      %v164 = vld [vmem:[%s1 + $0x4c] sm:$0xf]
      %v165 = vld [vmem:[%s1 + $0x50] sm:$0xf]
      %v166 = vld [vmem:[%s1 + $0x54] sm:$0xf]
      %v167 = vld [vmem:[%s1 + $0x58] sm:$0xf]
      %v168 = vld [vmem:[%s1 + $0x5c] sm:$0xf]
      %v169 = vld [vmem:[%s1 + $0x60] sm:$0xf]
      %v170 = vld [vmem:[%s1 + $0x64] sm:$0xf]
      %v171 = vld [vmem:[%s1 + $0x68] sm:$0xf]
      %v172 = vld [vmem:[%s1 + $0x6c] sm:$0xf]
      %v173 = vld [vmem:[%s1 + $0x70] sm:$0xf]
      %v174 = vld [vmem:[%s1 + $0x74] sm:$0xf]
      %v175 = vld [vmem:[%s1 + $0x78] sm:$0xf]
      %v176 = vld [vmem:[%s1 + $0x7c] sm:$0xf]
      %v177 = vld [vmem:[%s1 + $0x80] sm:$0xf]
      %v178 = vld [vmem:[%s1 + $0x84] sm:$0xf]
      %v179 = vld [vmem:[%s1 + $0x88] sm:$0xf]
      %v180 = vld [vmem:[%s1 + $0x8c] sm:$0xf]
      %v181 = vld [vmem:[%s1 + $0x90] sm:$0xf]
      %v182 = vld [vmem:[%s1 + $0x94] sm:$0xf]
      %v183 = vld [vmem:[%s1 + $0x98] sm:$0xf]
      %v184 = vld [vmem:[%s1 + $0x9c] sm:$0xf]
      %v185 = vld [vmem:[%s1 + $0xa0] sm:$0xf]
      %v186 = vld [vmem:[%s1 + $0xa4] sm:$0xf]
      %v187 = vld [vmem:[%s1 + $0xa8] sm:$0xf]
      %v188 = vld [vmem:[%s1 + $0xac] sm:$0xf]
      %v189 = vld [vmem:[%s1 + $0xb0] sm:$0xf]
      %v190 = vld [vmem:[%s1 + $0xb4] sm:$0xf]
      %v191 = vld [vmem:[%s1 + $0xb8] sm:$0xf]
      %v192 = vld [vmem:[%s1 + $0xbc] sm:$0xf]
      %v193 = vld [vmem:[%s1 + $0xc0] sm:$0xf]
      %v194 = vld [vmem:[%s1 + $0xc4] sm:$0xf]
      %v195 = vld [vmem:[%s1 + $0xc8] sm:$0xf]
      %v196 = vld [vmem:[%s1 + $0xcc] sm:$0xf]
      %v197 = vld [vmem:[%s1 + $0xd0] sm:$0xf]
      %v198 = vld [vmem:[%s1 + $0xd4] sm:$0xf]
      %v199 = vld [vmem:[%s1 + $0xd8] sm:$0xf]
      %v200 = vld [vmem:[%s1 + $0xdc] sm:$0xf]
      %v201 = vld [vmem:[%s1 + $0xe0] sm:$0xf]
      %v202 = vld [vmem:[%s1 + $0xe4] sm:$0xf]
      %v203 = vld [vmem:[%s1 + $0xe8] sm:$0xf]
      %v204 = vld [vmem:[%s1 + $0xec] sm:$0xf]
      %v205 = vld [vmem:[%s1 + $0xf0] sm:$0xf]
      %v206 = vld [vmem:[%s1 + $0xf4] sm:$0xf]
      %v207 = vld [vmem:[%s1 + $0xf8] sm:$0xf]
      %v208 = vld [vmem:[%s1 + $0xfc] sm:$0xf]
      %v209 = vld [vmem:[%s1 + $0x100] sm:$0xf]
      %v210 = vld [vmem:[%s1 + $0x104] sm:$0xf]
      %v211 = vld [vmem:[%s1 + $0x108] sm:$0xf]
      %v212 = vld [vmem:[%s1 + $0x10c] sm:$0xf]
      %v213 = vld [vmem:[%s1 + $0x110] sm:$0xf]
      %v214 = vld [vmem:[%s1 + $0x114] sm:$0xf]
      %v215 = vld [vmem:[%s1 + $0x118] sm:$0xf]
      %v216 = vld [vmem:[%s1 + $0x11c] sm:$0xf]
      %v219 = vcombine.high %v143, %v143
      %v221 = vunpack.c.l.s4 1983009808
      %v222 = vunpack.c.0.s8 %v221
      %v223 = vlaneseq
      %v224 = vshrl.u32 %v223, 7
      %v225 = vsub.s32 %v222, %v224
      %v226 = vrot.slane %v143, %v225
      %v228 = vunpack.c.l.s4 1983009808
      %v229 = vunpack.c.0.s8 %v228
      %v230 = vlaneseq
      %v231 = vshrl.u32 %v230, 7
      %v232 = vsub.s32 %v229, %v231
      %v233 = vrot.slane %v219, %v232
      %v234 = vcombine.high %v226, %v226
      %v235 = vcombine.high %v233, %v233
      %v237 = vunpack.c.l.s4 1983009808
      %v238 = vunpack.c.0.s8 %v237
      %v239 = vlaneseq
      %v240 = vshrl.u32 %v239, 7
      %v241 = vsub.s32 %v238, %v240
      %v242 = vrot.slane %v144, %v241
      %v319 = vunpack.c.l.b16 %v145
      %v320 = vunpack.c.l.b16 %v146
      %v321 = vunpack.c.l.b16 %v147
      %v322 = vunpack.c.l.b16 %v148
      %v323 = vunpack.c.l.b16 %v149
      %v324 = vunpack.c.l.b16 %v150
      %v325 = vunpack.c.l.b16 %v151
      %v326 = vunpack.c.l.b16 %v152
      %v327 = vunpack.c.l.b16 %v153
      %v328 = vunpack.c.l.b16 %v154
      %v329 = vunpack.c.l.b16 %v155
      %v330 = vunpack.c.l.b16 %v156
      %v331 = vunpack.c.l.b16 %v157
      %v332 = vunpack.c.l.b16 %v158
      %v333 = vunpack.c.l.b16 %v159
      %v334 = vunpack.c.l.b16 %v160
      %v335 = vunpack.c.l.b16 %v161
      %v336 = vunpack.c.l.b16 %v162
      %v337 = vunpack.c.l.b16 %v163
      %v338 = vunpack.c.l.b16 %v164
      %v339 = vunpack.c.l.b16 %v165
      %v340 = vunpack.c.l.b16 %v166
      %v341 = vunpack.c.l.b16 %v167
      %v342 = vunpack.c.l.b16 %v168
      %v343 = vunpack.c.l.b16 %v169
      %v344 = vunpack.c.l.b16 %v170
      %v345 = vunpack.c.l.b16 %v171
      %v346 = vunpack.c.l.b16 %v172
      %v347 = vunpack.c.l.b16 %v173
      %v348 = vunpack.c.l.b16 %v174
      %v349 = vunpack.c.l.b16 %v175
      %v350 = vunpack.c.l.b16 %v176
      %v351 = vunpack.c.l.b16 %v177
      %v352 = vunpack.c.l.b16 %v178
      %v353 = vunpack.c.l.b16 %v179
      %v354 = vunpack.c.l.b16 %v180
      %v355 = vunpack.c.l.b16 %v181
      %v356 = vunpack.c.l.b16 %v182
      %v357 = vunpack.c.l.b16 %v183
      %v358 = vunpack.c.l.b16 %v184
      %v359 = vunpack.c.l.b16 %v185
      %v360 = vunpack.c.l.b16 %v186
      %v361 = vunpack.c.l.b16 %v187
      %v362 = vunpack.c.l.b16 %v188
      %v363 = vunpack.c.l.b16 %v189
      %v364 = vunpack.c.l.b16 %v190
      %v365 = vunpack.c.l.b16 %v191
      %v366 = vunpack.c.l.b16 %v192
      %v367 = vunpack.c.l.b16 %v193
      %v368 = vunpack.c.l.b16 %v194
      %v369 = vunpack.c.l.b16 %v195
      %v370 = vunpack.c.l.b16 %v196
      %v371 = vunpack.c.l.b16 %v197
      %v372 = vunpack.c.l.b16 %v198
      %v373 = vunpack.c.l.b16 %v199
      %v374 = vunpack.c.l.b16 %v200
      %v375 = vunpack.c.l.b16 %v201
      %v376 = vunpack.c.l.b16 %v202
      %v377 = vunpack.c.l.b16 %v203
      %v378 = vunpack.c.l.b16 %v204
      %v379 = vunpack.c.l.b16 %v205
      %v380 = vunpack.c.l.b16 %v206
      %v381 = vunpack.c.l.b16 %v207
      %v382 = vunpack.c.l.b16 %v208
      %v383 = vunpack.c.l.b16 %v209
      %v384 = vunpack.c.l.b16 %v210
      %v385 = vunpack.c.l.b16 %v211
      %v386 = vunpack.c.l.b16 %v212
      %v387 = vunpack.c.l.b16 %v213
      %v388 = vunpack.c.l.b16 %v214
      %v389 = vunpack.c.l.b16 %v215
      %v390 = vunpack.c.l.b16 %v216
      %v391 = vpack.c.b16 %v320, %v319
      %v392 = vpack.c.b16 %v322, %v321
      %v393 = vpack.c.b16 %v324, %v323
      %v394 = vpack.c.b16 %v326, %v325
      %v395 = vpack.c.b16 %v328, %v327
      %v396 = vpack.c.b16 %v330, %v329
      %v397 = vpack.c.b16 %v332, %v331
      %v398 = vpack.c.b16 %v334, %v333
      %v399 = vpack.c.b16 %v336, %v335
      %v400 = vpack.c.b16 %v338, %v337
      %v401 = vpack.c.b16 %v340, %v339
      %v402 = vpack.c.b16 %v342, %v341
      %v403 = vpack.c.b16 %v344, %v343
      %v404 = vpack.c.b16 %v346, %v345
      %v405 = vpack.c.b16 %v348, %v347
      %v406 = vpack.c.b16 %v350, %v349
      %v407 = vpack.c.b16 %v352, %v351
      %v408 = vpack.c.b16 %v354, %v353
      %v409 = vpack.c.b16 %v356, %v355
      %v410 = vpack.c.b16 %v358, %v357
      %v411 = vpack.c.b16 %v360, %v359
      %v412 = vpack.c.b16 %v362, %v361
      %v413 = vpack.c.b16 %v364, %v363
      %v414 = vpack.c.b16 %v366, %v365
      %v415 = vpack.c.b16 %v368, %v367
      %v416 = vpack.c.b16 %v370, %v369
      %v417 = vpack.c.b16 %v372, %v371
      %v418 = vpack.c.b16 %v374, %v373
      %v419 = vpack.c.b16 %v376, %v375
      %v420 = vpack.c.b16 %v378, %v377
      %v421 = vpack.c.b16 %v380, %v379
      %v422 = vpack.c.b16 %v382, %v381
      %v423 = vpack.c.b16 %v384, %v383
      %v424 = vpack.c.b16 %v386, %v385
      %v425 = vpack.c.b16 %v388, %v387
      %v426 = vpack.c.b16 %v390, %v389
      %vm463 = vcmask 523264
      %v465 = vsel %vm463, %v242, 0
      %467 = vmatprep.subr.bf16.mxu0 0
      %468 = vmatpush1.bf16.msra.mxu0 %v391
      %469 = vmatprep.subr.bf16.mxu0 0
      %470 = vmatpush1.bf16.msra.mxu0 %v392
      %471 = vmatprep.subr.bf16.mxu0 0
      %472 = vmatpush1.bf16.msra.mxu0 %v393
      %473 = vmatprep.subr.bf16.mxu0 0
      %474 = vmatpush1.bf16.msra.mxu0 %v394
      %475 = vmatprep.subr.bf16.mxu0 0
      %476 = vmatpush1.bf16.msra.mxu0 %v395
      %477 = vmatprep.subr.bf16.mxu0 0
      %478 = vmatpush1.bf16.msra.mxu0 %v396
      %479 = vmatprep.subr.bf16.mxu0 0
      %480 = vmatpush1.bf16.msra.mxu0 %v397
      %481 = vmatprep.subr.bf16.mxu0 0
      %482 = vmatpush1.bf16.msra.mxu0 %v398
      %483 = vmatprep.subr.bf16.mxu0 0
      %484 = vmatpush1.bf16.msra.mxu0 %v399
      %485 = vmatprep.subr.bf16.mxu0 0
      %486 = vmatpush1.bf16.msra.mxu0 %v400
      %487 = vmatprep.subr.bf16.mxu0 0
      %488 = vmatpush1.bf16.msra.mxu0 %v401
      %489 = vmatprep.subr.bf16.mxu0 0
      %490 = vmatpush1.bf16.msra.mxu0 %v402
      %491 = vmatprep.subr.bf16.mxu0 0
      %492 = vmatpush1.bf16.msra.mxu0 %v403
      %493 = vmatprep.subr.bf16.mxu0 0
      %494 = vmatpush1.bf16.msra.mxu0 %v404
      %495 = vmatprep.subr.bf16.mxu0 0
      %496 = vmatpush1.bf16.msra.mxu0 %v405
      %497 = vmatprep.subr.bf16.mxu0 0
      %498 = vmatpush1.bf16.msra.mxu0 %v406
      %499 = vmatprep.mubr.bf16.mxu0 %v234
      %500 = vmatmul.mubr.bf16.gmra.mrb[0].mxu0 %v226
      %v501 = vpop.f32.mrb[0].mxu0
      %v502 = vadd.f32 0.0, %v501
      %v503 = vpop.f32.mrb[0].mxu0
      %v504 = vpop.f32.mrb[0].mxu0
      %v505 = vpop.f32.mrb[0].mxu0
      %506 = vdwg.mxu0
      %507 = vmatprep.subr.bf16.mxu0 0
      %508 = vmatpush1.bf16.msra.mxu0 %v407
      %509 = vmatprep.subr.bf16.mxu0 0
      %510 = vmatpush1.bf16.msra.mxu0 %v408
      %511 = vmatprep.subr.bf16.mxu0 0
      %512 = vmatpush1.bf16.msra.mxu0 %v409
      %513 = vmatprep.subr.bf16.mxu0 0
      %514 = vmatpush1.bf16.msra.mxu0 %v410
      %515 = vmatprep.subr.bf16.mxu0 0
      %516 = vmatpush1.bf16.msra.mxu0 %v411
      %517 = vmatprep.subr.bf16.mxu0 0
      %518 = vmatpush1.bf16.msra.mxu0 %v412
      %519 = vmatprep.subr.bf16.mxu0 0
      %520 = vmatpush1.bf16.msra.mxu0 %v413
      %521 = vmatprep.subr.bf16.mxu0 0
      %522 = vmatpush1.bf16.msra.mxu0 %v414
      %523 = vmatprep.subr.bf16.mxu0 0
      %524 = vmatpush1.bf16.msra.mxu0 %v415
      %525 = vmatprep.subr.bf16.mxu0 0
      %526 = vmatpush1.bf16.msra.mxu0 %v416
      %527 = vmatprep.subr.bf16.mxu0 0
      %528 = vmatpush1.bf16.msra.mxu0 %v417
      %529 = vmatprep.subr.bf16.mxu0 0
      %530 = vmatpush1.bf16.msra.mxu0 %v418
      %531 = vmatprep.subr.bf16.mxu0 0
      %532 = vmatpush1.bf16.msra.mxu0 %v419
      %533 = vmatprep.subr.bf16.mxu0 0
      %534 = vmatpush1.bf16.msra.mxu0 %v420
      %535 = vmatprep.subr.bf16.mxu0 0
      %536 = vmatpush1.bf16.msra.mxu0 %v421
      %537 = vmatprep.subr.bf16.mxu0 0
      %538 = vmatpush1.bf16.msra.mxu0 %v422
      %539 = vmatprep.mubr.bf16.mxu0 %v235
      %540 = vmatmul.mubr.bf16.gmra.mrb[0].mxu0 %v233
      %v541 = vpop.f32.mrb[0].mxu0
      %v542 = vadd.f32 %v502, %v541
      %v543 = vpop.f32.mrb[0].mxu0
      %v544 = vpop.f32.mrb[0].mxu0
      %v545 = vpop.f32.mrb[0].mxu0
      %546 = vdwg.mxu0
      %547 = vmatprep.subr.bf16.mxu0 0
      %548 = vmatpush1.bf16.msra.mxu0 %v423
      %549 = vmatprep.subr.bf16.mxu0 0
      %550 = vmatpush1.bf16.msra.mxu0 %v424
      %551 = vmatprep.subr.bf16.mxu0 0
      %552 = vmatpush1.bf16.msra.mxu0 %v425
      %553 = vmatprep.subr.bf16.mxu0 0
      %554 = vmatpush1.bf16.msra.mxu0 %v426
      %555 = vmatprep.subr.bf16.mxu0 0
      %556 = vmatpush1.bf16.msra.mxu0 0
      %557 = vmatprep.subr.bf16.mxu0 0
      %558 = vmatpush1.bf16.msra.mxu0 0
      %559 = vmatprep.subr.bf16.mxu0 0
      %560 = vmatpush1.bf16.msra.mxu0 0
      %561 = vmatprep.subr.bf16.mxu0 0
      %562 = vmatpush1.bf16.msra.mxu0 0
      %563 = vmatprep.subr.bf16.mxu0 0
      %564 = vmatpush1.bf16.msra.mxu0 0
      %565 = vmatprep.subr.bf16.mxu0 0
      %566 = vmatpush1.bf16.msra.mxu0 0
      %567 = vmatprep.subr.bf16.mxu0 0
      %568 = vmatpush1.bf16.msra.mxu0 0
      %569 = vmatprep.subr.bf16.mxu0 0
      %570 = vmatpush1.bf16.msra.mxu0 0
      %571 = vmatprep.subr.bf16.mxu0 0
      %572 = vmatpush1.bf16.msra.mxu0 0
      %573 = vmatprep.subr.bf16.mxu0 0
      %574 = vmatpush1.bf16.msra.mxu0 0
      %575 = vmatprep.subr.bf16.mxu0 0
      %576 = vmatpush1.bf16.msra.mxu0 0
      %577 = vmatprep.subr.bf16.mxu0 0
      %578 = vmatpush1.bf16.msra.mxu0 0
      %579 = vmatprep.mubr.bf16.mxu0 0
      %580 = vmatmul.mubr.bf16.gmra.mrb[0].mxu0 %v465
      %v581 = vpop.f32.mrb[0].mxu0
      %v582 = vadd.f32 %v542, %v581
      %v583 = vpop.f32.mrb[0].mxu0
      %v584 = vpop.f32.mrb[0].mxu0
      %v585 = vpop.f32.mrb[0].mxu0
      %586 = vdwg.mxu0
      %vm587 = vcmask 1043456
      %v588 = vsel %vm587, %v582, 0.0
      %v589 = vrot.slane %v588, 4
      %v590 = vadd.f32 %v588, %v589
      %v591 = vrot.slane %v590, 2
      %v592 = vadd.f32 %v590, %v591
      %v593 = vrot.slane %v592, 1
      %v594 = vadd.f32 %v592, %v593
      %v595 = vrcp.pop 4.0
      %v596 = vmul.f32 %v594, %v595
      %v597 = vsub.f32 %v582, %v596
      %v598 = vmul.f32 %v597, %v597
      %v599 = vsel %vm587, %v598, 0.0
      %v600 = vrot.slane %v599, 4
      %v601 = vadd.f32 %v599, %v600
      %v602 = vrot.slane %v601, 2
      %v603 = vadd.f32 %v601, %v602
      %v604 = vrot.slane %v603, 1
      %v605 = vadd.f32 %v603, %v604
      %v606 = vmul.f32 %v605, %v595
      %v607 = vadd.f32 %v606, 1e-05
      %v608 = vrsqrt.pop %v607
      %v609 = vmul.f32 %v597, %v608
      %v610 = vmax.f32 %v609, 0.0
      %611 = vst [vmem:[%s141] sm:$0xf] %v610
      %p612 = scmp.lt.s32.totalorder %s13, 1
      %s613 = scalar_select %p612, %s13, 1
      %s614 = smul.addr %s613, 4
      %s615 = scalar_lea.vmem %s2, %s614
      // Predicated region
      $region29: #{style_encoder_mlp.15} parent=27 // pred_check
        %p616 = pneg %p78
      $region30: #{style_encoder_mlp.15} parent=27 // pred_check_branch
        %618 = sbr.rel (%p616) target = $region32
      $region31: #{style_encoder_mlp.15} parent=27 // pred_region
        _
      $region32: #{style_encoder_mlp.15} parent=27 // pred_fallthru
        _
    $region28: #{style_encoder_mlp.15} parent=5 // pred_fallthru
      _
    %p619 = scmp.le.s32.totalorder 2, %s8
    // Predicated region
    $region33: #{style_encoder_mlp.15} parent=5 // pred_check
      %p620 = pneg %p619
    $region34: #{style_encoder_mlp.15} parent=5 // pred_check_branch
      %622 = sbr.rel (%p620) target = $region36
    $region35: #{style_encoder_mlp.15} parent=5 // pred_region
      %s623 = ssub.s32 %s8, 2
      // Predicated region
      $region37: #{style_encoder_mlp.15} parent=35 // pred_check
        %p624 = pneg %p84
      $region38: #{style_encoder_mlp.15} parent=35 // pred_check_branch
        %626 = sbr.rel (%p624) target = $region40
      $region39: #{style_encoder_mlp.15} parent=35 // pred_region
        %p627 = scmp.lt.s32.totalorder %s14, 1
        %s628 = scalar_select %p627, %s14, 1
        %s629 = smul.addr %s628, 4
        %s630 = scalar_lea.vmem %s2, %s629
      $region40: #{style_encoder_mlp.15} parent=35 // pred_fallthru
        _
    $region36: #{style_encoder_mlp.15} parent=5 // pred_fallthru
      _
  $region6: #{style_encoder_mlp.15} parent=0 // loop_footer
    %s12 = sadd.s32 1, %s8
  $region7: #{style_encoder_mlp.15} parent=0 // loop_footer_branch
    %7 = sbr.rel target = $region3
  $region8: #{style_encoder_mlp.15} parent=0 // loop_exit
    _

// kernel: style_encoder_mlp.16
$region0: #{style_encoder_mlp.16}
  #allocation0 [shape = 'u32[]', space=smem, size = 0x4, offset = 0x4, fixed_abs, tag = 'smem constant byte address 0x4 - core index']
  #allocation1 [shape = 'u32[144,128]{1,0:T(1,128)}', space=vmem, size = 0x12000, scoped, tag = 'internal scratch']
  %s0 = inlined_call_operand.vmem [shape: bf16[2,4,576], index: 0, kind: input, shape index: {}]
  %s1 = inlined_call_operand.vmem [shape: bf16[576,128], index: 1, kind: input, shape index: {}]
  %s2 = inlined_call_operand.vmem [shape: f32[2,4,128], index: 2, kind: input, shape index: {}]
  %s3 = inlined_call_operand.vmem [shape: f32[2,4,128], index: 3, kind: output, shape index: {}]
  %s4 = sld [smem:[#allocation0]]
  $region45: #{style_encoder_mlp.16} parent=0
    _
  %s6 = ssub.s32 1, %s4
  %s7 = scalar_select 0, %s6, %s4
  loop: start=0, step=1, limit=4
  $region2: #{style_encoder_mlp.16} parent=0 // loop_pre_header
    _
  $region3: #{style_encoder_mlp.16} parent=0 // loop_header
    %s9 = sphi 0, %s13
    %p10 = scmp.ge.s32.totalorder %s9, 4
    %s19 = sphi 0, %s21
    %s22 = sphi 0, %s19
    %s23 = sphi 0, %s22
    %s39 = sphi 0, %s23
    %s43 = sphi 0, %s43
    %s45 = sphi 0, %s43
    %s46 = sphi 0, %s45
    %s60 = sphi 0, %s46
    %s66 = sphi 0, %s68
    %s69 = sphi 0, %s66
    %s70 = sphi 0, %s69
    %s86 = sphi 0, %s70
    %s92 = sphi 0, %s94
    %s95 = sphi 0, %s92
    %s96 = sphi 0, %s95
    %s112 = sphi 0, %s96
  $region4: #{style_encoder_mlp.16} parent=0 // loop_header_branch
    %12 = sbr.rel (%p10) target = $region8
  $region5: #{style_encoder_mlp.16} parent=0 // loop_body
    %s14 = ssub.s32 %s9, 1
    %s15 = ssub.s32 %s9, 2
    %s16 = sadd.s32 %s9, 1
    %s17 = ssub.s32 %s9, %s16
    %p18 = scmp.eq.s32.totalorder %s17, 0
    %s20 = sadd.s32 %s19, 1
    %s21 = scalar_select %p18, %s19, %s20
    %p24 = pneg %p18
    %p25 = scmp.eq.s32.totalorder %s9, 1
    %p26 = por %p24, %p25
    %p27 = scmp.ne.s32.totalorder %s19, %s22
    %p28 = scmp.eq.s32.totalorder %s9, 0
    %p29 = por %p27, %p28
    %p30 = scmp.ne.s32.totalorder %s19, %s22
    %p31 = scmp.eq.s32.totalorder %s14, 1
    %p32 = por %p30, %p31
    %p33 = scmp.ne.s32.totalorder %s22, %s23
    %p34 = scmp.eq.s32.totalorder %s14, 0
    %p35 = por %p33, %p34
    %p36 = scmp.ne.s32.totalorder %s22, %s23
    %p37 = scmp.eq.s32.totalorder %s15, 1
    %p38 = por %p36, %p37
    %p40 = scmp.ne.s32.totalorder %s23, %s39
    %p41 = scmp.eq.s32.totalorder %s15, 0
    %p42 = por %p40, %p41
    %s44 = sadd.s32 %s43, 1
    %p47 = scmp.eq.s32.totalorder %s9, 1
    %p48 = scmp.ne.s32.totalorder %s43, %s45
    %p49 = scmp.eq.s32.totalorder %s9, 0
    %p50 = por %p48, %p49
    %p51 = scmp.ne.s32.totalorder %s43, %s45
    %p52 = scmp.eq.s32.totalorder %s14, 1
    %p53 = por %p51, %p52
    %p54 = scmp.ne.s32.totalorder %s45, %s46
    %p55 = scmp.eq.s32.totalorder %s14, 0
    %p56 = por %p54, %p55
    %p57 = scmp.ne.s32.totalorder %s45, %s46
    %p58 = scmp.eq.s32.totalorder %s15, 1
    %p59 = por %p57, %p58
    %p61 = scmp.ne.s32.totalorder %s46, %s60
    %p62 = scmp.eq.s32.totalorder %s15, 0
    %p63 = por %p61, %p62
    %s64 = ssub.s32 %s9, %s16
    %p65 = scmp.eq.s32.totalorder %s64, 0
    %s67 = sadd.s32 %s66, 1
    %s68 = scalar_select %p65, %s66, %s67
    %p71 = pneg %p65
    %p72 = scmp.eq.s32.totalorder %s9, 1
    %p73 = por %p71, %p72
    %p74 = scmp.ne.s32.totalorder %s66, %s69
    %p75 = scmp.eq.s32.totalorder %s9, 0
    %p76 = por %p74, %p75
    %p77 = scmp.ne.s32.totalorder %s66, %s69
    %p78 = scmp.eq.s32.totalorder %s14, 1
    %p79 = por %p77, %p78
    %p80 = scmp.ne.s32.totalorder %s69, %s70
    %p81 = scmp.eq.s32.totalorder %s14, 0
    %p82 = por %p80, %p81
    %p83 = scmp.ne.s32.totalorder %s69, %s70
    %p84 = scmp.eq.s32.totalorder %s15, 1
    %p85 = por %p83, %p84
    %p87 = scmp.ne.s32.totalorder %s70, %s86
    %p88 = scmp.eq.s32.totalorder %s15, 0
    %p89 = por %p87, %p88
    %s90 = ssub.s32 %s9, %s16
    %p91 = scmp.eq.s32.totalorder %s90, 0
    %s93 = sadd.s32 %s92, 1
    %s94 = scalar_select %p91, %s92, %s93
    %p97 = pneg %p91
    %p98 = scmp.eq.s32.totalorder %s9, 1
    %p99 = por %p97, %p98
    %p100 = scmp.ne.s32.totalorder %s92, %s95
    %p101 = scmp.eq.s32.totalorder %s9, 0
    %p102 = por %p100, %p101
    %p103 = scmp.ne.s32.totalorder %s92, %s95
    %p104 = scmp.eq.s32.totalorder %s14, 1
    %p105 = por %p103, %p104
    %p106 = scmp.ne.s32.totalorder %s95, %s96
    %p107 = scmp.eq.s32.totalorder %s14, 0
    %p108 = por %p106, %p107
    %p109 = scmp.ne.s32.totalorder %s95, %s96
    %p110 = scmp.eq.s32.totalorder %s15, 1
    %p111 = por %p109, %p110
    %p113 = scmp.ne.s32.totalorder %s96, %s112
    %p114 = scmp.eq.s32.totalorder %s15, 0
    %p115 = por %p113, %p114
    %p116 = scmp.le.s32.totalorder 1, %s9
    %p117 = scmp.lt.s32.totalorder %s9, 3
    %p118 = pnand %p116, %p117
    %p119 = pneg %p118
    // Predicated region
    $region9: #{style_encoder_mlp.16} parent=5 // pred_check
      _
    $region10: #{style_encoder_mlp.16} parent=5 // pred_check_branch
      %121 = sbr.rel (%p118) target = $region12
    $region11: #{style_encoder_mlp.16} parent=5 // pred_region
      %s122 = ssub.s32 %s9, 1
      // Predicated region
      $region13: #{style_encoder_mlp.16} parent=11 // pred_check
        %p123 = pneg %p56
      $region14: #{style_encoder_mlp.16} parent=11 // pred_check_branch
        %125 = sbr.rel (%p123) target = $region16
      $region15: #{style_encoder_mlp.16} parent=11 // pred_region
        _
      $region16: #{style_encoder_mlp.16} parent=11 // pred_fallthru
        _
    $region12: #{style_encoder_mlp.16} parent=5 // pred_fallthru
      _
    %p126 = scmp.lt.s32.totalorder %s9, 2
    // Predicated region
    $region17: #{style_encoder_mlp.16} parent=5 // pred_check
      %p127 = pneg %p126
    $region18: #{style_encoder_mlp.16} parent=5 // pred_check_branch
      %129 = sbr.rel (%p127) target = $region20
    $region19: #{style_encoder_mlp.16} parent=5 // pred_region
      // Predicated region
      $region21: #{style_encoder_mlp.16} parent=19 // pred_check
        %p130 = pneg %p29
      $region22: #{style_encoder_mlp.16} parent=19 // pred_check_branch
        %132 = sbr.rel (%p130) target = $region24
      $region23: #{style_encoder_mlp.16} parent=19 // pred_region
        %p133 = scmp.lt.s32.totalorder %s9, 1
        %s134 = scalar_select %p133, %s9, 1
        %s135 = smul.addr %s134, 5
        %s136 = smul.addr %s135, 2
        %s137 = scalar_lea.vmem %s0, %s136
      $region24: #{style_encoder_mlp.16} parent=19 // pred_fallthru
        _
      // Predicated region
      $region25: #{style_encoder_mlp.16} parent=19 // pred_check
        %p138 = pneg %p76
      $region26: #{style_encoder_mlp.16} parent=19 // pred_check_branch
        %140 = sbr.rel (%p138) target = $region28
      $region27: #{style_encoder_mlp.16} parent=19 // pred_region
        %p141 = scmp.lt.s32.totalorder %s9, 1
        %s142 = scalar_select %p141, %s9, 1
        %s143 = smul.addr %s142, 4
        %s144 = scalar_lea.vmem %s2, %s143
      $region28: #{style_encoder_mlp.16} parent=19 // pred_fallthru
        _
    $region20: #{style_encoder_mlp.16} parent=5 // pred_fallthru
      _
    %p145 = scmp.le.s32.totalorder 1, %s9
    %p146 = scmp.lt.s32.totalorder %s9, 3
    %p147 = pnand %p145, %p146
    %p148 = pneg %p147
    // Predicated region
    $region29: #{style_encoder_mlp.16} parent=5 // pred_check
      _
    $region30: #{style_encoder_mlp.16} parent=5 // pred_check_branch
      %150 = sbr.rel (%p147) target = $region32
    $region31: #{style_encoder_mlp.16} parent=5 // pred_region
      %s151 = ssub.s32 %s9, 1
      %p152 = scmp.lt.s32.totalorder %s14, 1
      %s153 = scalar_select %p152, %s14, 1
      %s154 = smul.addr %s153, 5
      %s155 = smul.addr %s154, 2
      %s156 = scalar_lea.vmem %s0, %s155
      %p157 = pneg %p35
      %p158 = pneg %p32
      %p159 = pneg %p56
      %p160 = pneg %p53
      %p161 = scmp.lt.s32.totalorder %s14, 1
      %s162 = scalar_select %p161, %s14, 1
      %s163 = smul.addr %s162, 4
      %s164 = scalar_lea.vmem %s2, %s163
      %p165 = pneg %p82
      %p166 = pneg %p79
      %p167 = pneg %p108
      %p168 = pneg %p105
      %p169 = scmp.lt.s32.totalorder %s14, 1
      %s170 = scalar_select %p169, %s14, 1
      %s171 = smul.addr %s170, 4
      %s172 = scalar_lea.vmem %s3, %s171
      %p173 = scmp.lt.s32.totalorder %s14, 1
      %s174 = scalar_select %p173, %s14, 1
      %s175 = smul.addr %s174, 5
      %s176 = smul.addr %s175, 2
      %s177 = scalar_lea.vmem %s0, %s176
      %p178 = scmp.lt.s32.totalorder %s14, 1
      %s179 = scalar_select %p178, %s14, 1
      %s180 = smul.addr %s179, 4
      %s181 = scalar_lea.vmem %s2, %s180
      %p182 = scmp.lt.s32.totalorder %s14, 1
      %s183 = scalar_select %p182, %s14, 1
      %s184 = smul.addr %s183, 4
      %s185 = scalar_lea.vmem %s3, %s184
      %v187 = vld [vmem:[%s177] sm:$0xff]
      %v188 = vld [vmem:[%s177 + $0x8] sm:$0x3]
      %v189 = vld [vmem:[%s1] sm:$0xf]
      %v190 = vld [vmem:[%s1 + $0x4] sm:$0xf]
      %v191 = vld [vmem:[%s1 + $0x8] sm:$0xf]
      %v192 = vld [vmem:[%s1 + $0xc] sm:$0xf]
      %v193 = vld [vmem:[%s1 + $0x10] sm:$0xf]
      %v194 = vld [vmem:[%s1 + $0x14] sm:$0xf]
      %v195 = vld [vmem:[%s1 + $0x18] sm:$0xf]
      %v196 = vld [vmem:[%s1 + $0x1c] sm:$0xf]
      %v197 = vld [vmem:[%s1 + $0x20] sm:$0xf]
      %v198 = vld [vmem:[%s1 + $0x24] sm:$0xf]
      %v199 = vld [vmem:[%s1 + $0x28] sm:$0xf]
      %v200 = vld [vmem:[%s1 + $0x2c] sm:$0xf]
      %v201 = vld [vmem:[%s1 + $0x30] sm:$0xf]
      %v202 = vld [vmem:[%s1 + $0x34] sm:$0xf]
      %v203 = vld [vmem:[%s1 + $0x38] sm:$0xf]
      %v204 = vld [vmem:[%s1 + $0x3c] sm:$0xf]
      %v205 = vld [vmem:[%s1 + $0x40] sm:$0xf]
      %v206 = vld [vmem:[%s1 + $0x44] sm:$0xf]
      %v207 = vld [vmem:[%s1 + $0x48] sm:$0xf]
      %v208 = vld [vmem:[%s1 + $0x4c] sm:$0xf]
      %v209 = vld [vmem:[%s1 + $0x50] sm:$0xf]
      %v210 = vld [vmem:[%s1 + $0x54] sm:$0xf]
      %v211 = vld [vmem:[%s1 + $0x58] sm:$0xf]
      %v212 = vld [vmem:[%s1 + $0x5c] sm:$0xf]
      %v213 = vld [vmem:[%s1 + $0x60] sm:$0xf]
      %v214 = vld [vmem:[%s1 + $0x64] sm:$0xf]
      %v215 = vld [vmem:[%s1 + $0x68] sm:$0xf]
      %v216 = vld [vmem:[%s1 + $0x6c] sm:$0xf]
      %v217 = vld [vmem:[%s1 + $0x70] sm:$0xf]
      %v218 = vld [vmem:[%s1 + $0x74] sm:$0xf]
      %v219 = vld [vmem:[%s1 + $0x78] sm:$0xf]
      %v220 = vld [vmem:[%s1 + $0x7c] sm:$0xf]
      %v221 = vld [vmem:[%s1 + $0x80] sm:$0xf]
      %v222 = vld [vmem:[%s1 + $0x84] sm:$0xf]
      %v223 = vld [vmem:[%s1 + $0x88] sm:$0xf]
      %v224 = vld [vmem:[%s1 + $0x8c] sm:$0xf]
      %v225 = vld [vmem:[%s1 + $0x90] sm:$0xf]
      %v226 = vld [vmem:[%s1 + $0x94] sm:$0xf]
      %v227 = vld [vmem:[%s1 + $0x98] sm:$0xf]
      %v228 = vld [vmem:[%s1 + $0x9c] sm:$0xf]
      %v229 = vld [vmem:[%s1 + $0xa0] sm:$0xf]
      %v230 = vld [vmem:[%s1 + $0xa4] sm:$0xf]
      %v231 = vld [vmem:[%s1 + $0xa8] sm:$0xf]
      %v232 = vld [vmem:[%s1 + $0xac] sm:$0xf]
      %v233 = vld [vmem:[%s1 + $0xb0] sm:$0xf]
      %v234 = vld [vmem:[%s1 + $0xb4] sm:$0xf]
      %v235 = vld [vmem:[%s1 + $0xb8] sm:$0xf]
      %v236 = vld [vmem:[%s1 + $0xbc] sm:$0xf]
      %v237 = vld [vmem:[%s1 + $0xc0] sm:$0xf]
      %v238 = vld [vmem:[%s1 + $0xc4] sm:$0xf]
      %v239 = vld [vmem:[%s1 + $0xc8] sm:$0xf]
      %v240 = vld [vmem:[%s1 + $0xcc] sm:$0xf]
      %v241 = vld [vmem:[%s1 + $0xd0] sm:$0xf]
      %v242 = vld [vmem:[%s1 + $0xd4] sm:$0xf]
      %v243 = vld [vmem:[%s1 + $0xd8] sm:$0xf]
      %v244 = vld [vmem:[%s1 + $0xdc] sm:$0xf]
      %v245 = vld [vmem:[%s1 + $0xe0] sm:$0xf]
      %v246 = vld [vmem:[%s1 + $0xe4] sm:$0xf]
      %v247 = vld [vmem:[%s1 + $0xe8] sm:$0xf]
      %v248 = vld [vmem:[%s1 + $0xec] sm:$0xf]
      %v249 = vld [vmem:[%s1 + $0xf0] sm:$0xf]
      %v250 = vld [vmem:[%s1 + $0xf4] sm:$0xf]
      %v251 = vld [vmem:[%s1 + $0xf8] sm:$0xf]
      %v252 = vld [vmem:[%s1 + $0xfc] sm:$0xf]
      %v253 = vld [vmem:[%s1 + $0x100] sm:$0xf]
      %v254 = vld [vmem:[%s1 + $0x104] sm:$0xf]
      %v255 = vld [vmem:[%s1 + $0x108] sm:$0xf]
      %v256 = vld [vmem:[%s1 + $0x10c] sm:$0xf]
      %v257 = vld [vmem:[%s1 + $0x110] sm:$0xf]
      %v258 = vld [vmem:[%s1 + $0x114] sm:$0xf]
      %v259 = vld [vmem:[%s1 + $0x118] sm:$0xf]
      %v260 = vld [vmem:[%s1 + $0x11c] sm:$0xf]
      %v263 = vcombine.high %v187, %v187
      %v265 = vunpack.c.l.s4 1983009808
      %v266 = vunpack.c.0.s8 %v265
      %v267 = vlaneseq
      %v268 = vshrl.u32 %v267, 7
      %v269 = vsub.s32 %v266, %v268
      %v270 = vrot.slane %v187, %v269
      %v272 = vunpack.c.l.s4 1983009808
      %v273 = vunpack.c.0.s8 %v272
      %v274 = vlaneseq
      %v275 = vshrl.u32 %v274, 7
      %v276 = vsub.s32 %v273, %v275
      %v277 = vrot.slane %v263, %v276
      %v278 = vcombine.high %v270, %v270
      %v279 = vcombine.high %v277, %v277
      %v281 = vunpack.c.l.s4 1983009808
      %v282 = vunpack.c.0.s8 %v281
      %v283 = vlaneseq
      %v284 = vshrl.u32 %v283, 7
      %v285 = vsub.s32 %v282, %v284
      %v286 = vrot.slane %v188, %v285
      %v363 = vunpack.c.l.b16 %v189
      %v364 = vunpack.c.l.b16 %v190
      %v365 = vunpack.c.l.b16 %v191
      %v366 = vunpack.c.l.b16 %v192
      %v367 = vunpack.c.l.b16 %v193
      %v368 = vunpack.c.l.b16 %v194
      %v369 = vunpack.c.l.b16 %v195
      %v370 = vunpack.c.l.b16 %v196
      %v371 = vunpack.c.l.b16 %v197
      %v372 = vunpack.c.l.b16 %v198
      %v373 = vunpack.c.l.b16 %v199
      %v374 = vunpack.c.l.b16 %v200
      %v375 = vunpack.c.l.b16 %v201
      %v376 = vunpack.c.l.b16 %v202
      %v377 = vunpack.c.l.b16 %v203
      %v378 = vunpack.c.l.b16 %v204
      %v379 = vunpack.c.l.b16 %v205
      %v380 = vunpack.c.l.b16 %v206
      %v381 = vunpack.c.l.b16 %v207
      %v382 = vunpack.c.l.b16 %v208
      %v383 = vunpack.c.l.b16 %v209
      %v384 = vunpack.c.l.b16 %v210
      %v385 = vunpack.c.l.b16 %v211
      %v386 = vunpack.c.l.b16 %v212
      %v387 = vunpack.c.l.b16 %v213
      %v388 = vunpack.c.l.b16 %v214
      %v389 = vunpack.c.l.b16 %v215
      %v390 = vunpack.c.l.b16 %v216
      %v391 = vunpack.c.l.b16 %v217
      %v392 = vunpack.c.l.b16 %v218
      %v393 = vunpack.c.l.b16 %v219
      %v394 = vunpack.c.l.b16 %v220
      %v395 = vunpack.c.l.b16 %v221
      %v396 = vunpack.c.l.b16 %v222
      %v397 = vunpack.c.l.b16 %v223
      %v398 = vunpack.c.l.b16 %v224
      %v399 = vunpack.c.l.b16 %v225
      %v400 = vunpack.c.l.b16 %v226
      %v401 = vunpack.c.l.b16 %v227
      %v402 = vunpack.c.l.b16 %v228
      %v403 = vunpack.c.l.b16 %v229
      %v404 = vunpack.c.l.b16 %v230
      %v405 = vunpack.c.l.b16 %v231
      %v406 = vunpack.c.l.b16 %v232
      %v407 = vunpack.c.l.b16 %v233
      %v408 = vunpack.c.l.b16 %v234
      %v409 = vunpack.c.l.b16 %v235
      %v410 = vunpack.c.l.b16 %v236
      %v411 = vunpack.c.l.b16 %v237
      %v412 = vunpack.c.l.b16 %v238
      %v413 = vunpack.c.l.b16 %v239
      %v414 = vunpack.c.l.b16 %v240
      %v415 = vunpack.c.l.b16 %v241
      %v416 = vunpack.c.l.b16 %v242
      %v417 = vunpack.c.l.b16 %v243
      %v418 = vunpack.c.l.b16 %v244
      %v419 = vunpack.c.l.b16 %v245
      %v420 = vunpack.c.l.b16 %v246
      %v421 = vunpack.c.l.b16 %v247
      %v422 = vunpack.c.l.b16 %v248
      %v423 = vunpack.c.l.b16 %v249
      %v424 = vunpack.c.l.b16 %v250
      %v425 = vunpack.c.l.b16 %v251
      %v426 = vunpack.c.l.b16 %v252
      %v427 = vunpack.c.l.b16 %v253
      %v428 = vunpack.c.l.b16 %v254
      %v429 = vunpack.c.l.b16 %v255
      %v430 = vunpack.c.l.b16 %v256
      %v431 = vunpack.c.l.b16 %v257
      %v432 = vunpack.c.l.b16 %v258
      %v433 = vunpack.c.l.b16 %v259
      %v434 = vunpack.c.l.b16 %v260
      %v435 = vpack.c.b16 %v364, %v363
      %v436 = vpack.c.b16 %v366, %v365
      %v437 = vpack.c.b16 %v368, %v367
      %v438 = vpack.c.b16 %v370, %v369
      %v439 = vpack.c.b16 %v372, %v371
      %v440 = vpack.c.b16 %v374, %v373
      %v441 = vpack.c.b16 %v376, %v375
      %v442 = vpack.c.b16 %v378, %v377
      %v443 = vpack.c.b16 %v380, %v379
      %v444 = vpack.c.b16 %v382, %v381
      %v445 = vpack.c.b16 %v384, %v383
      %v446 = vpack.c.b16 %v386, %v385
      %v447 = vpack.c.b16 %v388, %v387
      %v448 = vpack.c.b16 %v390, %v389
      %v449 = vpack.c.b16 %v392, %v391
      %v450 = vpack.c.b16 %v394, %v393
      %v451 = vpack.c.b16 %v396, %v395
      %v452 = vpack.c.b16 %v398, %v397
      %v453 = vpack.c.b16 %v400, %v399
      %v454 = vpack.c.b16 %v402, %v401
      %v455 = vpack.c.b16 %v404, %v403
      %v456 = vpack.c.b16 %v406, %v405
      %v457 = vpack.c.b16 %v408, %v407
      %v458 = vpack.c.b16 %v410, %v409
      %v459 = vpack.c.b16 %v412, %v411
      %v460 = vpack.c.b16 %v414, %v413
      %v461 = vpack.c.b16 %v416, %v415
      %v462 = vpack.c.b16 %v418, %v417
      %v463 = vpack.c.b16 %v420, %v419
      %v464 = vpack.c.b16 %v422, %v421
      %v465 = vpack.c.b16 %v424, %v423
      %v466 = vpack.c.b16 %v426, %v425
      %v467 = vpack.c.b16 %v428, %v427
      %v468 = vpack.c.b16 %v430, %v429
      %v469 = vpack.c.b16 %v432, %v431
      %v470 = vpack.c.b16 %v434, %v433
      %vm507 = vcmask 523264
      %v509 = vsel %vm507, %v286, 0
      %511 = vmatprep.subr.bf16.mxu0 0
      %512 = vmatpush1.bf16.msra.mxu0 %v435
      %513 = vmatprep.subr.bf16.mxu0 0
      %514 = vmatpush1.bf16.msra.mxu0 %v436
      %515 = vmatprep.subr.bf16.mxu0 0
      %516 = vmatpush1.bf16.msra.mxu0 %v437
      %517 = vmatprep.subr.bf16.mxu0 0
      %518 = vmatpush1.bf16.msra.mxu0 %v438
      %519 = vmatprep.subr.bf16.mxu0 0
      %520 = vmatpush1.bf16.msra.mxu0 %v439
      %521 = vmatprep.subr.bf16.mxu0 0
      %522 = vmatpush1.bf16.msra.mxu0 %v440
      %523 = vmatprep.subr.bf16.mxu0 0
      %524 = vmatpush1.bf16.msra.mxu0 %v441
      %525 = vmatprep.subr.bf16.mxu0 0
      %526 = vmatpush1.bf16.msra.mxu0 %v442
      %527 = vmatprep.subr.bf16.mxu0 0
      %528 = vmatpush1.bf16.msra.mxu0 %v443
      %529 = vmatprep.subr.bf16.mxu0 0
      %530 = vmatpush1.bf16.msra.mxu0 %v444
      %531 = vmatprep.subr.bf16.mxu0 0
      %532 = vmatpush1.bf16.msra.mxu0 %v445
      %533 = vmatprep.subr.bf16.mxu0 0
      %534 = vmatpush1.bf16.msra.mxu0 %v446
      %535 = vmatprep.subr.bf16.mxu0 0
      %536 = vmatpush1.bf16.msra.mxu0 %v447
      %537 = vmatprep.subr.bf16.mxu0 0
      %538 = vmatpush1.bf16.msra.mxu0 %v448
      %539 = vmatprep.subr.bf16.mxu0 0
      %540 = vmatpush1.bf16.msra.mxu0 %v449
      %541 = vmatprep.subr.bf16.mxu0 0
      %542 = vmatpush1.bf16.msra.mxu0 %v450
      %543 = vmatprep.mubr.bf16.mxu0 %v278
      %544 = vmatmul.mubr.bf16.gmra.mrb[0].mxu0 %v270
      %v545 = vpop.f32.mrb[0].mxu0
      %v546 = vadd.f32 0.0, %v545
      %v547 = vpop.f32.mrb[0].mxu0
      %v548 = vpop.f32.mrb[0].mxu0
      %v549 = vpop.f32.mrb[0].mxu0
      %550 = vdwg.mxu0
      %551 = vmatprep.subr.bf16.mxu0 0
      %552 = vmatpush1.bf16.msra.mxu0 %v451
      %553 = vmatprep.subr.bf16.mxu0 0
      %554 = vmatpush1.bf16.msra.mxu0 %v452
      %555 = vmatprep.subr.bf16.mxu0 0
      %556 = vmatpush1.bf16.msra.mxu0 %v453
      %557 = vmatprep.subr.bf16.mxu0 0
      %558 = vmatpush1.bf16.msra.mxu0 %v454
      %559 = vmatprep.subr.bf16.mxu0 0
      %560 = vmatpush1.bf16.msra.mxu0 %v455
      %561 = vmatprep.subr.bf16.mxu0 0
      %562 = vmatpush1.bf16.msra.mxu0 %v456
      %563 = vmatprep.subr.bf16.mxu0 0
      %564 = vmatpush1.bf16.msra.mxu0 %v457
      %565 = vmatprep.subr.bf16.mxu0 0
      %566 = vmatpush1.bf16.msra.mxu0 %v458
      %567 = vmatprep.subr.bf16.mxu0 0
      %568 = vmatpush1.bf16.msra.mxu0 %v459
      %569 = vmatprep.subr.bf16.mxu0 0
      %570 = vmatpush1.bf16.msra.mxu0 %v460
      %571 = vmatprep.subr.bf16.mxu0 0
      %572 = vmatpush1.bf16.msra.mxu0 %v461
      %573 = vmatprep.subr.bf16.mxu0 0
      %574 = vmatpush1.bf16.msra.mxu0 %v462
      %575 = vmatprep.subr.bf16.mxu0 0
      %576 = vmatpush1.bf16.msra.mxu0 %v463
      %577 = vmatprep.subr.bf16.mxu0 0
      %578 = vmatpush1.bf16.msra.mxu0 %v464
      %579 = vmatprep.subr.bf16.mxu0 0
      %580 = vmatpush1.bf16.msra.mxu0 %v465
      %581 = vmatprep.subr.bf16.mxu0 0
      %582 = vmatpush1.bf16.msra.mxu0 %v466
      %583 = vmatprep.mubr.bf16.mxu0 %v279
      %584 = vmatmul.mubr.bf16.gmra.mrb[0].mxu0 %v277
      %v585 = vpop.f32.mrb[0].mxu0
      %v586 = vadd.f32 %v546, %v585
      %v587 = vpop.f32.mrb[0].mxu0
      %v588 = vpop.f32.mrb[0].mxu0
      %v589 = vpop.f32.mrb[0].mxu0
      %590 = vdwg.mxu0
      %591 = vmatprep.subr.bf16.mxu0 0
      %592 = vmatpush1.bf16.msra.mxu0 %v467
      %593 = vmatprep.subr.bf16.mxu0 0
      %594 = vmatpush1.bf16.msra.mxu0 %v468
      %595 = vmatprep.subr.bf16.mxu0 0
      %596 = vmatpush1.bf16.msra.mxu0 %v469
      %597 = vmatprep.subr.bf16.mxu0 0
      %598 = vmatpush1.bf16.msra.mxu0 %v470
      %599 = vmatprep.subr.bf16.mxu0 0
      %600 = vmatpush1.bf16.msra.mxu0 0
      %601 = vmatprep.subr.bf16.mxu0 0
      %602 = vmatpush1.bf16.msra.mxu0 0
      %603 = vmatprep.subr.bf16.mxu0 0
      %604 = vmatpush1.bf16.msra.mxu0 0
      %605 = vmatprep.subr.bf16.mxu0 0
      %606 = vmatpush1.bf16.msra.mxu0 0
      %607 = vmatprep.subr.bf16.mxu0 0
      %608 = vmatpush1.bf16.msra.mxu0 0
      %609 = vmatprep.subr.bf16.mxu0 0
      %610 = vmatpush1.bf16.msra.mxu0 0
      %611 = vmatprep.subr.bf16.mxu0 0
      %612 = vmatpush1.bf16.msra.mxu0 0
      %613 = vmatprep.subr.bf16.mxu0 0
      %614 = vmatpush1.bf16.msra.mxu0 0
      %615 = vmatprep.subr.bf16.mxu0 0
      %616 = vmatpush1.bf16.msra.mxu0 0
      %617 = vmatprep.subr.bf16.mxu0 0
      %618 = vmatpush1.bf16.msra.mxu0 0
      %619 = vmatprep.subr.bf16.mxu0 0
      %620 = vmatpush1.bf16.msra.mxu0 0
      %621 = vmatprep.subr.bf16.mxu0 0
      %622 = vmatpush1.bf16.msra.mxu0 0
      %623 = vmatprep.mubr.bf16.mxu0 0
      %624 = vmatmul.mubr.bf16.gmra.mrb[0].mxu0 %v509
      %v625 = vpop.f32.mrb[0].mxu0
      %v626 = vadd.f32 %v586, %v625
      %v627 = vpop.f32.mrb[0].mxu0
      %v628 = vpop.f32.mrb[0].mxu0
      %v629 = vpop.f32.mrb[0].mxu0
      %630 = vdwg.mxu0
      %vm631 = vcmask 1043456
      %v632 = vsel %vm631, %v626, 0.0
      %v633 = vrot.slane %v632, 4
      %v634 = vadd.f32 %v632, %v633
      %v635 = vrot.slane %v634, 2
      %v636 = vadd.f32 %v634, %v635
      %v637 = vrot.slane %v636, 1
      %v638 = vadd.f32 %v636, %v637
      %v639 = vrcp.pop 4.0
      %v640 = vmul.f32 %v638, %v639
      %v641 = vsub.f32 %v626, %v640
      %v642 = vmul.f32 %v641, %v641
      %v643 = vsel %vm631, %v642, 0.0
      %v644 = vrot.slane %v643, 4
      %v645 = vadd.f32 %v643, %v644
      %v646 = vrot.slane %v645, 2
      %v647 = vadd.f32 %v645, %v646
      %v648 = vrot.slane %v647, 1
      %v649 = vadd.f32 %v647, %v648
      %v650 = vmul.f32 %v649, %v639
      %v651 = vadd.f32 %v650, 1e-05
      %v652 = vrsqrt.pop %v651
      %v653 = vmul.f32 %v641, %v652
      %v654 = vld [vmem:[%s181] sm:$0xf]
      %v655 = vadd.f32 %v653, %v654
      %656 = vst [vmem:[%s185] sm:$0xf] %v655
      %p657 = scmp.lt.s32.totalorder %s14, 1
      %s658 = scalar_select %p657, %s14, 1
      %s659 = smul.addr %s658, 4
      %s660 = scalar_lea.vmem %s3, %s659
      // Predicated region
      $region33: #{style_encoder_mlp.16} parent=31 // pred_check
        %p661 = pneg %p105
      $region34: #{style_encoder_mlp.16} parent=31 // pred_check_branch
        %663 = sbr.rel (%p661) target = $region36
      $region35: #{style_encoder_mlp.16} parent=31 // pred_region
        _
      $region36: #{style_encoder_mlp.16} parent=31 // pred_fallthru
        _
    $region32: #{style_encoder_mlp.16} parent=5 // pred_fallthru
      _
    %p664 = scmp.le.s32.totalorder 2, %s9
    // Predicated region
    $region37: #{style_encoder_mlp.16} parent=5 // pred_check
      %p665 = pneg %p664
    $region38: #{style_encoder_mlp.16} parent=5 // pred_check_branch
      %667 = sbr.rel (%p665) target = $region40
    $region39: #{style_encoder_mlp.16} parent=5 // pred_region
      %s668 = ssub.s32 %s9, 2
      // Predicated region
      $region41: #{style_encoder_mlp.16} parent=39 // pred_check
        %p669 = pneg %p111
      $region42: #{style_encoder_mlp.16} parent=39 // pred_check_branch
        %671 = sbr.rel (%p669) target = $region44
      $region43: #{style_encoder_mlp.16} parent=39 // pred_region
        %p672 = scmp.lt.s32.totalorder %s15, 1
        %s673 = scalar_select %p672, %s15, 1
        %s674 = smul.addr %s673, 4
        %s675 = scalar_lea.vmem %s3, %s674
      $region44: #{style_encoder_mlp.16} parent=39 // pred_fallthru
        _
    $region40: #{style_encoder_mlp.16} parent=5 // pred_fallthru
      _
  $region6: #{style_encoder_mlp.16} parent=0 // loop_footer
    %s13 = sadd.s32 1, %s9
  $region7: #{style_encoder_mlp.16} parent=0 // loop_footer_branch
    %8 = sbr.rel target = $region3
  $region8: #{style_encoder_mlp.16} parent=0 // loop_exit
    _

// kernel: style_encoder_mlp.18
$region0: #{style_encoder_mlp.18}
  #allocation0 [shape = 'u32[]', space=smem, size = 0x4, offset = 0x4, fixed_abs, tag = 'smem constant byte address 0x4 - core index']
  #allocation1 [shape = 'u32[144,128]{1,0:T(1,128)}', space=vmem, size = 0x12000, scoped, tag = 'internal scratch']
  %s0 = inlined_call_operand.vmem [shape: bf16[2,4,576], index: 0, kind: input, shape index: {}]
  %s1 = inlined_call_operand.vmem [shape: bf16[576,128], index: 1, kind: input, shape index: {}]
  %s2 = inlined_call_operand.vmem [shape: f32[2,4,128], index: 2, kind: input, shape index: {}]
  %s3 = inlined_call_operand.vmem [shape: f32[2,1,128], index: 3, kind: output, shape index: {}]
  %s4 = sld [smem:[#allocation0]]
  $region45: #{style_encoder_mlp.18} parent=0
    _
  %s6 = ssub.s32 1, %s4
  %s7 = scalar_select 0, %s6, %s4
  loop: start=0, step=1, limit=4
  $region2: #{style_encoder_mlp.18} parent=0 // loop_pre_header
    _
  $region3: #{style_encoder_mlp.18} parent=0 // loop_header
    %s9 = sphi 0, %s13
    %p10 = scmp.ge.s32.totalorder %s9, 4
    %s19 = sphi 0, %s21
    %s22 = sphi 0, %s19
    %s23 = sphi 0, %s22
    %s39 = sphi 0, %s23
    %s43 = sphi 0, %s43
    %s45 = sphi 0, %s43
    %s46 = sphi 0, %s45
    %s60 = sphi 0, %s46
    %s66 = sphi 0, %s68
    %s69 = sphi 0, %s66
    %s70 = sphi 0, %s69
    %s86 = sphi 0, %s70
    %s92 = sphi 0, %s94
    %s95 = sphi 0, %s92
    %s96 = sphi 0, %s95
    %s112 = sphi 0, %s96
  $region4: #{style_encoder_mlp.18} parent=0 // loop_header_branch
    %12 = sbr.rel (%p10) target = $region8
  $region5: #{style_encoder_mlp.18} parent=0 // loop_body
    %s14 = ssub.s32 %s9, 1
    %s15 = ssub.s32 %s9, 2
    %s16 = sadd.s32 %s9, 1
    %s17 = ssub.s32 %s9, %s16
    %p18 = scmp.eq.s32.totalorder %s17, 0
    %s20 = sadd.s32 %s19, 1
    %s21 = scalar_select %p18, %s19, %s20
    %p24 = pneg %p18
    %p25 = scmp.eq.s32.totalorder %s9, 1
    %p26 = por %p24, %p25
    %p27 = scmp.ne.s32.totalorder %s19, %s22
    %p28 = scmp.eq.s32.totalorder %s9, 0
    %p29 = por %p27, %p28
    %p30 = scmp.ne.s32.totalorder %s19, %s22
    %p31 = scmp.eq.s32.totalorder %s14, 1
    %p32 = por %p30, %p31
    %p33 = scmp.ne.s32.totalorder %s22, %s23
    %p34 = scmp.eq.s32.totalorder %s14, 0
    %p35 = por %p33, %p34
    %p36 = scmp.ne.s32.totalorder %s22, %s23
    %p37 = scmp.eq.s32.totalorder %s15, 1
    %p38 = por %p36, %p37
    %p40 = scmp.ne.s32.totalorder %s23, %s39
    %p41 = scmp.eq.s32.totalorder %s15, 0
    %p42 = por %p40, %p41
    %s44 = sadd.s32 %s43, 1
    %p47 = scmp.eq.s32.totalorder %s9, 1
    %p48 = scmp.ne.s32.totalorder %s43, %s45
    %p49 = scmp.eq.s32.totalorder %s9, 0
    %p50 = por %p48, %p49
    %p51 = scmp.ne.s32.totalorder %s43, %s45
    %p52 = scmp.eq.s32.totalorder %s14, 1
    %p53 = por %p51, %p52
    %p54 = scmp.ne.s32.totalorder %s45, %s46
    %p55 = scmp.eq.s32.totalorder %s14, 0
    %p56 = por %p54, %p55
    %p57 = scmp.ne.s32.totalorder %s45, %s46
    %p58 = scmp.eq.s32.totalorder %s15, 1
    %p59 = por %p57, %p58
    %p61 = scmp.ne.s32.totalorder %s46, %s60
    %p62 = scmp.eq.s32.totalorder %s15, 0
    %p63 = por %p61, %p62
    %s64 = ssub.s32 %s9, %s16
    %p65 = scmp.eq.s32.totalorder %s64, 0
    %s67 = sadd.s32 %s66, 1
    %s68 = scalar_select %p65, %s66, %s67
    %p71 = pneg %p65
    %p72 = scmp.eq.s32.totalorder %s9, 1
    %p73 = por %p71, %p72
    %p74 = scmp.ne.s32.totalorder %s66, %s69
    %p75 = scmp.eq.s32.totalorder %s9, 0
    %p76 = por %p74, %p75
    %p77 = scmp.ne.s32.totalorder %s66, %s69
    %p78 = scmp.eq.s32.totalorder %s14, 1
    %p79 = por %p77, %p78
    %p80 = scmp.ne.s32.totalorder %s69, %s70
    %p81 = scmp.eq.s32.totalorder %s14, 0
    %p82 = por %p80, %p81
    %p83 = scmp.ne.s32.totalorder %s69, %s70
    %p84 = scmp.eq.s32.totalorder %s15, 1
    %p85 = por %p83, %p84
    %p87 = scmp.ne.s32.totalorder %s70, %s86
    %p88 = scmp.eq.s32.totalorder %s15, 0
    %p89 = por %p87, %p88
    %s90 = ssub.s32 %s9, %s16
    %p91 = scmp.eq.s32.totalorder %s90, 0
    %s93 = sadd.s32 %s92, 1
    %s94 = scalar_select %p91, %s92, %s93
    %p97 = pneg %p91
    %p98 = scmp.eq.s32.totalorder %s9, 1
    %p99 = por %p97, %p98
    %p100 = scmp.ne.s32.totalorder %s92, %s95
    %p101 = scmp.eq.s32.totalorder %s9, 0
    %p102 = por %p100, %p101
    %p103 = scmp.ne.s32.totalorder %s92, %s95
    %p104 = scmp.eq.s32.totalorder %s14, 1
    %p105 = por %p103, %p104
    %p106 = scmp.ne.s32.totalorder %s95, %s96
    %p107 = scmp.eq.s32.totalorder %s14, 0
    %p108 = por %p106, %p107
    %p109 = scmp.ne.s32.totalorder %s95, %s96
    %p110 = scmp.eq.s32.totalorder %s15, 1
    %p111 = por %p109, %p110
    %p113 = scmp.ne.s32.totalorder %s96, %s112
    %p114 = scmp.eq.s32.totalorder %s15, 0
    %p115 = por %p113, %p114
    %p116 = scmp.le.s32.totalorder 1, %s9
    %p117 = scmp.lt.s32.totalorder %s9, 3
    %p118 = pnand %p116, %p117
    %p119 = pneg %p118
    // Predicated region
    $region9: #{style_encoder_mlp.18} parent=5 // pred_check
      _
    $region10: #{style_encoder_mlp.18} parent=5 // pred_check_branch
      %121 = sbr.rel (%p118) target = $region12
    $region11: #{style_encoder_mlp.18} parent=5 // pred_region
      %s122 = ssub.s32 %s9, 1
      // Predicated region
      $region13: #{style_encoder_mlp.18} parent=11 // pred_check
        %p123 = pneg %p56
      $region14: #{style_encoder_mlp.18} parent=11 // pred_check_branch
        %125 = sbr.rel (%p123) target = $region16
      $region15: #{style_encoder_mlp.18} parent=11 // pred_region
        _
      $region16: #{style_encoder_mlp.18} parent=11 // pred_fallthru
        _
    $region12: #{style_encoder_mlp.18} parent=5 // pred_fallthru
      _
    %p126 = scmp.lt.s32.totalorder %s9, 2
    // Predicated region
    $region17: #{style_encoder_mlp.18} parent=5 // pred_check
      %p127 = pneg %p126
    $region18: #{style_encoder_mlp.18} parent=5 // pred_check_branch
      %129 = sbr.rel (%p127) target = $region20
    $region19: #{style_encoder_mlp.18} parent=5 // pred_region
      // Predicated region
      $region21: #{style_encoder_mlp.18} parent=19 // pred_check
        %p130 = pneg %p29
      $region22: #{style_encoder_mlp.18} parent=19 // pred_check_branch
        %132 = sbr.rel (%p130) target = $region24
      $region23: #{style_encoder_mlp.18} parent=19 // pred_region
        %p133 = scmp.lt.s32.totalorder %s9, 1
        %s134 = scalar_select %p133, %s9, 1
        %s135 = smul.addr %s134, 5
        %s136 = smul.addr %s135, 2
        %s137 = scalar_lea.vmem %s0, %s136
      $region24: #{style_encoder_mlp.18} parent=19 // pred_fallthru
        _
      // Predicated region
      $region25: #{style_encoder_mlp.18} parent=19 // pred_check
        %p138 = pneg %p76
      $region26: #{style_encoder_mlp.18} parent=19 // pred_check_branch
        %140 = sbr.rel (%p138) target = $region28
      $region27: #{style_encoder_mlp.18} parent=19 // pred_region
        %p141 = scmp.lt.s32.totalorder %s9, 1
        %s142 = scalar_select %p141, %s9, 1
        %s143 = smul.addr %s142, 4
        %s144 = scalar_lea.vmem %s2, %s143
      $region28: #{style_encoder_mlp.18} parent=19 // pred_fallthru
        _
    $region20: #{style_encoder_mlp.18} parent=5 // pred_fallthru
      _
    %p145 = scmp.le.s32.totalorder 1, %s9
    %p146 = scmp.lt.s32.totalorder %s9, 3
    %p147 = pnand %p145, %p146
    %p148 = pneg %p147
    // Predicated region
    $region29: #{style_encoder_mlp.18} parent=5 // pred_check
      _
    $region30: #{style_encoder_mlp.18} parent=5 // pred_check_branch
      %150 = sbr.rel (%p147) target = $region32
    $region31: #{style_encoder_mlp.18} parent=5 // pred_region
      %s151 = ssub.s32 %s9, 1
      %p152 = scmp.lt.s32.totalorder %s14, 1
      %s153 = scalar_select %p152, %s14, 1
      %s154 = smul.addr %s153, 5
      %s155 = smul.addr %s154, 2
      %s156 = scalar_lea.vmem %s0, %s155
      %p157 = pneg %p35
      %p158 = pneg %p32
      %p159 = pneg %p56
      %p160 = pneg %p53
      %p161 = scmp.lt.s32.totalorder %s14, 1
      %s162 = scalar_select %p161, %s14, 1
      %s163 = smul.addr %s162, 4
      %s164 = scalar_lea.vmem %s2, %s163
      %p165 = pneg %p82
      %p166 = pneg %p79
      %p167 = pneg %p108
      %p168 = pneg %p105
      %p169 = scmp.lt.s32.totalorder %s14, 1
      %s170 = scalar_select %p169, %s14, 1
      %s171 = scalar_lea.vmem %s3, %s170
      %p172 = scmp.lt.s32.totalorder %s14, 1
      %s173 = scalar_select %p172, %s14, 1
      %s174 = smul.addr %s173, 5
      %s175 = smul.addr %s174, 2
      %s176 = scalar_lea.vmem %s0, %s175
      %p177 = scmp.lt.s32.totalorder %s14, 1
      %s178 = scalar_select %p177, %s14, 1
      %s179 = smul.addr %s178, 4
      %s180 = scalar_lea.vmem %s2, %s179
      %p181 = scmp.lt.s32.totalorder %s14, 1
      %s182 = scalar_select %p181, %s14, 1
      %s183 = scalar_lea.vmem %s3, %s182
      %v185 = vld [vmem:[%s176] sm:$0xff]
      %v186 = vld [vmem:[%s176 + $0x8] sm:$0x3]
      %v187 = vld [vmem:[%s1] sm:$0xf]
      %v188 = vld [vmem:[%s1 + $0x4] sm:$0xf]
      %v189 = vld [vmem:[%s1 + $0x8] sm:$0xf]
      %v190 = vld [vmem:[%s1 + $0xc] sm:$0xf]
      %v191 = vld [vmem:[%s1 + $0x10] sm:$0xf]
      %v192 = vld [vmem:[%s1 + $0x14] sm:$0xf]
      %v193 = vld [vmem:[%s1 + $0x18] sm:$0xf]
      %v194 = vld [vmem:[%s1 + $0x1c] sm:$0xf]
      %v195 = vld [vmem:[%s1 + $0x20] sm:$0xf]
      %v196 = vld [vmem:[%s1 + $0x24] sm:$0xf]
      %v197 = vld [vmem:[%s1 + $0x28] sm:$0xf]
      %v198 = vld [vmem:[%s1 + $0x2c] sm:$0xf]
      %v199 = vld [vmem:[%s1 + $0x30] sm:$0xf]
      %v200 = vld [vmem:[%s1 + $0x34] sm:$0xf]
      %v201 = vld [vmem:[%s1 + $0x38] sm:$0xf]
      %v202 = vld [vmem:[%s1 + $0x3c] sm:$0xf]
      %v203 = vld [vmem:[%s1 + $0x40] sm:$0xf]
      %v204 = vld [vmem:[%s1 + $0x44] sm:$0xf]
      %v205 = vld [vmem:[%s1 + $0x48] sm:$0xf]
      %v206 = vld [vmem:[%s1 + $0x4c] sm:$0xf]
      %v207 = vld [vmem:[%s1 + $0x50] sm:$0xf]
      %v208 = vld [vmem:[%s1 + $0x54] sm:$0xf]
      %v209 = vld [vmem:[%s1 + $0x58] sm:$0xf]
      %v210 = vld [vmem:[%s1 + $0x5c] sm:$0xf]
      %v211 = vld [vmem:[%s1 + $0x60] sm:$0xf]
      %v212 = vld [vmem:[%s1 + $0x64] sm:$0xf]
      %v213 = vld [vmem:[%s1 + $0x68] sm:$0xf]
      %v214 = vld [vmem:[%s1 + $0x6c] sm:$0xf]
      %v215 = vld [vmem:[%s1 + $0x70] sm:$0xf]
      %v216 = vld [vmem:[%s1 + $0x74] sm:$0xf]
      %v217 = vld [vmem:[%s1 + $0x78] sm:$0xf]
      %v218 = vld [vmem:[%s1 + $0x7c] sm:$0xf]
      %v219 = vld [vmem:[%s1 + $0x80] sm:$0xf]
      %v220 = vld [vmem:[%s1 + $0x84] sm:$0xf]
      %v221 = vld [vmem:[%s1 + $0x88] sm:$0xf]
      %v222 = vld [vmem:[%s1 + $0x8c] sm:$0xf]
      %v223 = vld [vmem:[%s1 + $0x90] sm:$0xf]
      %v224 = vld [vmem:[%s1 + $0x94] sm:$0xf]
      %v225 = vld [vmem:[%s1 + $0x98] sm:$0xf]
      %v226 = vld [vmem:[%s1 + $0x9c] sm:$0xf]
      %v227 = vld [vmem:[%s1 + $0xa0] sm:$0xf]
      %v228 = vld [vmem:[%s1 + $0xa4] sm:$0xf]
      %v229 = vld [vmem:[%s1 + $0xa8] sm:$0xf]
      %v230 = vld [vmem:[%s1 + $0xac] sm:$0xf]
      %v231 = vld [vmem:[%s1 + $0xb0] sm:$0xf]
      %v232 = vld [vmem:[%s1 + $0xb4] sm:$0xf]
      %v233 = vld [vmem:[%s1 + $0xb8] sm:$0xf]
      %v234 = vld [vmem:[%s1 + $0xbc] sm:$0xf]
      %v235 = vld [vmem:[%s1 + $0xc0] sm:$0xf]
      %v236 = vld [vmem:[%s1 + $0xc4] sm:$0xf]
      %v237 = vld [vmem:[%s1 + $0xc8] sm:$0xf]
      %v238 = vld [vmem:[%s1 + $0xcc] sm:$0xf]
      %v239 = vld [vmem:[%s1 + $0xd0] sm:$0xf]
      %v240 = vld [vmem:[%s1 + $0xd4] sm:$0xf]
      %v241 = vld [vmem:[%s1 + $0xd8] sm:$0xf]
      %v242 = vld [vmem:[%s1 + $0xdc] sm:$0xf]
      %v243 = vld [vmem:[%s1 + $0xe0] sm:$0xf]
      %v244 = vld [vmem:[%s1 + $0xe4] sm:$0xf]
      %v245 = vld [vmem:[%s1 + $0xe8] sm:$0xf]
      %v246 = vld [vmem:[%s1 + $0xec] sm:$0xf]
      %v247 = vld [vmem:[%s1 + $0xf0] sm:$0xf]
      %v248 = vld [vmem:[%s1 + $0xf4] sm:$0xf]
      %v249 = vld [vmem:[%s1 + $0xf8] sm:$0xf]
      %v250 = vld [vmem:[%s1 + $0xfc] sm:$0xf]
      %v251 = vld [vmem:[%s1 + $0x100] sm:$0xf]
      %v252 = vld [vmem:[%s1 + $0x104] sm:$0xf]
      %v253 = vld [vmem:[%s1 + $0x108] sm:$0xf]
      %v254 = vld [vmem:[%s1 + $0x10c] sm:$0xf]
      %v255 = vld [vmem:[%s1 + $0x110] sm:$0xf]
      %v256 = vld [vmem:[%s1 + $0x114] sm:$0xf]
      %v257 = vld [vmem:[%s1 + $0x118] sm:$0xf]
      %v258 = vld [vmem:[%s1 + $0x11c] sm:$0xf]
      %v261 = vcombine.high %v185, %v185
      %v263 = vunpack.c.l.s4 1983009808
      %v264 = vunpack.c.0.s8 %v263
      %v265 = vlaneseq
      %v266 = vshrl.u32 %v265, 7
      %v267 = vsub.s32 %v264, %v266
      %v268 = vrot.slane %v185, %v267
      %v270 = vunpack.c.l.s4 1983009808
      %v271 = vunpack.c.0.s8 %v270
      %v272 = vlaneseq
      %v273 = vshrl.u32 %v272, 7
      %v274 = vsub.s32 %v271, %v273
      %v275 = vrot.slane %v261, %v274
      %v276 = vcombine.high %v268, %v268
      %v277 = vcombine.high %v275, %v275
      %v279 = vunpack.c.l.s4 1983009808
      %v280 = vunpack.c.0.s8 %v279
      %v281 = vlaneseq
      %v282 = vshrl.u32 %v281, 7
      %v283 = vsub.s32 %v280, %v282
      %v284 = vrot.slane %v186, %v283
      %v361 = vunpack.c.l.b16 %v187
      %v362 = vunpack.c.l.b16 %v188
      %v363 = vunpack.c.l.b16 %v189
      %v364 = vunpack.c.l.b16 %v190
      %v365 = vunpack.c.l.b16 %v191
      %v366 = vunpack.c.l.b16 %v192
      %v367 = vunpack.c.l.b16 %v193
      %v368 = vunpack.c.l.b16 %v194
      %v369 = vunpack.c.l.b16 %v195
      %v370 = vunpack.c.l.b16 %v196
      %v371 = vunpack.c.l.b16 %v197
      %v372 = vunpack.c.l.b16 %v198
      %v373 = vunpack.c.l.b16 %v199
      %v374 = vunpack.c.l.b16 %v200
      %v375 = vunpack.c.l.b16 %v201
      %v376 = vunpack.c.l.b16 %v202
      %v377 = vunpack.c.l.b16 %v203
      %v378 = vunpack.c.l.b16 %v204
      %v379 = vunpack.c.l.b16 %v205
      %v380 = vunpack.c.l.b16 %v206
      %v381 = vunpack.c.l.b16 %v207
      %v382 = vunpack.c.l.b16 %v208
      %v383 = vunpack.c.l.b16 %v209
      %v384 = vunpack.c.l.b16 %v210
      %v385 = vunpack.c.l.b16 %v211
      %v386 = vunpack.c.l.b16 %v212
      %v387 = vunpack.c.l.b16 %v213
      %v388 = vunpack.c.l.b16 %v214
      %v389 = vunpack.c.l.b16 %v215
      %v390 = vunpack.c.l.b16 %v216
      %v391 = vunpack.c.l.b16 %v217
      %v392 = vunpack.c.l.b16 %v218
      %v393 = vunpack.c.l.b16 %v219
      %v394 = vunpack.c.l.b16 %v220
      %v395 = vunpack.c.l.b16 %v221
      %v396 = vunpack.c.l.b16 %v222
      %v397 = vunpack.c.l.b16 %v223
      %v398 = vunpack.c.l.b16 %v224
      %v399 = vunpack.c.l.b16 %v225
      %v400 = vunpack.c.l.b16 %v226
      %v401 = vunpack.c.l.b16 %v227
      %v402 = vunpack.c.l.b16 %v228
      %v403 = vunpack.c.l.b16 %v229
      %v404 = vunpack.c.l.b16 %v230
      %v405 = vunpack.c.l.b16 %v231
      %v406 = vunpack.c.l.b16 %v232
      %v407 = vunpack.c.l.b16 %v233
      %v408 = vunpack.c.l.b16 %v234
      %v409 = vunpack.c.l.b16 %v235
      %v410 = vunpack.c.l.b16 %v236
      %v411 = vunpack.c.l.b16 %v237
      %v412 = vunpack.c.l.b16 %v238
      %v413 = vunpack.c.l.b16 %v239
      %v414 = vunpack.c.l.b16 %v240
      %v415 = vunpack.c.l.b16 %v241
      %v416 = vunpack.c.l.b16 %v242
      %v417 = vunpack.c.l.b16 %v243
      %v418 = vunpack.c.l.b16 %v244
      %v419 = vunpack.c.l.b16 %v245
      %v420 = vunpack.c.l.b16 %v246
      %v421 = vunpack.c.l.b16 %v247
      %v422 = vunpack.c.l.b16 %v248
      %v423 = vunpack.c.l.b16 %v249
      %v424 = vunpack.c.l.b16 %v250
      %v425 = vunpack.c.l.b16 %v251
      %v426 = vunpack.c.l.b16 %v252
      %v427 = vunpack.c.l.b16 %v253
      %v428 = vunpack.c.l.b16 %v254
      %v429 = vunpack.c.l.b16 %v255
      %v430 = vunpack.c.l.b16 %v256
      %v431 = vunpack.c.l.b16 %v257
      %v432 = vunpack.c.l.b16 %v258
      %v433 = vpack.c.b16 %v362, %v361
      %v434 = vpack.c.b16 %v364, %v363
      %v435 = vpack.c.b16 %v366, %v365
      %v436 = vpack.c.b16 %v368, %v367
      %v437 = vpack.c.b16 %v370, %v369
      %v438 = vpack.c.b16 %v372, %v371
      %v439 = vpack.c.b16 %v374, %v373
      %v440 = vpack.c.b16 %v376, %v375
      %v441 = vpack.c.b16 %v378, %v377
      %v442 = vpack.c.b16 %v380, %v379
      %v443 = vpack.c.b16 %v382, %v381
      %v444 = vpack.c.b16 %v384, %v383
      %v445 = vpack.c.b16 %v386, %v385
      %v446 = vpack.c.b16 %v388, %v387
      %v447 = vpack.c.b16 %v390, %v389
      %v448 = vpack.c.b16 %v392, %v391
      %v449 = vpack.c.b16 %v394, %v393
      %v450 = vpack.c.b16 %v396, %v395
      %v451 = vpack.c.b16 %v398, %v397
      %v452 = vpack.c.b16 %v400, %v399
      %v453 = vpack.c.b16 %v402, %v401
      %v454 = vpack.c.b16 %v404, %v403
      %v455 = vpack.c.b16 %v406, %v405
      %v456 = vpack.c.b16 %v408, %v407
      %v457 = vpack.c.b16 %v410, %v409
      %v458 = vpack.c.b16 %v412, %v411
      %v459 = vpack.c.b16 %v414, %v413
      %v460 = vpack.c.b16 %v416, %v415
      %v461 = vpack.c.b16 %v418, %v417
      %v462 = vpack.c.b16 %v420, %v419
      %v463 = vpack.c.b16 %v422, %v421
      %v464 = vpack.c.b16 %v424, %v423
      %v465 = vpack.c.b16 %v426, %v425
      %v466 = vpack.c.b16 %v428, %v427
      %v467 = vpack.c.b16 %v430, %v429
      %v468 = vpack.c.b16 %v432, %v431
      %vm505 = vcmask 523264
      %v507 = vsel %vm505, %v284, 0
      %509 = vmatprep.subr.bf16.mxu0 0
      %510 = vmatpush1.bf16.msra.mxu0 %v433
      %511 = vmatprep.subr.bf16.mxu0 0
      %512 = vmatpush1.bf16.msra.mxu0 %v434
      %513 = vmatprep.subr.bf16.mxu0 0
      %514 = vmatpush1.bf16.msra.mxu0 %v435
      %515 = vmatprep.subr.bf16.mxu0 0
      %516 = vmatpush1.bf16.msra.mxu0 %v436
      %517 = vmatprep.subr.bf16.mxu0 0
      %518 = vmatpush1.bf16.msra.mxu0 %v437
      %519 = vmatprep.subr.bf16.mxu0 0
      %520 = vmatpush1.bf16.msra.mxu0 %v438
      %521 = vmatprep.subr.bf16.mxu0 0
      %522 = vmatpush1.bf16.msra.mxu0 %v439
      %523 = vmatprep.subr.bf16.mxu0 0
      %524 = vmatpush1.bf16.msra.mxu0 %v440
      %525 = vmatprep.subr.bf16.mxu0 0
      %526 = vmatpush1.bf16.msra.mxu0 %v441
      %527 = vmatprep.subr.bf16.mxu0 0
      %528 = vmatpush1.bf16.msra.mxu0 %v442
      %529 = vmatprep.subr.bf16.mxu0 0
      %530 = vmatpush1.bf16.msra.mxu0 %v443
      %531 = vmatprep.subr.bf16.mxu0 0
      %532 = vmatpush1.bf16.msra.mxu0 %v444
      %533 = vmatprep.subr.bf16.mxu0 0
      %534 = vmatpush1.bf16.msra.mxu0 %v445
      %535 = vmatprep.subr.bf16.mxu0 0
      %536 = vmatpush1.bf16.msra.mxu0 %v446
      %537 = vmatprep.subr.bf16.mxu0 0
      %538 = vmatpush1.bf16.msra.mxu0 %v447
      %539 = vmatprep.subr.bf16.mxu0 0
      %540 = vmatpush1.bf16.msra.mxu0 %v448
      %541 = vmatprep.mubr.bf16.mxu0 %v276
      %542 = vmatmul.mubr.bf16.gmra.mrb[0].mxu0 %v268
      %v543 = vpop.f32.mrb[0].mxu0
      %v544 = vadd.f32 0.0, %v543
      %v545 = vpop.f32.mrb[0].mxu0
      %v546 = vpop.f32.mrb[0].mxu0
      %v547 = vpop.f32.mrb[0].mxu0
      %548 = vdwg.mxu0
      %549 = vmatprep.subr.bf16.mxu0 0
      %550 = vmatpush1.bf16.msra.mxu0 %v449
      %551 = vmatprep.subr.bf16.mxu0 0
      %552 = vmatpush1.bf16.msra.mxu0 %v450
      %553 = vmatprep.subr.bf16.mxu0 0
      %554 = vmatpush1.bf16.msra.mxu0 %v451
      %555 = vmatprep.subr.bf16.mxu0 0
      %556 = vmatpush1.bf16.msra.mxu0 %v452
      %557 = vmatprep.subr.bf16.mxu0 0
      %558 = vmatpush1.bf16.msra.mxu0 %v453
      %559 = vmatprep.subr.bf16.mxu0 0
      %560 = vmatpush1.bf16.msra.mxu0 %v454
      %561 = vmatprep.subr.bf16.mxu0 0
      %562 = vmatpush1.bf16.msra.mxu0 %v455
      %563 = vmatprep.subr.bf16.mxu0 0
      %564 = vmatpush1.bf16.msra.mxu0 %v456
      %565 = vmatprep.subr.bf16.mxu0 0
      %566 = vmatpush1.bf16.msra.mxu0 %v457
      %567 = vmatprep.subr.bf16.mxu0 0
      %568 = vmatpush1.bf16.msra.mxu0 %v458
      %569 = vmatprep.subr.bf16.mxu0 0
      %570 = vmatpush1.bf16.msra.mxu0 %v459
      %571 = vmatprep.subr.bf16.mxu0 0
      %572 = vmatpush1.bf16.msra.mxu0 %v460
      %573 = vmatprep.subr.bf16.mxu0 0
      %574 = vmatpush1.bf16.msra.mxu0 %v461
      %575 = vmatprep.subr.bf16.mxu0 0
      %576 = vmatpush1.bf16.msra.mxu0 %v462
      %577 = vmatprep.subr.bf16.mxu0 0
      %578 = vmatpush1.bf16.msra.mxu0 %v463
      %579 = vmatprep.subr.bf16.mxu0 0
      %580 = vmatpush1.bf16.msra.mxu0 %v464
      %581 = vmatprep.mubr.bf16.mxu0 %v277
      %582 = vmatmul.mubr.bf16.gmra.mrb[0].mxu0 %v275
      %v583 = vpop.f32.mrb[0].mxu0
      %v584 = vadd.f32 %v544, %v583
      %v585 = vpop.f32.mrb[0].mxu0
      %v586 = vpop.f32.mrb[0].mxu0
      %v587 = vpop.f32.mrb[0].mxu0
      %588 = vdwg.mxu0
      %589 = vmatprep.subr.bf16.mxu0 0
      %590 = vmatpush1.bf16.msra.mxu0 %v465
      %591 = vmatprep.subr.bf16.mxu0 0
      %592 = vmatpush1.bf16.msra.mxu0 %v466
      %593 = vmatprep.subr.bf16.mxu0 0
      %594 = vmatpush1.bf16.msra.mxu0 %v467
      %595 = vmatprep.subr.bf16.mxu0 0
      %596 = vmatpush1.bf16.msra.mxu0 %v468
      %597 = vmatprep.subr.bf16.mxu0 0
      %598 = vmatpush1.bf16.msra.mxu0 0
      %599 = vmatprep.subr.bf16.mxu0 0
      %600 = vmatpush1.bf16.msra.mxu0 0
      %601 = vmatprep.subr.bf16.mxu0 0
      %602 = vmatpush1.bf16.msra.mxu0 0
      %603 = vmatprep.subr.bf16.mxu0 0
      %604 = vmatpush1.bf16.msra.mxu0 0
      %605 = vmatprep.subr.bf16.mxu0 0
      %606 = vmatpush1.bf16.msra.mxu0 0
      %607 = vmatprep.subr.bf16.mxu0 0
      %608 = vmatpush1.bf16.msra.mxu0 0
      %609 = vmatprep.subr.bf16.mxu0 0
      %610 = vmatpush1.bf16.msra.mxu0 0
      %611 = vmatprep.subr.bf16.mxu0 0
      %612 = vmatpush1.bf16.msra.mxu0 0
      %613 = vmatprep.subr.bf16.mxu0 0
      %614 = vmatpush1.bf16.msra.mxu0 0
      %615 = vmatprep.subr.bf16.mxu0 0
      %616 = vmatpush1.bf16.msra.mxu0 0
      %617 = vmatprep.subr.bf16.mxu0 0
      %618 = vmatpush1.bf16.msra.mxu0 0
      %619 = vmatprep.subr.bf16.mxu0 0
      %620 = vmatpush1.bf16.msra.mxu0 0
      %621 = vmatprep.mubr.bf16.mxu0 0
      %622 = vmatmul.mubr.bf16.gmra.mrb[0].mxu0 %v507
      %v623 = vpop.f32.mrb[0].mxu0
      %v624 = vadd.f32 %v584, %v623
      %v625 = vpop.f32.mrb[0].mxu0
      %v626 = vpop.f32.mrb[0].mxu0
      %v627 = vpop.f32.mrb[0].mxu0
      %628 = vdwg.mxu0
      %vm629 = vcmask 1043456
      %v630 = vsel %vm629, %v624, 0.0
      %v631 = vrot.slane %v630, 4
      %v632 = vadd.f32 %v630, %v631
      %v633 = vrot.slane %v632, 2
      %v634 = vadd.f32 %v632, %v633
      %v635 = vrot.slane %v634, 1
      %v636 = vadd.f32 %v634, %v635
      %v637 = vrcp.pop 4.0
      %v638 = vmul.f32 %v636, %v637
      %v639 = vsub.f32 %v624, %v638
      %v640 = vmul.f32 %v639, %v639
      %v641 = vsel %vm629, %v640, 0.0
      %v642 = vrot.slane %v641, 4
      %v643 = vadd.f32 %v641, %v642
      %v644 = vrot.slane %v643, 2
      %v645 = vadd.f32 %v643, %v644
      %v646 = vrot.slane %v645, 1
      %v647 = vadd.f32 %v645, %v646
      %v648 = vmul.f32 %v647, %v637
      %v649 = vadd.f32 %v648, 1e-05
      %v650 = vrsqrt.pop %v649
      %v651 = vmul.f32 %v639, %v650
      %v652 = vld [vmem:[%s180] sm:$0xf]
      %v653 = vadd.f32 %v651, %v652
      %v654 = vsel %vm629, %v653, 0.0
      %v655 = vrot.slane %v654, 4
      %v656 = vadd.f32 %v654, %v655
      %v657 = vrot.slane %v656, 2
      %v658 = vadd.f32 %v656, %v657
      %v659 = vrot.slane %v658, 1
      %v660 = vadd.f32 %v658, %v659
      %v661 = vmul.f32 %v660, %v637
      %662 = vst [vmem:[%s183] sm:$0x1] %v661
      %p663 = scmp.lt.s32.totalorder %s14, 1
      %s664 = scalar_select %p663, %s14, 1
      %s665 = scalar_lea.vmem %s3, %s664
      // Predicated region
      $region33: #{style_encoder_mlp.18} parent=31 // pred_check
        %p666 = pneg %p105
      $region34: #{style_encoder_mlp.18} parent=31 // pred_check_branch
        %668 = sbr.rel (%p666) target = $region36
      $region35: #{style_encoder_mlp.18} parent=31 // pred_region
        _
      $region36: #{style_encoder_mlp.18} parent=31 // pred_fallthru
        _
    $region32: #{style_encoder_mlp.18} parent=5 // pred_fallthru
      _
    %p669 = scmp.le.s32.totalorder 2, %s9
    // Predicated region
    $region37: #{style_encoder_mlp.18} parent=5 // pred_check
      %p670 = pneg %p669
    $region38: #{style_encoder_mlp.18} parent=5 // pred_check_branch
      %672 = sbr.rel (%p670) target = $region40
    $region39: #{style_encoder_mlp.18} parent=5 // pred_region
      %s673 = ssub.s32 %s9, 2
      // Predicated region
      $region41: #{style_encoder_mlp.18} parent=39 // pred_check
        %p674 = pneg %p111
      $region42: #{style_encoder_mlp.18} parent=39 // pred_check_branch
        %676 = sbr.rel (%p674) target = $region44
      $region43: #{style_encoder_mlp.18} parent=39 // pred_region
        %p677 = scmp.lt.s32.totalorder %s15, 1
        %s678 = scalar_select %p677, %s15, 1
        %s679 = scalar_lea.vmem %s3, %s678
      $region44: #{style_encoder_mlp.18} parent=39 // pred_fallthru
        _
    $region40: #{style_encoder_mlp.18} parent=5 // pred_fallthru
      _
  $region6: #{style_encoder_mlp.18} parent=0 // loop_footer
    %s13 = sadd.s32 1, %s9
  $region7: #{style_encoder_mlp.18} parent=0 // loop_footer_branch
    %8 = sbr.rel target = $region3
  $region8: #{style_encoder_mlp.18} parent=0 // loop_exit
    _

// kernel: style_encoder_mlp.19
$region0: #{style_encoder_mlp.19}
  #allocation0 [shape = 'u32[]', space=smem, size = 0x4, offset = 0x4, fixed_abs, tag = 'smem constant byte address 0x4 - core index']
  #allocation1 [shape = 'u32[144,128]{1,0:T(1,128)}', space=vmem, size = 0x12000, scoped, tag = 'internal scratch']
  %s0 = inlined_call_operand.vmem [shape: f32[2,128], index: 0, kind: input, shape index: {}]
  %s1 = inlined_call_operand.vmem [shape: f32[128,128], index: 1, kind: input, shape index: {}]
  %s2 = inlined_call_operand.vmem [shape: f32[1,128], index: 2, kind: input, shape index: {}]
  %s3 = inlined_call_operand.vmem [shape: f32[128,128], index: 3, kind: input, shape index: {}]
  %s4 = inlined_call_operand.vmem [shape: f32[1,128], index: 4, kind: input, shape index: {}]
  %s5 = inlined_call_operand.vmem [shape: f32[128,128], index: 5, kind: input, shape index: {}]
  %s6 = inlined_call_operand.vmem [shape: f32[1,128], index: 6, kind: input, shape index: {}]
  %s7 = inlined_call_operand.hbm [shape: f32[2,128], index: 7, kind: output, shape index: {}]
  %s8 = sld [smem:[#allocation0]]
  $region38: #{style_encoder_mlp.19} parent=0
    _
  %s10 = ssub.s32 1, %s8
  %s11 = scalar_select 0, %s10, %s8
  $region1: #{style_encoder_mlp.19} parent=0
    #allocation2 [shape = 'u8[1024]{0}', space=vmem, size = 0x400, scoped, tag = 'output window, operand 0, single buffered']
    #allocation3 [shape = 's32[1]{0}', space=sflag, size = 0x4, scoped, tag = 'scoped memory for style_encoder_mlp.19']
    %12 = vsyncpa [#allocation3], 0
    // Predicated region
    $region2: #{style_encoder_mlp.19} parent=1 // pred_check
      _
    $region3: #{style_encoder_mlp.19} parent=1 // pred_check_branch
      %14 = sbr.rel (0) target = $region5
    $region4: #{style_encoder_mlp.19} parent=1 // pred_region
      _
    $region5: #{style_encoder_mlp.19} parent=1 // pred_fallthru
      _
    // Predicated region
    $region6: #{style_encoder_mlp.19} parent=1 // pred_check
      _
    $region7: #{style_encoder_mlp.19} parent=1 // pred_check_branch
      %16 = sbr.rel (0) target = $region9
    $region8: #{style_encoder_mlp.19} parent=1 // pred_region
      _
    $region9: #{style_encoder_mlp.19} parent=1 // pred_fallthru
      _
    // Predicated region
    $region10: #{style_encoder_mlp.19} parent=1 // pred_check
      _
    $region11: #{style_encoder_mlp.19} parent=1 // pred_check_branch
      %18 = sbr.rel (0) target = $region13
    $region12: #{style_encoder_mlp.19} parent=1 // pred_region
      _
    $region13: #{style_encoder_mlp.19} parent=1 // pred_fallthru
      _
    // Predicated region
    $region14: #{style_encoder_mlp.19} parent=1 // pred_check
      _
    $region15: #{style_encoder_mlp.19} parent=1 // pred_check_branch
      %20 = sbr.rel (0) target = $region17
    $region16: #{style_encoder_mlp.19} parent=1 // pred_region
      _
    $region17: #{style_encoder_mlp.19} parent=1 // pred_fallthru
      _
    // Predicated region
    $region18: #{style_encoder_mlp.19} parent=1 // pred_check
      _
    $region19: #{style_encoder_mlp.19} parent=1 // pred_check_branch
      %22 = sbr.rel (0) target = $region21
    $region20: #{style_encoder_mlp.19} parent=1 // pred_region
      _
    $region21: #{style_encoder_mlp.19} parent=1 // pred_fallthru
      _
    // Predicated region
    $region22: #{style_encoder_mlp.19} parent=1 // pred_check
      _
    $region23: #{style_encoder_mlp.19} parent=1 // pred_check_branch
      %24 = sbr.rel (0) target = $region25
    $region24: #{style_encoder_mlp.19} parent=1 // pred_region
      _
    $region25: #{style_encoder_mlp.19} parent=1 // pred_fallthru
      _
    // Predicated region
    $region26: #{style_encoder_mlp.19} parent=1 // pred_check
      _
    $region27: #{style_encoder_mlp.19} parent=1 // pred_check_branch
      %26 = sbr.rel (0) target = $region29
    $region28: #{style_encoder_mlp.19} parent=1 // pred_region
      _
    $region29: #{style_encoder_mlp.19} parent=1 // pred_fallthru
      _
    %v27 = vld [vmem:[%s0] sm:$0x3]
    %v28 = vld [vmem:[%s1] sm:$0xff]
    %v29 = vld [vmem:[%s1 + $0x8] sm:$0xff]
    %v30 = vld [vmem:[%s1 + $0x10] sm:$0xff]
    %v31 = vld [vmem:[%s1 + $0x18] sm:$0xff]
    %v32 = vld [vmem:[%s1 + $0x20] sm:$0xff]
    %v33 = vld [vmem:[%s1 + $0x28] sm:$0xff]
    %v34 = vld [vmem:[%s1 + $0x30] sm:$0xff]
    %v35 = vld [vmem:[%s1 + $0x38] sm:$0xff]
    %v36 = vld [vmem:[%s1 + $0x40] sm:$0xff]
    %v37 = vld [vmem:[%s1 + $0x48] sm:$0xff]
    %v38 = vld [vmem:[%s1 + $0x50] sm:$0xff]
    %v39 = vld [vmem:[%s1 + $0x58] sm:$0xff]
    %v40 = vld [vmem:[%s1 + $0x60] sm:$0xff]
    %v41 = vld [vmem:[%s1 + $0x68] sm:$0xff]
    %v42 = vld [vmem:[%s1 + $0x70] sm:$0xff]
    %v43 = vld [vmem:[%s1 + $0x78] sm:$0xff]
    %v44 = vld [vmem:[%s2] sm:$0x1]
    %v46 = vlaneseq
    %v47 = vshrl.u32 %v46, 7
    %v48 = vsub.s32 0, %v47
    %v49 = vrot.slane %v44, %v48
    %51 = vmatprep.subr.mxu0 0.0
    %52 = vmatpush1.msra.mxu0 %v28
    %53 = vmatprep.subr.mxu0 0.0
    %54 = vmatpush1.msra.mxu0 %v29
    %55 = vmatprep.subr.mxu0 0.0
    %56 = vmatpush1.msra.mxu0 %v30
    %57 = vmatprep.subr.mxu0 0.0
    %58 = vmatpush1.msra.mxu0 %v31
    %59 = vmatprep.subr.mxu0 0.0
    %60 = vmatpush1.msra.mxu0 %v32
    %61 = vmatprep.subr.mxu0 0.0
    %62 = vmatpush1.msra.mxu0 %v33
    %63 = vmatprep.subr.mxu0 0.0
    %64 = vmatpush1.msra.mxu0 %v34
    %65 = vmatprep.subr.mxu0 0.0
    %66 = vmatpush1.msra.mxu0 %v35
    %67 = vmatprep.subr.mxu0 0.0
    %68 = vmatpush1.msra.mxu0 %v36
    %69 = vmatprep.subr.mxu0 0.0
    %70 = vmatpush1.msra.mxu0 %v37
    %71 = vmatprep.subr.mxu0 0.0
    %72 = vmatpush1.msra.mxu0 %v38
    %73 = vmatprep.subr.mxu0 0.0
    %74 = vmatpush1.msra.mxu0 %v39
    %75 = vmatprep.subr.mxu0 0.0
    %76 = vmatpush1.msra.mxu0 %v40
    %77 = vmatprep.subr.mxu0 0.0
    %78 = vmatpush1.msra.mxu0 %v41
    %79 = vmatprep.subr.mxu0 0.0
    %80 = vmatpush1.msra.mxu0 %v42
    %81 = vmatprep.subr.mxu0 0.0
    %82 = vmatpush1.msra.mxu0 %v43
    %83 = vmatprep.subr.mxu0 0.0
    %84 = vmatpush1.msra.mxu0 0.0
    %85 = vmatprep.subr.mxu0 0.0
    %86 = vmatpush1.msra.mxu0 0.0
    %87 = vmatprep.subr.mxu0 0.0
    %88 = vmatpush1.msra.mxu0 0.0
    %89 = vmatprep.subr.mxu0 0.0
    %90 = vmatpush1.msra.mxu0 0.0
    %91 = vmatprep.subr.mxu0 0.0
    %92 = vmatpush1.msra.mxu0 0.0
    %93 = vmatprep.subr.mxu0 0.0
    %94 = vmatpush1.msra.mxu0 0.0
    %95 = vmatprep.subr.mxu0 0.0
    %96 = vmatpush1.msra.mxu0 0.0
    %97 = vmatprep.subr.mxu0 0.0
    %98 = vmatpush1.msra.mxu0 0.0
    %99 = vmatprep.subr.mxu0 0.0
    %100 = vmatpush1.msra.mxu0 0.0
    %101 = vmatprep.subr.mxu0 0.0
    %102 = vmatpush1.msra.mxu0 0.0
    %103 = vmatprep.subr.mxu0 0.0
    %104 = vmatpush1.msra.mxu0 0.0
    %105 = vmatprep.subr.mxu0 0.0
    %106 = vmatpush1.msra.mxu0 0.0
    %107 = vmatprep.subr.mxu0 0.0
    %108 = vmatpush1.msra.mxu0 0.0
    %109 = vmatprep.subr.mxu0 0.0
    %110 = vmatpush1.msra.mxu0 0.0
    %111 = vmatprep.subr.mxu0 0.0
    %112 = vmatpush1.msra.mxu0 0.0
    %113 = vmatprep.subr.mxu0 0.0
    %114 = vmatpush1.msra.mxu0 0.0
    %115 = vmatprep.mubr.f32.mxu0 0.0
    %116 = vmatmul.mubr.f32.gmra.mrb[0].mxu0 %v27
    %v117 = vpop.f32.mrb[0].mxu0
    %v118 = vadd.f32 %v49, %v117
    %v119 = vpop.f32.mrb[0].mxu0
    %120 = vdwg.mxu0
    %v121 = vmax.f32 %v118, 0.0
    %v122 = vld [vmem:[%s3] sm:$0xff]
    %v123 = vld [vmem:[%s3 + $0x8] sm:$0xff]
    %v124 = vld [vmem:[%s3 + $0x10] sm:$0xff]
    %v125 = vld [vmem:[%s3 + $0x18] sm:$0xff]
    %v126 = vld [vmem:[%s3 + $0x20] sm:$0xff]
    %v127 = vld [vmem:[%s3 + $0x28] sm:$0xff]
    %v128 = vld [vmem:[%s3 + $0x30] sm:$0xff]
    %v129 = vld [vmem:[%s3 + $0x38] sm:$0xff]
    %v130 = vld [vmem:[%s3 + $0x40] sm:$0xff]
    %v131 = vld [vmem:[%s3 + $0x48] sm:$0xff]
    %v132 = vld [vmem:[%s3 + $0x50] sm:$0xff]
    %v133 = vld [vmem:[%s3 + $0x58] sm:$0xff]
    %v134 = vld [vmem:[%s3 + $0x60] sm:$0xff]
    %v135 = vld [vmem:[%s3 + $0x68] sm:$0xff]
    %v136 = vld [vmem:[%s3 + $0x70] sm:$0xff]
    %v137 = vld [vmem:[%s3 + $0x78] sm:$0xff]
    %v138 = vld [vmem:[%s4] sm:$0x1]
    %v140 = vlaneseq
    %v141 = vshrl.u32 %v140, 7
    %v142 = vsub.s32 0, %v141
    %v143 = vrot.slane %v138, %v142
    %145 = vmatprep.subr.mxu0 0.0
    %146 = vmatpush1.msra.mxu0 %v122
    %147 = vmatprep.subr.mxu0 0.0
    %148 = vmatpush1.msra.mxu0 %v123
    %149 = vmatprep.subr.mxu0 0.0
    %150 = vmatpush1.msra.mxu0 %v124
    %151 = vmatprep.subr.mxu0 0.0
    %152 = vmatpush1.msra.mxu0 %v125
    %153 = vmatprep.subr.mxu0 0.0
    %154 = vmatpush1.msra.mxu0 %v126
    %155 = vmatprep.subr.mxu0 0.0
    %156 = vmatpush1.msra.mxu0 %v127
    %157 = vmatprep.subr.mxu0 0.0
    %158 = vmatpush1.msra.mxu0 %v128
    %159 = vmatprep.subr.mxu0 0.0
    %160 = vmatpush1.msra.mxu0 %v129
    %161 = vmatprep.subr.mxu0 0.0
    %162 = vmatpush1.msra.mxu0 %v130
    %163 = vmatprep.subr.mxu0 0.0
    %164 = vmatpush1.msra.mxu0 %v131
    %165 = vmatprep.subr.mxu0 0.0
    %166 = vmatpush1.msra.mxu0 %v132
    %167 = vmatprep.subr.mxu0 0.0
    %168 = vmatpush1.msra.mxu0 %v133
    %169 = vmatprep.subr.mxu0 0.0
    %170 = vmatpush1.msra.mxu0 %v134
    %171 = vmatprep.subr.mxu0 0.0
    %172 = vmatpush1.msra.mxu0 %v135
    %173 = vmatprep.subr.mxu0 0.0
    %174 = vmatpush1.msra.mxu0 %v136
    %175 = vmatprep.subr.mxu0 0.0
    %176 = vmatpush1.msra.mxu0 %v137
    %177 = vmatprep.subr.mxu0 0.0
    %178 = vmatpush1.msra.mxu0 0.0
    %179 = vmatprep.subr.mxu0 0.0
    %180 = vmatpush1.msra.mxu0 0.0
    %181 = vmatprep.subr.mxu0 0.0
    %182 = vmatpush1.msra.mxu0 0.0
    %183 = vmatprep.subr.mxu0 0.0
    %184 = vmatpush1.msra.mxu0 0.0
    %185 = vmatprep.subr.mxu0 0.0
    %186 = vmatpush1.msra.mxu0 0.0
    %187 = vmatprep.subr.mxu0 0.0
    %188 = vmatpush1.msra.mxu0 0.0
    %189 = vmatprep.subr.mxu0 0.0
    %190 = vmatpush1.msra.mxu0 0.0
    %191 = vmatprep.subr.mxu0 0.0
    %192 = vmatpush1.msra.mxu0 0.0
    %193 = vmatprep.subr.mxu0 0.0
    %194 = vmatpush1.msra.mxu0 0.0
    %195 = vmatprep.subr.mxu0 0.0
    %196 = vmatpush1.msra.mxu0 0.0
    %197 = vmatprep.subr.mxu0 0.0
    %198 = vmatpush1.msra.mxu0 0.0
    %199 = vmatprep.subr.mxu0 0.0
    %200 = vmatpush1.msra.mxu0 0.0
    %201 = vmatprep.subr.mxu0 0.0
    %202 = vmatpush1.msra.mxu0 0.0
    %203 = vmatprep.subr.mxu0 0.0
    %204 = vmatpush1.msra.mxu0 0.0
    %205 = vmatprep.subr.mxu0 0.0
    %206 = vmatpush1.msra.mxu0 0.0
    %207 = vmatprep.subr.mxu0 0.0
    %208 = vmatpush1.msra.mxu0 0.0
    %209 = vmatprep.mubr.f32.mxu0 0.0
    %210 = vmatmul.mubr.f32.gmra.mrb[0].mxu0 %v121
    %v211 = vpop.f32.mrb[0].mxu0
    %v212 = vadd.f32 %v143, %v211
    %v213 = vpop.f32.mrb[0].mxu0
    %214 = vdwg.mxu0
    %v215 = vmax.f32 %v212, 0.0
    %v216 = vld [vmem:[%s5] sm:$0xff]
    %v217 = vld [vmem:[%s5 + $0x8] sm:$0xff]
    %v218 = vld [vmem:[%s5 + $0x10] sm:$0xff]
    %v219 = vld [vmem:[%s5 + $0x18] sm:$0xff]
    %v220 = vld [vmem:[%s5 + $0x20] sm:$0xff]
    %v221 = vld [vmem:[%s5 + $0x28] sm:$0xff]
    %v222 = vld [vmem:[%s5 + $0x30] sm:$0xff]
    %v223 = vld [vmem:[%s5 + $0x38] sm:$0xff]
    %v224 = vld [vmem:[%s5 + $0x40] sm:$0xff]
    %v225 = vld [vmem:[%s5 + $0x48] sm:$0xff]
    %v226 = vld [vmem:[%s5 + $0x50] sm:$0xff]
    %v227 = vld [vmem:[%s5 + $0x58] sm:$0xff]
    %v228 = vld [vmem:[%s5 + $0x60] sm:$0xff]
    %v229 = vld [vmem:[%s5 + $0x68] sm:$0xff]
    %v230 = vld [vmem:[%s5 + $0x70] sm:$0xff]
    %v231 = vld [vmem:[%s5 + $0x78] sm:$0xff]
    %v232 = vld [vmem:[%s6] sm:$0x1]
    %v234 = vlaneseq
    %v235 = vshrl.u32 %v234, 7
    %v236 = vsub.s32 0, %v235
    %v237 = vrot.slane %v232, %v236
    %239 = vmatprep.subr.mxu0 0.0
    %240 = vmatpush1.msra.mxu0 %v216
    %241 = vmatprep.subr.mxu0 0.0
    %242 = vmatpush1.msra.mxu0 %v217
    %243 = vmatprep.subr.mxu0 0.0
    %244 = vmatpush1.msra.mxu0 %v218
    %245 = vmatprep.subr.mxu0 0.0
    %246 = vmatpush1.msra.mxu0 %v219
    %247 = vmatprep.subr.mxu0 0.0
    %248 = vmatpush1.msra.mxu0 %v220
    %249 = vmatprep.subr.mxu0 0.0
    %250 = vmatpush1.msra.mxu0 %v221
    %251 = vmatprep.subr.mxu0 0.0
    %252 = vmatpush1.msra.mxu0 %v222
    %253 = vmatprep.subr.mxu0 0.0
    %254 = vmatpush1.msra.mxu0 %v223
    %255 = vmatprep.subr.mxu0 0.0
    %256 = vmatpush1.msra.mxu0 %v224
    %257 = vmatprep.subr.mxu0 0.0
    %258 = vmatpush1.msra.mxu0 %v225
    %259 = vmatprep.subr.mxu0 0.0
    %260 = vmatpush1.msra.mxu0 %v226
    %261 = vmatprep.subr.mxu0 0.0
    %262 = vmatpush1.msra.mxu0 %v227
    %263 = vmatprep.subr.mxu0 0.0
    %264 = vmatpush1.msra.mxu0 %v228
    %265 = vmatprep.subr.mxu0 0.0
    %266 = vmatpush1.msra.mxu0 %v229
    %267 = vmatprep.subr.mxu0 0.0
    %268 = vmatpush1.msra.mxu0 %v230
    %269 = vmatprep.subr.mxu0 0.0
    %270 = vmatpush1.msra.mxu0 %v231
    %271 = vmatprep.subr.mxu0 0.0
    %272 = vmatpush1.msra.mxu0 0.0
    %273 = vmatprep.subr.mxu0 0.0
    %274 = vmatpush1.msra.mxu0 0.0
    %275 = vmatprep.subr.mxu0 0.0
    %276 = vmatpush1.msra.mxu0 0.0
    %277 = vmatprep.subr.mxu0 0.0
    %278 = vmatpush1.msra.mxu0 0.0
    %279 = vmatprep.subr.mxu0 0.0
    %280 = vmatpush1.msra.mxu0 0.0
    %281 = vmatprep.subr.mxu0 0.0
    %282 = vmatpush1.msra.mxu0 0.0
    %283 = vmatprep.subr.mxu0 0.0
    %284 = vmatpush1.msra.mxu0 0.0
    %285 = vmatprep.subr.mxu0 0.0
    %286 = vmatpush1.msra.mxu0 0.0
    %287 = vmatprep.subr.mxu0 0.0
    %288 = vmatpush1.msra.mxu0 0.0
    %289 = vmatprep.subr.mxu0 0.0
    %290 = vmatpush1.msra.mxu0 0.0
    %291 = vmatprep.subr.mxu0 0.0
    %292 = vmatpush1.msra.mxu0 0.0
    %293 = vmatprep.subr.mxu0 0.0
    %294 = vmatpush1.msra.mxu0 0.0
    %295 = vmatprep.subr.mxu0 0.0
    %296 = vmatpush1.msra.mxu0 0.0
    %297 = vmatprep.subr.mxu0 0.0
    %298 = vmatpush1.msra.mxu0 0.0
    %299 = vmatprep.subr.mxu0 0.0
    %300 = vmatpush1.msra.mxu0 0.0
    %301 = vmatprep.subr.mxu0 0.0
    %302 = vmatpush1.msra.mxu0 0.0
    %303 = vmatprep.mubr.f32.mxu0 0.0
    %304 = vmatmul.mubr.f32.gmra.mrb[0].mxu0 %v215
    %v305 = vpop.f32.mrb[0].mxu0
    %v306 = vadd.f32 %v237, %v305
    %v307 = vpop.f32.mrb[0].mxu0
    %308 = vdwg.mxu0
    %309 = vst [vmem:[#allocation2] sm:$0x3] %v306
    // Predicated region
    $region30: #{style_encoder_mlp.19} parent=1 // pred_check
      _
    $region31: #{style_encoder_mlp.19} parent=1 // pred_check_branch
      %311 = sbr.rel (0) target = $region33
    $region32: #{style_encoder_mlp.19} parent=1 // pred_region
      %s313 = ssub.s32 32, 32
      %314 = vsyncadd [#allocation3], %s313
      %s316 = sshll.u32 [#allocation2], 4
      %s317 = int_to_ptr.vmem [resolvable:$true] %s316
      %319 = dma.vmem_to_hbm [thread:$0]  %s317, 32, %s7, [#allocation3]
    $region33: #{style_encoder_mlp.19} parent=1 // pred_fallthru
      _
    // Predicated region
    $region34: #{style_encoder_mlp.19} parent=1 // pred_check
      _
    $region35: #{style_encoder_mlp.19} parent=1 // pred_check_branch
      %321 = sbr.rel (0) target = $region37
    $region36: #{style_encoder_mlp.19} parent=1 // pred_region
      %322 = dma.done [#allocation3], 32
    $region37: #{style_encoder_mlp.19} parent=1 // pred_fallthru
      _
    %323 = vsyncpa [#allocation3], 1

</llo_original>
